<compile_context>
chip_gen: v7x
topology: tpu7x:2x2x1
jax: 0.10.0
libtpu: 0.0.40
codegen_flags: <defaults>
</compile_context>

<pallas_src>
import functools

import jax
import jax.numpy as jnp
import numpy as np
from jax.experimental import pallas as pl
from jax.experimental.pallas import tpu as pltpu


def _round_up(x, m):
    return ((x + m - 1) // m) * m


# ----------------------------------------------------------------------------
# Fused kernel
# ----------------------------------------------------------------------------
def fused_rnn_kernel(*refs, sim, chunk, bb, hidden, seq_len):
    if sim:
        (x_ref, w_ih_ref, w_hh_ref, b_i_ref, b_hn_ref, w_tag_ref, b_tag_ref,
         nvec_ref, wiki_ref, w_emb_ref, b_emb_ref, w_att_ref, w_l2_ref,
         out_ref, h_scr, m_scr, gi_scr) = refs
    else:
        (x_ref, w_ih_ref, w_hh_ref, b_i_ref, b_hn_ref, w_tag_ref, b_tag_ref,
         out_ref, h_scr, m_scr, gi_scr) = refs

    c = pl.program_id(1)                       # sequence-chunk axis (last, serial)
    last = pl.num_programs(1) - 1
    H = hidden

    @pl.when(c == 0)
    def _():
        h_scr[...] = jnp.zeros_like(h_scr)     # init_hidden(): zeros
        m_scr[...] = jnp.full_like(m_scr, -1.0)  # tanh lower bound (S >= 1)

    # ---- hoisted input projection: ONE fused bf16 (chunk*bb,E)@(E,3H) matmul
    #      per chunk, parked in VMEM scratch (bounds live ranges in the loop).
    xs = x_ref[...]                                            # (chunk*bb, E) bf16
    gi = jnp.dot(xs, w_ih_ref[...], preferred_element_type=jnp.float32)
    gi_scr[...] = gi + b_i_ref[...]                            # f32 (chunk*bb, 3H)

    w_hh = w_hh_ref[...]                                       # (H, 3H) bf16
    b_hn = b_hn_ref[...]                                       # (1, H)  f32

    def run_chunk(masked):
        h = h_scr[...]
        m = m_scr[...]
        for t in range(chunk):                                 # fully unrolled
            gi_t = gi_scr[pl.ds(t * bb, bb), :]                # aligned (bb, 3H)
            # single fused 3H-wide matmul on the serial critical path
            gh = jnp.dot(h.astype(w_hh.dtype), w_hh,
                         preferred_element_type=jnp.float32)   # (bb, 3H)
            r = jax.nn.sigmoid(gi_t[:, 0:H] + gh[:, 0:H])
            z = jax.nn.sigmoid(gi_t[:, H:2 * H] + gh[:, H:2 * H])
            n = jnp.tanh(gi_t[:, 2 * H:] + r * (gh[:, 2 * H:] + b_hn))
            h_new = n + z * (h - n)                            # == (1-z)*n + z*h
            m_new = jnp.maximum(m, jnp.tanh(h_new))            # MaxPool1d(seq)
            if masked:                                         # last chunk only
                valid = (c * chunk + t) < seq_len
                h_new = jnp.where(valid, h_new, h)
                m_new = jnp.where(valid, m_new, m)
            h, m = h_new, m_new
        h_scr[...] = h
        m_scr[...] = m

    if (seq_len % chunk) != 0:
        # Tail masking only on the final chunk; interior chunks stay clean.
        @pl.when(c != last)
        def _():
            run_chunk(False)

        @pl.when(c == last)
        def _():
            run_chunk(True)
    else:
        run_chunk(False)

    # ---- epilogue on last chunk: hidden2tag (+ fused sim path) ----
    @pl.when(c == last)
    def _():
        m = m_scr[...]
        vec2 = (jnp.dot(m, w_tag_ref[...], preferred_element_type=jnp.float32)
                + b_tag_ref[...])                              # (bb, T_pad) lane-dense
        if sim:
            nv = nvec_ref[...]                                 # (bb, R)
            wk = wiki_ref[...]                                 # (W_pad, R)
            Wp, R = wk.shape
            prod = (nv[:, None, :] * wk[None, :, :]).reshape(bb * Wp, R)
            emb = (jnp.dot(prod, w_emb_ref[...],
                           preferred_element_type=jnp.float32)
                   + b_emb_ref[...])                           # (bb*Wp, E)
            att = jax.nn.sigmoid(jnp.dot(emb, w_att_ref[...],
                                         preferred_element_type=jnp.float32))
            gated = (emb * att).reshape(bb, Wp, emb.shape[-1])
            vec3 = jnp.sum(gated * w_l2_ref[...], axis=-1)     # (bb, W_pad==T_pad)
            # vec2.detach() only affects autograd; forward value is identical.
            out_ref[...] = jax.nn.sigmoid(vec2 + vec3)
        else:
            out_ref[...] = jax.nn.sigmoid(vec2)


# ----------------------------------------------------------------------------
# Wrapper
# ----------------------------------------------------------------------------
def rnn_forward(params, vec1, nvec, wiki, simlearning, chunk=32, batch_block=None):
    B, S = vec1.shape
    E = params['emb_table'].shape[1]
    H = params['w_hh_k'].shape[0]
    T = int(params['tagset_size'])
    T_pad = params['w_tag_k'].shape[1]
    sim = (simlearning == 1)

    chunk = max(1, min(chunk, S))
    num_chunks = pl.cdiv(S, chunk)
    S_pad = num_chunks * chunk

    bb = batch_block if batch_block is not None else _round_up(B, 8)
    bb = _round_up(bb, 8)
    B_pad = _round_up(B, bb)
    nb = B_pad // bb

    # Blocked, time-major embedding gather: permute the tiny token-id matrix
    # instead of transposing the (S,B,E) activation tensor on the host.
    # Padded positions use token 0 (padding_idx) and are masked / sliced away.
    ids = jnp.transpose(vec1)                                  # (S, B)
    ids = jnp.pad(ids, ((0, S_pad - S), (0, B_pad - B)))
    ids = ids.reshape(S_pad, nb, bb).transpose(1, 0, 2).reshape(nb, S_pad * bb)
    x = params['emb_table'][ids].astype(jnp.bfloat16)          # (nb, S_pad*bb, E)
    # TODO(synk): nn.Dropout(p=0.2) is identity in eval mode; training-mode dropout not implemented.

    in_specs = [
        pl.BlockSpec((None, chunk * bb, E), lambda b, c: (b, c, 0)),   # x block
        pl.BlockSpec((E, 3 * H), lambda b, c: (0, 0)),                 # W_ih_all^T (bf16)
        pl.BlockSpec((H, 3 * H), lambda b, c: (0, 0)),                 # W_hh_all^T (bf16)
        pl.BlockSpec((1, 3 * H), lambda b, c: (0, 0)),                 # b_r|b_z|b_in
        pl.BlockSpec((1, H), lambda b, c: (0, 0)),                     # b_hn
        pl.BlockSpec((H, T_pad), lambda b, c: (0, 0)),                 # hidden2tag W^T (padded)
        pl.BlockSpec((1, T_pad), lambda b, c: (0, 0)),                 # hidden2tag b (padded)
    ]
    inputs = [x, params['w_ih_k'], params['w_hh_k'], params['b_i_k'],
              params['b_hn_k'], params['w_tag_k'], params['b_tag_k']]
    if sim:
        R = nvec.shape[1]
        W = wiki.shape[0]
        assert W <= T_pad, "wiki rows must match tagset size"
        nvec_p = jnp.pad(nvec.astype(jnp.float32), ((0, B_pad - B), (0, 0)))
        wiki_p = jnp.pad(wiki.astype(jnp.float32), ((0, T_pad - W), (0, 0)))
        in_specs += [
            pl.BlockSpec((bb, R), lambda b, c: (b, 0)),                # nvec
            pl.BlockSpec((T_pad, R), lambda b, c: (0, 0)),             # wiki (padded rows)
            pl.BlockSpec((R, E), lambda b, c: (0, 0)),                 # embedding W^T
            pl.BlockSpec((1, E), lambda b, c: (0, 0)),                 # embedding b
            pl.BlockSpec((E, E), lambda b, c: (0, 0)),                 # vattention W^T
            pl.BlockSpec((1, E), lambda b, c: (0, 0)),                 # layer2 W
        ]
        inputs += [nvec_p, wiki_p, params['w_emb_T'], params['b_emb'],
                   params['w_att_T'], params['w_l2']]

    kernel = functools.partial(fused_rnn_kernel, sim=sim, chunk=chunk, bb=bb,
                               hidden=H, seq_len=S)
    out = pl.pallas_call(
        kernel,
        out_shape=jax.ShapeDtypeStruct((B_pad, T_pad), jnp.float32),
        grid_spec=pltpu.PrefetchScalarGridSpec(
            num_scalar_prefetch=0,
            grid=(nb, num_chunks),            # (batch blocks, sequence chunks)
            in_specs=in_specs,
            out_specs=pl.BlockSpec((bb, T_pad), lambda b, c: (b, 0)),
            scratch_shapes=[pltpu.VMEM((bb, H), jnp.float32),            # h state
                            pltpu.VMEM((bb, H), jnp.float32),            # running max
                            pltpu.VMEM((chunk * bb, 3 * H), jnp.float32)],  # gi slab
        ),
        compiler_params=pltpu.CompilerParams(
            # batch axis parallel (v7x megacore), serial recurrence axis last
            dimension_semantics=("parallel", "arbitrary"),
            vmem_limit_bytes=64 * 1024 * 1024),
    )(*inputs)
    return out[:B, :T]


# ----------------------------------------------------------------------------
# Parameter init (PyTorch-like layouts + kernel-friendly fused/padded forms)
# ----------------------------------------------------------------------------
def init_params(key, vocab_size, E, H, T, R):
    ks = jax.random.split(key, 11)

    def u(k, shape, scale):
        return jax.random.uniform(k, shape, jnp.float32, -scale, scale)

    emb = jax.random.normal(ks[0], (vocab_size + 1, E), jnp.float32)
    emb = emb.at[0].set(0.0)                  # padding_idx = 0

    s = 1.0 / np.sqrt(H)
    w_ih = u(ks[1], (3 * H, E), s)            # GRU weight_ih_l0 (r|z|n)
    w_hh = u(ks[2], (3 * H, H), s)            # GRU weight_hh_l0
    b_ih = u(ks[3], (3 * H,), s)
    b_hh = u(ks[4], (3 * H,), s)
    w_tag = u(ks[5], (T, H), s)               # hidden2tag
    b_tag = u(ks[6], (T,), s)
    w_emb = u(ks[7], (E, R), 1.0 / np.sqrt(R))    # embedding: Linear(R, E)
    b_emb = u(ks[8], (E,), 1.0 / np.sqrt(R))
    w_att = u(ks[9], (E, E), 1.0 / np.sqrt(E))    # vattention (no bias)
    w_l2 = u(ks[10], (1, E), 1.0 / np.sqrt(E))    # layer2 (no bias)

    T_pad = _round_up(T, 128)                 # lane-dense output

    # Fused-gate biases: b_r/b_z fold ih+hh; b_in goes into gi; b_hn stays with gh_n.
    b_i = jnp.concatenate([b_ih[:H] + b_hh[:H],
                           b_ih[H:2 * H] + b_hh[H:2 * H],
                           b_ih[2 * H:]]).reshape(1, 3 * H)
    b_hn = b_hh[2 * H:].reshape(1, H)

    w_tag_k = jnp.zeros((H, T_pad), jnp.float32).at[:, :T].set(w_tag.T)
    b_tag_k = jnp.zeros((1, T_pad), jnp.float32).at[:, :T].set(b_tag)

    return dict(
        emb_table=emb,
        tagset_size=T,
        # kernel-friendly forms (bf16 operands for the recurrence matmuls)
        w_ih_k=jnp.transpose(w_ih).astype(jnp.bfloat16),   # (E, 3H)
        w_hh_k=jnp.transpose(w_hh).astype(jnp.bfloat16),   # (H, 3H)
        b_i_k=b_i, b_hn_k=b_hn,
        w_tag_k=w_tag_k, b_tag_k=b_tag_k,
        w_emb_T=jnp.transpose(w_emb), b_emb=b_emb.reshape(1, -1),
        w_att_T=jnp.transpose(w_att), w_l2=w_l2,
        # full-precision reference forms
        w_ih_T=jnp.transpose(w_ih), w_hh_T=jnp.transpose(w_hh),
        b_ih=b_ih.reshape(1, -1), b_hh=b_hh.reshape(1, -1),
        w_tag_T=jnp.transpose(w_tag), b_tag=b_tag.reshape(1, -1),
    )


# ----------------------------------------------------------------------------
# Pure-JAX f32 reference for verification
# ----------------------------------------------------------------------------
def rnn_forward_ref(params, vec1, nvec, wiki, simlearning):
    x = params['emb_table'][vec1]
    B = x.shape[0]
    H = params['w_hh_T'].shape[0]
    w_ih_T, w_hh_T = params['w_ih_T'], params['w_hh_T']
    b_ih, b_hh = params['b_ih'][0], params['b_hh'][0]

    def step(h, x_t):
        gi = x_t @ w_ih_T + b_ih
        gh = h @ w_hh_T + b_hh
        r = jax.nn.sigmoid(gi[:, :H] + gh[:, :H])
        z = jax.nn.sigmoid(gi[:, H:2 * H] + gh[:, H:2 * H])
        n = jnp.tanh(gi[:, 2 * H:] + r * gh[:, 2 * H:])
        h_new = (1.0 - z) * n + z * h
        return h_new, h_new

    h0 = jnp.zeros((B, H), jnp.float32)
    _, hs = jax.lax.scan(step, h0, jnp.transpose(x, (1, 0, 2)))
    output1 = jnp.max(jnp.tanh(hs), axis=0)
    vec2 = output1 @ params['w_tag_T'] + params['b_tag'][0]
    if simlearning == 1:
        new = wiki[None, :, :] * nvec[:, None, :]
        new = jnp.einsum('bwr,re->bwe', new, params['w_emb_T']) + params['b_emb'][0]
        att = jax.nn.sigmoid(jnp.einsum('bwe,ef->bwf', new, params['w_att_T']))
        new = new * att
        vec3 = jnp.sum(new * params['w_l2'][0][None, None, :], axis=-1)
        return jax.nn.sigmoid(vec2 + vec3)
    return jax.nn.sigmoid(vec2)


if __name__ == "__main__":
    # Small, module-consistent shapes; H multiple of 128, B multiple of 8.
    B, S = 16, 12               # batch, sequence length
    E, H = 32, 128              # Embeddingsize, hidden_dim (scaled down)
    T, R = 16, 24               # tagset_size (= #wiki rows), rvocsize
    V = 50                      # vocab_size

    key = jax.random.PRNGKey(0)
    kp, k1, k2, k3 = jax.random.split(key, 4)
    params = init_params(kp, V, E, H, T, R)

    vec1 = jax.random.randint(k1, (B, S), 0, V + 1)              # token ids
    nvec = jax.random.uniform(k2, (B, R), jnp.float32)
    wiki = jax.random.uniform(k3, (T, R), jnp.float32)

    # chunk=8 -> 2 sequence chunks (last one tail-masked, S=12);
    # batch_block=8 -> 2 batch blocks on the parallel grid axis.
    out_sim = rnn_forward(params, vec1, nvec, wiki, simlearning=1,
                          chunk=8, batch_block=8)
    out_nosim = rnn_forward(params, vec1, nvec, wiki, simlearning=0,
                            chunk=8, batch_block=8)
    jax.block_until_ready((out_sim, out_nosim))

    ref_sim = rnn_forward_ref(params, vec1, nvec, wiki, 1)
    ref_nosim = rnn_forward_ref(params, vec1, nvec, wiki, 0)
    # bf16 matmul operands in the kernel -> relaxed tolerance vs f32 reference.
    np.testing.assert_allclose(np.asarray(out_sim), np.asarray(ref_sim),
                               rtol=3e-2, atol=3e-2)
    np.testing.assert_allclose(np.asarray(out_nosim), np.asarray(ref_nosim),
                               rtol=3e-2, atol=3e-2)
    print("KERNEL_OK")
</pallas_src>

<mosaic_0001>
module attributes {stable_mosaic.version = 11 : i64} {
  func.func @fused_rnn_kernel(%arg0: i32, %arg1: i32, %arg2: memref<1x64x32xbf16, #tpu.memory_space<vmem>>, %arg3: memref<32x384xbf16, #tpu.memory_space<vmem>>, %arg4: memref<128x384xbf16, #tpu.memory_space<vmem>>, %arg5: memref<1x384xf32, #tpu.memory_space<vmem>>, %arg6: memref<1x128xf32, #tpu.memory_space<vmem>>, %arg7: memref<128x128xf32, #tpu.memory_space<vmem>>, %arg8: memref<1x128xf32, #tpu.memory_space<vmem>>, %arg9: memref<8x24xf32, #tpu.memory_space<vmem>>, %arg10: memref<128x24xf32, #tpu.memory_space<vmem>>, %arg11: memref<24x32xf32, #tpu.memory_space<vmem>>, %arg12: memref<1x32xf32, #tpu.memory_space<vmem>>, %arg13: memref<32x32xf32, #tpu.memory_space<vmem>>, %arg14: memref<1x32xf32, #tpu.memory_space<vmem>>, %arg15: memref<8x128xf32, #tpu.memory_space<vmem>>, %arg16: memref<8x128xf32, #tpu.memory_space<vmem>>, %arg17: memref<8x128xf32, #tpu.memory_space<vmem>>, %arg18: memref<64x384xf32, #tpu.memory_space<vmem>>) attributes {dimension_semantics = [#tpu.dimension_semantics<parallel>, #tpu.dimension_semantics<arbitrary>], iteration_bounds = array<i64: 2, 2>, scalar_prefetch = 0 : i64, scratch_operands = 3 : i64, tpu.core_type = #tpu.core_type<tc>, window_params = [{transform_indices = @transform_0, window_bounds = array<i64: 1, 64, 32>}, {pipeline_mode = #tpu.pipeline_mode<synchronous>, transform_indices = @transform_1, window_bounds = array<i64: 32, 384>}, {pipeline_mode = #tpu.pipeline_mode<synchronous>, transform_indices = @transform_2, window_bounds = array<i64: 128, 384>}, {pipeline_mode = #tpu.pipeline_mode<synchronous>, transform_indices = @transform_3, window_bounds = array<i64: 1, 384>}, {pipeline_mode = #tpu.pipeline_mode<synchronous>, transform_indices = @transform_4, window_bounds = array<i64: 1, 128>}, {pipeline_mode = #tpu.pipeline_mode<synchronous>, transform_indices = @transform_5, window_bounds = array<i64: 128, 128>}, {pipeline_mode = #tpu.pipeline_mode<synchronous>, transform_indices = @transform_6, window_bounds = array<i64: 1, 128>}, {transform_indices = @transform_7, window_bounds = array<i64: 8, 24>}, {pipeline_mode = #tpu.pipeline_mode<synchronous>, transform_indices = @transform_8, window_bounds = array<i64: 128, 24>}, {pipeline_mode = #tpu.pipeline_mode<synchronous>, transform_indices = @transform_9, window_bounds = array<i64: 24, 32>}, {pipeline_mode = #tpu.pipeline_mode<synchronous>, transform_indices = @transform_10, window_bounds = array<i64: 1, 32>}, {pipeline_mode = #tpu.pipeline_mode<synchronous>, transform_indices = @transform_11, window_bounds = array<i64: 32, 32>}, {pipeline_mode = #tpu.pipeline_mode<synchronous>, transform_indices = @transform_12, window_bounds = array<i64: 1, 32>}, {transform_indices = @transform_13, window_bounds = array<i64: 8, 128>}]} {
    %c0_i32 = arith.constant 0 : i32
    %0 = arith.cmpi eq, %arg1, %c0_i32 : i32
    %1 = arith.extui %0 : i1 to i32
    %c0_i32_0 = arith.constant 0 : i32
    %2 = arith.cmpi ne, %1, %c0_i32_0 : i32
    scf.if %2 {
      %cst_18 = arith.constant 0.000000e+00 : f32
      %22 = vector.broadcast %cst_18 : f32 to vector<8x128xf32>
      %c0_19 = arith.constant 0 : index
      %c0_20 = arith.constant 0 : index
      %23 = vector.load %arg16[%c0_19, %c0_20] : memref<8x128xf32, #tpu.memory_space<vmem>>, vector<8x128xf32>
      tpu.vector_store %arg16[%c0_19, %c0_20], %22 {strides = array<i32>} : memref<8x128xf32, #tpu.memory_space<vmem>>, vector<8x128xf32>,
      %cst_21 = arith.constant -1.000000e+00 : f32
      %24 = vector.broadcast %cst_21 : f32 to vector<8x128xf32>
      %c0_22 = arith.constant 0 : index
      %c0_23 = arith.constant 0 : index
      %25 = vector.load %arg17[%c0_22, %c0_23] : memref<8x128xf32, #tpu.memory_space<vmem>>, vector<8x128xf32>
      tpu.vector_store %arg17[%c0_22, %c0_23], %24 {strides = array<i32>} : memref<8x128xf32, #tpu.memory_space<vmem>>, vector<8x128xf32>,
    } else {
    }
    %c0 = arith.constant 0 : index
    %c0_1 = arith.constant 0 : index
    %c0_2 = arith.constant 0 : index
    %3 = vector.load %arg2[%c0, %c0_1, %c0_2] : memref<1x64x32xbf16, #tpu.memory_space<vmem>>, vector<1x64x32xbf16>
    %4 = vector.shape_cast %3 : vector<1x64x32xbf16> to vector<64x32xbf16>
    %c0_3 = arith.constant 0 : index
    %c0_4 = arith.constant 0 : index
    %5 = vector.load %arg3[%c0_3, %c0_4] : memref<32x384xbf16, #tpu.memory_space<vmem>>, vector<32x384xbf16>
    %cst = arith.constant dense<0.000000e+00> : vector<64x384xf32>
    %6 = tpu.matmul %4, %5, %cst {dimension_numbers = #tpu.dot_dimension_numbers<[1], [0], [0], [1], [0, 0, 1, 1], [], []>} : vector<64x32xbf16>, vector<32x384xbf16>, vector<64x384xf32> -> vector<64x384xf32>
    %c0_5 = arith.constant 0 : index
    %c0_6 = arith.constant 0 : index
    %7 = vector.load %arg5[%c0_5, %c0_6] : memref<1x384xf32, #tpu.memory_space<vmem>>, vector<1x384xf32>
    %8 = vector.broadcast %7 : vector<1x384xf32> to vector<64x384xf32>
    %9 = arith.addf %6, %8 : vector<64x384xf32>
    %c0_7 = arith.constant 0 : index
    %c0_8 = arith.constant 0 : index
    %10 = vector.load %arg18[%c0_7, %c0_8] : memref<64x384xf32, #tpu.memory_space<vmem>>, vector<64x384xf32>
    tpu.vector_store %arg18[%c0_7, %c0_8], %9 {strides = array<i32>} : memref<64x384xf32, #tpu.memory_space<vmem>>, vector<64x384xf32>,
    %c0_9 = arith.constant 0 : index
    %c0_10 = arith.constant 0 : index
    %11 = vector.load %arg4[%c0_9, %c0_10] : memref<128x384xbf16, #tpu.memory_space<vmem>>, vector<128x384xbf16>
    %c0_11 = arith.constant 0 : index
    %c0_12 = arith.constant 0 : index
    %12 = vector.load %arg6[%c0_11, %c0_12] : memref<1x128xf32, #tpu.memory_space<vmem>>, vector<1x128xf32>
    %c1_i32 = arith.constant 1 : i32
    %13 = arith.cmpi ne, %arg1, %c1_i32 : i32
    %14 = arith.extui %13 : i1 to i32
    %c0_i32_13 = arith.constant 0 : i32
    %15 = arith.cmpi ne, %14, %c0_i32_13 : i32
    scf.if %15 {
      %c0_18 = arith.constant 0 : index
      %c0_19 = arith.constant 0 : index
      %22 = vector.load %arg16[%c0_18, %c0_19] : memref<8x128xf32, #tpu.memory_space<vmem>>, vector<8x128xf32>
      %c0_20 = arith.constant 0 : index
      %c0_21 = arith.constant 0 : index
      %23 = vector.load %arg17[%c0_20, %c0_21] : memref<8x128xf32, #tpu.memory_space<vmem>>, vector<8x128xf32>
      %c0_22 = arith.constant 0 : index
      %c0_23 = arith.constant 0 : index
      %24 = vector.load %arg18[%c0_22, %c0_23] : memref<64x384xf32, #tpu.memory_space<vmem>>, vector<8x384xf32>
      %25 = arith.truncf %22 : vector<8x128xf32> to vector<8x128xbf16>
      %cst_24 = arith.constant dense<0.000000e+00> : vector<8x384xf32>
      %26 = tpu.matmul %25, %11, %cst_24 {dimension_numbers = #tpu.dot_dimension_numbers<[1], [0], [0], [1], [0, 0, 1, 1], [], []>} : vector<8x128xbf16>, vector<128x384xbf16>, vector<8x384xf32> -> vector<8x384xf32>
      %27 = vector.extract_strided_slice %24 {offsets = [0, 0], sizes = [8, 128], strides = [1, 1]} : vector<8x384xf32> to vector<8x128xf32>
      %28 = vector.extract_strided_slice %26 {offsets = [0, 0], sizes = [8, 128], strides = [1, 1]} : vector<8x384xf32> to vector<8x128xf32>
      %29 = arith.addf %27, %28 : vector<8x128xf32>
      %30 = arith.negf %29 : vector<8x128xf32>
      %31 = math.exp %30 : vector<8x128xf32>
      %cst_25 = arith.constant 1.000000e+00 : f32
      %32 = vector.broadcast %cst_25 : f32 to vector<8x128xf32>
      %33 = arith.addf %32, %31 : vector<8x128xf32>
      %34 = arith.divf %32, %33 : vector<8x128xf32>
      %35 = vector.extract_strided_slice %24 {offsets = [0, 128], sizes = [8, 128], strides = [1, 1]} : vector<8x384xf32> to vector<8x128xf32>
      %36 = vector.extract_strided_slice %26 {offsets = [0, 128], sizes = [8, 128], strides = [1, 1]} : vector<8x384xf32> to vector<8x128xf32>
      %37 = arith.addf %35, %36 : vector<8x128xf32>
      %38 = arith.negf %37 : vector<8x128xf32>
      %39 = math.exp %38 : vector<8x128xf32>
      %cst_26 = arith.constant 1.000000e+00 : f32
      %40 = vector.broadcast %cst_26 : f32 to vector<8x128xf32>
      %41 = arith.addf %40, %39 : vector<8x128xf32>
      %42 = arith.divf %40, %41 : vector<8x128xf32>
      %43 = vector.extract_strided_slice %24 {offsets = [0, 256], sizes = [8, 128], strides = [1, 1]} : vector<8x384xf32> to vector<8x128xf32>
      %44 = vector.extract_strided_slice %26 {offsets = [0, 256], sizes = [8, 128], strides = [1, 1]} : vector<8x384xf32> to vector<8x128xf32>
      %45 = vector.broadcast %12 : vector<1x128xf32> to vector<8x128xf32>
      %46 = arith.addf %44, %45 : vector<8x128xf32>
      %47 = arith.mulf %34, %46 : vector<8x128xf32>
      %48 = arith.addf %43, %47 : vector<8x128xf32>
      %49 = math.tanh %48 : vector<8x128xf32>
      %50 = arith.subf %22, %49 : vector<8x128xf32>
      %51 = arith.mulf %42, %50 : vector<8x128xf32>
      %52 = arith.addf %49, %51 : vector<8x128xf32>
      %53 = math.tanh %52 : vector<8x128xf32>
      %54 = arith.maximumf %23, %53 : vector<8x128xf32>
      %c8 = arith.constant 8 : index
      %c0_27 = arith.constant 0 : index
      %55 = vector.load %arg18[%c8, %c0_27] : memref<64x384xf32, #tpu.memory_space<vmem>>, vector<8x384xf32>
      %56 = arith.truncf %52 : vector<8x128xf32> to vector<8x128xbf16>
      %cst_28 = arith.constant dense<0.000000e+00> : vector<8x384xf32>
      %57 = tpu.matmul %56, %11, %cst_28 {dimension_numbers = #tpu.dot_dimension_numbers<[1], [0], [0], [1], [0, 0, 1, 1], [], []>} : vector<8x128xbf16>, vector<128x384xbf16>, vector<8x384xf32> -> vector<8x384xf32>
      %58 = vector.extract_strided_slice %55 {offsets = [0, 0], sizes = [8, 128], strides = [1, 1]} : vector<8x384xf32> to vector<8x128xf32>
      %59 = vector.extract_strided_slice %57 {offsets = [0, 0], sizes = [8, 128], strides = [1, 1]} : vector<8x384xf32> to vector<8x128xf32>
      %60 = arith.addf %58, %59 : vector<8x128xf32>
      %61 = arith.negf %60 : vector<8x128xf32>
      %62 = math.exp %61 : vector<8x128xf32>
      %cst_29 = arith.constant 1.000000e+00 : f32
      %63 = vector.broadcast %cst_29 : f32 to vector<8x128xf32>
      %64 = arith.addf %63, %62 : vector<8x128xf32>
      %65 = arith.divf %63, %64 : vector<8x128xf32>
      %66 = vector.extract_strided_slice %55 {offsets = [0, 128], sizes = [8, 128], strides = [1, 1]} : vector<8x384xf32> to vector<8x128xf32>
      %67 = vector.extract_strided_slice %57 {offsets = [0, 128], sizes = [8, 128], strides = [1, 1]} : vector<8x384xf32> to vector<8x128xf32>
      %68 = arith.addf %66, %67 : vector<8x128xf32>
      %69 = arith.negf %68 : vector<8x128xf32>
      %70 = math.exp %69 : vector<8x128xf32>
      %cst_30 = arith.constant 1.000000e+00 : f32
      %71 = vector.broadcast %cst_30 : f32 to vector<8x128xf32>
      %72 = arith.addf %71, %70 : vector<8x128xf32>
      %73 = arith.divf %71, %72 : vector<8x128xf32>
      %74 = vector.extract_strided_slice %55 {offsets = [0, 256], sizes = [8, 128], strides = [1, 1]} : vector<8x384xf32> to vector<8x128xf32>
      %75 = vector.extract_strided_slice %57 {offsets = [0, 256], sizes = [8, 128], strides = [1, 1]} : vector<8x384xf32> to vector<8x128xf32>
      %76 = vector.broadcast %12 : vector<1x128xf32> to vector<8x128xf32>
      %77 = arith.addf %75, %76 : vector<8x128xf32>
      %78 = arith.mulf %65, %77 : vector<8x128xf32>
      %79 = arith.addf %74, %78 : vector<8x128xf32>
      %80 = math.tanh %79 : vector<8x128xf32>
      %81 = arith.subf %52, %80 : vector<8x128xf32>
      %82 = arith.mulf %73, %81 : vector<8x128xf32>
      %83 = arith.addf %80, %82 : vector<8x128xf32>
      %84 = math.tanh %83 : vector<8x128xf32>
      %85 = arith.maximumf %54, %84 : vector<8x128xf32>
      %c16 = arith.constant 16 : index
      %c0_31 = arith.constant 0 : index
      %86 = vector.load %arg18[%c16, %c0_31] : memref<64x384xf32, #tpu.memory_space<vmem>>, vector<8x384xf32>
      %87 = arith.truncf %83 : vector<8x128xf32> to vector<8x128xbf16>
      %cst_32 = arith.constant dense<0.000000e+00> : vector<8x384xf32>
      %88 = tpu.matmul %87, %11, %cst_32 {dimension_numbers = #tpu.dot_dimension_numbers<[1], [0], [0], [1], [0, 0, 1, 1], [], []>} : vector<8x128xbf16>, vector<128x384xbf16>, vector<8x384xf32> -> vector<8x384xf32>
      %89 = vector.extract_strided_slice %86 {offsets = [0, 0], sizes = [8, 128], strides = [1, 1]} : vector<8x384xf32> to vector<8x128xf32>
      %90 = vector.extract_strided_slice %88 {offsets = [0, 0], sizes = [8, 128], strides = [1, 1]} : vector<8x384xf32> to vector<8x128xf32>
      %91 = arith.addf %89, %90 : vector<8x128xf32>
      %92 = arith.negf %91 : vector<8x128xf32>
      %93 = math.exp %92 : vector<8x128xf32>
      %cst_33 = arith.constant 1.000000e+00 : f32
      %94 = vector.broadcast %cst_33 : f32 to vector<8x128xf32>
      %95 = arith.addf %94, %93 : vector<8x128xf32>
      %96 = arith.divf %94, %95 : vector<8x128xf32>
      %97 = vector.extract_strided_slice %86 {offsets = [0, 128], sizes = [8, 128], strides = [1, 1]} : vector<8x384xf32> to vector<8x128xf32>
      %98 = vector.extract_strided_slice %88 {offsets = [0, 128], sizes = [8, 128], strides = [1, 1]} : vector<8x384xf32> to vector<8x128xf32>
      %99 = arith.addf %97, %98 : vector<8x128xf32>
      %100 = arith.negf %99 : vector<8x128xf32>
      %101 = math.exp %100 : vector<8x128xf32>
      %cst_34 = arith.constant 1.000000e+00 : f32
      %102 = vector.broadcast %cst_34 : f32 to vector<8x128xf32>
      %103 = arith.addf %102, %101 : vector<8x128xf32>
      %104 = arith.divf %102, %103 : vector<8x128xf32>
      %105 = vector.extract_strided_slice %86 {offsets = [0, 256], sizes = [8, 128], strides = [1, 1]} : vector<8x384xf32> to vector<8x128xf32>
      %106 = vector.extract_strided_slice %88 {offsets = [0, 256], sizes = [8, 128], strides = [1, 1]} : vector<8x384xf32> to vector<8x128xf32>
      %107 = vector.broadcast %12 : vector<1x128xf32> to vector<8x128xf32>
      %108 = arith.addf %106, %107 : vector<8x128xf32>
      %109 = arith.mulf %96, %108 : vector<8x128xf32>
      %110 = arith.addf %105, %109 : vector<8x128xf32>
      %111 = math.tanh %110 : vector<8x128xf32>
      %112 = arith.subf %83, %111 : vector<8x128xf32>
      %113 = arith.mulf %104, %112 : vector<8x128xf32>
      %114 = arith.addf %111, %113 : vector<8x128xf32>
      %115 = math.tanh %114 : vector<8x128xf32>
      %116 = arith.maximumf %85, %115 : vector<8x128xf32>
      %c24 = arith.constant 24 : index
      %c0_35 = arith.constant 0 : index
      %117 = vector.load %arg18[%c24, %c0_35] : memref<64x384xf32, #tpu.memory_space<vmem>>, vector<8x384xf32>
      %118 = arith.truncf %114 : vector<8x128xf32> to vector<8x128xbf16>
      %cst_36 = arith.constant dense<0.000000e+00> : vector<8x384xf32>
      %119 = tpu.matmul %118, %11, %cst_36 {dimension_numbers = #tpu.dot_dimension_numbers<[1], [0], [0], [1], [0, 0, 1, 1], [], []>} : vector<8x128xbf16>, vector<128x384xbf16>, vector<8x384xf32> -> vector<8x384xf32>
      %120 = vector.extract_strided_slice %117 {offsets = [0, 0], sizes = [8, 128], strides = [1, 1]} : vector<8x384xf32> to vector<8x128xf32>
      %121 = vector.extract_strided_slice %119 {offsets = [0, 0], sizes = [8, 128], strides = [1, 1]} : vector<8x384xf32> to vector<8x128xf32>
      %122 = arith.addf %120, %121 : vector<8x128xf32>
      %123 = arith.negf %122 : vector<8x128xf32>
      %124 = math.exp %123 : vector<8x128xf32>
      %cst_37 = arith.constant 1.000000e+00 : f32
      %125 = vector.broadcast %cst_37 : f32 to vector<8x128xf32>
      %126 = arith.addf %125, %124 : vector<8x128xf32>
      %127 = arith.divf %125, %126 : vector<8x128xf32>
      %128 = vector.extract_strided_slice %117 {offsets = [0, 128], sizes = [8, 128], strides = [1, 1]} : vector<8x384xf32> to vector<8x128xf32>
      %129 = vector.extract_strided_slice %119 {offsets = [0, 128], sizes = [8, 128], strides = [1, 1]} : vector<8x384xf32> to vector<8x128xf32>
      %130 = arith.addf %128, %129 : vector<8x128xf32>
      %131 = arith.negf %130 : vector<8x128xf32>
      %132 = math.exp %131 : vector<8x128xf32>
      %cst_38 = arith.constant 1.000000e+00 : f32
      %133 = vector.broadcast %cst_38 : f32 to vector<8x128xf32>
      %134 = arith.addf %133, %132 : vector<8x128xf32>
      %135 = arith.divf %133, %134 : vector<8x128xf32>
      %136 = vector.extract_strided_slice %117 {offsets = [0, 256], sizes = [8, 128], strides = [1, 1]} : vector<8x384xf32> to vector<8x128xf32>
      %137 = vector.extract_strided_slice %119 {offsets = [0, 256], sizes = [8, 128], strides = [1, 1]} : vector<8x384xf32> to vector<8x128xf32>
      %138 = vector.broadcast %12 : vector<1x128xf32> to vector<8x128xf32>
      %139 = arith.addf %137, %138 : vector<8x128xf32>
      %140 = arith.mulf %127, %139 : vector<8x128xf32>
      %141 = arith.addf %136, %140 : vector<8x128xf32>
      %142 = math.tanh %141 : vector<8x128xf32>
      %143 = arith.subf %114, %142 : vector<8x128xf32>
      %144 = arith.mulf %135, %143 : vector<8x128xf32>
      %145 = arith.addf %142, %144 : vector<8x128xf32>
      %146 = math.tanh %145 : vector<8x128xf32>
      %147 = arith.maximumf %116, %146 : vector<8x128xf32>
      %c32 = arith.constant 32 : index
      %c0_39 = arith.constant 0 : index
      %148 = vector.load %arg18[%c32, %c0_39] : memref<64x384xf32, #tpu.memory_space<vmem>>, vector<8x384xf32>
      %149 = arith.truncf %145 : vector<8x128xf32> to vector<8x128xbf16>
      %cst_40 = arith.constant dense<0.000000e+00> : vector<8x384xf32>
      %150 = tpu.matmul %149, %11, %cst_40 {dimension_numbers = #tpu.dot_dimension_numbers<[1], [0], [0], [1], [0, 0, 1, 1], [], []>} : vector<8x128xbf16>, vector<128x384xbf16>, vector<8x384xf32> -> vector<8x384xf32>
      %151 = vector.extract_strided_slice %148 {offsets = [0, 0], sizes = [8, 128], strides = [1, 1]} : vector<8x384xf32> to vector<8x128xf32>
      %152 = vector.extract_strided_slice %150 {offsets = [0, 0], sizes = [8, 128], strides = [1, 1]} : vector<8x384xf32> to vector<8x128xf32>
      %153 = arith.addf %151, %152 : vector<8x128xf32>
      %154 = arith.negf %153 : vector<8x128xf32>
      %155 = math.exp %154 : vector<8x128xf32>
      %cst_41 = arith.constant 1.000000e+00 : f32
      %156 = vector.broadcast %cst_41 : f32 to vector<8x128xf32>
      %157 = arith.addf %156, %155 : vector<8x128xf32>
      %158 = arith.divf %156, %157 : vector<8x128xf32>
      %159 = vector.extract_strided_slice %148 {offsets = [0, 128], sizes = [8, 128], strides = [1, 1]} : vector<8x384xf32> to vector<8x128xf32>
      %160 = vector.extract_strided_slice %150 {offsets = [0, 128], sizes = [8, 128], strides = [1, 1]} : vector<8x384xf32> to vector<8x128xf32>
      %161 = arith.addf %159, %160 : vector<8x128xf32>
      %162 = arith.negf %161 : vector<8x128xf32>
      %163 = math.exp %162 : vector<8x128xf32>
      %cst_42 = arith.constant 1.000000e+00 : f32
      %164 = vector.broadcast %cst_42 : f32 to vector<8x128xf32>
      %165 = arith.addf %164, %163 : vector<8x128xf32>
      %166 = arith.divf %164, %165 : vector<8x128xf32>
      %167 = vector.extract_strided_slice %148 {offsets = [0, 256], sizes = [8, 128], strides = [1, 1]} : vector<8x384xf32> to vector<8x128xf32>
      %168 = vector.extract_strided_slice %150 {offsets = [0, 256], sizes = [8, 128], strides = [1, 1]} : vector<8x384xf32> to vector<8x128xf32>
      %169 = vector.broadcast %12 : vector<1x128xf32> to vector<8x128xf32>
      %170 = arith.addf %168, %169 : vector<8x128xf32>
      %171 = arith.mulf %158, %170 : vector<8x128xf32>
      %172 = arith.addf %167, %171 : vector<8x128xf32>
      %173 = math.tanh %172 : vector<8x128xf32>
      %174 = arith.subf %145, %173 : vector<8x128xf32>
      %175 = arith.mulf %166, %174 : vector<8x128xf32>
      %176 = arith.addf %173, %175 : vector<8x128xf32>
      %177 = math.tanh %176 : vector<8x128xf32>
      %178 = arith.maximumf %147, %177 : vector<8x128xf32>
      %c40 = arith.constant 40 : index
      %c0_43 = arith.constant 0 : index
      %179 = vector.load %arg18[%c40, %c0_43] : memref<64x384xf32, #tpu.memory_space<vmem>>, vector<8x384xf32>
      %180 = arith.truncf %176 : vector<8x128xf32> to vector<8x128xbf16>
      %cst_44 = arith.constant dense<0.000000e+00> : vector<8x384xf32>
      %181 = tpu.matmul %180, %11, %cst_44 {dimension_numbers = #tpu.dot_dimension_numbers<[1], [0], [0], [1], [0, 0, 1, 1], [], []>} : vector<8x128xbf16>, vector<128x384xbf16>, vector<8x384xf32> -> vector<8x384xf32>
      %182 = vector.extract_strided_slice %179 {offsets = [0, 0], sizes = [8, 128], strides = [1, 1]} : vector<8x384xf32> to vector<8x128xf32>
      %183 = vector.extract_strided_slice %181 {offsets = [0, 0], sizes = [8, 128], strides = [1, 1]} : vector<8x384xf32> to vector<8x128xf32>
      %184 = arith.addf %182, %183 : vector<8x128xf32>
      %185 = arith.negf %184 : vector<8x128xf32>
      %186 = math.exp %185 : vector<8x128xf32>
      %cst_45 = arith.constant 1.000000e+00 : f32
      %187 = vector.broadcast %cst_45 : f32 to vector<8x128xf32>
      %188 = arith.addf %187, %186 : vector<8x128xf32>
      %189 = arith.divf %187, %188 : vector<8x128xf32>
      %190 = vector.extract_strided_slice %179 {offsets = [0, 128], sizes = [8, 128], strides = [1, 1]} : vector<8x384xf32> to vector<8x128xf32>
      %191 = vector.extract_strided_slice %181 {offsets = [0, 128], sizes = [8, 128], strides = [1, 1]} : vector<8x384xf32> to vector<8x128xf32>
      %192 = arith.addf %190, %191 : vector<8x128xf32>
      %193 = arith.negf %192 : vector<8x128xf32>
      %194 = math.exp %193 : vector<8x128xf32>
      %cst_46 = arith.constant 1.000000e+00 : f32
      %195 = vector.broadcast %cst_46 : f32 to vector<8x128xf32>
      %196 = arith.addf %195, %194 : vector<8x128xf32>
      %197 = arith.divf %195, %196 : vector<8x128xf32>
      %198 = vector.extract_strided_slice %179 {offsets = [0, 256], sizes = [8, 128], strides = [1, 1]} : vector<8x384xf32> to vector<8x128xf32>
      %199 = vector.extract_strided_slice %181 {offsets = [0, 256], sizes = [8, 128], strides = [1, 1]} : vector<8x384xf32> to vector<8x128xf32>
      %200 = vector.broadcast %12 : vector<1x128xf32> to vector<8x128xf32>
      %201 = arith.addf %199, %200 : vector<8x128xf32>
      %202 = arith.mulf %189, %201 : vector<8x128xf32>
      %203 = arith.addf %198, %202 : vector<8x128xf32>
      %204 = math.tanh %203 : vector<8x128xf32>
      %205 = arith.subf %176, %204 : vector<8x128xf32>
      %206 = arith.mulf %197, %205 : vector<8x128xf32>
      %207 = arith.addf %204, %206 : vector<8x128xf32>
      %208 = math.tanh %207 : vector<8x128xf32>
      %209 = arith.maximumf %178, %208 : vector<8x128xf32>
      %c48 = arith.constant 48 : index
      %c0_47 = arith.constant 0 : index
      %210 = vector.load %arg18[%c48, %c0_47] : memref<64x384xf32, #tpu.memory_space<vmem>>, vector<8x384xf32>
      %211 = arith.truncf %207 : vector<8x128xf32> to vector<8x128xbf16>
      %cst_48 = arith.constant dense<0.000000e+00> : vector<8x384xf32>
      %212 = tpu.matmul %211, %11, %cst_48 {dimension_numbers = #tpu.dot_dimension_numbers<[1], [0], [0], [1], [0, 0, 1, 1], [], []>} : vector<8x128xbf16>, vector<128x384xbf16>, vector<8x384xf32> -> vector<8x384xf32>
      %213 = vector.extract_strided_slice %210 {offsets = [0, 0], sizes = [8, 128], strides = [1, 1]} : vector<8x384xf32> to vector<8x128xf32>
      %214 = vector.extract_strided_slice %212 {offsets = [0, 0], sizes = [8, 128], strides = [1, 1]} : vector<8x384xf32> to vector<8x128xf32>
      %215 = arith.addf %213, %214 : vector<8x128xf32>
      %216 = arith.negf %215 : vector<8x128xf32>
      %217 = math.exp %216 : vector<8x128xf32>
      %cst_49 = arith.constant 1.000000e+00 : f32
      %218 = vector.broadcast %cst_49 : f32 to vector<8x128xf32>
      %219 = arith.addf %218, %217 : vector<8x128xf32>
      %220 = arith.divf %218, %219 : vector<8x128xf32>
      %221 = vector.extract_strided_slice %210 {offsets = [0, 128], sizes = [8, 128], strides = [1, 1]} : vector<8x384xf32> to vector<8x128xf32>
      %222 = vector.extract_strided_slice %212 {offsets = [0, 128], sizes = [8, 128], strides = [1, 1]} : vector<8x384xf32> to vector<8x128xf32>
      %223 = arith.addf %221, %222 : vector<8x128xf32>
      %224 = arith.negf %223 : vector<8x128xf32>
      %225 = math.exp %224 : vector<8x128xf32>
      %cst_50 = arith.constant 1.000000e+00 : f32
      %226 = vector.broadcast %cst_50 : f32 to vector<8x128xf32>
      %227 = arith.addf %226, %225 : vector<8x128xf32>
      %228 = arith.divf %226, %227 : vector<8x128xf32>
      %229 = vector.extract_strided_slice %210 {offsets = [0, 256], sizes = [8, 128], strides = [1, 1]} : vector<8x384xf32> to vector<8x128xf32>
      %230 = vector.extract_strided_slice %212 {offsets = [0, 256], sizes = [8, 128], strides = [1, 1]} : vector<8x384xf32> to vector<8x128xf32>
      %231 = vector.broadcast %12 : vector<1x128xf32> to vector<8x128xf32>
      %232 = arith.addf %230, %231 : vector<8x128xf32>
      %233 = arith.mulf %220, %232 : vector<8x128xf32>
      %234 = arith.addf %229, %233 : vector<8x128xf32>
      %235 = math.tanh %234 : vector<8x128xf32>
      %236 = arith.subf %207, %235 : vector<8x128xf32>
      %237 = arith.mulf %228, %236 : vector<8x128xf32>
      %238 = arith.addf %235, %237 : vector<8x128xf32>
      %239 = math.tanh %238 : vector<8x128xf32>
      %240 = arith.maximumf %209, %239 : vector<8x128xf32>
      %c56 = arith.constant 56 : index
      %c0_51 = arith.constant 0 : index
      %241 = vector.load %arg18[%c56, %c0_51] : memref<64x384xf32, #tpu.memory_space<vmem>>, vector<8x384xf32>
      %242 = arith.truncf %238 : vector<8x128xf32> to vector<8x128xbf16>
      %cst_52 = arith.constant dense<0.000000e+00> : vector<8x384xf32>
      %243 = tpu.matmul %242, %11, %cst_52 {dimension_numbers = #tpu.dot_dimension_numbers<[1], [0], [0], [1], [0, 0, 1, 1], [], []>} : vector<8x128xbf16>, vector<128x384xbf16>, vector<8x384xf32> -> vector<8x384xf32>
      %244 = vector.extract_strided_slice %241 {offsets = [0, 0], sizes = [8, 128], strides = [1, 1]} : vector<8x384xf32> to vector<8x128xf32>
      %245 = vector.extract_strided_slice %243 {offsets = [0, 0], sizes = [8, 128], strides = [1, 1]} : vector<8x384xf32> to vector<8x128xf32>
      %246 = arith.addf %244, %245 : vector<8x128xf32>
      %247 = arith.negf %246 : vector<8x128xf32>
      %248 = math.exp %247 : vector<8x128xf32>
      %cst_53 = arith.constant 1.000000e+00 : f32
      %249 = vector.broadcast %cst_53 : f32 to vector<8x128xf32>
      %250 = arith.addf %249, %248 : vector<8x128xf32>
      %251 = arith.divf %249, %250 : vector<8x128xf32>
      %252 = vector.extract_strided_slice %241 {offsets = [0, 128], sizes = [8, 128], strides = [1, 1]} : vector<8x384xf32> to vector<8x128xf32>
      %253 = vector.extract_strided_slice %243 {offsets = [0, 128], sizes = [8, 128], strides = [1, 1]} : vector<8x384xf32> to vector<8x128xf32>
      %254 = arith.addf %252, %253 : vector<8x128xf32>
      %255 = arith.negf %254 : vector<8x128xf32>
      %256 = math.exp %255 : vector<8x128xf32>
      %cst_54 = arith.constant 1.000000e+00 : f32
      %257 = vector.broadcast %cst_54 : f32 to vector<8x128xf32>
      %258 = arith.addf %257, %256 : vector<8x128xf32>
      %259 = arith.divf %257, %258 : vector<8x128xf32>
      %260 = vector.extract_strided_slice %241 {offsets = [0, 256], sizes = [8, 128], strides = [1, 1]} : vector<8x384xf32> to vector<8x128xf32>
      %261 = vector.extract_strided_slice %243 {offsets = [0, 256], sizes = [8, 128], strides = [1, 1]} : vector<8x384xf32> to vector<8x128xf32>
      %262 = vector.broadcast %12 : vector<1x128xf32> to vector<8x128xf32>
      %263 = arith.addf %261, %262 : vector<8x128xf32>
      %264 = arith.mulf %251, %263 : vector<8x128xf32>
      %265 = arith.addf %260, %264 : vector<8x128xf32>
      %266 = math.tanh %265 : vector<8x128xf32>
      %267 = arith.subf %238, %266 : vector<8x128xf32>
      %268 = arith.mulf %259, %267 : vector<8x128xf32>
      %269 = arith.addf %266, %268 : vector<8x128xf32>
      %270 = math.tanh %269 : vector<8x128xf32>
      %271 = arith.maximumf %240, %270 : vector<8x128xf32>
      %c0_55 = arith.constant 0 : index
      %c0_56 = arith.constant 0 : index
      %272 = vector.load %arg16[%c0_55, %c0_56] : memref<8x128xf32, #tpu.memory_space<vmem>>, vector<8x128xf32>
      tpu.vector_store %arg16[%c0_55, %c0_56], %269 {strides = array<i32>} : memref<8x128xf32, #tpu.memory_space<vmem>>, vector<8x128xf32>,
      %c0_57 = arith.constant 0 : index
      %c0_58 = arith.constant 0 : index
      %273 = vector.load %arg17[%c0_57, %c0_58] : memref<8x128xf32, #tpu.memory_space<vmem>>, vector<8x128xf32>
      tpu.vector_store %arg17[%c0_57, %c0_58], %271 {strides = array<i32>} : memref<8x128xf32, #tpu.memory_space<vmem>>, vector<8x128xf32>,
    } else {
    }
    %c1_i32_14 = arith.constant 1 : i32
    %16 = arith.cmpi eq, %arg1, %c1_i32_14 : i32
    %17 = arith.extui %16 : i1 to i32
    %c0_i32_15 = arith.constant 0 : i32
    %18 = arith.cmpi ne, %17, %c0_i32_15 : i32
    scf.if %18 {
      %c0_18 = arith.constant 0 : index
      %c0_19 = arith.constant 0 : index
      %22 = vector.load %arg16[%c0_18, %c0_19] : memref<8x128xf32, #tpu.memory_space<vmem>>, vector<8x128xf32>
      %c0_20 = arith.constant 0 : index
      %c0_21 = arith.constant 0 : index
      %23 = vector.load %arg17[%c0_20, %c0_21] : memref<8x128xf32, #tpu.memory_space<vmem>>, vector<8x128xf32>
      %c0_22 = arith.constant 0 : index
      %c0_23 = arith.constant 0 : index
      %24 = vector.load %arg18[%c0_22, %c0_23] : memref<64x384xf32, #tpu.memory_space<vmem>>, vector<8x384xf32>
      %25 = arith.truncf %22 : vector<8x128xf32> to vector<8x128xbf16>
      %cst_24 = arith.constant dense<0.000000e+00> : vector<8x384xf32>
      %26 = tpu.matmul %25, %11, %cst_24 {dimension_numbers = #tpu.dot_dimension_numbers<[1], [0], [0], [1], [0, 0, 1, 1], [], []>} : vector<8x128xbf16>, vector<128x384xbf16>, vector<8x384xf32> -> vector<8x384xf32>
      %27 = vector.extract_strided_slice %24 {offsets = [0, 0], sizes = [8, 128], strides = [1, 1]} : vector<8x384xf32> to vector<8x128xf32>
      %28 = vector.extract_strided_slice %26 {offsets = [0, 0], sizes = [8, 128], strides = [1, 1]} : vector<8x384xf32> to vector<8x128xf32>
      %29 = arith.addf %27, %28 : vector<8x128xf32>
      %30 = arith.negf %29 : vector<8x128xf32>
      %31 = math.exp %30 : vector<8x128xf32>
      %cst_25 = arith.constant 1.000000e+00 : f32
      %32 = vector.broadcast %cst_25 : f32 to vector<8x128xf32>
      %33 = arith.addf %32, %31 : vector<8x128xf32>
      %34 = arith.divf %32, %33 : vector<8x128xf32>
      %35 = vector.extract_strided_slice %24 {offsets = [0, 128], sizes = [8, 128], strides = [1, 1]} : vector<8x384xf32> to vector<8x128xf32>
      %36 = vector.extract_strided_slice %26 {offsets = [0, 128], sizes = [8, 128], strides = [1, 1]} : vector<8x384xf32> to vector<8x128xf32>
      %37 = arith.addf %35, %36 : vector<8x128xf32>
      %38 = arith.negf %37 : vector<8x128xf32>
      %39 = math.exp %38 : vector<8x128xf32>
      %cst_26 = arith.constant 1.000000e+00 : f32
      %40 = vector.broadcast %cst_26 : f32 to vector<8x128xf32>
      %41 = arith.addf %40, %39 : vector<8x128xf32>
      %42 = arith.divf %40, %41 : vector<8x128xf32>
      %43 = vector.extract_strided_slice %24 {offsets = [0, 256], sizes = [8, 128], strides = [1, 1]} : vector<8x384xf32> to vector<8x128xf32>
      %44 = vector.extract_strided_slice %26 {offsets = [0, 256], sizes = [8, 128], strides = [1, 1]} : vector<8x384xf32> to vector<8x128xf32>
      %45 = vector.broadcast %12 : vector<1x128xf32> to vector<8x128xf32>
      %46 = arith.addf %44, %45 : vector<8x128xf32>
      %47 = arith.mulf %34, %46 : vector<8x128xf32>
      %48 = arith.addf %43, %47 : vector<8x128xf32>
      %49 = math.tanh %48 : vector<8x128xf32>
      %50 = arith.subf %22, %49 : vector<8x128xf32>
      %51 = arith.mulf %42, %50 : vector<8x128xf32>
      %52 = arith.addf %49, %51 : vector<8x128xf32>
      %53 = math.tanh %52 : vector<8x128xf32>
      %54 = arith.maximumf %23, %53 : vector<8x128xf32>
      %c8_i32 = arith.constant 8 : i32
      %55 = arith.muli %arg1, %c8_i32 : i32
      %c0_i32_27 = arith.constant 0 : i32
      %56 = arith.addi %55, %c0_i32_27 : i32
      %c12_i32 = arith.constant 12 : i32
      %57 = arith.cmpi slt, %56, %c12_i32 : i32
      %58 = arith.select %57, %52, %22 : vector<8x128xf32>
      %59 = arith.select %57, %54, %23 : vector<8x128xf32>
      %c8 = arith.constant 8 : index
      %c0_28 = arith.constant 0 : index
      %60 = vector.load %arg18[%c8, %c0_28] : memref<64x384xf32, #tpu.memory_space<vmem>>, vector<8x384xf32>
      %61 = arith.truncf %58 : vector<8x128xf32> to vector<8x128xbf16>
      %cst_29 = arith.constant dense<0.000000e+00> : vector<8x384xf32>
      %62 = tpu.matmul %61, %11, %cst_29 {dimension_numbers = #tpu.dot_dimension_numbers<[1], [0], [0], [1], [0, 0, 1, 1], [], []>} : vector<8x128xbf16>, vector<128x384xbf16>, vector<8x384xf32> -> vector<8x384xf32>
      %63 = vector.extract_strided_slice %60 {offsets = [0, 0], sizes = [8, 128], strides = [1, 1]} : vector<8x384xf32> to vector<8x128xf32>
      %64 = vector.extract_strided_slice %62 {offsets = [0, 0], sizes = [8, 128], strides = [1, 1]} : vector<8x384xf32> to vector<8x128xf32>
      %65 = arith.addf %63, %64 : vector<8x128xf32>
      %66 = arith.negf %65 : vector<8x128xf32>
      %67 = math.exp %66 : vector<8x128xf32>
      %cst_30 = arith.constant 1.000000e+00 : f32
      %68 = vector.broadcast %cst_30 : f32 to vector<8x128xf32>
      %69 = arith.addf %68, %67 : vector<8x128xf32>
      %70 = arith.divf %68, %69 : vector<8x128xf32>
      %71 = vector.extract_strided_slice %60 {offsets = [0, 128], sizes = [8, 128], strides = [1, 1]} : vector<8x384xf32> to vector<8x128xf32>
      %72 = vector.extract_strided_slice %62 {offsets = [0, 128], sizes = [8, 128], strides = [1, 1]} : vector<8x384xf32> to vector<8x128xf32>
      %73 = arith.addf %71, %72 : vector<8x128xf32>
      %74 = arith.negf %73 : vector<8x128xf32>
      %75 = math.exp %74 : vector<8x128xf32>
      %cst_31 = arith.constant 1.000000e+00 : f32
      %76 = vector.broadcast %cst_31 : f32 to vector<8x128xf32>
      %77 = arith.addf %76, %75 : vector<8x128xf32>
      %78 = arith.divf %76, %77 : vector<8x128xf32>
      %79 = vector.extract_strided_slice %60 {offsets = [0, 256], sizes = [8, 128], strides = [1, 1]} : vector<8x384xf32> to vector<8x128xf32>
      %80 = vector.extract_strided_slice %62 {offsets = [0, 256], sizes = [8, 128], strides = [1, 1]} : vector<8x384xf32> to vector<8x128xf32>
      %81 = vector.broadcast %12 : vector<1x128xf32> to vector<8x128xf32>
      %82 = arith.addf %80, %81 : vector<8x128xf32>
      %83 = arith.mulf %70, %82 : vector<8x128xf32>
      %84 = arith.addf %79, %83 : vector<8x128xf32>
      %85 = math.tanh %84 : vector<8x128xf32>
      %86 = arith.subf %58, %85 : vector<8x128xf32>
      %87 = arith.mulf %78, %86 : vector<8x128xf32>
      %88 = arith.addf %85, %87 : vector<8x128xf32>
      %89 = math.tanh %88 : vector<8x128xf32>
      %90 = arith.maximumf %59, %89 : vector<8x128xf32>
      %c8_i32_32 = arith.constant 8 : i32
      %91 = arith.muli %arg1, %c8_i32_32 : i32
      %c1_i32_33 = arith.constant 1 : i32
      %92 = arith.addi %91, %c1_i32_33 : i32
      %c12_i32_34 = arith.constant 12 : i32
      %93 = arith.cmpi slt, %92, %c12_i32_34 : i32
      %94 = arith.select %93, %88, %58 : vector<8x128xf32>
      %95 = arith.select %93, %90, %59 : vector<8x128xf32>
      %c16 = arith.constant 16 : index
      %c0_35 = arith.constant 0 : index
      %96 = vector.load %arg18[%c16, %c0_35] : memref<64x384xf32, #tpu.memory_space<vmem>>, vector<8x384xf32>
      %97 = arith.truncf %94 : vector<8x128xf32> to vector<8x128xbf16>
      %cst_36 = arith.constant dense<0.000000e+00> : vector<8x384xf32>
      %98 = tpu.matmul %97, %11, %cst_36 {dimension_numbers = #tpu.dot_dimension_numbers<[1], [0], [0], [1], [0, 0, 1, 1], [], []>} : vector<8x128xbf16>, vector<128x384xbf16>, vector<8x384xf32> -> vector<8x384xf32>
      %99 = vector.extract_strided_slice %96 {offsets = [0, 0], sizes = [8, 128], strides = [1, 1]} : vector<8x384xf32> to vector<8x128xf32>
      %100 = vector.extract_strided_slice %98 {offsets = [0, 0], sizes = [8, 128], strides = [1, 1]} : vector<8x384xf32> to vector<8x128xf32>
      %101 = arith.addf %99, %100 : vector<8x128xf32>
      %102 = arith.negf %101 : vector<8x128xf32>
      %103 = math.exp %102 : vector<8x128xf32>
      %cst_37 = arith.constant 1.000000e+00 : f32
      %104 = vector.broadcast %cst_37 : f32 to vector<8x128xf32>
      %105 = arith.addf %104, %103 : vector<8x128xf32>
      %106 = arith.divf %104, %105 : vector<8x128xf32>
      %107 = vector.extract_strided_slice %96 {offsets = [0, 128], sizes = [8, 128], strides = [1, 1]} : vector<8x384xf32> to vector<8x128xf32>
      %108 = vector.extract_strided_slice %98 {offsets = [0, 128], sizes = [8, 128], strides = [1, 1]} : vector<8x384xf32> to vector<8x128xf32>
      %109 = arith.addf %107, %108 : vector<8x128xf32>
      %110 = arith.negf %109 : vector<8x128xf32>
      %111 = math.exp %110 : vector<8x128xf32>
      %cst_38 = arith.constant 1.000000e+00 : f32
      %112 = vector.broadcast %cst_38 : f32 to vector<8x128xf32>
      %113 = arith.addf %112, %111 : vector<8x128xf32>
      %114 = arith.divf %112, %113 : vector<8x128xf32>
      %115 = vector.extract_strided_slice %96 {offsets = [0, 256], sizes = [8, 128], strides = [1, 1]} : vector<8x384xf32> to vector<8x128xf32>
      %116 = vector.extract_strided_slice %98 {offsets = [0, 256], sizes = [8, 128], strides = [1, 1]} : vector<8x384xf32> to vector<8x128xf32>
      %117 = vector.broadcast %12 : vector<1x128xf32> to vector<8x128xf32>
      %118 = arith.addf %116, %117 : vector<8x128xf32>
      %119 = arith.mulf %106, %118 : vector<8x128xf32>
      %120 = arith.addf %115, %119 : vector<8x128xf32>
      %121 = math.tanh %120 : vector<8x128xf32>
      %122 = arith.subf %94, %121 : vector<8x128xf32>
      %123 = arith.mulf %114, %122 : vector<8x128xf32>
      %124 = arith.addf %121, %123 : vector<8x128xf32>
      %125 = math.tanh %124 : vector<8x128xf32>
      %126 = arith.maximumf %95, %125 : vector<8x128xf32>
      %c8_i32_39 = arith.constant 8 : i32
      %127 = arith.muli %arg1, %c8_i32_39 : i32
      %c2_i32 = arith.constant 2 : i32
      %128 = arith.addi %127, %c2_i32 : i32
      %c12_i32_40 = arith.constant 12 : i32
      %129 = arith.cmpi slt, %128, %c12_i32_40 : i32
      %130 = arith.select %129, %124, %94 : vector<8x128xf32>
      %131 = arith.select %129, %126, %95 : vector<8x128xf32>
      %c24 = arith.constant 24 : index
      %c0_41 = arith.constant 0 : index
      %132 = vector.load %arg18[%c24, %c0_41] : memref<64x384xf32, #tpu.memory_space<vmem>>, vector<8x384xf32>
      %133 = arith.truncf %130 : vector<8x128xf32> to vector<8x128xbf16>
      %cst_42 = arith.constant dense<0.000000e+00> : vector<8x384xf32>
      %134 = tpu.matmul %133, %11, %cst_42 {dimension_numbers = #tpu.dot_dimension_numbers<[1], [0], [0], [1], [0, 0, 1, 1], [], []>} : vector<8x128xbf16>, vector<128x384xbf16>, vector<8x384xf32> -> vector<8x384xf32>
      %135 = vector.extract_strided_slice %132 {offsets = [0, 0], sizes = [8, 128], strides = [1, 1]} : vector<8x384xf32> to vector<8x128xf32>
      %136 = vector.extract_strided_slice %134 {offsets = [0, 0], sizes = [8, 128], strides = [1, 1]} : vector<8x384xf32> to vector<8x128xf32>
      %137 = arith.addf %135, %136 : vector<8x128xf32>
      %138 = arith.negf %137 : vector<8x128xf32>
      %139 = math.exp %138 : vector<8x128xf32>
      %cst_43 = arith.constant 1.000000e+00 : f32
      %140 = vector.broadcast %cst_43 : f32 to vector<8x128xf32>
      %141 = arith.addf %140, %139 : vector<8x128xf32>
      %142 = arith.divf %140, %141 : vector<8x128xf32>
      %143 = vector.extract_strided_slice %132 {offsets = [0, 128], sizes = [8, 128], strides = [1, 1]} : vector<8x384xf32> to vector<8x128xf32>
      %144 = vector.extract_strided_slice %134 {offsets = [0, 128], sizes = [8, 128], strides = [1, 1]} : vector<8x384xf32> to vector<8x128xf32>
      %145 = arith.addf %143, %144 : vector<8x128xf32>
      %146 = arith.negf %145 : vector<8x128xf32>
      %147 = math.exp %146 : vector<8x128xf32>
      %cst_44 = arith.constant 1.000000e+00 : f32
      %148 = vector.broadcast %cst_44 : f32 to vector<8x128xf32>
      %149 = arith.addf %148, %147 : vector<8x128xf32>
      %150 = arith.divf %148, %149 : vector<8x128xf32>
      %151 = vector.extract_strided_slice %132 {offsets = [0, 256], sizes = [8, 128], strides = [1, 1]} : vector<8x384xf32> to vector<8x128xf32>
      %152 = vector.extract_strided_slice %134 {offsets = [0, 256], sizes = [8, 128], strides = [1, 1]} : vector<8x384xf32> to vector<8x128xf32>
      %153 = vector.broadcast %12 : vector<1x128xf32> to vector<8x128xf32>
      %154 = arith.addf %152, %153 : vector<8x128xf32>
      %155 = arith.mulf %142, %154 : vector<8x128xf32>
      %156 = arith.addf %151, %155 : vector<8x128xf32>
      %157 = math.tanh %156 : vector<8x128xf32>
      %158 = arith.subf %130, %157 : vector<8x128xf32>
      %159 = arith.mulf %150, %158 : vector<8x128xf32>
      %160 = arith.addf %157, %159 : vector<8x128xf32>
      %161 = math.tanh %160 : vector<8x128xf32>
      %162 = arith.maximumf %131, %161 : vector<8x128xf32>
      %c8_i32_45 = arith.constant 8 : i32
      %163 = arith.muli %arg1, %c8_i32_45 : i32
      %c3_i32 = arith.constant 3 : i32
      %164 = arith.addi %163, %c3_i32 : i32
      %c12_i32_46 = arith.constant 12 : i32
      %165 = arith.cmpi slt, %164, %c12_i32_46 : i32
      %166 = arith.select %165, %160, %130 : vector<8x128xf32>
      %167 = arith.select %165, %162, %131 : vector<8x128xf32>
      %c32 = arith.constant 32 : index
      %c0_47 = arith.constant 0 : index
      %168 = vector.load %arg18[%c32, %c0_47] : memref<64x384xf32, #tpu.memory_space<vmem>>, vector<8x384xf32>
      %169 = arith.truncf %166 : vector<8x128xf32> to vector<8x128xbf16>
      %cst_48 = arith.constant dense<0.000000e+00> : vector<8x384xf32>
      %170 = tpu.matmul %169, %11, %cst_48 {dimension_numbers = #tpu.dot_dimension_numbers<[1], [0], [0], [1], [0, 0, 1, 1], [], []>} : vector<8x128xbf16>, vector<128x384xbf16>, vector<8x384xf32> -> vector<8x384xf32>
      %171 = vector.extract_strided_slice %168 {offsets = [0, 0], sizes = [8, 128], strides = [1, 1]} : vector<8x384xf32> to vector<8x128xf32>
      %172 = vector.extract_strided_slice %170 {offsets = [0, 0], sizes = [8, 128], strides = [1, 1]} : vector<8x384xf32> to vector<8x128xf32>
      %173 = arith.addf %171, %172 : vector<8x128xf32>
      %174 = arith.negf %173 : vector<8x128xf32>
      %175 = math.exp %174 : vector<8x128xf32>
      %cst_49 = arith.constant 1.000000e+00 : f32
      %176 = vector.broadcast %cst_49 : f32 to vector<8x128xf32>
      %177 = arith.addf %176, %175 : vector<8x128xf32>
      %178 = arith.divf %176, %177 : vector<8x128xf32>
      %179 = vector.extract_strided_slice %168 {offsets = [0, 128], sizes = [8, 128], strides = [1, 1]} : vector<8x384xf32> to vector<8x128xf32>
      %180 = vector.extract_strided_slice %170 {offsets = [0, 128], sizes = [8, 128], strides = [1, 1]} : vector<8x384xf32> to vector<8x128xf32>
      %181 = arith.addf %179, %180 : vector<8x128xf32>
      %182 = arith.negf %181 : vector<8x128xf32>
      %183 = math.exp %182 : vector<8x128xf32>
      %cst_50 = arith.constant 1.000000e+00 : f32
      %184 = vector.broadcast %cst_50 : f32 to vector<8x128xf32>
      %185 = arith.addf %184, %183 : vector<8x128xf32>
      %186 = arith.divf %184, %185 : vector<8x128xf32>
      %187 = vector.extract_strided_slice %168 {offsets = [0, 256], sizes = [8, 128], strides = [1, 1]} : vector<8x384xf32> to vector<8x128xf32>
      %188 = vector.extract_strided_slice %170 {offsets = [0, 256], sizes = [8, 128], strides = [1, 1]} : vector<8x384xf32> to vector<8x128xf32>
      %189 = vector.broadcast %12 : vector<1x128xf32> to vector<8x128xf32>
      %190 = arith.addf %188, %189 : vector<8x128xf32>
      %191 = arith.mulf %178, %190 : vector<8x128xf32>
      %192 = arith.addf %187, %191 : vector<8x128xf32>
      %193 = math.tanh %192 : vector<8x128xf32>
      %194 = arith.subf %166, %193 : vector<8x128xf32>
      %195 = arith.mulf %186, %194 : vector<8x128xf32>
      %196 = arith.addf %193, %195 : vector<8x128xf32>
      %197 = math.tanh %196 : vector<8x128xf32>
      %198 = arith.maximumf %167, %197 : vector<8x128xf32>
      %c8_i32_51 = arith.constant 8 : i32
      %199 = arith.muli %arg1, %c8_i32_51 : i32
      %c4_i32 = arith.constant 4 : i32
      %200 = arith.addi %199, %c4_i32 : i32
      %c12_i32_52 = arith.constant 12 : i32
      %201 = arith.cmpi slt, %200, %c12_i32_52 : i32
      %202 = arith.select %201, %196, %166 : vector<8x128xf32>
      %203 = arith.select %201, %198, %167 : vector<8x128xf32>
      %c40 = arith.constant 40 : index
      %c0_53 = arith.constant 0 : index
      %204 = vector.load %arg18[%c40, %c0_53] : memref<64x384xf32, #tpu.memory_space<vmem>>, vector<8x384xf32>
      %205 = arith.truncf %202 : vector<8x128xf32> to vector<8x128xbf16>
      %cst_54 = arith.constant dense<0.000000e+00> : vector<8x384xf32>
      %206 = tpu.matmul %205, %11, %cst_54 {dimension_numbers = #tpu.dot_dimension_numbers<[1], [0], [0], [1], [0, 0, 1, 1], [], []>} : vector<8x128xbf16>, vector<128x384xbf16>, vector<8x384xf32> -> vector<8x384xf32>
      %207 = vector.extract_strided_slice %204 {offsets = [0, 0], sizes = [8, 128], strides = [1, 1]} : vector<8x384xf32> to vector<8x128xf32>
      %208 = vector.extract_strided_slice %206 {offsets = [0, 0], sizes = [8, 128], strides = [1, 1]} : vector<8x384xf32> to vector<8x128xf32>
      %209 = arith.addf %207, %208 : vector<8x128xf32>
      %210 = arith.negf %209 : vector<8x128xf32>
      %211 = math.exp %210 : vector<8x128xf32>
      %cst_55 = arith.constant 1.000000e+00 : f32
      %212 = vector.broadcast %cst_55 : f32 to vector<8x128xf32>
      %213 = arith.addf %212, %211 : vector<8x128xf32>
      %214 = arith.divf %212, %213 : vector<8x128xf32>
      %215 = vector.extract_strided_slice %204 {offsets = [0, 128], sizes = [8, 128], strides = [1, 1]} : vector<8x384xf32> to vector<8x128xf32>
      %216 = vector.extract_strided_slice %206 {offsets = [0, 128], sizes = [8, 128], strides = [1, 1]} : vector<8x384xf32> to vector<8x128xf32>
      %217 = arith.addf %215, %216 : vector<8x128xf32>
      %218 = arith.negf %217 : vector<8x128xf32>
      %219 = math.exp %218 : vector<8x128xf32>
      %cst_56 = arith.constant 1.000000e+00 : f32
      %220 = vector.broadcast %cst_56 : f32 to vector<8x128xf32>
      %221 = arith.addf %220, %219 : vector<8x128xf32>
      %222 = arith.divf %220, %221 : vector<8x128xf32>
      %223 = vector.extract_strided_slice %204 {offsets = [0, 256], sizes = [8, 128], strides = [1, 1]} : vector<8x384xf32> to vector<8x128xf32>
      %224 = vector.extract_strided_slice %206 {offsets = [0, 256], sizes = [8, 128], strides = [1, 1]} : vector<8x384xf32> to vector<8x128xf32>
      %225 = vector.broadcast %12 : vector<1x128xf32> to vector<8x128xf32>
      %226 = arith.addf %224, %225 : vector<8x128xf32>
      %227 = arith.mulf %214, %226 : vector<8x128xf32>
      %228 = arith.addf %223, %227 : vector<8x128xf32>
      %229 = math.tanh %228 : vector<8x128xf32>
      %230 = arith.subf %202, %229 : vector<8x128xf32>
      %231 = arith.mulf %222, %230 : vector<8x128xf32>
      %232 = arith.addf %229, %231 : vector<8x128xf32>
      %233 = math.tanh %232 : vector<8x128xf32>
      %234 = arith.maximumf %203, %233 : vector<8x128xf32>
      %c8_i32_57 = arith.constant 8 : i32
      %235 = arith.muli %arg1, %c8_i32_57 : i32
      %c5_i32 = arith.constant 5 : i32
      %236 = arith.addi %235, %c5_i32 : i32
      %c12_i32_58 = arith.constant 12 : i32
      %237 = arith.cmpi slt, %236, %c12_i32_58 : i32
      %238 = arith.select %237, %232, %202 : vector<8x128xf32>
      %239 = arith.select %237, %234, %203 : vector<8x128xf32>
      %c48 = arith.constant 48 : index
      %c0_59 = arith.constant 0 : index
      %240 = vector.load %arg18[%c48, %c0_59] : memref<64x384xf32, #tpu.memory_space<vmem>>, vector<8x384xf32>
      %241 = arith.truncf %238 : vector<8x128xf32> to vector<8x128xbf16>
      %cst_60 = arith.constant dense<0.000000e+00> : vector<8x384xf32>
      %242 = tpu.matmul %241, %11, %cst_60 {dimension_numbers = #tpu.dot_dimension_numbers<[1], [0], [0], [1], [0, 0, 1, 1], [], []>} : vector<8x128xbf16>, vector<128x384xbf16>, vector<8x384xf32> -> vector<8x384xf32>
      %243 = vector.extract_strided_slice %240 {offsets = [0, 0], sizes = [8, 128], strides = [1, 1]} : vector<8x384xf32> to vector<8x128xf32>
      %244 = vector.extract_strided_slice %242 {offsets = [0, 0], sizes = [8, 128], strides = [1, 1]} : vector<8x384xf32> to vector<8x128xf32>
      %245 = arith.addf %243, %244 : vector<8x128xf32>
      %246 = arith.negf %245 : vector<8x128xf32>
      %247 = math.exp %246 : vector<8x128xf32>
      %cst_61 = arith.constant 1.000000e+00 : f32
      %248 = vector.broadcast %cst_61 : f32 to vector<8x128xf32>
      %249 = arith.addf %248, %247 : vector<8x128xf32>
      %250 = arith.divf %248, %249 : vector<8x128xf32>
      %251 = vector.extract_strided_slice %240 {offsets = [0, 128], sizes = [8, 128], strides = [1, 1]} : vector<8x384xf32> to vector<8x128xf32>
      %252 = vector.extract_strided_slice %242 {offsets = [0, 128], sizes = [8, 128], strides = [1, 1]} : vector<8x384xf32> to vector<8x128xf32>
      %253 = arith.addf %251, %252 : vector<8x128xf32>
      %254 = arith.negf %253 : vector<8x128xf32>
      %255 = math.exp %254 : vector<8x128xf32>
      %cst_62 = arith.constant 1.000000e+00 : f32
      %256 = vector.broadcast %cst_62 : f32 to vector<8x128xf32>
      %257 = arith.addf %256, %255 : vector<8x128xf32>
      %258 = arith.divf %256, %257 : vector<8x128xf32>
      %259 = vector.extract_strided_slice %240 {offsets = [0, 256], sizes = [8, 128], strides = [1, 1]} : vector<8x384xf32> to vector<8x128xf32>
      %260 = vector.extract_strided_slice %242 {offsets = [0, 256], sizes = [8, 128], strides = [1, 1]} : vector<8x384xf32> to vector<8x128xf32>
      %261 = vector.broadcast %12 : vector<1x128xf32> to vector<8x128xf32>
      %262 = arith.addf %260, %261 : vector<8x128xf32>
      %263 = arith.mulf %250, %262 : vector<8x128xf32>
      %264 = arith.addf %259, %263 : vector<8x128xf32>
      %265 = math.tanh %264 : vector<8x128xf32>
      %266 = arith.subf %238, %265 : vector<8x128xf32>
      %267 = arith.mulf %258, %266 : vector<8x128xf32>
      %268 = arith.addf %265, %267 : vector<8x128xf32>
      %269 = math.tanh %268 : vector<8x128xf32>
      %270 = arith.maximumf %239, %269 : vector<8x128xf32>
      %c8_i32_63 = arith.constant 8 : i32
      %271 = arith.muli %arg1, %c8_i32_63 : i32
      %c6_i32 = arith.constant 6 : i32
      %272 = arith.addi %271, %c6_i32 : i32
      %c12_i32_64 = arith.constant 12 : i32
      %273 = arith.cmpi slt, %272, %c12_i32_64 : i32
      %274 = arith.select %273, %268, %238 : vector<8x128xf32>
      %275 = arith.select %273, %270, %239 : vector<8x128xf32>
      %c56 = arith.constant 56 : index
      %c0_65 = arith.constant 0 : index
      %276 = vector.load %arg18[%c56, %c0_65] : memref<64x384xf32, #tpu.memory_space<vmem>>, vector<8x384xf32>
      %277 = arith.truncf %274 : vector<8x128xf32> to vector<8x128xbf16>
      %cst_66 = arith.constant dense<0.000000e+00> : vector<8x384xf32>
      %278 = tpu.matmul %277, %11, %cst_66 {dimension_numbers = #tpu.dot_dimension_numbers<[1], [0], [0], [1], [0, 0, 1, 1], [], []>} : vector<8x128xbf16>, vector<128x384xbf16>, vector<8x384xf32> -> vector<8x384xf32>
      %279 = vector.extract_strided_slice %276 {offsets = [0, 0], sizes = [8, 128], strides = [1, 1]} : vector<8x384xf32> to vector<8x128xf32>
      %280 = vector.extract_strided_slice %278 {offsets = [0, 0], sizes = [8, 128], strides = [1, 1]} : vector<8x384xf32> to vector<8x128xf32>
      %281 = arith.addf %279, %280 : vector<8x128xf32>
      %282 = arith.negf %281 : vector<8x128xf32>
      %283 = math.exp %282 : vector<8x128xf32>
      %cst_67 = arith.constant 1.000000e+00 : f32
      %284 = vector.broadcast %cst_67 : f32 to vector<8x128xf32>
      %285 = arith.addf %284, %283 : vector<8x128xf32>
      %286 = arith.divf %284, %285 : vector<8x128xf32>
      %287 = vector.extract_strided_slice %276 {offsets = [0, 128], sizes = [8, 128], strides = [1, 1]} : vector<8x384xf32> to vector<8x128xf32>
      %288 = vector.extract_strided_slice %278 {offsets = [0, 128], sizes = [8, 128], strides = [1, 1]} : vector<8x384xf32> to vector<8x128xf32>
      %289 = arith.addf %287, %288 : vector<8x128xf32>
      %290 = arith.negf %289 : vector<8x128xf32>
      %291 = math.exp %290 : vector<8x128xf32>
      %cst_68 = arith.constant 1.000000e+00 : f32
      %292 = vector.broadcast %cst_68 : f32 to vector<8x128xf32>
      %293 = arith.addf %292, %291 : vector<8x128xf32>
      %294 = arith.divf %292, %293 : vector<8x128xf32>
      %295 = vector.extract_strided_slice %276 {offsets = [0, 256], sizes = [8, 128], strides = [1, 1]} : vector<8x384xf32> to vector<8x128xf32>
      %296 = vector.extract_strided_slice %278 {offsets = [0, 256], sizes = [8, 128], strides = [1, 1]} : vector<8x384xf32> to vector<8x128xf32>
      %297 = vector.broadcast %12 : vector<1x128xf32> to vector<8x128xf32>
      %298 = arith.addf %296, %297 : vector<8x128xf32>
      %299 = arith.mulf %286, %298 : vector<8x128xf32>
      %300 = arith.addf %295, %299 : vector<8x128xf32>
      %301 = math.tanh %300 : vector<8x128xf32>
      %302 = arith.subf %274, %301 : vector<8x128xf32>
      %303 = arith.mulf %294, %302 : vector<8x128xf32>
      %304 = arith.addf %301, %303 : vector<8x128xf32>
      %305 = math.tanh %304 : vector<8x128xf32>
      %306 = arith.maximumf %275, %305 : vector<8x128xf32>
      %c8_i32_69 = arith.constant 8 : i32
      %307 = arith.muli %arg1, %c8_i32_69 : i32
      %c7_i32 = arith.constant 7 : i32
      %308 = arith.addi %307, %c7_i32 : i32
      %c12_i32_70 = arith.constant 12 : i32
      %309 = arith.cmpi slt, %308, %c12_i32_70 : i32
      %310 = arith.select %309, %304, %274 : vector<8x128xf32>
      %311 = arith.select %309, %306, %275 : vector<8x128xf32>
      %c0_71 = arith.constant 0 : index
      %c0_72 = arith.constant 0 : index
      %312 = vector.load %arg16[%c0_71, %c0_72] : memref<8x128xf32, #tpu.memory_space<vmem>>, vector<8x128xf32>
      tpu.vector_store %arg16[%c0_71, %c0_72], %310 {strides = array<i32>} : memref<8x128xf32, #tpu.memory_space<vmem>>, vector<8x128xf32>,
      %c0_73 = arith.constant 0 : index
      %c0_74 = arith.constant 0 : index
      %313 = vector.load %arg17[%c0_73, %c0_74] : memref<8x128xf32, #tpu.memory_space<vmem>>, vector<8x128xf32>
      tpu.vector_store %arg17[%c0_73, %c0_74], %311 {strides = array<i32>} : memref<8x128xf32, #tpu.memory_space<vmem>>, vector<8x128xf32>,
    } else {
    }
    %c1_i32_16 = arith.constant 1 : i32
    %19 = arith.cmpi eq, %arg1, %c1_i32_16 : i32
    %20 = arith.extui %19 : i1 to i32
    %c0_i32_17 = arith.constant 0 : i32
    %21 = arith.cmpi ne, %20, %c0_i32_17 : i32
    scf.if %21 {
      %c0_18 = arith.constant 0 : index
      %c0_19 = arith.constant 0 : index
      %22 = vector.load %arg17[%c0_18, %c0_19] : memref<8x128xf32, #tpu.memory_space<vmem>>, vector<8x128xf32>
      %c0_20 = arith.constant 0 : index
      %c0_21 = arith.constant 0 : index
      %23 = vector.load %arg7[%c0_20, %c0_21] : memref<128x128xf32, #tpu.memory_space<vmem>>, vector<128x128xf32>
      %cst_22 = arith.constant dense<0.000000e+00> : vector<8x128xf32>
      %24 = tpu.matmul %22, %23, %cst_22 {dimension_numbers = #tpu.dot_dimension_numbers<[1], [0], [0], [1], [0, 0, 1, 1], [], []>} : vector<8x128xf32>, vector<128x128xf32>, vector<8x128xf32> -> vector<8x128xf32>
      %c0_23 = arith.constant 0 : index
      %c0_24 = arith.constant 0 : index
      %25 = vector.load %arg8[%c0_23, %c0_24] : memref<1x128xf32, #tpu.memory_space<vmem>>, vector<1x128xf32>
      %26 = vector.broadcast %25 : vector<1x128xf32> to vector<8x128xf32>
      %27 = arith.addf %24, %26 : vector<8x128xf32>
      %c0_25 = arith.constant 0 : index
      %c0_26 = arith.constant 0 : index
      %28 = vector.load %arg9[%c0_25, %c0_26] : memref<8x24xf32, #tpu.memory_space<vmem>>, vector<8x24xf32>
      %c0_27 = arith.constant 0 : index
      %c0_28 = arith.constant 0 : index
      %29 = vector.load %arg10[%c0_27, %c0_28] : memref<128x24xf32, #tpu.memory_space<vmem>>, vector<128x24xf32>
      %30 = vector.shape_cast %28 : vector<8x24xf32> to vector<8x1x24xf32>
      %31 = vector.shape_cast %29 : vector<128x24xf32> to vector<1x128x24xf32>
      %32 = vector.broadcast %30 : vector<8x1x24xf32> to vector<8x128x24xf32>
      %33 = vector.broadcast %31 : vector<1x128x24xf32> to vector<8x128x24xf32>
      %34 = arith.mulf %32, %33 : vector<8x128x24xf32>
      %35 = vector.shape_cast %34 : vector<8x128x24xf32> to vector<1024x24xf32>
      %c0_29 = arith.constant 0 : index
      %c0_30 = arith.constant 0 : index
      %36 = vector.load %arg11[%c0_29, %c0_30] : memref<24x32xf32, #tpu.memory_space<vmem>>, vector<24x32xf32>
      %cst_31 = arith.constant dense<0.000000e+00> : vector<1024x32xf32>
      %37 = tpu.matmul %35, %36, %cst_31 {dimension_numbers = #tpu.dot_dimension_numbers<[1], [0], [0], [1], [0, 0, 1, 1], [], []>} : vector<1024x24xf32>, vector<24x32xf32>, vector<1024x32xf32> -> vector<1024x32xf32>
      %c0_32 = arith.constant 0 : index
      %c0_33 = arith.constant 0 : index
      %38 = vector.load %arg12[%c0_32, %c0_33] : memref<1x32xf32, #tpu.memory_space<vmem>>, vector<1x32xf32>
      %39 = vector.broadcast %38 : vector<1x32xf32> to vector<1024x32xf32>
      %40 = arith.addf %37, %39 : vector<1024x32xf32>
      %c0_34 = arith.constant 0 : index
      %c0_35 = arith.constant 0 : index
      %41 = vector.load %arg13[%c0_34, %c0_35] : memref<32x32xf32, #tpu.memory_space<vmem>>, vector<32x32xf32>
      %cst_36 = arith.constant dense<0.000000e+00> : vector<1024x32xf32>
      %42 = tpu.matmul %40, %41, %cst_36 {dimension_numbers = #tpu.dot_dimension_numbers<[1], [0], [0], [1], [0, 0, 1, 1], [], []>} : vector<1024x32xf32>, vector<32x32xf32>, vector<1024x32xf32> -> vector<1024x32xf32>
      %43 = arith.negf %42 : vector<1024x32xf32>
      %44 = math.exp %43 : vector<1024x32xf32>
      %cst_37 = arith.constant 1.000000e+00 : f32
      %45 = vector.broadcast %cst_37 : f32 to vector<1024x32xf32>
      %46 = arith.addf %45, %44 : vector<1024x32xf32>
      %47 = arith.divf %45, %46 : vector<1024x32xf32>
      %48 = arith.mulf %40, %47 : vector<1024x32xf32>
      %49 = vector.shape_cast %48 : vector<1024x32xf32> to vector<8x128x32xf32>
      %c0_38 = arith.constant 0 : index
      %c0_39 = arith.constant 0 : index
      %50 = vector.load %arg14[%c0_38, %c0_39] : memref<1x32xf32, #tpu.memory_space<vmem>>, vector<1x32xf32>
      %51 = vector.shape_cast %50 : vector<1x32xf32> to vector<1x1x32xf32>
      %52 = vector.broadcast %51 : vector<1x1x32xf32> to vector<8x128x32xf32>
      %53 = arith.mulf %49, %52 : vector<8x128x32xf32>
      %cst_40 = arith.constant dense<0.000000e+00> : vector<8x128xf32>
      %54 = vector.multi_reduction <add>, %53, %cst_40 [2] : vector<8x128x32xf32> to vector<8x128xf32>
      %55 = arith.addf %27, %54 : vector<8x128xf32>
      %56 = arith.negf %55 : vector<8x128xf32>
      %57 = math.exp %56 : vector<8x128xf32>
      %cst_41 = arith.constant 1.000000e+00 : f32
      %58 = vector.broadcast %cst_41 : f32 to vector<8x128xf32>
      %59 = arith.addf %58, %57 : vector<8x128xf32>
      %60 = arith.divf %58, %59 : vector<8x128xf32>
      %c0_42 = arith.constant 0 : index
      %c0_43 = arith.constant 0 : index
      %61 = vector.load %arg15[%c0_42, %c0_43] : memref<8x128xf32, #tpu.memory_space<vmem>>, vector<8x128xf32>
      tpu.vector_store %arg15[%c0_42, %c0_43], %60 {strides = array<i32>} : memref<8x128xf32, #tpu.memory_space<vmem>>, vector<8x128xf32>,
    } else {
    }
    return
  }
  func.func @transform_0(%arg0: i32, %arg1: i32) -> (i32, i32, i32) {
    %c0_i32 = arith.constant 0 : i32
    %c0_i32_0 = arith.constant 0 : i32
    return %arg0, %arg1, %c0_i32 : i32, i32, i32
  }
  func.func @transform_1(%arg0: i32, %arg1: i32) -> (i32, i32) {
    %c0_i32 = arith.constant 0 : i32
    %c0_i32_0 = arith.constant 0 : i32
    %c0_i32_1 = arith.constant 0 : i32
    return %c0_i32, %c0_i32_0 : i32, i32
  }
  func.func @transform_2(%arg0: i32, %arg1: i32) -> (i32, i32) {
    %c0_i32 = arith.constant 0 : i32
    %c0_i32_0 = arith.constant 0 : i32
    %c0_i32_1 = arith.constant 0 : i32
    return %c0_i32, %c0_i32_0 : i32, i32
  }
  func.func @transform_3(%arg0: i32, %arg1: i32) -> (i32, i32) {
    %c0_i32 = arith.constant 0 : i32
    %c0_i32_0 = arith.constant 0 : i32
    %c0_i32_1 = arith.constant 0 : i32
    return %c0_i32, %c0_i32_0 : i32, i32
  }
  func.func @transform_4(%arg0: i32, %arg1: i32) -> (i32, i32) {
    %c0_i32 = arith.constant 0 : i32
    %c0_i32_0 = arith.constant 0 : i32
    %c0_i32_1 = arith.constant 0 : i32
    return %c0_i32, %c0_i32_0 : i32, i32
  }
  func.func @transform_5(%arg0: i32, %arg1: i32) -> (i32, i32) {
    %c0_i32 = arith.constant 0 : i32
    %c0_i32_0 = arith.constant 0 : i32
    %c0_i32_1 = arith.constant 0 : i32
    return %c0_i32, %c0_i32_0 : i32, i32
  }
  func.func @transform_6(%arg0: i32, %arg1: i32) -> (i32, i32) {
    %c0_i32 = arith.constant 0 : i32
    %c0_i32_0 = arith.constant 0 : i32
    %c0_i32_1 = arith.constant 0 : i32
    return %c0_i32, %c0_i32_0 : i32, i32
  }
  func.func @transform_7(%arg0: i32, %arg1: i32) -> (i32, i32) {
    %c0_i32 = arith.constant 0 : i32
    %c0_i32_0 = arith.constant 0 : i32
    return %arg0, %c0_i32 : i32, i32
  }
  func.func @transform_8(%arg0: i32, %arg1: i32) -> (i32, i32) {
    %c0_i32 = arith.constant 0 : i32
    %c0_i32_0 = arith.constant 0 : i32
    %c0_i32_1 = arith.constant 0 : i32
    return %c0_i32, %c0_i32_0 : i32, i32
  }
  func.func @transform_9(%arg0: i32, %arg1: i32) -> (i32, i32) {
    %c0_i32 = arith.constant 0 : i32
    %c0_i32_0 = arith.constant 0 : i32
    %c0_i32_1 = arith.constant 0 : i32
    return %c0_i32, %c0_i32_0 : i32, i32
  }
  func.func @transform_10(%arg0: i32, %arg1: i32) -> (i32, i32) {
    %c0_i32 = arith.constant 0 : i32
    %c0_i32_0 = arith.constant 0 : i32
    %c0_i32_1 = arith.constant 0 : i32
    return %c0_i32, %c0_i32_0 : i32, i32
  }
  func.func @transform_11(%arg0: i32, %arg1: i32) -> (i32, i32) {
    %c0_i32 = arith.constant 0 : i32
    %c0_i32_0 = arith.constant 0 : i32
    %c0_i32_1 = arith.constant 0 : i32
    return %c0_i32, %c0_i32_0 : i32, i32
  }
  func.func @transform_12(%arg0: i32, %arg1: i32) -> (i32, i32) {
    %c0_i32 = arith.constant 0 : i32
    %c0_i32_0 = arith.constant 0 : i32
    %c0_i32_1 = arith.constant 0 : i32
    return %c0_i32, %c0_i32_0 : i32, i32
  }
  func.func @transform_13(%arg0: i32, %arg1: i32) -> (i32, i32) {
    %c0_i32 = arith.constant 0 : i32
    %c0_i32_0 = arith.constant 0 : i32
    return %arg0, %c0_i32 : i32, i32
  }
}

</mosaic_0001>

<llo_original>
// kernel: tpu_custom_call.1
$region0: #{tpu_custom_call.1}
  #allocation0 [shape = 'u32[]', space=smem, size = 0x4, offset = 0x4, fixed_abs, tag = 'smem constant byte address 0x4 - core index']
  #allocation1 [shape = 'u32[144,128]{1,0:T(1,128)}', space=vmem, size = 0x12000, scoped, tag = 'internal scratch']
  #allocation2 [shape = 'f32[8,128]{1,0:T(8,128)}', space=vmem, size = 0x1000, scoped, tag = 'scratch operand']
  #allocation3 [shape = 'f32[8,128]{1,0:T(8,128)}', space=vmem, size = 0x1000, scoped, tag = 'scratch operand']
  #allocation4 [shape = 'f32[64,384]{1,0:T(8,128)}', space=vmem, size = 0x18000, scoped, tag = 'scratch operand']
  %s0 = inlined_call_operand.hbm [shape: bf16[2,128,32], index: 0, kind: input, shape index: {}]
  %s1 = inlined_call_operand.hbm [shape: bf16[32,384], index: 1, kind: input, shape index: {}]
  %s2 = inlined_call_operand.hbm [shape: bf16[128,384], index: 2, kind: input, shape index: {}]
  %s3 = inlined_call_operand.hbm [shape: f32[1,384], index: 3, kind: input, shape index: {}]
  %s4 = inlined_call_operand.hbm [shape: f32[1,128], index: 4, kind: input, shape index: {}]
  %s5 = inlined_call_operand.hbm [shape: f32[128,128], index: 5, kind: input, shape index: {}]
  %s6 = inlined_call_operand.hbm [shape: f32[1,128], index: 6, kind: input, shape index: {}]
  %s7 = inlined_call_operand.hbm [shape: f32[16,24], index: 7, kind: input, shape index: {}]
  %s8 = inlined_call_operand.hbm [shape: f32[128,24], index: 8, kind: input, shape index: {}]
  %s9 = inlined_call_operand.hbm [shape: f32[24,32], index: 9, kind: input, shape index: {}]
  %s10 = inlined_call_operand.hbm [shape: f32[1,32], index: 10, kind: input, shape index: {}]
  %s11 = inlined_call_operand.hbm [shape: f32[32,32], index: 11, kind: input, shape index: {}]
  %s12 = inlined_call_operand.hbm [shape: f32[1,32], index: 12, kind: input, shape index: {}]
  %s13 = inlined_call_operand.hbm [shape: f32[16,128], index: 13, kind: output, shape index: {}]
  %s14 = sld [smem:[#allocation0]]
  $region149: #{tpu_custom_call.1} parent=0
    _
  %s16 = ssub.s32 1, %s14
  %s17 = scalar_select 0, %s16, %s14
  $region1: #{tpu_custom_call.1} parent=0
    #allocation5 [shape = 'u8[32768]{0}', space=vmem, size = 0x8000, scoped, tag = 'input window, operand 0']
    #allocation6 [shape = 's32[2]{0}', space=sflag, size = 0x8, scoped, tag = 'scoped memory for tpu_custom_call.1']
    #allocation7 [shape = 's32[2]{0}', space=sflag, size = 0x8, scoped, tag = 'scoped memory for tpu_custom_call.1']
    #allocation8 [shape = 'u8[24576]{0}', space=vmem, size = 0x6000, scoped, tag = 'input window, operand 1, single buffered']
    #allocation9 [shape = 's32[1]{0}', space=sflag, size = 0x4, scoped, tag = 'scoped memory for tpu_custom_call.1']
    #allocation10 [shape = 'u8[98304]{0}', space=vmem, size = 0x18000, scoped, tag = 'input window, operand 2, single buffered']
    #allocation11 [shape = 'u8[1536]{0}', space=vmem, size = 0x800, scoped, tag = 'input window, operand 3, single buffered']
    #allocation12 [shape = 's32[1]{0}', space=sflag, size = 0x4, scoped, tag = 'scoped memory for tpu_custom_call.1']
    #allocation13 [shape = 'u8[512]{0}', space=vmem, size = 0x400, scoped, tag = 'input window, operand 4, single buffered']
    #allocation14 [shape = 'u8[65536]{0}', space=vmem, size = 0x10000, scoped, tag = 'input window, operand 5, single buffered']
    #allocation15 [shape = 's32[1]{0}', space=sflag, size = 0x4, scoped, tag = 'scoped memory for tpu_custom_call.1']
    #allocation16 [shape = 'u8[512]{0}', space=vmem, size = 0x400, scoped, tag = 'input window, operand 6, single buffered']
    #allocation17 [shape = 'u8[8192]{0}', space=vmem, size = 0x2000, scoped, tag = 'input window, operand 7']
    #allocation18 [shape = 's32[2]{0}', space=sflag, size = 0x8, scoped, tag = 'scoped memory for tpu_custom_call.1']
    #allocation19 [shape = 'u8[65536]{0}', space=vmem, size = 0x10000, scoped, tag = 'input window, operand 8, single buffered']
    #allocation20 [shape = 'u8[12288]{0}', space=vmem, size = 0x3000, scoped, tag = 'input window, operand 9, single buffered']
    #allocation21 [shape = 's32[1]{0}', space=sflag, size = 0x4, scoped, tag = 'scoped memory for tpu_custom_call.1']
    #allocation22 [shape = 'u8[512]{0}', space=vmem, size = 0x400, scoped, tag = 'input window, operand 10, single buffered']
    #allocation23 [shape = 'u8[16384]{0}', space=vmem, size = 0x4000, scoped, tag = 'input window, operand 11, single buffered']
    #allocation24 [shape = 's32[1]{0}', space=sflag, size = 0x4, scoped, tag = 'scoped memory for tpu_custom_call.1']
    #allocation25 [shape = 'u8[512]{0}', space=vmem, size = 0x400, scoped, tag = 'input window, operand 12, single buffered']
    #allocation26 [shape = 'u8[8192]{0}', space=vmem, size = 0x2000, scoped, tag = 'output window, operand 0']
    %18 = vsyncpa [#allocation6], 0
    %s19 = scalar_lea.sflag [#allocation6], 1
    %20 = vsyncpa %s19, 0
    %21 = vsyncpa [#allocation9], 0
    %22 = vsyncpa [#allocation12], 0
    %23 = vsyncpa [#allocation15], 0
    %24 = vsyncpa [#allocation18], 0
    %s25 = scalar_lea.sflag [#allocation18], 1
    %26 = vsyncpa %s25, 0
    %27 = vsyncpa [#allocation21], 0
    %28 = vsyncpa [#allocation24], 0
    %29 = vsyncpa [#allocation7], 0
    %s30 = scalar_lea.sflag [#allocation7], 1
    %31 = vsyncpa %s30, 0
    loop: start=0, step=1, limit=6
    $region2: #{tpu_custom_call.1} parent=1 // loop_pre_header
      _
    $region3: #{tpu_custom_call.1} parent=1 // loop_header
      %s33 = sphi 0, %s37
      %p34 = scmp.ge.s32.totalorder %s33, 6
      %s40 = sphi 0, %s52
      %s41 = sphi 0, %s48
      %s42 = sphi 0, %s40
      %s43 = sphi 0, %s41
      %s44 = sphi 0, %s42
      %s45 = sphi 0, %s43
      %s57 = sphi 0, %s59
      %s60 = sphi 0, %s57
      %s61 = sphi 0, %s60
      %s77 = sphi 0, %s61
      %s81 = sphi 0, %s81
      %s83 = sphi 0, %s81
      %s84 = sphi 0, %s83
      %s98 = sphi 0, %s84
      %s102 = sphi 0, %s102
      %s104 = sphi 0, %s102
      %s105 = sphi 0, %s104
      %s119 = sphi 0, %s105
      %s123 = sphi 0, %s123
      %s125 = sphi 0, %s123
      %s126 = sphi 0, %s125
      %s140 = sphi 0, %s126
      %s144 = sphi 0, %s144
      %s146 = sphi 0, %s144
      %s147 = sphi 0, %s146
      %s161 = sphi 0, %s147
      %s165 = sphi 0, %s165
      %s167 = sphi 0, %s165
      %s168 = sphi 0, %s167
      %s182 = sphi 0, %s168
      %s186 = sphi 0, %s186
      %s188 = sphi 0, %s186
      %s189 = sphi 0, %s188
      %s203 = sphi 0, %s189
      %s209 = sphi 0, %s211
      %s212 = sphi 0, %s209
      %s213 = sphi 0, %s212
      %s229 = sphi 0, %s213
      %s233 = sphi 0, %s233
      %s235 = sphi 0, %s233
      %s236 = sphi 0, %s235
      %s250 = sphi 0, %s236
      %s254 = sphi 0, %s254
      %s256 = sphi 0, %s254
      %s257 = sphi 0, %s256
      %s271 = sphi 0, %s257
      %s275 = sphi 0, %s275
      %s277 = sphi 0, %s275
      %s278 = sphi 0, %s277
      %s292 = sphi 0, %s278
      %s296 = sphi 0, %s296
      %s298 = sphi 0, %s296
      %s299 = sphi 0, %s298
      %s313 = sphi 0, %s299
      %s317 = sphi 0, %s317
      %s319 = sphi 0, %s317
      %s320 = sphi 0, %s319
      %s334 = sphi 0, %s320
      %s340 = sphi 0, %s342
      %s343 = sphi 0, %s340
      %s344 = sphi 0, %s343
      %s360 = sphi 0, %s344
    $region4: #{tpu_custom_call.1} parent=1 // loop_header_branch
      %36 = sbr.rel (%p34) target = $region8
    $region5: #{tpu_custom_call.1} parent=1 // loop_body
      %s38 = ssub.s32 %s33, 1
      %s39 = ssub.s32 %s33, 2
      %s46 = sadd.s32 1, %s41
      %p47 = scmp.ge.s32.totalorder %s46, 2
      %s48 = scalar_select %p47, 0, %s46
      %s49 = sadd.s32 1, %s40
      %s50 = scalar_select %p47, %s49, %s40
      %p51 = scmp.ge.s32.totalorder %s50, 2
      %s52 = scalar_select %p51, 0, %s50
      %s53 = ssub.s32 %s40, %s52
      %s54 = ssub.s32 %s41, %s48
      %s55 = sor.u32 %s53, %s54
      %p56 = scmp.eq.s32.totalorder %s55, 0
      %s58 = sadd.s32 %s57, 1
      %s59 = scalar_select %p56, %s57, %s58
      %p62 = pneg %p56
      %p63 = scmp.eq.s32.totalorder %s33, 3
      %p64 = por %p62, %p63
      %p65 = scmp.ne.s32.totalorder %s57, %s60
      %p66 = scmp.eq.s32.totalorder %s33, 0
      %p67 = por %p65, %p66
      %p68 = scmp.ne.s32.totalorder %s57, %s60
      %p69 = scmp.eq.s32.totalorder %s38, 3
      %p70 = por %p68, %p69
      %p71 = scmp.ne.s32.totalorder %s60, %s61
      %p72 = scmp.eq.s32.totalorder %s38, 0
      %p73 = por %p71, %p72
      %p74 = scmp.ne.s32.totalorder %s60, %s61
      %p75 = scmp.eq.s32.totalorder %s39, 3
      %p76 = por %p74, %p75
      %p78 = scmp.ne.s32.totalorder %s61, %s77
      %p79 = scmp.eq.s32.totalorder %s39, 0
      %p80 = por %p78, %p79
      %s82 = sadd.s32 %s81, 1
      %p85 = scmp.eq.s32.totalorder %s33, 3
      %p86 = scmp.ne.s32.totalorder %s81, %s83
      %p87 = scmp.eq.s32.totalorder %s33, 0
      %p88 = por %p86, %p87
      %p89 = scmp.ne.s32.totalorder %s81, %s83
      %p90 = scmp.eq.s32.totalorder %s38, 3
      %p91 = por %p89, %p90
      %p92 = scmp.ne.s32.totalorder %s83, %s84
      %p93 = scmp.eq.s32.totalorder %s38, 0
      %p94 = por %p92, %p93
      %p95 = scmp.ne.s32.totalorder %s83, %s84
      %p96 = scmp.eq.s32.totalorder %s39, 3
      %p97 = por %p95, %p96
      %p99 = scmp.ne.s32.totalorder %s84, %s98
      %p100 = scmp.eq.s32.totalorder %s39, 0
      %p101 = por %p99, %p100
      %s103 = sadd.s32 %s102, 1
      %p106 = scmp.eq.s32.totalorder %s33, 3
      %p107 = scmp.ne.s32.totalorder %s102, %s104
      %p108 = scmp.eq.s32.totalorder %s33, 0
      %p109 = por %p107, %p108
      %p110 = scmp.ne.s32.totalorder %s102, %s104
      %p111 = scmp.eq.s32.totalorder %s38, 3
      %p112 = por %p110, %p111
      %p113 = scmp.ne.s32.totalorder %s104, %s105
      %p114 = scmp.eq.s32.totalorder %s38, 0
      %p115 = por %p113, %p114
      %p116 = scmp.ne.s32.totalorder %s104, %s105
      %p117 = scmp.eq.s32.totalorder %s39, 3
      %p118 = por %p116, %p117
      %p120 = scmp.ne.s32.totalorder %s105, %s119
      %p121 = scmp.eq.s32.totalorder %s39, 0
      %p122 = por %p120, %p121
      %s124 = sadd.s32 %s123, 1
      %p127 = scmp.eq.s32.totalorder %s33, 3
      %p128 = scmp.ne.s32.totalorder %s123, %s125
      %p129 = scmp.eq.s32.totalorder %s33, 0
      %p130 = por %p128, %p129
      %p131 = scmp.ne.s32.totalorder %s123, %s125
      %p132 = scmp.eq.s32.totalorder %s38, 3
      %p133 = por %p131, %p132
      %p134 = scmp.ne.s32.totalorder %s125, %s126
      %p135 = scmp.eq.s32.totalorder %s38, 0
      %p136 = por %p134, %p135
      %p137 = scmp.ne.s32.totalorder %s125, %s126
      %p138 = scmp.eq.s32.totalorder %s39, 3
      %p139 = por %p137, %p138
      %p141 = scmp.ne.s32.totalorder %s126, %s140
      %p142 = scmp.eq.s32.totalorder %s39, 0
      %p143 = por %p141, %p142
      %s145 = sadd.s32 %s144, 1
      %p148 = scmp.eq.s32.totalorder %s33, 3
      %p149 = scmp.ne.s32.totalorder %s144, %s146
      %p150 = scmp.eq.s32.totalorder %s33, 0
      %p151 = por %p149, %p150
      %p152 = scmp.ne.s32.totalorder %s144, %s146
      %p153 = scmp.eq.s32.totalorder %s38, 3
      %p154 = por %p152, %p153
      %p155 = scmp.ne.s32.totalorder %s146, %s147
      %p156 = scmp.eq.s32.totalorder %s38, 0
      %p157 = por %p155, %p156
      %p158 = scmp.ne.s32.totalorder %s146, %s147
      %p159 = scmp.eq.s32.totalorder %s39, 3
      %p160 = por %p158, %p159
      %p162 = scmp.ne.s32.totalorder %s147, %s161
      %p163 = scmp.eq.s32.totalorder %s39, 0
      %p164 = por %p162, %p163
      %s166 = sadd.s32 %s165, 1
      %p169 = scmp.eq.s32.totalorder %s33, 3
      %p170 = scmp.ne.s32.totalorder %s165, %s167
      %p171 = scmp.eq.s32.totalorder %s33, 0
      %p172 = por %p170, %p171
      %p173 = scmp.ne.s32.totalorder %s165, %s167
      %p174 = scmp.eq.s32.totalorder %s38, 3
      %p175 = por %p173, %p174
      %p176 = scmp.ne.s32.totalorder %s167, %s168
      %p177 = scmp.eq.s32.totalorder %s38, 0
      %p178 = por %p176, %p177
      %p179 = scmp.ne.s32.totalorder %s167, %s168
      %p180 = scmp.eq.s32.totalorder %s39, 3
      %p181 = por %p179, %p180
      %p183 = scmp.ne.s32.totalorder %s168, %s182
      %p184 = scmp.eq.s32.totalorder %s39, 0
      %p185 = por %p183, %p184
      %s187 = sadd.s32 %s186, 1
      %p190 = scmp.eq.s32.totalorder %s33, 3
      %p191 = scmp.ne.s32.totalorder %s186, %s188
      %p192 = scmp.eq.s32.totalorder %s33, 0
      %p193 = por %p191, %p192
      %p194 = scmp.ne.s32.totalorder %s186, %s188
      %p195 = scmp.eq.s32.totalorder %s38, 3
      %p196 = por %p194, %p195
      %p197 = scmp.ne.s32.totalorder %s188, %s189
      %p198 = scmp.eq.s32.totalorder %s38, 0
      %p199 = por %p197, %p198
      %p200 = scmp.ne.s32.totalorder %s188, %s189
      %p201 = scmp.eq.s32.totalorder %s39, 3
      %p202 = por %p200, %p201
      %p204 = scmp.ne.s32.totalorder %s189, %s203
      %p205 = scmp.eq.s32.totalorder %s39, 0
      %p206 = por %p204, %p205
      %s207 = ssub.s32 %s40, %s52
      %p208 = scmp.eq.s32.totalorder %s207, 0
      %s210 = sadd.s32 %s209, 1
      %s211 = scalar_select %p208, %s209, %s210
      %p214 = pneg %p208
      %p215 = scmp.eq.s32.totalorder %s33, 3
      %p216 = por %p214, %p215
      %p217 = scmp.ne.s32.totalorder %s209, %s212
      %p218 = scmp.eq.s32.totalorder %s33, 0
      %p219 = por %p217, %p218
      %p220 = scmp.ne.s32.totalorder %s209, %s212
      %p221 = scmp.eq.s32.totalorder %s38, 3
      %p222 = por %p220, %p221
      %p223 = scmp.ne.s32.totalorder %s212, %s213
      %p224 = scmp.eq.s32.totalorder %s38, 0
      %p225 = por %p223, %p224
      %p226 = scmp.ne.s32.totalorder %s212, %s213
      %p227 = scmp.eq.s32.totalorder %s39, 3
      %p228 = por %p226, %p227
      %p230 = scmp.ne.s32.totalorder %s213, %s229
      %p231 = scmp.eq.s32.totalorder %s39, 0
      %p232 = por %p230, %p231
      %s234 = sadd.s32 %s233, 1
      %p237 = scmp.eq.s32.totalorder %s33, 3
      %p238 = scmp.ne.s32.totalorder %s233, %s235
      %p239 = scmp.eq.s32.totalorder %s33, 0
      %p240 = por %p238, %p239
      %p241 = scmp.ne.s32.totalorder %s233, %s235
      %p242 = scmp.eq.s32.totalorder %s38, 3
      %p243 = por %p241, %p242
      %p244 = scmp.ne.s32.totalorder %s235, %s236
      %p245 = scmp.eq.s32.totalorder %s38, 0
      %p246 = por %p244, %p245
      %p247 = scmp.ne.s32.totalorder %s235, %s236
      %p248 = scmp.eq.s32.totalorder %s39, 3
      %p249 = por %p247, %p248
      %p251 = scmp.ne.s32.totalorder %s236, %s250
      %p252 = scmp.eq.s32.totalorder %s39, 0
      %p253 = por %p251, %p252
      %s255 = sadd.s32 %s254, 1
      %p258 = scmp.eq.s32.totalorder %s33, 3
      %p259 = scmp.ne.s32.totalorder %s254, %s256
      %p260 = scmp.eq.s32.totalorder %s33, 0
      %p261 = por %p259, %p260
      %p262 = scmp.ne.s32.totalorder %s254, %s256
      %p263 = scmp.eq.s32.totalorder %s38, 3
      %p264 = por %p262, %p263
      %p265 = scmp.ne.s32.totalorder %s256, %s257
      %p266 = scmp.eq.s32.totalorder %s38, 0
      %p267 = por %p265, %p266
      %p268 = scmp.ne.s32.totalorder %s256, %s257
      %p269 = scmp.eq.s32.totalorder %s39, 3
      %p270 = por %p268, %p269
      %p272 = scmp.ne.s32.totalorder %s257, %s271
      %p273 = scmp.eq.s32.totalorder %s39, 0
      %p274 = por %p272, %p273
      %s276 = sadd.s32 %s275, 1
      %p279 = scmp.eq.s32.totalorder %s33, 3
      %p280 = scmp.ne.s32.totalorder %s275, %s277
      %p281 = scmp.eq.s32.totalorder %s33, 0
      %p282 = por %p280, %p281
      %p283 = scmp.ne.s32.totalorder %s275, %s277
      %p284 = scmp.eq.s32.totalorder %s38, 3
      %p285 = por %p283, %p284
      %p286 = scmp.ne.s32.totalorder %s277, %s278
      %p287 = scmp.eq.s32.totalorder %s38, 0
      %p288 = por %p286, %p287
      %p289 = scmp.ne.s32.totalorder %s277, %s278
      %p290 = scmp.eq.s32.totalorder %s39, 3
      %p291 = por %p289, %p290
      %p293 = scmp.ne.s32.totalorder %s278, %s292
      %p294 = scmp.eq.s32.totalorder %s39, 0
      %p295 = por %p293, %p294
      %s297 = sadd.s32 %s296, 1
      %p300 = scmp.eq.s32.totalorder %s33, 3
      %p301 = scmp.ne.s32.totalorder %s296, %s298
      %p302 = scmp.eq.s32.totalorder %s33, 0
      %p303 = por %p301, %p302
      %p304 = scmp.ne.s32.totalorder %s296, %s298
      %p305 = scmp.eq.s32.totalorder %s38, 3
      %p306 = por %p304, %p305
      %p307 = scmp.ne.s32.totalorder %s298, %s299
      %p308 = scmp.eq.s32.totalorder %s38, 0
      %p309 = por %p307, %p308
      %p310 = scmp.ne.s32.totalorder %s298, %s299
      %p311 = scmp.eq.s32.totalorder %s39, 3
      %p312 = por %p310, %p311
      %p314 = scmp.ne.s32.totalorder %s299, %s313
      %p315 = scmp.eq.s32.totalorder %s39, 0
      %p316 = por %p314, %p315
      %s318 = sadd.s32 %s317, 1
      %p321 = scmp.eq.s32.totalorder %s33, 3
      %p322 = scmp.ne.s32.totalorder %s317, %s319
      %p323 = scmp.eq.s32.totalorder %s33, 0
      %p324 = por %p322, %p323
      %p325 = scmp.ne.s32.totalorder %s317, %s319
      %p326 = scmp.eq.s32.totalorder %s38, 3
      %p327 = por %p325, %p326
      %p328 = scmp.ne.s32.totalorder %s319, %s320
      %p329 = scmp.eq.s32.totalorder %s38, 0
      %p330 = por %p328, %p329
      %p331 = scmp.ne.s32.totalorder %s319, %s320
      %p332 = scmp.eq.s32.totalorder %s39, 3
      %p333 = por %p331, %p332
      %p335 = scmp.ne.s32.totalorder %s320, %s334
      %p336 = scmp.eq.s32.totalorder %s39, 0
      %p337 = por %p335, %p336
      %s338 = ssub.s32 %s40, %s52
      %p339 = scmp.eq.s32.totalorder %s338, 0
      %s341 = sadd.s32 %s340, 1
      %s342 = scalar_select %p339, %s340, %s341
      %p345 = pneg %p339
      %p346 = scmp.eq.s32.totalorder %s33, 3
      %p347 = por %p345, %p346
      %p348 = scmp.ne.s32.totalorder %s340, %s343
      %p349 = scmp.eq.s32.totalorder %s33, 0
      %p350 = por %p348, %p349
      %p351 = scmp.ne.s32.totalorder %s340, %s343
      %p352 = scmp.eq.s32.totalorder %s38, 3
      %p353 = por %p351, %p352
      %p354 = scmp.ne.s32.totalorder %s343, %s344
      %p355 = scmp.eq.s32.totalorder %s38, 0
      %p356 = por %p354, %p355
      %p357 = scmp.ne.s32.totalorder %s343, %s344
      %p358 = scmp.eq.s32.totalorder %s39, 3
      %p359 = por %p357, %p358
      %p361 = scmp.ne.s32.totalorder %s344, %s360
      %p362 = scmp.eq.s32.totalorder %s39, 0
      %p363 = por %p361, %p362
      %p364 = scmp.le.s32.totalorder 1, %s33
      %p365 = scmp.lt.s32.totalorder %s33, 5
      %p366 = pnand %p364, %p365
      %p367 = pneg %p366
      // Predicated region
      $region9: #{tpu_custom_call.1} parent=5 // pred_check
        _
      $region10: #{tpu_custom_call.1} parent=5 // pred_check_branch
        %369 = sbr.rel (%p366) target = $region12
      $region11: #{tpu_custom_call.1} parent=5 // pred_region
        %s370 = ssub.s32 %s33, 1
        // Predicated region
        $region13: #{tpu_custom_call.1} parent=11 // pred_check
          %p371 = pneg %p94
        $region14: #{tpu_custom_call.1} parent=11 // pred_check_branch
          %373 = sbr.rel (%p371) target = $region16
        $region15: #{tpu_custom_call.1} parent=11 // pred_region
          %s375 = ssub.s32 768, 768
          %376 = vsyncadd [#allocation9], %s375
          %s377 = sshll.u32 [#allocation8], 4
          %s378 = int_to_ptr.vmem [resolvable:$true] %s377
          %383 = dma.hbm_to_vmem [thread:$0]  %s1, 768, %s378, [#allocation9], 192, 192, 12
        $region16: #{tpu_custom_call.1} parent=11 // pred_fallthru
          _
        // Predicated region
        $region17: #{tpu_custom_call.1} parent=11 // pred_check
          %p384 = pneg %p115
        $region18: #{tpu_custom_call.1} parent=11 // pred_check_branch
          %386 = sbr.rel (%p384) target = $region20
        $region19: #{tpu_custom_call.1} parent=11 // pred_region
          %s388 = ssub.s32 3072, 3072
          %389 = vsyncadd [#allocation9], %s388
          %s390 = sshll.u32 [#allocation10], 4
          %s391 = int_to_ptr.vmem [resolvable:$true] %s390
          %396 = dma.hbm_to_vmem [thread:$0]  %s2, 3072, %s391, [#allocation9], 192, 192, 12
        $region20: #{tpu_custom_call.1} parent=11 // pred_fallthru
          _
        // Predicated region
        $region21: #{tpu_custom_call.1} parent=11 // pred_check
          %p397 = pneg %p136
        $region22: #{tpu_custom_call.1} parent=11 // pred_check_branch
          %399 = sbr.rel (%p397) target = $region24
        $region23: #{tpu_custom_call.1} parent=11 // pred_region
          %s401 = ssub.s32 48, 48
          %402 = vsyncadd [#allocation12], %s401
          %s404 = sshll.u32 [#allocation11], 4
          %s405 = int_to_ptr.vmem [resolvable:$true] %s404
          %407 = dma.hbm_to_vmem [thread:$0]  %s3, 48, %s405, [#allocation12]
        $region24: #{tpu_custom_call.1} parent=11 // pred_fallthru
          _
        // Predicated region
        $region25: #{tpu_custom_call.1} parent=11 // pred_check
          %p408 = pneg %p157
        $region26: #{tpu_custom_call.1} parent=11 // pred_check_branch
          %410 = sbr.rel (%p408) target = $region28
        $region27: #{tpu_custom_call.1} parent=11 // pred_region
          %s412 = ssub.s32 16, 16
          %413 = vsyncadd [#allocation12], %s412
          %s415 = sshll.u32 [#allocation13], 4
          %s416 = int_to_ptr.vmem [resolvable:$true] %s415
          %418 = dma.hbm_to_vmem [thread:$0]  %s4, 16, %s416, [#allocation12]
        $region28: #{tpu_custom_call.1} parent=11 // pred_fallthru
          _
        // Predicated region
        $region29: #{tpu_custom_call.1} parent=11 // pred_check
          %p419 = pneg %p178
        $region30: #{tpu_custom_call.1} parent=11 // pred_check_branch
          %421 = sbr.rel (%p419) target = $region32
        $region31: #{tpu_custom_call.1} parent=11 // pred_region
          %s423 = ssub.s32 2048, 2048
          %424 = vsyncadd [#allocation15], %s423
          %s425 = sshll.u32 [#allocation14], 4
          %s426 = int_to_ptr.vmem [resolvable:$true] %s425
          %431 = dma.hbm_to_vmem [thread:$0]  %s5, 2048, %s426, [#allocation15], 128, 128, 8
        $region32: #{tpu_custom_call.1} parent=11 // pred_fallthru
          _
        // Predicated region
        $region33: #{tpu_custom_call.1} parent=11 // pred_check
          %p432 = pneg %p199
        $region34: #{tpu_custom_call.1} parent=11 // pred_check_branch
          %434 = sbr.rel (%p432) target = $region36
        $region35: #{tpu_custom_call.1} parent=11 // pred_region
          %s436 = ssub.s32 16, 16
          %437 = vsyncadd [#allocation15], %s436
          %s439 = sshll.u32 [#allocation16], 4
          %s440 = int_to_ptr.vmem [resolvable:$true] %s439
          %442 = dma.hbm_to_vmem [thread:$0]  %s6, 16, %s440, [#allocation15]
        $region36: #{tpu_custom_call.1} parent=11 // pred_fallthru
          _
        // Predicated region
        $region37: #{tpu_custom_call.1} parent=11 // pred_check
          %p443 = pneg %p246
        $region38: #{tpu_custom_call.1} parent=11 // pred_check_branch
          %445 = sbr.rel (%p443) target = $region40
        $region39: #{tpu_custom_call.1} parent=11 // pred_region
          %s447 = ssub.s32 2048, 2048
          %448 = vsyncadd [#allocation18], %s447
          %s449 = sshll.u32 [#allocation19], 4
          %s450 = int_to_ptr.vmem [resolvable:$true] %s449
          %455 = dma.hbm_to_vmem [thread:$0]  %s8, 2048, %s450, [#allocation18], 128, 128, 8
        $region40: #{tpu_custom_call.1} parent=11 // pred_fallthru
          _
        // Predicated region
        $region41: #{tpu_custom_call.1} parent=11 // pred_check
          %p456 = pneg %p267
        $region42: #{tpu_custom_call.1} parent=11 // pred_check_branch
          %458 = sbr.rel (%p456) target = $region44
        $region43: #{tpu_custom_call.1} parent=11 // pred_region
          %s460 = ssub.s32 384, 384
          %461 = vsyncadd [#allocation21], %s460
          %s462 = sshll.u32 [#allocation20], 4
          %s463 = int_to_ptr.vmem [resolvable:$true] %s462
          %468 = dma.hbm_to_vmem [thread:$0]  %s9, 384, %s463, [#allocation21], 128, 128, 8
        $region44: #{tpu_custom_call.1} parent=11 // pred_fallthru
          _
        // Predicated region
        $region45: #{tpu_custom_call.1} parent=11 // pred_check
          %p469 = pneg %p288
        $region46: #{tpu_custom_call.1} parent=11 // pred_check_branch
          %471 = sbr.rel (%p469) target = $region48
        $region47: #{tpu_custom_call.1} parent=11 // pred_region
          %s473 = ssub.s32 16, 16
          %474 = vsyncadd [#allocation21], %s473
          %s476 = sshll.u32 [#allocation22], 4
          %s477 = int_to_ptr.vmem [resolvable:$true] %s476
          %479 = dma.hbm_to_vmem [thread:$0]  %s10, 16, %s477, [#allocation21]
        $region48: #{tpu_custom_call.1} parent=11 // pred_fallthru
          _
        // Predicated region
        $region49: #{tpu_custom_call.1} parent=11 // pred_check
          %p480 = pneg %p309
        $region50: #{tpu_custom_call.1} parent=11 // pred_check_branch
          %482 = sbr.rel (%p480) target = $region52
        $region51: #{tpu_custom_call.1} parent=11 // pred_region
          %s484 = ssub.s32 512, 512
          %485 = vsyncadd [#allocation24], %s484
          %s486 = sshll.u32 [#allocation23], 4
          %s487 = int_to_ptr.vmem [resolvable:$true] %s486
          %492 = dma.hbm_to_vmem [thread:$0]  %s11, 512, %s487, [#allocation24], 128, 128, 8
        $region52: #{tpu_custom_call.1} parent=11 // pred_fallthru
          _
        // Predicated region
        $region53: #{tpu_custom_call.1} parent=11 // pred_check
          %p493 = pneg %p330
        $region54: #{tpu_custom_call.1} parent=11 // pred_check_branch
          %495 = sbr.rel (%p493) target = $region56
        $region55: #{tpu_custom_call.1} parent=11 // pred_region
          %s497 = ssub.s32 16, 16
          %498 = vsyncadd [#allocation24], %s497
          %s500 = sshll.u32 [#allocation25], 4
          %s501 = int_to_ptr.vmem [resolvable:$true] %s500
          %503 = dma.hbm_to_vmem [thread:$0]  %s12, 16, %s501, [#allocation24]
        $region56: #{tpu_custom_call.1} parent=11 // pred_fallthru
          _
      $region12: #{tpu_custom_call.1} parent=5 // pred_fallthru
        _
      %p504 = scmp.lt.s32.totalorder %s33, 4
      // Predicated region
      $region57: #{tpu_custom_call.1} parent=5 // pred_check
        %p505 = pneg %p504
      $region58: #{tpu_custom_call.1} parent=5 // pred_check_branch
        %507 = sbr.rel (%p505) target = $region60
      $region59: #{tpu_custom_call.1} parent=5 // pred_region
        // Predicated region
        $region61: #{tpu_custom_call.1} parent=59 // pred_check
          %p508 = pneg %p67
        $region62: #{tpu_custom_call.1} parent=59 // pred_check_branch
          %510 = sbr.rel (%p508) target = $region64
        $region63: #{tpu_custom_call.1} parent=59 // pred_region
          %s511 = sand.u32 %s57, 1
          %s512 = scalar_lea.sflag [#allocation6], %s511
          %s513 = sand.u32 %s57, 1
          %s514 = smul.addr %s513, 32
          %s515 = scalar_lea.vmem [#allocation5], %s514
          %s516 = smul.u32 8, %s41
          %s518 = ssub.s32 512, 512
          %519 = vsyncadd %s512, %s518
          %s520 = smul.addr %s40, 16
          %s521 = sadd.s32 %s516, %s520
          %s522 = smul.addr %s521, 64
          %s523 = scalar_lea.hbm %s0, %s522
          %s524 = sshll.u32 %s515, 4
          %s525 = int_to_ptr.vmem [resolvable:$true] %s524
          %530 = dma.hbm_to_vmem [thread:$0]  %s523, 512, %s525, %s512, 64, 64, 4
        $region64: #{tpu_custom_call.1} parent=59 // pred_fallthru
          _
        // Predicated region
        $region65: #{tpu_custom_call.1} parent=59 // pred_check
          %p531 = pneg %p219
        $region66: #{tpu_custom_call.1} parent=59 // pred_check_branch
          %533 = sbr.rel (%p531) target = $region68
        $region67: #{tpu_custom_call.1} parent=59 // pred_region
          %s534 = sand.u32 %s33, 1
          %s535 = scalar_lea.sflag [#allocation18], %s534
          %s536 = sand.u32 %s209, 1
          %s537 = smul.addr %s536, 8
          %s538 = scalar_lea.vmem [#allocation17], %s537
          %s540 = ssub.s32 128, 128
          %541 = vsyncadd %s535, %s540
          %s542 = smul.addr %s40, 128
          %s543 = scalar_lea.hbm %s7, %s542
          %s545 = sshll.u32 %s538, 4
          %s546 = int_to_ptr.vmem [resolvable:$true] %s545
          %548 = dma.hbm_to_vmem [thread:$0]  %s543, 128, %s546, %s535
        $region68: #{tpu_custom_call.1} parent=59 // pred_fallthru
          _
      $region60: #{tpu_custom_call.1} parent=5 // pred_fallthru
        _
      %p549 = scmp.le.s32.totalorder 1, %s33
      %p550 = scmp.lt.s32.totalorder %s33, 5
      %p551 = pnand %p549, %p550
      %p552 = pneg %p551
      // Predicated region
      $region69: #{tpu_custom_call.1} parent=5 // pred_check
        _
      $region70: #{tpu_custom_call.1} parent=5 // pred_check_branch
        %554 = sbr.rel (%p551) target = $region72
      $region71: #{tpu_custom_call.1} parent=5 // pred_region
        %s555 = ssub.s32 %s33, 1
        %s556 = sand.u32 %s60, 1
        %s557 = scalar_lea.sflag [#allocation6], %s556
        %s558 = sand.u32 %s60, 1
        %s559 = smul.addr %s558, 32
        %s560 = scalar_lea.vmem [#allocation5], %s559
        // Predicated region
        $region73: #{tpu_custom_call.1} parent=71 // pred_check
          %p561 = pneg %p73
        $region74: #{tpu_custom_call.1} parent=71 // pred_check_branch
          %563 = sbr.rel (%p561) target = $region76
        $region75: #{tpu_custom_call.1} parent=71 // pred_region
          %564 = dma.done %s557, 512
        $region76: #{tpu_custom_call.1} parent=71 // pred_fallthru
          _
        // Predicated region
        $region77: #{tpu_custom_call.1} parent=71 // pred_check
          %p565 = pneg %p94
        $region78: #{tpu_custom_call.1} parent=71 // pred_check_branch
          %567 = sbr.rel (%p565) target = $region80
        $region79: #{tpu_custom_call.1} parent=71 // pred_region
          %568 = dma.done [#allocation9], 768
        $region80: #{tpu_custom_call.1} parent=71 // pred_fallthru
          _
        // Predicated region
        $region81: #{tpu_custom_call.1} parent=71 // pred_check
          %p569 = pneg %p115
        $region82: #{tpu_custom_call.1} parent=71 // pred_check_branch
          %571 = sbr.rel (%p569) target = $region84
        $region83: #{tpu_custom_call.1} parent=71 // pred_region
          %572 = dma.done [#allocation9], 3072
        $region84: #{tpu_custom_call.1} parent=71 // pred_fallthru
          _
        // Predicated region
        $region85: #{tpu_custom_call.1} parent=71 // pred_check
          %p573 = pneg %p136
        $region86: #{tpu_custom_call.1} parent=71 // pred_check_branch
          %575 = sbr.rel (%p573) target = $region88
        $region87: #{tpu_custom_call.1} parent=71 // pred_region
          %576 = dma.done [#allocation12], 48
        $region88: #{tpu_custom_call.1} parent=71 // pred_fallthru
          _
        // Predicated region
        $region89: #{tpu_custom_call.1} parent=71 // pred_check
          %p577 = pneg %p157
        $region90: #{tpu_custom_call.1} parent=71 // pred_check_branch
          %579 = sbr.rel (%p577) target = $region92
        $region91: #{tpu_custom_call.1} parent=71 // pred_region
          %580 = dma.done [#allocation12], 16
        $region92: #{tpu_custom_call.1} parent=71 // pred_fallthru
          _
        // Predicated region
        $region93: #{tpu_custom_call.1} parent=71 // pred_check
          %p581 = pneg %p178
        $region94: #{tpu_custom_call.1} parent=71 // pred_check_branch
          %583 = sbr.rel (%p581) target = $region96
        $region95: #{tpu_custom_call.1} parent=71 // pred_region
          %584 = dma.done [#allocation15], 2048
        $region96: #{tpu_custom_call.1} parent=71 // pred_fallthru
          _
        // Predicated region
        $region97: #{tpu_custom_call.1} parent=71 // pred_check
          %p585 = pneg %p199
        $region98: #{tpu_custom_call.1} parent=71 // pred_check_branch
          %587 = sbr.rel (%p585) target = $region100
        $region99: #{tpu_custom_call.1} parent=71 // pred_region
          %588 = dma.done [#allocation15], 16
        $region100: #{tpu_custom_call.1} parent=71 // pred_fallthru
          _
        %s589 = sand.u32 %s38, 1
        %s590 = scalar_lea.sflag [#allocation18], %s589
        %s591 = sand.u32 %s212, 1
        %s592 = smul.addr %s591, 8
        %s593 = scalar_lea.vmem [#allocation17], %s592
        // Predicated region
        $region101: #{tpu_custom_call.1} parent=71 // pred_check
          %p594 = pneg %p225
        $region102: #{tpu_custom_call.1} parent=71 // pred_check_branch
          %596 = sbr.rel (%p594) target = $region104
        $region103: #{tpu_custom_call.1} parent=71 // pred_region
          %597 = dma.done %s590, 128
        $region104: #{tpu_custom_call.1} parent=71 // pred_fallthru
          _
        // Predicated region
        $region105: #{tpu_custom_call.1} parent=71 // pred_check
          %p598 = pneg %p246
        $region106: #{tpu_custom_call.1} parent=71 // pred_check_branch
          %600 = sbr.rel (%p598) target = $region108
        $region107: #{tpu_custom_call.1} parent=71 // pred_region
          %601 = dma.done [#allocation18], 2048
        $region108: #{tpu_custom_call.1} parent=71 // pred_fallthru
          _
        // Predicated region
        $region109: #{tpu_custom_call.1} parent=71 // pred_check
          %p602 = pneg %p267
        $region110: #{tpu_custom_call.1} parent=71 // pred_check_branch
          %604 = sbr.rel (%p602) target = $region112
        $region111: #{tpu_custom_call.1} parent=71 // pred_region
          %605 = dma.done [#allocation21], 384
        $region112: #{tpu_custom_call.1} parent=71 // pred_fallthru
          _
        // Predicated region
        $region113: #{tpu_custom_call.1} parent=71 // pred_check
          %p606 = pneg %p288
        $region114: #{tpu_custom_call.1} parent=71 // pred_check_branch
          %608 = sbr.rel (%p606) target = $region116
        $region115: #{tpu_custom_call.1} parent=71 // pred_region
          %609 = dma.done [#allocation21], 16
        $region116: #{tpu_custom_call.1} parent=71 // pred_fallthru
          _
        // Predicated region
        $region117: #{tpu_custom_call.1} parent=71 // pred_check
          %p610 = pneg %p309
        $region118: #{tpu_custom_call.1} parent=71 // pred_check_branch
          %612 = sbr.rel (%p610) target = $region120
        $region119: #{tpu_custom_call.1} parent=71 // pred_region
          %613 = dma.done [#allocation24], 512
        $region120: #{tpu_custom_call.1} parent=71 // pred_fallthru
          _
        // Predicated region
        $region121: #{tpu_custom_call.1} parent=71 // pred_check
          %p614 = pneg %p330
        $region122: #{tpu_custom_call.1} parent=71 // pred_check_branch
          %616 = sbr.rel (%p614) target = $region124
        $region123: #{tpu_custom_call.1} parent=71 // pred_region
          %617 = dma.done [#allocation24], 16
        $region124: #{tpu_custom_call.1} parent=71 // pred_fallthru
          _
        %s618 = sand.u32 %s60, 1
        %s619 = scalar_lea.sflag [#allocation6], %s618
        %s620 = sand.u32 %s60, 1
        %s621 = smul.addr %s620, 32
        %s622 = scalar_lea.vmem [#allocation5], %s621
        %p623 = pneg %p73
        %p624 = pneg %p70
        %p625 = pneg %p94
        %p626 = pneg %p91
        %p627 = pneg %p115
        %p628 = pneg %p112
        %p629 = pneg %p136
        %p630 = pneg %p133
        %p631 = pneg %p157
        %p632 = pneg %p154
        %p633 = pneg %p178
        %p634 = pneg %p175
        %p635 = pneg %p199
        %p636 = pneg %p196
        %s637 = sand.u32 %s38, 1
        %s638 = scalar_lea.sflag [#allocation18], %s637
        %s639 = sand.u32 %s212, 1
        %s640 = smul.addr %s639, 8
        %s641 = scalar_lea.vmem [#allocation17], %s640
        %p642 = pneg %p225
        %p643 = pneg %p222
        %p644 = pneg %p246
        %p645 = pneg %p243
        %p646 = pneg %p267
        %p647 = pneg %p264
        %p648 = pneg %p288
        %p649 = pneg %p285
        %p650 = pneg %p309
        %p651 = pneg %p306
        %p652 = pneg %p330
        %p653 = pneg %p327
        %p654 = pneg %p356
        %p655 = pneg %p353
        %s656 = sand.u32 %s343, 1
        %s657 = scalar_lea.sflag [#allocation7], %s656
        %s658 = sand.u32 %s343, 1
        %s659 = smul.addr %s658, 8
        %s660 = scalar_lea.vmem [#allocation26], %s659
        %s661 = smul.u32 8, %s43
        %p663 = scmp.eq.s32.totalorder %s43, 0
        // Predicated region
        $region125: #{tpu_custom_call.1} parent=71 // pred_check
          %p664 = pneg %p663
        $region126: #{tpu_custom_call.1} parent=71 // pred_check_branch
          %666 = sbr.rel (%p664) target = $region128
        $region127: #{tpu_custom_call.1} parent=71 // pred_region
          %667 = vst [vmem:[#allocation2] sm:$0xff] 0.0
          %668 = vst [vmem:[#allocation3] sm:$0xff] -1.0
        $region128: #{tpu_custom_call.1} parent=71 // pred_fallthru
          _
        %v669 = vld [vmem:[%s560] sm:$0xf]
        %v670 = vld [vmem:[%s560 + $0x4] sm:$0xf]
        %v671 = vld [vmem:[%s560 + $0x8] sm:$0xf]
        %v672 = vld [vmem:[%s560 + $0xc] sm:$0xf]
        %v673 = vld [vmem:[%s560 + $0x10] sm:$0xf]
        %v674 = vld [vmem:[%s560 + $0x14] sm:$0xf]
        %v675 = vld [vmem:[%s560 + $0x18] sm:$0xf]
        %v676 = vld [vmem:[%s560 + $0x1c] sm:$0xf]
        %v677 = vld [vmem:[#allocation8] sm:$0xff]
        %v678 = vld [vmem:[#allocation8 + $0x8] sm:$0xf]
        %v679 = vld [vmem:[#allocation8 + $0xc] sm:$0xff]
        %v680 = vld [vmem:[#allocation8 + $0x14] sm:$0xf]
        %v681 = vld [vmem:[#allocation8 + $0x18] sm:$0xff]
        %v682 = vld [vmem:[#allocation8 + $0x20] sm:$0xf]
        %v683 = vld [vmem:[#allocation8 + $0x24] sm:$0xff]
        %v684 = vld [vmem:[#allocation8 + $0x2c] sm:$0xf]
        %v685 = vld [vmem:[#allocation11] sm:$0x7]
        %v687 = vlaneseq
        %v688 = vshrl.u32 %v687, 7
        %v689 = vsub.s32 0, %v688
        %v690 = vrot.slane %v685, %v689
        %v691 = vlaneseq
        %v692 = vshrl.u32 %v691, 7
        %v693 = vsub.s32 1, %v692
        %v694 = vrot.slane %v685, %v693
        %v695 = vlaneseq
        %v696 = vshrl.u32 %v695, 7
        %v697 = vsub.s32 2, %v696
        %v698 = vrot.slane %v685, %v697
        %v710 = vunpack.c.l.b16 %v669
        %v711 = vunpack.c.l.b16 %v670
        %v712 = vunpack.c.l.b16 %v671
        %v713 = vunpack.c.l.b16 %v672
        %v714 = vunpack.c.l.b16 %v673
        %v715 = vunpack.c.l.b16 %v674
        %v716 = vunpack.c.l.b16 %v675
        %v717 = vunpack.c.l.b16 %v676
        %v718 = vpack.c.b16 %v711, %v710
        %v719 = vpack.c.b16 %v713, %v712
        %v720 = vpack.c.b16 %v715, %v714
        %v721 = vpack.c.b16 %v717, %v716
        %v730 = vunpack.c.l.b16 %v677
        %v731 = vunpack.c.h.b16 %v677
        %v732 = vunpack.c.l.b16 %v678
        %v733 = vunpack.c.l.b16 %v679
        %v734 = vunpack.c.h.b16 %v679
        %v735 = vunpack.c.l.b16 %v680
        %v736 = vunpack.c.l.b16 %v681
        %v737 = vunpack.c.h.b16 %v681
        %v738 = vunpack.c.l.b16 %v682
        %v739 = vunpack.c.l.b16 %v683
        %v740 = vunpack.c.h.b16 %v683
        %v741 = vunpack.c.l.b16 %v684
        %v742 = vpack.c.b16 %v733, %v730
        %v743 = vpack.c.b16 %v734, %v731
        %v744 = vpack.c.b16 %v735, %v732
        %v745 = vpack.c.b16 %v739, %v736
        %v746 = vpack.c.b16 %v740, %v737
        %v747 = vpack.c.b16 %v741, %v738
        %vm754 = vcmask 261120
        %v756 = vsel %vm754, %v718, 0
        %v759 = vsel %vm754, %v719, 0
        %v762 = vsel %vm754, %v720, 0
        %v765 = vsel %vm754, %v721, 0
        %767 = vmatprep.subr.bf16.mxu0 %v743
        %768 = vmatpush1.bf16.msra.mxu0 %v742
        %769 = vmatprep.subr.bf16.mxu0 %v746
        %770 = vmatpush1.bf16.msra.mxu0 %v745
        %771 = vmatprep.subr.bf16.mxu0 0
        %772 = vmatpush1.bf16.msra.mxu0 0
        %773 = vmatprep.subr.bf16.mxu0 0
        %774 = vmatpush1.bf16.msra.mxu0 0
        %775 = vmatprep.subr.bf16.mxu0 0
        %776 = vmatpush1.bf16.msra.mxu0 0
        %777 = vmatprep.subr.bf16.mxu0 0
        %778 = vmatpush1.bf16.msra.mxu0 0
        %779 = vmatprep.subr.bf16.mxu0 0
        %780 = vmatpush1.bf16.msra.mxu0 0
        %781 = vmatprep.subr.bf16.mxu0 0
        %782 = vmatpush1.bf16.msra.mxu0 0
        %783 = vmatprep.subr.bf16.mxu0 0
        %784 = vmatpush1.bf16.msra.mxu0 0
        %785 = vmatprep.subr.bf16.mxu0 0
        %786 = vmatpush1.bf16.msra.mxu0 0
        %787 = vmatprep.subr.bf16.mxu0 0
        %788 = vmatpush1.bf16.msra.mxu0 0
        %789 = vmatprep.subr.bf16.mxu0 0
        %790 = vmatpush1.bf16.msra.mxu0 0
        %791 = vmatprep.subr.bf16.mxu0 0
        %792 = vmatpush1.bf16.msra.mxu0 0
        %793 = vmatprep.subr.bf16.mxu0 0
        %794 = vmatpush1.bf16.msra.mxu0 0
        %795 = vmatprep.subr.bf16.mxu0 0
        %796 = vmatpush1.bf16.msra.mxu0 0
        %797 = vmatprep.subr.bf16.mxu0 0
        %798 = vmatpush1.bf16.msra.mxu0 0
        %799 = vmatprep.mubr.bf16.mxu0 0
        %800 = vmatmul.mubr.bf16.gmra.mrb[0].mxu0 %v756
        %v801 = vpop.f32.mrb[0].mxu0
        %v802 = vadd.f32 %v690, %v801
        %v803 = vpop.f32.mrb[0].mxu0
        %v804 = vadd.f32 %v694, %v803
        %v805 = vpop.f32.mrb[0].mxu0
        %v806 = vadd.f32 %v690, %v805
        %v807 = vpop.f32.mrb[0].mxu0
        %v808 = vadd.f32 %v694, %v807
        %809 = vmatprep.mubr.bf16.mxu0 0
        %810 = vmatmul.mubr.bf16.gmra.mrb[0].mxu0 %v759
        %v811 = vpop.f32.mrb[0].mxu0
        %v812 = vadd.f32 %v690, %v811
        %v813 = vpop.f32.mrb[0].mxu0
        %v814 = vadd.f32 %v694, %v813
        %v815 = vpop.f32.mrb[0].mxu0
        %v816 = vadd.f32 %v690, %v815
        %v817 = vpop.f32.mrb[0].mxu0
        %v818 = vadd.f32 %v694, %v817
        %819 = vmatprep.mubr.bf16.mxu0 0
        %820 = vmatmul.mubr.bf16.gmra.mrb[0].mxu0 %v762
        %v821 = vpop.f32.mrb[0].mxu0
        %v822 = vadd.f32 %v690, %v821
        %v823 = vpop.f32.mrb[0].mxu0
        %v824 = vadd.f32 %v694, %v823
        %v825 = vpop.f32.mrb[0].mxu0
        %v826 = vadd.f32 %v690, %v825
        %v827 = vpop.f32.mrb[0].mxu0
        %v828 = vadd.f32 %v694, %v827
        %829 = vmatprep.mubr.bf16.mxu0 0
        %830 = vmatmul.mubr.bf16.gmra.mrb[0].mxu0 %v765
        %v831 = vpop.f32.mrb[0].mxu0
        %v832 = vadd.f32 %v690, %v831
        %v833 = vpop.f32.mrb[0].mxu0
        %v834 = vadd.f32 %v694, %v833
        %v835 = vpop.f32.mrb[0].mxu0
        %v836 = vadd.f32 %v690, %v835
        %v837 = vpop.f32.mrb[0].mxu0
        %v838 = vadd.f32 %v694, %v837
        %839 = vdwg.mxu0
        %840 = vmatprep.subr.bf16.mxu0 0
        %841 = vmatpush1.bf16.msra.mxu0 %v744
        %842 = vmatprep.subr.bf16.mxu0 0
        %843 = vmatpush1.bf16.msra.mxu0 %v747
        %844 = vmatprep.subr.bf16.mxu0 0
        %845 = vmatpush1.bf16.msra.mxu0 0
        %846 = vmatprep.subr.bf16.mxu0 0
        %847 = vmatpush1.bf16.msra.mxu0 0
        %848 = vmatprep.subr.bf16.mxu0 0
        %849 = vmatpush1.bf16.msra.mxu0 0
        %850 = vmatprep.subr.bf16.mxu0 0
        %851 = vmatpush1.bf16.msra.mxu0 0
        %852 = vmatprep.subr.bf16.mxu0 0
        %853 = vmatpush1.bf16.msra.mxu0 0
        %854 = vmatprep.subr.bf16.mxu0 0
        %855 = vmatpush1.bf16.msra.mxu0 0
        %856 = vmatprep.subr.bf16.mxu0 0
        %857 = vmatpush1.bf16.msra.mxu0 0
        %858 = vmatprep.subr.bf16.mxu0 0
        %859 = vmatpush1.bf16.msra.mxu0 0
        %860 = vmatprep.subr.bf16.mxu0 0
        %861 = vmatpush1.bf16.msra.mxu0 0
        %862 = vmatprep.subr.bf16.mxu0 0
        %863 = vmatpush1.bf16.msra.mxu0 0
        %864 = vmatprep.subr.bf16.mxu0 0
        %865 = vmatpush1.bf16.msra.mxu0 0
        %866 = vmatprep.subr.bf16.mxu0 0
        %867 = vmatpush1.bf16.msra.mxu0 0
        %868 = vmatprep.subr.bf16.mxu0 0
        %869 = vmatpush1.bf16.msra.mxu0 0
        %870 = vmatprep.subr.bf16.mxu0 0
        %871 = vmatpush1.bf16.msra.mxu0 0
        %872 = vmatprep.mubr.bf16.mxu0 0
        %873 = vmatmul.mubr.bf16.gmra.mrb[0].mxu0 %v756
        %v874 = vpop.f32.mrb[0].mxu0
        %v875 = vadd.f32 %v698, %v874
        %v876 = vpop.f32.mrb[0].mxu0
        %v877 = vpop.f32.mrb[0].mxu0
        %v878 = vadd.f32 %v698, %v877
        %v879 = vpop.f32.mrb[0].mxu0
        %880 = vmatprep.mubr.bf16.mxu0 0
        %881 = vmatmul.mubr.bf16.gmra.mrb[0].mxu0 %v759
        %v882 = vpop.f32.mrb[0].mxu0
        %v883 = vadd.f32 %v698, %v882
        %v884 = vpop.f32.mrb[0].mxu0
        %v885 = vpop.f32.mrb[0].mxu0
        %v886 = vadd.f32 %v698, %v885
        %v887 = vpop.f32.mrb[0].mxu0
        %888 = vmatprep.mubr.bf16.mxu0 0
        %889 = vmatmul.mubr.bf16.gmra.mrb[0].mxu0 %v762
        %v890 = vpop.f32.mrb[0].mxu0
        %v891 = vadd.f32 %v698, %v890
        %v892 = vpop.f32.mrb[0].mxu0
        %v893 = vpop.f32.mrb[0].mxu0
        %v894 = vadd.f32 %v698, %v893
        %v895 = vpop.f32.mrb[0].mxu0
        %896 = vmatprep.mubr.bf16.mxu0 0
        %897 = vmatmul.mubr.bf16.gmra.mrb[0].mxu0 %v765
        %v898 = vpop.f32.mrb[0].mxu0
        %v899 = vadd.f32 %v698, %v898
        %v900 = vpop.f32.mrb[0].mxu0
        %v901 = vpop.f32.mrb[0].mxu0
        %v902 = vadd.f32 %v698, %v901
        %v903 = vpop.f32.mrb[0].mxu0
        %904 = vdwg.mxu0
        %905 = vst [vmem:[#allocation4] sm:$0xff] %v802
        %906 = vst [vmem:[#allocation4 + $0x8] sm:$0xff] %v804
        %907 = vst [vmem:[#allocation4 + $0x10] sm:$0xff] %v875
        %908 = vst [vmem:[#allocation4 + $0x18] sm:$0xff] %v806
        %909 = vst [vmem:[#allocation4 + $0x20] sm:$0xff] %v808
        %910 = vst [vmem:[#allocation4 + $0x28] sm:$0xff] %v878
        %911 = vst [vmem:[#allocation4 + $0x30] sm:$0xff] %v812
        %912 = vst [vmem:[#allocation4 + $0x38] sm:$0xff] %v814
        %913 = vst [vmem:[#allocation4 + $0x40] sm:$0xff] %v883
        %914 = vst [vmem:[#allocation4 + $0x48] sm:$0xff] %v816
        %915 = vst [vmem:[#allocation4 + $0x50] sm:$0xff] %v818
        %916 = vst [vmem:[#allocation4 + $0x58] sm:$0xff] %v886
        %917 = vst [vmem:[#allocation4 + $0x60] sm:$0xff] %v822
        %918 = vst [vmem:[#allocation4 + $0x68] sm:$0xff] %v824
        %919 = vst [vmem:[#allocation4 + $0x70] sm:$0xff] %v891
        %920 = vst [vmem:[#allocation4 + $0x78] sm:$0xff] %v826
        %921 = vst [vmem:[#allocation4 + $0x80] sm:$0xff] %v828
        %922 = vst [vmem:[#allocation4 + $0x88] sm:$0xff] %v894
        %923 = vst [vmem:[#allocation4 + $0x90] sm:$0xff] %v832
        %924 = vst [vmem:[#allocation4 + $0x98] sm:$0xff] %v834
        %925 = vst [vmem:[#allocation4 + $0xa0] sm:$0xff] %v899
        %926 = vst [vmem:[#allocation4 + $0xa8] sm:$0xff] %v836
        %927 = vst [vmem:[#allocation4 + $0xb0] sm:$0xff] %v838
        %928 = vst [vmem:[#allocation4 + $0xb8] sm:$0xff] %v902
        %v929 = vld [vmem:[#allocation10] sm:$0xff]
        %v930 = vld [vmem:[#allocation10 + $0x8] sm:$0xf]
        %v931 = vld [vmem:[#allocation10 + $0xc] sm:$0xff]
        %v932 = vld [vmem:[#allocation10 + $0x14] sm:$0xf]
        %v933 = vld [vmem:[#allocation10 + $0x18] sm:$0xff]
        %v934 = vld [vmem:[#allocation10 + $0x20] sm:$0xf]
        %v935 = vld [vmem:[#allocation10 + $0x24] sm:$0xff]
        %v936 = vld [vmem:[#allocation10 + $0x2c] sm:$0xf]
        %v937 = vld [vmem:[#allocation10 + $0x30] sm:$0xff]
        %v938 = vld [vmem:[#allocation10 + $0x38] sm:$0xf]
        %v939 = vld [vmem:[#allocation10 + $0x3c] sm:$0xff]
        %v940 = vld [vmem:[#allocation10 + $0x44] sm:$0xf]
        %v941 = vld [vmem:[#allocation10 + $0x48] sm:$0xff]
        %v942 = vld [vmem:[#allocation10 + $0x50] sm:$0xf]
        %v943 = vld [vmem:[#allocation10 + $0x54] sm:$0xff]
        %v944 = vld [vmem:[#allocation10 + $0x5c] sm:$0xf]
        %v945 = vld [vmem:[#allocation10 + $0x60] sm:$0xff]
        %v946 = vld [vmem:[#allocation10 + $0x68] sm:$0xf]
        %v947 = vld [vmem:[#allocation10 + $0x6c] sm:$0xff]
        %v948 = vld [vmem:[#allocation10 + $0x74] sm:$0xf]
        %v949 = vld [vmem:[#allocation10 + $0x78] sm:$0xff]
        %v950 = vld [vmem:[#allocation10 + $0x80] sm:$0xf]
        %v951 = vld [vmem:[#allocation10 + $0x84] sm:$0xff]
        %v952 = vld [vmem:[#allocation10 + $0x8c] sm:$0xf]
        %v953 = vld [vmem:[#allocation10 + $0x90] sm:$0xff]
        %v954 = vld [vmem:[#allocation10 + $0x98] sm:$0xf]
        %v955 = vld [vmem:[#allocation10 + $0x9c] sm:$0xff]
        %v956 = vld [vmem:[#allocation10 + $0xa4] sm:$0xf]
        %v957 = vld [vmem:[#allocation10 + $0xa8] sm:$0xff]
        %v958 = vld [vmem:[#allocation10 + $0xb0] sm:$0xf]
        %v959 = vld [vmem:[#allocation10 + $0xb4] sm:$0xff]
        %v960 = vld [vmem:[#allocation10 + $0xbc] sm:$0xf]
        %v961 = vld [vmem:[#allocation13] sm:$0x1]
        %p962 = scmp.ne.s32.totalorder %s43, 1
        // Predicated region
        $region129: #{tpu_custom_call.1} parent=71 // pred_check
          %p963 = pneg %p962
        $region130: #{tpu_custom_call.1} parent=71 // pred_check_branch
          %965 = sbr.rel (%p963) target = $region132
        $region131: #{tpu_custom_call.1} parent=71 // pred_region
          %v966 = vld [vmem:[#allocation2] sm:$0xff]
          %v967 = vld [vmem:[#allocation3] sm:$0xff]
          %v968 = vld [vmem:[#allocation4] sm:$0xff]
          %v969 = vld [vmem:[#allocation4 + $0x8] sm:$0xff]
          %v970 = vld [vmem:[#allocation4 + $0x10] sm:$0xff]
          %v971 = vpack.c.bf16 %v966, %v966
          %v1004 = vunpack.c.l.b16 %v929
          %v1005 = vunpack.c.h.b16 %v929
          %v1006 = vunpack.c.l.b16 %v930
          %v1007 = vunpack.c.l.b16 %v931
          %v1008 = vunpack.c.h.b16 %v931
          %v1009 = vunpack.c.l.b16 %v932
          %v1010 = vunpack.c.l.b16 %v933
          %v1011 = vunpack.c.h.b16 %v933
          %v1012 = vunpack.c.l.b16 %v934
          %v1013 = vunpack.c.l.b16 %v935
          %v1014 = vunpack.c.h.b16 %v935
          %v1015 = vunpack.c.l.b16 %v936
          %v1016 = vunpack.c.l.b16 %v937
          %v1017 = vunpack.c.h.b16 %v937
          %v1018 = vunpack.c.l.b16 %v938
          %v1019 = vunpack.c.l.b16 %v939
          %v1020 = vunpack.c.h.b16 %v939
          %v1021 = vunpack.c.l.b16 %v940
          %v1022 = vunpack.c.l.b16 %v941
          %v1023 = vunpack.c.h.b16 %v941
          %v1024 = vunpack.c.l.b16 %v942
          %v1025 = vunpack.c.l.b16 %v943
          %v1026 = vunpack.c.h.b16 %v943
          %v1027 = vunpack.c.l.b16 %v944
          %v1028 = vunpack.c.l.b16 %v945
          %v1029 = vunpack.c.h.b16 %v945
          %v1030 = vunpack.c.l.b16 %v946
          %v1031 = vunpack.c.l.b16 %v947
          %v1032 = vunpack.c.h.b16 %v947
          %v1033 = vunpack.c.l.b16 %v948
          %v1034 = vunpack.c.l.b16 %v949
          %v1035 = vunpack.c.h.b16 %v949
          %v1036 = vunpack.c.l.b16 %v950
          %v1037 = vunpack.c.l.b16 %v951
          %v1038 = vunpack.c.h.b16 %v951
          %v1039 = vunpack.c.l.b16 %v952
          %v1040 = vunpack.c.l.b16 %v953
          %v1041 = vunpack.c.h.b16 %v953
          %v1042 = vunpack.c.l.b16 %v954
          %v1043 = vunpack.c.l.b16 %v955
          %v1044 = vunpack.c.h.b16 %v955
          %v1045 = vunpack.c.l.b16 %v956
          %v1046 = vunpack.c.l.b16 %v957
          %v1047 = vunpack.c.h.b16 %v957
          %v1048 = vunpack.c.l.b16 %v958
          %v1049 = vunpack.c.l.b16 %v959
          %v1050 = vunpack.c.h.b16 %v959
          %v1051 = vunpack.c.l.b16 %v960
          %v1052 = vpack.c.b16 %v1007, %v1004
          %v1053 = vpack.c.b16 %v1008, %v1005
          %v1054 = vpack.c.b16 %v1009, %v1006
          %v1055 = vpack.c.b16 %v1013, %v1010
          %v1056 = vpack.c.b16 %v1014, %v1011
          %v1057 = vpack.c.b16 %v1015, %v1012
          %v1058 = vpack.c.b16 %v1019, %v1016
          %v1059 = vpack.c.b16 %v1020, %v1017
          %v1060 = vpack.c.b16 %v1021, %v1018
          %v1061 = vpack.c.b16 %v1025, %v1022
          %v1062 = vpack.c.b16 %v1026, %v1023
          %v1063 = vpack.c.b16 %v1027, %v1024
          %v1064 = vpack.c.b16 %v1031, %v1028
          %v1065 = vpack.c.b16 %v1032, %v1029
          %v1066 = vpack.c.b16 %v1033, %v1030
          %v1067 = vpack.c.b16 %v1037, %v1034
          %v1068 = vpack.c.b16 %v1038, %v1035
          %v1069 = vpack.c.b16 %v1039, %v1036
          %v1070 = vpack.c.b16 %v1043, %v1040
          %v1071 = vpack.c.b16 %v1044, %v1041
          %v1072 = vpack.c.b16 %v1045, %v1042
          %v1073 = vpack.c.b16 %v1049, %v1046
          %v1074 = vpack.c.b16 %v1050, %v1047
          %v1075 = vpack.c.b16 %v1051, %v1048
          %1100 = vmatprep.subr.bf16.mxu0 %v1053
          %1101 = vmatpush1.bf16.msra.mxu0 %v1052
          %1102 = vmatprep.subr.bf16.mxu0 %v1056
          %1103 = vmatpush1.bf16.msra.mxu0 %v1055
          %1104 = vmatprep.subr.bf16.mxu0 %v1059
          %1105 = vmatpush1.bf16.msra.mxu0 %v1058
          %1106 = vmatprep.subr.bf16.mxu0 %v1062
          %1107 = vmatpush1.bf16.msra.mxu0 %v1061
          %1108 = vmatprep.subr.bf16.mxu0 %v1065
          %1109 = vmatpush1.bf16.msra.mxu0 %v1064
          %1110 = vmatprep.subr.bf16.mxu0 %v1068
          %1111 = vmatpush1.bf16.msra.mxu0 %v1067
          %1112 = vmatprep.subr.bf16.mxu0 %v1071
          %1113 = vmatpush1.bf16.msra.mxu0 %v1070
          %1114 = vmatprep.subr.bf16.mxu0 %v1074
          %1115 = vmatpush1.bf16.msra.mxu0 %v1073
          %1116 = vmatprep.subr.bf16.mxu0 0
          %1117 = vmatpush1.bf16.msra.mxu0 0
          %1118 = vmatprep.subr.bf16.mxu0 0
          %1119 = vmatpush1.bf16.msra.mxu0 0
          %1120 = vmatprep.subr.bf16.mxu0 0
          %1121 = vmatpush1.bf16.msra.mxu0 0
          %1122 = vmatprep.subr.bf16.mxu0 0
          %1123 = vmatpush1.bf16.msra.mxu0 0
          %1124 = vmatprep.subr.bf16.mxu0 0
          %1125 = vmatpush1.bf16.msra.mxu0 0
          %1126 = vmatprep.subr.bf16.mxu0 0
          %1127 = vmatpush1.bf16.msra.mxu0 0
          %1128 = vmatprep.subr.bf16.mxu0 0
          %1129 = vmatpush1.bf16.msra.mxu0 0
          %1130 = vmatprep.subr.bf16.mxu0 0
          %1131 = vmatpush1.bf16.msra.mxu0 0
          %1132 = vmatprep.mubr.bf16.mxu0 0
          %1133 = vmatmul.mubr.bf16.gmra.mrb[0].mxu0 %v971
          %v1134 = vpop.f32.mrb[0].mxu0
          %v1135 = vadd.f32 0.0, %v1134
          %v1136 = vpop.f32.mrb[0].mxu0
          %v1137 = vadd.f32 0.0, %v1136
          %v1138 = vpop.f32.mrb[0].mxu0
          %v1139 = vpop.f32.mrb[0].mxu0
          %1140 = vdwg.mxu0
          %1141 = vmatprep.subr.bf16.mxu0 0
          %1142 = vmatpush1.bf16.msra.mxu0 %v1054
          %1143 = vmatprep.subr.bf16.mxu0 0
          %1144 = vmatpush1.bf16.msra.mxu0 %v1057
          %1145 = vmatprep.subr.bf16.mxu0 0
          %1146 = vmatpush1.bf16.msra.mxu0 %v1060
          %1147 = vmatprep.subr.bf16.mxu0 0
          %1148 = vmatpush1.bf16.msra.mxu0 %v1063
          %1149 = vmatprep.subr.bf16.mxu0 0
          %1150 = vmatpush1.bf16.msra.mxu0 %v1066
          %1151 = vmatprep.subr.bf16.mxu0 0
          %1152 = vmatpush1.bf16.msra.mxu0 %v1069
          %1153 = vmatprep.subr.bf16.mxu0 0
          %1154 = vmatpush1.bf16.msra.mxu0 %v1072
          %1155 = vmatprep.subr.bf16.mxu0 0
          %1156 = vmatpush1.bf16.msra.mxu0 %v1075
          %1157 = vmatprep.subr.bf16.mxu0 0
          %1158 = vmatpush1.bf16.msra.mxu0 0
          %1159 = vmatprep.subr.bf16.mxu0 0
          %1160 = vmatpush1.bf16.msra.mxu0 0
          %1161 = vmatprep.subr.bf16.mxu0 0
          %1162 = vmatpush1.bf16.msra.mxu0 0
          %1163 = vmatprep.subr.bf16.mxu0 0
          %1164 = vmatpush1.bf16.msra.mxu0 0
          %1165 = vmatprep.subr.bf16.mxu0 0
          %1166 = vmatpush1.bf16.msra.mxu0 0
          %1167 = vmatprep.subr.bf16.mxu0 0
          %1168 = vmatpush1.bf16.msra.mxu0 0
          %1169 = vmatprep.subr.bf16.mxu0 0
          %1170 = vmatpush1.bf16.msra.mxu0 0
          %1171 = vmatprep.subr.bf16.mxu0 0
          %1172 = vmatpush1.bf16.msra.mxu0 0
          %1173 = vmatprep.mubr.bf16.mxu0 0
          %1174 = vmatmul.mubr.bf16.gmra.mrb[0].mxu0 %v971
          %v1175 = vpop.f32.mrb[0].mxu0
          %v1176 = vadd.f32 0.0, %v1175
          %v1177 = vpop.f32.mrb[0].mxu0
          %v1178 = vpop.f32.mrb[0].mxu0
          %v1179 = vpop.f32.mrb[0].mxu0
          %1180 = vdwg.mxu0
          %v1181 = vadd.f32 %v968, %v1135
          %v1182 = vxor.u32 %v1181, 2147483648
          %v1183 = vmul.f32 %v1182, 1.442695
          %v1184 = vpow.pop %v1183
          %v1185 = vadd.f32 %v1184, 1.0
          %v1186 = vrcp.pop %v1185
          %v1187 = vmul.f32 1.0, %v1186
          %v1188 = vadd.f32 %v969, %v1137
          %v1189 = vxor.u32 %v1188, 2147483648
          %v1190 = vmul.f32 %v1189, 1.442695
          %v1191 = vpow.pop %v1190
          %v1192 = vadd.f32 %v1191, 1.0
          %v1193 = vrcp.pop %v1192
          %v1194 = vmul.f32 1.0, %v1193
          %v1196 = vlaneseq
          %v1197 = vshrl.u32 %v1196, 7
          %v1198 = vsub.s32 0, %v1197
          %v1199 = vrot.slane %v961, %v1198
          %v1201 = vadd.f32 %v1176, %v1199
          %v1202 = vmul.f32 %v1187, %v1201
          %v1203 = vadd.f32 %v970, %v1202
          %v1204 = vtanh.pop %v1203
          %v1205 = vsub.f32 %v966, %v1204
          %v1206 = vmul.f32 %v1194, %v1205
          %v1207 = vadd.f32 %v1204, %v1206
          %v1208 = vtanh.pop %v1207
          %v1209 = vmax.f32 %v967, %v1208
          %v1210 = vld [vmem:[#allocation4 + $0x18] sm:$0xff]
          %v1211 = vld [vmem:[#allocation4 + $0x20] sm:$0xff]
          %v1212 = vld [vmem:[#allocation4 + $0x28] sm:$0xff]
          %v1213 = vpack.c.bf16 %v1207, %v1207
          %1214 = vmatprep.subr.bf16.mxu0 %v1053
          %1215 = vmatpush1.bf16.msra.mxu0 %v1052
          %1216 = vmatprep.subr.bf16.mxu0 %v1056
          %1217 = vmatpush1.bf16.msra.mxu0 %v1055
          %1218 = vmatprep.subr.bf16.mxu0 %v1059
          %1219 = vmatpush1.bf16.msra.mxu0 %v1058
          %1220 = vmatprep.subr.bf16.mxu0 %v1062
          %1221 = vmatpush1.bf16.msra.mxu0 %v1061
          %1222 = vmatprep.subr.bf16.mxu0 %v1065
          %1223 = vmatpush1.bf16.msra.mxu0 %v1064
          %1224 = vmatprep.subr.bf16.mxu0 %v1068
          %1225 = vmatpush1.bf16.msra.mxu0 %v1067
          %1226 = vmatprep.subr.bf16.mxu0 %v1071
          %1227 = vmatpush1.bf16.msra.mxu0 %v1070
          %1228 = vmatprep.subr.bf16.mxu0 %v1074
          %1229 = vmatpush1.bf16.msra.mxu0 %v1073
          %1230 = vmatprep.subr.bf16.mxu0 0
          %1231 = vmatpush1.bf16.msra.mxu0 0
          %1232 = vmatprep.subr.bf16.mxu0 0
          %1233 = vmatpush1.bf16.msra.mxu0 0
          %1234 = vmatprep.subr.bf16.mxu0 0
          %1235 = vmatpush1.bf16.msra.mxu0 0
          %1236 = vmatprep.subr.bf16.mxu0 0
          %1237 = vmatpush1.bf16.msra.mxu0 0
          %1238 = vmatprep.subr.bf16.mxu0 0
          %1239 = vmatpush1.bf16.msra.mxu0 0
          %1240 = vmatprep.subr.bf16.mxu0 0
          %1241 = vmatpush1.bf16.msra.mxu0 0
          %1242 = vmatprep.subr.bf16.mxu0 0
          %1243 = vmatpush1.bf16.msra.mxu0 0
          %1244 = vmatprep.subr.bf16.mxu0 0
          %1245 = vmatpush1.bf16.msra.mxu0 0
          %1246 = vmatprep.mubr.bf16.mxu0 0
          %1247 = vmatmul.mubr.bf16.gmra.mrb[0].mxu0 %v1213
          %v1248 = vpop.f32.mrb[0].mxu0
          %v1249 = vadd.f32 0.0, %v1248
          %v1250 = vpop.f32.mrb[0].mxu0
          %v1251 = vadd.f32 0.0, %v1250
          %v1252 = vpop.f32.mrb[0].mxu0
          %v1253 = vpop.f32.mrb[0].mxu0
          %1254 = vdwg.mxu0
          %1255 = vmatprep.subr.bf16.mxu0 0
          %1256 = vmatpush1.bf16.msra.mxu0 %v1054
          %1257 = vmatprep.subr.bf16.mxu0 0
          %1258 = vmatpush1.bf16.msra.mxu0 %v1057
          %1259 = vmatprep.subr.bf16.mxu0 0
          %1260 = vmatpush1.bf16.msra.mxu0 %v1060
          %1261 = vmatprep.subr.bf16.mxu0 0
          %1262 = vmatpush1.bf16.msra.mxu0 %v1063
          %1263 = vmatprep.subr.bf16.mxu0 0
          %1264 = vmatpush1.bf16.msra.mxu0 %v1066
          %1265 = vmatprep.subr.bf16.mxu0 0
          %1266 = vmatpush1.bf16.msra.mxu0 %v1069
          %1267 = vmatprep.subr.bf16.mxu0 0
          %1268 = vmatpush1.bf16.msra.mxu0 %v1072
          %1269 = vmatprep.subr.bf16.mxu0 0
          %1270 = vmatpush1.bf16.msra.mxu0 %v1075
          %1271 = vmatprep.subr.bf16.mxu0 0
          %1272 = vmatpush1.bf16.msra.mxu0 0
          %1273 = vmatprep.subr.bf16.mxu0 0
          %1274 = vmatpush1.bf16.msra.mxu0 0
          %1275 = vmatprep.subr.bf16.mxu0 0
          %1276 = vmatpush1.bf16.msra.mxu0 0
          %1277 = vmatprep.subr.bf16.mxu0 0
          %1278 = vmatpush1.bf16.msra.mxu0 0
          %1279 = vmatprep.subr.bf16.mxu0 0
          %1280 = vmatpush1.bf16.msra.mxu0 0
          %1281 = vmatprep.subr.bf16.mxu0 0
          %1282 = vmatpush1.bf16.msra.mxu0 0
          %1283 = vmatprep.subr.bf16.mxu0 0
          %1284 = vmatpush1.bf16.msra.mxu0 0
          %1285 = vmatprep.subr.bf16.mxu0 0
          %1286 = vmatpush1.bf16.msra.mxu0 0
          %1287 = vmatprep.mubr.bf16.mxu0 0
          %1288 = vmatmul.mubr.bf16.gmra.mrb[0].mxu0 %v1213
          %v1289 = vpop.f32.mrb[0].mxu0
          %v1290 = vadd.f32 0.0, %v1289
          %v1291 = vpop.f32.mrb[0].mxu0
          %v1292 = vpop.f32.mrb[0].mxu0
          %v1293 = vpop.f32.mrb[0].mxu0
          %1294 = vdwg.mxu0
          %v1295 = vadd.f32 %v1210, %v1249
          %v1296 = vxor.u32 %v1295, 2147483648
          %v1297 = vmul.f32 %v1296, 1.442695
          %v1298 = vpow.pop %v1297
          %v1299 = vadd.f32 %v1298, 1.0
          %v1300 = vrcp.pop %v1299
          %v1301 = vmul.f32 1.0, %v1300
          %v1302 = vadd.f32 %v1211, %v1251
          %v1303 = vxor.u32 %v1302, 2147483648
          %v1304 = vmul.f32 %v1303, 1.442695
          %v1305 = vpow.pop %v1304
          %v1306 = vadd.f32 %v1305, 1.0
          %v1307 = vrcp.pop %v1306
          %v1308 = vmul.f32 1.0, %v1307
          %v1309 = vadd.f32 %v1290, %v1199
          %v1310 = vmul.f32 %v1301, %v1309
          %v1311 = vadd.f32 %v1212, %v1310
          %v1312 = vtanh.pop %v1311
          %v1313 = vsub.f32 %v1207, %v1312
          %v1314 = vmul.f32 %v1308, %v1313
          %v1315 = vadd.f32 %v1312, %v1314
          %v1316 = vtanh.pop %v1315
          %v1317 = vmax.f32 %v1209, %v1316
          %v1318 = vld [vmem:[#allocation4 + $0x30] sm:$0xff]
          %v1319 = vld [vmem:[#allocation4 + $0x38] sm:$0xff]
          %v1320 = vld [vmem:[#allocation4 + $0x40] sm:$0xff]
          %v1321 = vpack.c.bf16 %v1315, %v1315
          %1322 = vmatprep.subr.bf16.mxu0 %v1053
          %1323 = vmatpush1.bf16.msra.mxu0 %v1052
          %1324 = vmatprep.subr.bf16.mxu0 %v1056
          %1325 = vmatpush1.bf16.msra.mxu0 %v1055
          %1326 = vmatprep.subr.bf16.mxu0 %v1059
          %1327 = vmatpush1.bf16.msra.mxu0 %v1058
          %1328 = vmatprep.subr.bf16.mxu0 %v1062
          %1329 = vmatpush1.bf16.msra.mxu0 %v1061
          %1330 = vmatprep.subr.bf16.mxu0 %v1065
          %1331 = vmatpush1.bf16.msra.mxu0 %v1064
          %1332 = vmatprep.subr.bf16.mxu0 %v1068
          %1333 = vmatpush1.bf16.msra.mxu0 %v1067
          %1334 = vmatprep.subr.bf16.mxu0 %v1071
          %1335 = vmatpush1.bf16.msra.mxu0 %v1070
          %1336 = vmatprep.subr.bf16.mxu0 %v1074
          %1337 = vmatpush1.bf16.msra.mxu0 %v1073
          %1338 = vmatprep.subr.bf16.mxu0 0
          %1339 = vmatpush1.bf16.msra.mxu0 0
          %1340 = vmatprep.subr.bf16.mxu0 0
          %1341 = vmatpush1.bf16.msra.mxu0 0
          %1342 = vmatprep.subr.bf16.mxu0 0
          %1343 = vmatpush1.bf16.msra.mxu0 0
          %1344 = vmatprep.subr.bf16.mxu0 0
          %1345 = vmatpush1.bf16.msra.mxu0 0
          %1346 = vmatprep.subr.bf16.mxu0 0
          %1347 = vmatpush1.bf16.msra.mxu0 0
          %1348 = vmatprep.subr.bf16.mxu0 0
          %1349 = vmatpush1.bf16.msra.mxu0 0
          %1350 = vmatprep.subr.bf16.mxu0 0
          %1351 = vmatpush1.bf16.msra.mxu0 0
          %1352 = vmatprep.subr.bf16.mxu0 0
          %1353 = vmatpush1.bf16.msra.mxu0 0
          %1354 = vmatprep.mubr.bf16.mxu0 0
          %1355 = vmatmul.mubr.bf16.gmra.mrb[0].mxu0 %v1321
          %v1356 = vpop.f32.mrb[0].mxu0
          %v1357 = vadd.f32 0.0, %v1356
          %v1358 = vpop.f32.mrb[0].mxu0
          %v1359 = vadd.f32 0.0, %v1358
          %v1360 = vpop.f32.mrb[0].mxu0
          %v1361 = vpop.f32.mrb[0].mxu0
          %1362 = vdwg.mxu0
          %1363 = vmatprep.subr.bf16.mxu0 0
          %1364 = vmatpush1.bf16.msra.mxu0 %v1054
          %1365 = vmatprep.subr.bf16.mxu0 0
          %1366 = vmatpush1.bf16.msra.mxu0 %v1057
          %1367 = vmatprep.subr.bf16.mxu0 0
          %1368 = vmatpush1.bf16.msra.mxu0 %v1060
          %1369 = vmatprep.subr.bf16.mxu0 0
          %1370 = vmatpush1.bf16.msra.mxu0 %v1063
          %1371 = vmatprep.subr.bf16.mxu0 0
          %1372 = vmatpush1.bf16.msra.mxu0 %v1066
          %1373 = vmatprep.subr.bf16.mxu0 0
          %1374 = vmatpush1.bf16.msra.mxu0 %v1069
          %1375 = vmatprep.subr.bf16.mxu0 0
          %1376 = vmatpush1.bf16.msra.mxu0 %v1072
          %1377 = vmatprep.subr.bf16.mxu0 0
          %1378 = vmatpush1.bf16.msra.mxu0 %v1075
          %1379 = vmatprep.subr.bf16.mxu0 0
          %1380 = vmatpush1.bf16.msra.mxu0 0
          %1381 = vmatprep.subr.bf16.mxu0 0
          %1382 = vmatpush1.bf16.msra.mxu0 0
          %1383 = vmatprep.subr.bf16.mxu0 0
          %1384 = vmatpush1.bf16.msra.mxu0 0
          %1385 = vmatprep.subr.bf16.mxu0 0
          %1386 = vmatpush1.bf16.msra.mxu0 0
          %1387 = vmatprep.subr.bf16.mxu0 0
          %1388 = vmatpush1.bf16.msra.mxu0 0
          %1389 = vmatprep.subr.bf16.mxu0 0
          %1390 = vmatpush1.bf16.msra.mxu0 0
          %1391 = vmatprep.subr.bf16.mxu0 0
          %1392 = vmatpush1.bf16.msra.mxu0 0
          %1393 = vmatprep.subr.bf16.mxu0 0
          %1394 = vmatpush1.bf16.msra.mxu0 0
          %1395 = vmatprep.mubr.bf16.mxu0 0
          %1396 = vmatmul.mubr.bf16.gmra.mrb[0].mxu0 %v1321
          %v1397 = vpop.f32.mrb[0].mxu0
          %v1398 = vadd.f32 0.0, %v1397
          %v1399 = vpop.f32.mrb[0].mxu0
          %v1400 = vpop.f32.mrb[0].mxu0
          %v1401 = vpop.f32.mrb[0].mxu0
          %1402 = vdwg.mxu0
          %v1403 = vadd.f32 %v1318, %v1357
          %v1404 = vxor.u32 %v1403, 2147483648
          %v1405 = vmul.f32 %v1404, 1.442695
          %v1406 = vpow.pop %v1405
          %v1407 = vadd.f32 %v1406, 1.0
          %v1408 = vrcp.pop %v1407
          %v1409 = vmul.f32 1.0, %v1408
          %v1410 = vadd.f32 %v1319, %v1359
          %v1411 = vxor.u32 %v1410, 2147483648
          %v1412 = vmul.f32 %v1411, 1.442695
          %v1413 = vpow.pop %v1412
          %v1414 = vadd.f32 %v1413, 1.0
          %v1415 = vrcp.pop %v1414
          %v1416 = vmul.f32 1.0, %v1415
          %v1417 = vadd.f32 %v1398, %v1199
          %v1418 = vmul.f32 %v1409, %v1417
          %v1419 = vadd.f32 %v1320, %v1418
          %v1420 = vtanh.pop %v1419
          %v1421 = vsub.f32 %v1315, %v1420
          %v1422 = vmul.f32 %v1416, %v1421
          %v1423 = vadd.f32 %v1420, %v1422
          %v1424 = vtanh.pop %v1423
          %v1425 = vmax.f32 %v1317, %v1424
          %v1426 = vld [vmem:[#allocation4 + $0x48] sm:$0xff]
          %v1427 = vld [vmem:[#allocation4 + $0x50] sm:$0xff]
          %v1428 = vld [vmem:[#allocation4 + $0x58] sm:$0xff]
          %v1429 = vpack.c.bf16 %v1423, %v1423
          %1430 = vmatprep.subr.bf16.mxu0 %v1053
          %1431 = vmatpush1.bf16.msra.mxu0 %v1052
          %1432 = vmatprep.subr.bf16.mxu0 %v1056
          %1433 = vmatpush1.bf16.msra.mxu0 %v1055
          %1434 = vmatprep.subr.bf16.mxu0 %v1059
          %1435 = vmatpush1.bf16.msra.mxu0 %v1058
          %1436 = vmatprep.subr.bf16.mxu0 %v1062
          %1437 = vmatpush1.bf16.msra.mxu0 %v1061
          %1438 = vmatprep.subr.bf16.mxu0 %v1065
          %1439 = vmatpush1.bf16.msra.mxu0 %v1064
          %1440 = vmatprep.subr.bf16.mxu0 %v1068
          %1441 = vmatpush1.bf16.msra.mxu0 %v1067
          %1442 = vmatprep.subr.bf16.mxu0 %v1071
          %1443 = vmatpush1.bf16.msra.mxu0 %v1070
          %1444 = vmatprep.subr.bf16.mxu0 %v1074
          %1445 = vmatpush1.bf16.msra.mxu0 %v1073
          %1446 = vmatprep.subr.bf16.mxu0 0
          %1447 = vmatpush1.bf16.msra.mxu0 0
          %1448 = vmatprep.subr.bf16.mxu0 0
          %1449 = vmatpush1.bf16.msra.mxu0 0
          %1450 = vmatprep.subr.bf16.mxu0 0
          %1451 = vmatpush1.bf16.msra.mxu0 0
          %1452 = vmatprep.subr.bf16.mxu0 0
          %1453 = vmatpush1.bf16.msra.mxu0 0
          %1454 = vmatprep.subr.bf16.mxu0 0
          %1455 = vmatpush1.bf16.msra.mxu0 0
          %1456 = vmatprep.subr.bf16.mxu0 0
          %1457 = vmatpush1.bf16.msra.mxu0 0
          %1458 = vmatprep.subr.bf16.mxu0 0
          %1459 = vmatpush1.bf16.msra.mxu0 0
          %1460 = vmatprep.subr.bf16.mxu0 0
          %1461 = vmatpush1.bf16.msra.mxu0 0
          %1462 = vmatprep.mubr.bf16.mxu0 0
          %1463 = vmatmul.mubr.bf16.gmra.mrb[0].mxu0 %v1429
          %v1464 = vpop.f32.mrb[0].mxu0
          %v1465 = vadd.f32 0.0, %v1464
          %v1466 = vpop.f32.mrb[0].mxu0
          %v1467 = vadd.f32 0.0, %v1466
          %v1468 = vpop.f32.mrb[0].mxu0
          %v1469 = vpop.f32.mrb[0].mxu0
          %1470 = vdwg.mxu0
          %1471 = vmatprep.subr.bf16.mxu0 0
          %1472 = vmatpush1.bf16.msra.mxu0 %v1054
          %1473 = vmatprep.subr.bf16.mxu0 0
          %1474 = vmatpush1.bf16.msra.mxu0 %v1057
          %1475 = vmatprep.subr.bf16.mxu0 0
          %1476 = vmatpush1.bf16.msra.mxu0 %v1060
          %1477 = vmatprep.subr.bf16.mxu0 0
          %1478 = vmatpush1.bf16.msra.mxu0 %v1063
          %1479 = vmatprep.subr.bf16.mxu0 0
          %1480 = vmatpush1.bf16.msra.mxu0 %v1066
          %1481 = vmatprep.subr.bf16.mxu0 0
          %1482 = vmatpush1.bf16.msra.mxu0 %v1069
          %1483 = vmatprep.subr.bf16.mxu0 0
          %1484 = vmatpush1.bf16.msra.mxu0 %v1072
          %1485 = vmatprep.subr.bf16.mxu0 0
          %1486 = vmatpush1.bf16.msra.mxu0 %v1075
          %1487 = vmatprep.subr.bf16.mxu0 0
          %1488 = vmatpush1.bf16.msra.mxu0 0
          %1489 = vmatprep.subr.bf16.mxu0 0
          %1490 = vmatpush1.bf16.msra.mxu0 0
          %1491 = vmatprep.subr.bf16.mxu0 0
          %1492 = vmatpush1.bf16.msra.mxu0 0
          %1493 = vmatprep.subr.bf16.mxu0 0
          %1494 = vmatpush1.bf16.msra.mxu0 0
          %1495 = vmatprep.subr.bf16.mxu0 0
          %1496 = vmatpush1.bf16.msra.mxu0 0
          %1497 = vmatprep.subr.bf16.mxu0 0
          %1498 = vmatpush1.bf16.msra.mxu0 0
          %1499 = vmatprep.subr.bf16.mxu0 0
          %1500 = vmatpush1.bf16.msra.mxu0 0
          %1501 = vmatprep.subr.bf16.mxu0 0
          %1502 = vmatpush1.bf16.msra.mxu0 0
          %1503 = vmatprep.mubr.bf16.mxu0 0
          %1504 = vmatmul.mubr.bf16.gmra.mrb[0].mxu0 %v1429
          %v1505 = vpop.f32.mrb[0].mxu0
          %v1506 = vadd.f32 0.0, %v1505
          %v1507 = vpop.f32.mrb[0].mxu0
          %v1508 = vpop.f32.mrb[0].mxu0
          %v1509 = vpop.f32.mrb[0].mxu0
          %1510 = vdwg.mxu0
          %v1511 = vadd.f32 %v1426, %v1465
          %v1512 = vxor.u32 %v1511, 2147483648
          %v1513 = vmul.f32 %v1512, 1.442695
          %v1514 = vpow.pop %v1513
          %v1515 = vadd.f32 %v1514, 1.0
          %v1516 = vrcp.pop %v1515
          %v1517 = vmul.f32 1.0, %v1516
          %v1518 = vadd.f32 %v1427, %v1467
          %v1519 = vxor.u32 %v1518, 2147483648
          %v1520 = vmul.f32 %v1519, 1.442695
          %v1521 = vpow.pop %v1520
          %v1522 = vadd.f32 %v1521, 1.0
          %v1523 = vrcp.pop %v1522
          %v1524 = vmul.f32 1.0, %v1523
          %v1525 = vadd.f32 %v1506, %v1199
          %v1526 = vmul.f32 %v1517, %v1525
          %v1527 = vadd.f32 %v1428, %v1526
          %v1528 = vtanh.pop %v1527
          %v1529 = vsub.f32 %v1423, %v1528
          %v1530 = vmul.f32 %v1524, %v1529
          %v1531 = vadd.f32 %v1528, %v1530
          %v1532 = vtanh.pop %v1531
          %v1533 = vmax.f32 %v1425, %v1532
          %v1534 = vld [vmem:[#allocation4 + $0x60] sm:$0xff]
          %v1535 = vld [vmem:[#allocation4 + $0x68] sm:$0xff]
          %v1536 = vld [vmem:[#allocation4 + $0x70] sm:$0xff]
          %v1537 = vpack.c.bf16 %v1531, %v1531
          %1538 = vmatprep.subr.bf16.mxu0 %v1053
          %1539 = vmatpush1.bf16.msra.mxu0 %v1052
          %1540 = vmatprep.subr.bf16.mxu0 %v1056
          %1541 = vmatpush1.bf16.msra.mxu0 %v1055
          %1542 = vmatprep.subr.bf16.mxu0 %v1059
          %1543 = vmatpush1.bf16.msra.mxu0 %v1058
          %1544 = vmatprep.subr.bf16.mxu0 %v1062
          %1545 = vmatpush1.bf16.msra.mxu0 %v1061
          %1546 = vmatprep.subr.bf16.mxu0 %v1065
          %1547 = vmatpush1.bf16.msra.mxu0 %v1064
          %1548 = vmatprep.subr.bf16.mxu0 %v1068
          %1549 = vmatpush1.bf16.msra.mxu0 %v1067
          %1550 = vmatprep.subr.bf16.mxu0 %v1071
          %1551 = vmatpush1.bf16.msra.mxu0 %v1070
          %1552 = vmatprep.subr.bf16.mxu0 %v1074
          %1553 = vmatpush1.bf16.msra.mxu0 %v1073
          %1554 = vmatprep.subr.bf16.mxu0 0
          %1555 = vmatpush1.bf16.msra.mxu0 0
          %1556 = vmatprep.subr.bf16.mxu0 0
          %1557 = vmatpush1.bf16.msra.mxu0 0
          %1558 = vmatprep.subr.bf16.mxu0 0
          %1559 = vmatpush1.bf16.msra.mxu0 0
          %1560 = vmatprep.subr.bf16.mxu0 0
          %1561 = vmatpush1.bf16.msra.mxu0 0
          %1562 = vmatprep.subr.bf16.mxu0 0
          %1563 = vmatpush1.bf16.msra.mxu0 0
          %1564 = vmatprep.subr.bf16.mxu0 0
          %1565 = vmatpush1.bf16.msra.mxu0 0
          %1566 = vmatprep.subr.bf16.mxu0 0
          %1567 = vmatpush1.bf16.msra.mxu0 0
          %1568 = vmatprep.subr.bf16.mxu0 0
          %1569 = vmatpush1.bf16.msra.mxu0 0
          %1570 = vmatprep.mubr.bf16.mxu0 0
          %1571 = vmatmul.mubr.bf16.gmra.mrb[0].mxu0 %v1537
          %v1572 = vpop.f32.mrb[0].mxu0
          %v1573 = vadd.f32 0.0, %v1572
          %v1574 = vpop.f32.mrb[0].mxu0
          %v1575 = vadd.f32 0.0, %v1574
          %v1576 = vpop.f32.mrb[0].mxu0
          %v1577 = vpop.f32.mrb[0].mxu0
          %1578 = vdwg.mxu0
          %1579 = vmatprep.subr.bf16.mxu0 0
          %1580 = vmatpush1.bf16.msra.mxu0 %v1054
          %1581 = vmatprep.subr.bf16.mxu0 0
          %1582 = vmatpush1.bf16.msra.mxu0 %v1057
          %1583 = vmatprep.subr.bf16.mxu0 0
          %1584 = vmatpush1.bf16.msra.mxu0 %v1060
          %1585 = vmatprep.subr.bf16.mxu0 0
          %1586 = vmatpush1.bf16.msra.mxu0 %v1063
          %1587 = vmatprep.subr.bf16.mxu0 0
          %1588 = vmatpush1.bf16.msra.mxu0 %v1066
          %1589 = vmatprep.subr.bf16.mxu0 0
          %1590 = vmatpush1.bf16.msra.mxu0 %v1069
          %1591 = vmatprep.subr.bf16.mxu0 0
          %1592 = vmatpush1.bf16.msra.mxu0 %v1072
          %1593 = vmatprep.subr.bf16.mxu0 0
          %1594 = vmatpush1.bf16.msra.mxu0 %v1075
          %1595 = vmatprep.subr.bf16.mxu0 0
          %1596 = vmatpush1.bf16.msra.mxu0 0
          %1597 = vmatprep.subr.bf16.mxu0 0
          %1598 = vmatpush1.bf16.msra.mxu0 0
          %1599 = vmatprep.subr.bf16.mxu0 0
          %1600 = vmatpush1.bf16.msra.mxu0 0
          %1601 = vmatprep.subr.bf16.mxu0 0
          %1602 = vmatpush1.bf16.msra.mxu0 0
          %1603 = vmatprep.subr.bf16.mxu0 0
          %1604 = vmatpush1.bf16.msra.mxu0 0
          %1605 = vmatprep.subr.bf16.mxu0 0
          %1606 = vmatpush1.bf16.msra.mxu0 0
          %1607 = vmatprep.subr.bf16.mxu0 0
          %1608 = vmatpush1.bf16.msra.mxu0 0
          %1609 = vmatprep.subr.bf16.mxu0 0
          %1610 = vmatpush1.bf16.msra.mxu0 0
          %1611 = vmatprep.mubr.bf16.mxu0 0
          %1612 = vmatmul.mubr.bf16.gmra.mrb[0].mxu0 %v1537
          %v1613 = vpop.f32.mrb[0].mxu0
          %v1614 = vadd.f32 0.0, %v1613
          %v1615 = vpop.f32.mrb[0].mxu0
          %v1616 = vpop.f32.mrb[0].mxu0
          %v1617 = vpop.f32.mrb[0].mxu0
          %1618 = vdwg.mxu0
          %v1619 = vadd.f32 %v1534, %v1573
          %v1620 = vxor.u32 %v1619, 2147483648
          %v1621 = vmul.f32 %v1620, 1.442695
          %v1622 = vpow.pop %v1621
          %v1623 = vadd.f32 %v1622, 1.0
          %v1624 = vrcp.pop %v1623
          %v1625 = vmul.f32 1.0, %v1624
          %v1626 = vadd.f32 %v1535, %v1575
          %v1627 = vxor.u32 %v1626, 2147483648
          %v1628 = vmul.f32 %v1627, 1.442695
          %v1629 = vpow.pop %v1628
          %v1630 = vadd.f32 %v1629, 1.0
          %v1631 = vrcp.pop %v1630
          %v1632 = vmul.f32 1.0, %v1631
          %v1633 = vadd.f32 %v1614, %v1199
          %v1634 = vmul.f32 %v1625, %v1633
          %v1635 = vadd.f32 %v1536, %v1634
          %v1636 = vtanh.pop %v1635
          %v1637 = vsub.f32 %v1531, %v1636
          %v1638 = vmul.f32 %v1632, %v1637
          %v1639 = vadd.f32 %v1636, %v1638
          %v1640 = vtanh.pop %v1639
          %v1641 = vmax.f32 %v1533, %v1640
          %v1642 = vld [vmem:[#allocation4 + $0x78] sm:$0xff]
          %v1643 = vld [vmem:[#allocation4 + $0x80] sm:$0xff]
          %v1644 = vld [vmem:[#allocation4 + $0x88] sm:$0xff]
          %v1645 = vpack.c.bf16 %v1639, %v1639
          %1646 = vmatprep.subr.bf16.mxu0 %v1053
          %1647 = vmatpush1.bf16.msra.mxu0 %v1052
          %1648 = vmatprep.subr.bf16.mxu0 %v1056
          %1649 = vmatpush1.bf16.msra.mxu0 %v1055
          %1650 = vmatprep.subr.bf16.mxu0 %v1059
          %1651 = vmatpush1.bf16.msra.mxu0 %v1058
          %1652 = vmatprep.subr.bf16.mxu0 %v1062
          %1653 = vmatpush1.bf16.msra.mxu0 %v1061
          %1654 = vmatprep.subr.bf16.mxu0 %v1065
          %1655 = vmatpush1.bf16.msra.mxu0 %v1064
          %1656 = vmatprep.subr.bf16.mxu0 %v1068
          %1657 = vmatpush1.bf16.msra.mxu0 %v1067
          %1658 = vmatprep.subr.bf16.mxu0 %v1071
          %1659 = vmatpush1.bf16.msra.mxu0 %v1070
          %1660 = vmatprep.subr.bf16.mxu0 %v1074
          %1661 = vmatpush1.bf16.msra.mxu0 %v1073
          %1662 = vmatprep.subr.bf16.mxu0 0
          %1663 = vmatpush1.bf16.msra.mxu0 0
          %1664 = vmatprep.subr.bf16.mxu0 0
          %1665 = vmatpush1.bf16.msra.mxu0 0
          %1666 = vmatprep.subr.bf16.mxu0 0
          %1667 = vmatpush1.bf16.msra.mxu0 0
          %1668 = vmatprep.subr.bf16.mxu0 0
          %1669 = vmatpush1.bf16.msra.mxu0 0
          %1670 = vmatprep.subr.bf16.mxu0 0
          %1671 = vmatpush1.bf16.msra.mxu0 0
          %1672 = vmatprep.subr.bf16.mxu0 0
          %1673 = vmatpush1.bf16.msra.mxu0 0
          %1674 = vmatprep.subr.bf16.mxu0 0
          %1675 = vmatpush1.bf16.msra.mxu0 0
          %1676 = vmatprep.subr.bf16.mxu0 0
          %1677 = vmatpush1.bf16.msra.mxu0 0
          %1678 = vmatprep.mubr.bf16.mxu0 0
          %1679 = vmatmul.mubr.bf16.gmra.mrb[0].mxu0 %v1645
          %v1680 = vpop.f32.mrb[0].mxu0
          %v1681 = vadd.f32 0.0, %v1680
          %v1682 = vpop.f32.mrb[0].mxu0
          %v1683 = vadd.f32 0.0, %v1682
          %v1684 = vpop.f32.mrb[0].mxu0
          %v1685 = vpop.f32.mrb[0].mxu0
          %1686 = vdwg.mxu0
          %1687 = vmatprep.subr.bf16.mxu0 0
          %1688 = vmatpush1.bf16.msra.mxu0 %v1054
          %1689 = vmatprep.subr.bf16.mxu0 0
          %1690 = vmatpush1.bf16.msra.mxu0 %v1057
          %1691 = vmatprep.subr.bf16.mxu0 0
          %1692 = vmatpush1.bf16.msra.mxu0 %v1060
          %1693 = vmatprep.subr.bf16.mxu0 0
          %1694 = vmatpush1.bf16.msra.mxu0 %v1063
          %1695 = vmatprep.subr.bf16.mxu0 0
          %1696 = vmatpush1.bf16.msra.mxu0 %v1066
          %1697 = vmatprep.subr.bf16.mxu0 0
          %1698 = vmatpush1.bf16.msra.mxu0 %v1069
          %1699 = vmatprep.subr.bf16.mxu0 0
          %1700 = vmatpush1.bf16.msra.mxu0 %v1072
          %1701 = vmatprep.subr.bf16.mxu0 0
          %1702 = vmatpush1.bf16.msra.mxu0 %v1075
          %1703 = vmatprep.subr.bf16.mxu0 0
          %1704 = vmatpush1.bf16.msra.mxu0 0
          %1705 = vmatprep.subr.bf16.mxu0 0
          %1706 = vmatpush1.bf16.msra.mxu0 0
          %1707 = vmatprep.subr.bf16.mxu0 0
          %1708 = vmatpush1.bf16.msra.mxu0 0
          %1709 = vmatprep.subr.bf16.mxu0 0
          %1710 = vmatpush1.bf16.msra.mxu0 0
          %1711 = vmatprep.subr.bf16.mxu0 0
          %1712 = vmatpush1.bf16.msra.mxu0 0
          %1713 = vmatprep.subr.bf16.mxu0 0
          %1714 = vmatpush1.bf16.msra.mxu0 0
          %1715 = vmatprep.subr.bf16.mxu0 0
          %1716 = vmatpush1.bf16.msra.mxu0 0
          %1717 = vmatprep.subr.bf16.mxu0 0
          %1718 = vmatpush1.bf16.msra.mxu0 0
          %1719 = vmatprep.mubr.bf16.mxu0 0
          %1720 = vmatmul.mubr.bf16.gmra.mrb[0].mxu0 %v1645
          %v1721 = vpop.f32.mrb[0].mxu0
          %v1722 = vadd.f32 0.0, %v1721
          %v1723 = vpop.f32.mrb[0].mxu0
          %v1724 = vpop.f32.mrb[0].mxu0
          %v1725 = vpop.f32.mrb[0].mxu0
          %1726 = vdwg.mxu0
          %v1727 = vadd.f32 %v1642, %v1681
          %v1728 = vxor.u32 %v1727, 2147483648
          %v1729 = vmul.f32 %v1728, 1.442695
          %v1730 = vpow.pop %v1729
          %v1731 = vadd.f32 %v1730, 1.0
          %v1732 = vrcp.pop %v1731
          %v1733 = vmul.f32 1.0, %v1732
          %v1734 = vadd.f32 %v1643, %v1683
          %v1735 = vxor.u32 %v1734, 2147483648
          %v1736 = vmul.f32 %v1735, 1.442695
          %v1737 = vpow.pop %v1736
          %v1738 = vadd.f32 %v1737, 1.0
          %v1739 = vrcp.pop %v1738
          %v1740 = vmul.f32 1.0, %v1739
          %v1741 = vadd.f32 %v1722, %v1199
          %v1742 = vmul.f32 %v1733, %v1741
          %v1743 = vadd.f32 %v1644, %v1742
          %v1744 = vtanh.pop %v1743
          %v1745 = vsub.f32 %v1639, %v1744
          %v1746 = vmul.f32 %v1740, %v1745
          %v1747 = vadd.f32 %v1744, %v1746
          %v1748 = vtanh.pop %v1747
          %v1749 = vmax.f32 %v1641, %v1748
          %v1750 = vld [vmem:[#allocation4 + $0x90] sm:$0xff]
          %v1751 = vld [vmem:[#allocation4 + $0x98] sm:$0xff]
          %v1752 = vld [vmem:[#allocation4 + $0xa0] sm:$0xff]
          %v1753 = vpack.c.bf16 %v1747, %v1747
          %1754 = vmatprep.subr.bf16.mxu0 %v1053
          %1755 = vmatpush1.bf16.msra.mxu0 %v1052
          %1756 = vmatprep.subr.bf16.mxu0 %v1056
          %1757 = vmatpush1.bf16.msra.mxu0 %v1055
          %1758 = vmatprep.subr.bf16.mxu0 %v1059
          %1759 = vmatpush1.bf16.msra.mxu0 %v1058
          %1760 = vmatprep.subr.bf16.mxu0 %v1062
          %1761 = vmatpush1.bf16.msra.mxu0 %v1061
          %1762 = vmatprep.subr.bf16.mxu0 %v1065
          %1763 = vmatpush1.bf16.msra.mxu0 %v1064
          %1764 = vmatprep.subr.bf16.mxu0 %v1068
          %1765 = vmatpush1.bf16.msra.mxu0 %v1067
          %1766 = vmatprep.subr.bf16.mxu0 %v1071
          %1767 = vmatpush1.bf16.msra.mxu0 %v1070
          %1768 = vmatprep.subr.bf16.mxu0 %v1074
          %1769 = vmatpush1.bf16.msra.mxu0 %v1073
          %1770 = vmatprep.subr.bf16.mxu0 0
          %1771 = vmatpush1.bf16.msra.mxu0 0
          %1772 = vmatprep.subr.bf16.mxu0 0
          %1773 = vmatpush1.bf16.msra.mxu0 0
          %1774 = vmatprep.subr.bf16.mxu0 0
          %1775 = vmatpush1.bf16.msra.mxu0 0
          %1776 = vmatprep.subr.bf16.mxu0 0
          %1777 = vmatpush1.bf16.msra.mxu0 0
          %1778 = vmatprep.subr.bf16.mxu0 0
          %1779 = vmatpush1.bf16.msra.mxu0 0
          %1780 = vmatprep.subr.bf16.mxu0 0
          %1781 = vmatpush1.bf16.msra.mxu0 0
          %1782 = vmatprep.subr.bf16.mxu0 0
          %1783 = vmatpush1.bf16.msra.mxu0 0
          %1784 = vmatprep.subr.bf16.mxu0 0
          %1785 = vmatpush1.bf16.msra.mxu0 0
          %1786 = vmatprep.mubr.bf16.mxu0 0
          %1787 = vmatmul.mubr.bf16.gmra.mrb[0].mxu0 %v1753
          %v1788 = vpop.f32.mrb[0].mxu0
          %v1789 = vadd.f32 0.0, %v1788
          %v1790 = vpop.f32.mrb[0].mxu0
          %v1791 = vadd.f32 0.0, %v1790
          %v1792 = vpop.f32.mrb[0].mxu0
          %v1793 = vpop.f32.mrb[0].mxu0
          %1794 = vdwg.mxu0
          %1795 = vmatprep.subr.bf16.mxu0 0
          %1796 = vmatpush1.bf16.msra.mxu0 %v1054
          %1797 = vmatprep.subr.bf16.mxu0 0
          %1798 = vmatpush1.bf16.msra.mxu0 %v1057
          %1799 = vmatprep.subr.bf16.mxu0 0
          %1800 = vmatpush1.bf16.msra.mxu0 %v1060
          %1801 = vmatprep.subr.bf16.mxu0 0
          %1802 = vmatpush1.bf16.msra.mxu0 %v1063
          %1803 = vmatprep.subr.bf16.mxu0 0
          %1804 = vmatpush1.bf16.msra.mxu0 %v1066
          %1805 = vmatprep.subr.bf16.mxu0 0
          %1806 = vmatpush1.bf16.msra.mxu0 %v1069
          %1807 = vmatprep.subr.bf16.mxu0 0
          %1808 = vmatpush1.bf16.msra.mxu0 %v1072
          %1809 = vmatprep.subr.bf16.mxu0 0
          %1810 = vmatpush1.bf16.msra.mxu0 %v1075
          %1811 = vmatprep.subr.bf16.mxu0 0
          %1812 = vmatpush1.bf16.msra.mxu0 0
          %1813 = vmatprep.subr.bf16.mxu0 0
          %1814 = vmatpush1.bf16.msra.mxu0 0
          %1815 = vmatprep.subr.bf16.mxu0 0
          %1816 = vmatpush1.bf16.msra.mxu0 0
          %1817 = vmatprep.subr.bf16.mxu0 0
          %1818 = vmatpush1.bf16.msra.mxu0 0
          %1819 = vmatprep.subr.bf16.mxu0 0
          %1820 = vmatpush1.bf16.msra.mxu0 0
          %1821 = vmatprep.subr.bf16.mxu0 0
          %1822 = vmatpush1.bf16.msra.mxu0 0
          %1823 = vmatprep.subr.bf16.mxu0 0
          %1824 = vmatpush1.bf16.msra.mxu0 0
          %1825 = vmatprep.subr.bf16.mxu0 0
          %1826 = vmatpush1.bf16.msra.mxu0 0
          %1827 = vmatprep.mubr.bf16.mxu0 0
          %1828 = vmatmul.mubr.bf16.gmra.mrb[0].mxu0 %v1753
          %v1829 = vpop.f32.mrb[0].mxu0
          %v1830 = vadd.f32 0.0, %v1829
          %v1831 = vpop.f32.mrb[0].mxu0
          %v1832 = vpop.f32.mrb[0].mxu0
          %v1833 = vpop.f32.mrb[0].mxu0
          %1834 = vdwg.mxu0
          %v1835 = vadd.f32 %v1750, %v1789
          %v1836 = vxor.u32 %v1835, 2147483648
          %v1837 = vmul.f32 %v1836, 1.442695
          %v1838 = vpow.pop %v1837
          %v1839 = vadd.f32 %v1838, 1.0
          %v1840 = vrcp.pop %v1839
          %v1841 = vmul.f32 1.0, %v1840
          %v1842 = vadd.f32 %v1751, %v1791
          %v1843 = vxor.u32 %v1842, 2147483648
          %v1844 = vmul.f32 %v1843, 1.442695
          %v1845 = vpow.pop %v1844
          %v1846 = vadd.f32 %v1845, 1.0
          %v1847 = vrcp.pop %v1846
          %v1848 = vmul.f32 1.0, %v1847
          %v1849 = vadd.f32 %v1830, %v1199
          %v1850 = vmul.f32 %v1841, %v1849
          %v1851 = vadd.f32 %v1752, %v1850
          %v1852 = vtanh.pop %v1851
          %v1853 = vsub.f32 %v1747, %v1852
          %v1854 = vmul.f32 %v1848, %v1853
          %v1855 = vadd.f32 %v1852, %v1854
          %v1856 = vtanh.pop %v1855
          %v1857 = vmax.f32 %v1749, %v1856
          %v1858 = vld [vmem:[#allocation4 + $0xa8] sm:$0xff]
          %v1859 = vld [vmem:[#allocation4 + $0xb0] sm:$0xff]
          %v1860 = vld [vmem:[#allocation4 + $0xb8] sm:$0xff]
          %v1861 = vpack.c.bf16 %v1855, %v1855
          %1862 = vmatprep.subr.bf16.mxu0 %v1053
          %1863 = vmatpush1.bf16.msra.mxu0 %v1052
          %1864 = vmatprep.subr.bf16.mxu0 %v1056
          %1865 = vmatpush1.bf16.msra.mxu0 %v1055
          %1866 = vmatprep.subr.bf16.mxu0 %v1059
          %1867 = vmatpush1.bf16.msra.mxu0 %v1058
          %1868 = vmatprep.subr.bf16.mxu0 %v1062
          %1869 = vmatpush1.bf16.msra.mxu0 %v1061
          %1870 = vmatprep.subr.bf16.mxu0 %v1065
          %1871 = vmatpush1.bf16.msra.mxu0 %v1064
          %1872 = vmatprep.subr.bf16.mxu0 %v1068
          %1873 = vmatpush1.bf16.msra.mxu0 %v1067
          %1874 = vmatprep.subr.bf16.mxu0 %v1071
          %1875 = vmatpush1.bf16.msra.mxu0 %v1070
          %1876 = vmatprep.subr.bf16.mxu0 %v1074
          %1877 = vmatpush1.bf16.msra.mxu0 %v1073
          %1878 = vmatprep.subr.bf16.mxu0 0
          %1879 = vmatpush1.bf16.msra.mxu0 0
          %1880 = vmatprep.subr.bf16.mxu0 0
          %1881 = vmatpush1.bf16.msra.mxu0 0
          %1882 = vmatprep.subr.bf16.mxu0 0
          %1883 = vmatpush1.bf16.msra.mxu0 0
          %1884 = vmatprep.subr.bf16.mxu0 0
          %1885 = vmatpush1.bf16.msra.mxu0 0
          %1886 = vmatprep.subr.bf16.mxu0 0
          %1887 = vmatpush1.bf16.msra.mxu0 0
          %1888 = vmatprep.subr.bf16.mxu0 0
          %1889 = vmatpush1.bf16.msra.mxu0 0
          %1890 = vmatprep.subr.bf16.mxu0 0
          %1891 = vmatpush1.bf16.msra.mxu0 0
          %1892 = vmatprep.subr.bf16.mxu0 0
          %1893 = vmatpush1.bf16.msra.mxu0 0
          %1894 = vmatprep.mubr.bf16.mxu0 0
          %1895 = vmatmul.mubr.bf16.gmra.mrb[0].mxu0 %v1861
          %v1896 = vpop.f32.mrb[0].mxu0
          %v1897 = vadd.f32 0.0, %v1896
          %v1898 = vpop.f32.mrb[0].mxu0
          %v1899 = vadd.f32 0.0, %v1898
          %v1900 = vpop.f32.mrb[0].mxu0
          %v1901 = vpop.f32.mrb[0].mxu0
          %1902 = vdwg.mxu0
          %1903 = vmatprep.subr.bf16.mxu0 0
          %1904 = vmatpush1.bf16.msra.mxu0 %v1054
          %1905 = vmatprep.subr.bf16.mxu0 0
          %1906 = vmatpush1.bf16.msra.mxu0 %v1057
          %1907 = vmatprep.subr.bf16.mxu0 0
          %1908 = vmatpush1.bf16.msra.mxu0 %v1060
          %1909 = vmatprep.subr.bf16.mxu0 0
          %1910 = vmatpush1.bf16.msra.mxu0 %v1063
          %1911 = vmatprep.subr.bf16.mxu0 0
          %1912 = vmatpush1.bf16.msra.mxu0 %v1066
          %1913 = vmatprep.subr.bf16.mxu0 0
          %1914 = vmatpush1.bf16.msra.mxu0 %v1069
          %1915 = vmatprep.subr.bf16.mxu0 0
          %1916 = vmatpush1.bf16.msra.mxu0 %v1072
          %1917 = vmatprep.subr.bf16.mxu0 0
          %1918 = vmatpush1.bf16.msra.mxu0 %v1075
          %1919 = vmatprep.subr.bf16.mxu0 0
          %1920 = vmatpush1.bf16.msra.mxu0 0
          %1921 = vmatprep.subr.bf16.mxu0 0
          %1922 = vmatpush1.bf16.msra.mxu0 0
          %1923 = vmatprep.subr.bf16.mxu0 0
          %1924 = vmatpush1.bf16.msra.mxu0 0
          %1925 = vmatprep.subr.bf16.mxu0 0
          %1926 = vmatpush1.bf16.msra.mxu0 0
          %1927 = vmatprep.subr.bf16.mxu0 0
          %1928 = vmatpush1.bf16.msra.mxu0 0
          %1929 = vmatprep.subr.bf16.mxu0 0
          %1930 = vmatpush1.bf16.msra.mxu0 0
          %1931 = vmatprep.subr.bf16.mxu0 0
          %1932 = vmatpush1.bf16.msra.mxu0 0
          %1933 = vmatprep.subr.bf16.mxu0 0
          %1934 = vmatpush1.bf16.msra.mxu0 0
          %1935 = vmatprep.mubr.bf16.mxu0 0
          %1936 = vmatmul.mubr.bf16.gmra.mrb[0].mxu0 %v1861
          %v1937 = vpop.f32.mrb[0].mxu0
          %v1938 = vadd.f32 0.0, %v1937
          %v1939 = vpop.f32.mrb[0].mxu0
          %v1940 = vpop.f32.mrb[0].mxu0
          %v1941 = vpop.f32.mrb[0].mxu0
          %1942 = vdwg.mxu0
          %v1943 = vadd.f32 %v1858, %v1897
          %v1944 = vxor.u32 %v1943, 2147483648
          %v1945 = vmul.f32 %v1944, 1.442695
          %v1946 = vpow.pop %v1945
          %v1947 = vadd.f32 %v1946, 1.0
          %v1948 = vrcp.pop %v1947
          %v1949 = vmul.f32 1.0, %v1948
          %v1950 = vadd.f32 %v1859, %v1899
          %v1951 = vxor.u32 %v1950, 2147483648
          %v1952 = vmul.f32 %v1951, 1.442695
          %v1953 = vpow.pop %v1952
          %v1954 = vadd.f32 %v1953, 1.0
          %v1955 = vrcp.pop %v1954
          %v1956 = vmul.f32 1.0, %v1955
          %v1957 = vadd.f32 %v1938, %v1199
          %v1958 = vmul.f32 %v1949, %v1957
          %v1959 = vadd.f32 %v1860, %v1958
          %v1960 = vtanh.pop %v1959
          %v1961 = vsub.f32 %v1855, %v1960
          %v1962 = vmul.f32 %v1956, %v1961
          %v1963 = vadd.f32 %v1960, %v1962
          %v1964 = vtanh.pop %v1963
          %v1965 = vmax.f32 %v1857, %v1964
          %1966 = vst [vmem:[#allocation2] sm:$0xff] %v1963
          %1967 = vst [vmem:[#allocation3] sm:$0xff] %v1965
        $region132: #{tpu_custom_call.1} parent=71 // pred_fallthru
          _
        %p1968 = scmp.eq.s32.totalorder %s43, 1
        // Predicated region
        $region133: #{tpu_custom_call.1} parent=71 // pred_check
          %p1969 = pneg %p1968
        $region134: #{tpu_custom_call.1} parent=71 // pred_check_branch
          %1971 = sbr.rel (%p1969) target = $region136
        $region135: #{tpu_custom_call.1} parent=71 // pred_region
          %v1972 = vld [vmem:[#allocation2] sm:$0xff]
          %v1973 = vld [vmem:[#allocation3] sm:$0xff]
          %v1974 = vld [vmem:[#allocation4] sm:$0xff]
          %v1975 = vld [vmem:[#allocation4 + $0x8] sm:$0xff]
          %v1976 = vld [vmem:[#allocation4 + $0x10] sm:$0xff]
          %v1977 = vpack.c.bf16 %v1972, %v1972
          %v2010 = vunpack.c.l.b16 %v929
          %v2011 = vunpack.c.h.b16 %v929
          %v2012 = vunpack.c.l.b16 %v930
          %v2013 = vunpack.c.l.b16 %v931
          %v2014 = vunpack.c.h.b16 %v931
          %v2015 = vunpack.c.l.b16 %v932
          %v2016 = vunpack.c.l.b16 %v933
          %v2017 = vunpack.c.h.b16 %v933
          %v2018 = vunpack.c.l.b16 %v934
          %v2019 = vunpack.c.l.b16 %v935
          %v2020 = vunpack.c.h.b16 %v935
          %v2021 = vunpack.c.l.b16 %v936
          %v2022 = vunpack.c.l.b16 %v937
          %v2023 = vunpack.c.h.b16 %v937
          %v2024 = vunpack.c.l.b16 %v938
          %v2025 = vunpack.c.l.b16 %v939
          %v2026 = vunpack.c.h.b16 %v939
          %v2027 = vunpack.c.l.b16 %v940
          %v2028 = vunpack.c.l.b16 %v941
          %v2029 = vunpack.c.h.b16 %v941
          %v2030 = vunpack.c.l.b16 %v942
          %v2031 = vunpack.c.l.b16 %v943
          %v2032 = vunpack.c.h.b16 %v943
          %v2033 = vunpack.c.l.b16 %v944
          %v2034 = vunpack.c.l.b16 %v945
          %v2035 = vunpack.c.h.b16 %v945
          %v2036 = vunpack.c.l.b16 %v946
          %v2037 = vunpack.c.l.b16 %v947
          %v2038 = vunpack.c.h.b16 %v947
          %v2039 = vunpack.c.l.b16 %v948
          %v2040 = vunpack.c.l.b16 %v949
          %v2041 = vunpack.c.h.b16 %v949
          %v2042 = vunpack.c.l.b16 %v950
          %v2043 = vunpack.c.l.b16 %v951
          %v2044 = vunpack.c.h.b16 %v951
          %v2045 = vunpack.c.l.b16 %v952
          %v2046 = vunpack.c.l.b16 %v953
          %v2047 = vunpack.c.h.b16 %v953
          %v2048 = vunpack.c.l.b16 %v954
          %v2049 = vunpack.c.l.b16 %v955
          %v2050 = vunpack.c.h.b16 %v955
          %v2051 = vunpack.c.l.b16 %v956
          %v2052 = vunpack.c.l.b16 %v957
          %v2053 = vunpack.c.h.b16 %v957
          %v2054 = vunpack.c.l.b16 %v958
          %v2055 = vunpack.c.l.b16 %v959
          %v2056 = vunpack.c.h.b16 %v959
          %v2057 = vunpack.c.l.b16 %v960
          %v2058 = vpack.c.b16 %v2013, %v2010
          %v2059 = vpack.c.b16 %v2014, %v2011
          %v2060 = vpack.c.b16 %v2015, %v2012
          %v2061 = vpack.c.b16 %v2019, %v2016
          %v2062 = vpack.c.b16 %v2020, %v2017
          %v2063 = vpack.c.b16 %v2021, %v2018
          %v2064 = vpack.c.b16 %v2025, %v2022
          %v2065 = vpack.c.b16 %v2026, %v2023
          %v2066 = vpack.c.b16 %v2027, %v2024
          %v2067 = vpack.c.b16 %v2031, %v2028
          %v2068 = vpack.c.b16 %v2032, %v2029
          %v2069 = vpack.c.b16 %v2033, %v2030
          %v2070 = vpack.c.b16 %v2037, %v2034
          %v2071 = vpack.c.b16 %v2038, %v2035
          %v2072 = vpack.c.b16 %v2039, %v2036
          %v2073 = vpack.c.b16 %v2043, %v2040
          %v2074 = vpack.c.b16 %v2044, %v2041
          %v2075 = vpack.c.b16 %v2045, %v2042
          %v2076 = vpack.c.b16 %v2049, %v2046
          %v2077 = vpack.c.b16 %v2050, %v2047
          %v2078 = vpack.c.b16 %v2051, %v2048
          %v2079 = vpack.c.b16 %v2055, %v2052
          %v2080 = vpack.c.b16 %v2056, %v2053
          %v2081 = vpack.c.b16 %v2057, %v2054
          %2106 = vmatprep.subr.bf16.mxu0 %v2059
          %2107 = vmatpush1.bf16.msra.mxu0 %v2058
          %2108 = vmatprep.subr.bf16.mxu0 %v2062
          %2109 = vmatpush1.bf16.msra.mxu0 %v2061
          %2110 = vmatprep.subr.bf16.mxu0 %v2065
          %2111 = vmatpush1.bf16.msra.mxu0 %v2064
          %2112 = vmatprep.subr.bf16.mxu0 %v2068
          %2113 = vmatpush1.bf16.msra.mxu0 %v2067
          %2114 = vmatprep.subr.bf16.mxu0 %v2071
          %2115 = vmatpush1.bf16.msra.mxu0 %v2070
          %2116 = vmatprep.subr.bf16.mxu0 %v2074
          %2117 = vmatpush1.bf16.msra.mxu0 %v2073
          %2118 = vmatprep.subr.bf16.mxu0 %v2077
          %2119 = vmatpush1.bf16.msra.mxu0 %v2076
          %2120 = vmatprep.subr.bf16.mxu0 %v2080
          %2121 = vmatpush1.bf16.msra.mxu0 %v2079
          %2122 = vmatprep.subr.bf16.mxu0 0
          %2123 = vmatpush1.bf16.msra.mxu0 0
          %2124 = vmatprep.subr.bf16.mxu0 0
          %2125 = vmatpush1.bf16.msra.mxu0 0
          %2126 = vmatprep.subr.bf16.mxu0 0
          %2127 = vmatpush1.bf16.msra.mxu0 0
          %2128 = vmatprep.subr.bf16.mxu0 0
          %2129 = vmatpush1.bf16.msra.mxu0 0
          %2130 = vmatprep.subr.bf16.mxu0 0
          %2131 = vmatpush1.bf16.msra.mxu0 0
          %2132 = vmatprep.subr.bf16.mxu0 0
          %2133 = vmatpush1.bf16.msra.mxu0 0
          %2134 = vmatprep.subr.bf16.mxu0 0
          %2135 = vmatpush1.bf16.msra.mxu0 0
          %2136 = vmatprep.subr.bf16.mxu0 0
          %2137 = vmatpush1.bf16.msra.mxu0 0
          %2138 = vmatprep.mubr.bf16.mxu0 0
          %2139 = vmatmul.mubr.bf16.gmra.mrb[0].mxu0 %v1977
          %v2140 = vpop.f32.mrb[0].mxu0
          %v2141 = vadd.f32 0.0, %v2140
          %v2142 = vpop.f32.mrb[0].mxu0
          %v2143 = vadd.f32 0.0, %v2142
          %v2144 = vpop.f32.mrb[0].mxu0
          %v2145 = vpop.f32.mrb[0].mxu0
          %2146 = vdwg.mxu0
          %2147 = vmatprep.subr.bf16.mxu0 0
          %2148 = vmatpush1.bf16.msra.mxu0 %v2060
          %2149 = vmatprep.subr.bf16.mxu0 0
          %2150 = vmatpush1.bf16.msra.mxu0 %v2063
          %2151 = vmatprep.subr.bf16.mxu0 0
          %2152 = vmatpush1.bf16.msra.mxu0 %v2066
          %2153 = vmatprep.subr.bf16.mxu0 0
          %2154 = vmatpush1.bf16.msra.mxu0 %v2069
          %2155 = vmatprep.subr.bf16.mxu0 0
          %2156 = vmatpush1.bf16.msra.mxu0 %v2072
          %2157 = vmatprep.subr.bf16.mxu0 0
          %2158 = vmatpush1.bf16.msra.mxu0 %v2075
          %2159 = vmatprep.subr.bf16.mxu0 0
          %2160 = vmatpush1.bf16.msra.mxu0 %v2078
          %2161 = vmatprep.subr.bf16.mxu0 0
          %2162 = vmatpush1.bf16.msra.mxu0 %v2081
          %2163 = vmatprep.subr.bf16.mxu0 0
          %2164 = vmatpush1.bf16.msra.mxu0 0
          %2165 = vmatprep.subr.bf16.mxu0 0
          %2166 = vmatpush1.bf16.msra.mxu0 0
          %2167 = vmatprep.subr.bf16.mxu0 0
          %2168 = vmatpush1.bf16.msra.mxu0 0
          %2169 = vmatprep.subr.bf16.mxu0 0
          %2170 = vmatpush1.bf16.msra.mxu0 0
          %2171 = vmatprep.subr.bf16.mxu0 0
          %2172 = vmatpush1.bf16.msra.mxu0 0
          %2173 = vmatprep.subr.bf16.mxu0 0
          %2174 = vmatpush1.bf16.msra.mxu0 0
          %2175 = vmatprep.subr.bf16.mxu0 0
          %2176 = vmatpush1.bf16.msra.mxu0 0
          %2177 = vmatprep.subr.bf16.mxu0 0
          %2178 = vmatpush1.bf16.msra.mxu0 0
          %2179 = vmatprep.mubr.bf16.mxu0 0
          %2180 = vmatmul.mubr.bf16.gmra.mrb[0].mxu0 %v1977
          %v2181 = vpop.f32.mrb[0].mxu0
          %v2182 = vadd.f32 0.0, %v2181
          %v2183 = vpop.f32.mrb[0].mxu0
          %v2184 = vpop.f32.mrb[0].mxu0
          %v2185 = vpop.f32.mrb[0].mxu0
          %2186 = vdwg.mxu0
          %v2187 = vadd.f32 %v1974, %v2141
          %v2188 = vxor.u32 %v2187, 2147483648
          %v2189 = vmul.f32 %v2188, 1.442695
          %v2190 = vpow.pop %v2189
          %v2191 = vadd.f32 %v2190, 1.0
          %v2192 = vrcp.pop %v2191
          %v2193 = vmul.f32 1.0, %v2192
          %v2194 = vadd.f32 %v1975, %v2143
          %v2195 = vxor.u32 %v2194, 2147483648
          %v2196 = vmul.f32 %v2195, 1.442695
          %v2197 = vpow.pop %v2196
          %v2198 = vadd.f32 %v2197, 1.0
          %v2199 = vrcp.pop %v2198
          %v2200 = vmul.f32 1.0, %v2199
          %v2202 = vlaneseq
          %v2203 = vshrl.u32 %v2202, 7
          %v2204 = vsub.s32 0, %v2203
          %v2205 = vrot.slane %v961, %v2204
          %v2207 = vadd.f32 %v2182, %v2205
          %v2208 = vmul.f32 %v2193, %v2207
          %v2209 = vadd.f32 %v1976, %v2208
          %v2210 = vtanh.pop %v2209
          %v2211 = vsub.f32 %v1972, %v2210
          %v2212 = vmul.f32 %v2200, %v2211
          %v2213 = vadd.f32 %v2210, %v2212
          %v2214 = vtanh.pop %v2213
          %v2215 = vmax.f32 %v1973, %v2214
          %s2216 = smul.u32 %s43, 8
          %p2217 = scmp.lt.s32.totalorder %s2216, 12
          %s2218 = scalar_select %p2217, 1, 0
          %v2219 = vstv %s2218
          %vm2220 = vcmp.eq.s32.totalorder %v2219, 1
          %v2221 = vsel %vm2220, %v2213, %v1972
          %v2222 = vsel %vm2220, %v2215, %v1973
          %v2223 = vld [vmem:[#allocation4 + $0x18] sm:$0xff]
          %v2224 = vld [vmem:[#allocation4 + $0x20] sm:$0xff]
          %v2225 = vld [vmem:[#allocation4 + $0x28] sm:$0xff]
          %v2226 = vpack.c.bf16 %v2221, %v2221
          %2227 = vmatprep.subr.bf16.mxu0 %v2059
          %2228 = vmatpush1.bf16.msra.mxu0 %v2058
          %2229 = vmatprep.subr.bf16.mxu0 %v2062
          %2230 = vmatpush1.bf16.msra.mxu0 %v2061
          %2231 = vmatprep.subr.bf16.mxu0 %v2065
          %2232 = vmatpush1.bf16.msra.mxu0 %v2064
          %2233 = vmatprep.subr.bf16.mxu0 %v2068
          %2234 = vmatpush1.bf16.msra.mxu0 %v2067
          %2235 = vmatprep.subr.bf16.mxu0 %v2071
          %2236 = vmatpush1.bf16.msra.mxu0 %v2070
          %2237 = vmatprep.subr.bf16.mxu0 %v2074
          %2238 = vmatpush1.bf16.msra.mxu0 %v2073
          %2239 = vmatprep.subr.bf16.mxu0 %v2077
          %2240 = vmatpush1.bf16.msra.mxu0 %v2076
          %2241 = vmatprep.subr.bf16.mxu0 %v2080
          %2242 = vmatpush1.bf16.msra.mxu0 %v2079
          %2243 = vmatprep.subr.bf16.mxu0 0
          %2244 = vmatpush1.bf16.msra.mxu0 0
          %2245 = vmatprep.subr.bf16.mxu0 0
          %2246 = vmatpush1.bf16.msra.mxu0 0
          %2247 = vmatprep.subr.bf16.mxu0 0
          %2248 = vmatpush1.bf16.msra.mxu0 0
          %2249 = vmatprep.subr.bf16.mxu0 0
          %2250 = vmatpush1.bf16.msra.mxu0 0
          %2251 = vmatprep.subr.bf16.mxu0 0
          %2252 = vmatpush1.bf16.msra.mxu0 0
          %2253 = vmatprep.subr.bf16.mxu0 0
          %2254 = vmatpush1.bf16.msra.mxu0 0
          %2255 = vmatprep.subr.bf16.mxu0 0
          %2256 = vmatpush1.bf16.msra.mxu0 0
          %2257 = vmatprep.subr.bf16.mxu0 0
          %2258 = vmatpush1.bf16.msra.mxu0 0
          %2259 = vmatprep.mubr.bf16.mxu0 0
          %2260 = vmatmul.mubr.bf16.gmra.mrb[0].mxu0 %v2226
          %v2261 = vpop.f32.mrb[0].mxu0
          %v2262 = vadd.f32 0.0, %v2261
          %v2263 = vpop.f32.mrb[0].mxu0
          %v2264 = vadd.f32 0.0, %v2263
          %v2265 = vpop.f32.mrb[0].mxu0
          %v2266 = vpop.f32.mrb[0].mxu0
          %2267 = vdwg.mxu0
          %2268 = vmatprep.subr.bf16.mxu0 0
          %2269 = vmatpush1.bf16.msra.mxu0 %v2060
          %2270 = vmatprep.subr.bf16.mxu0 0
          %2271 = vmatpush1.bf16.msra.mxu0 %v2063
          %2272 = vmatprep.subr.bf16.mxu0 0
          %2273 = vmatpush1.bf16.msra.mxu0 %v2066
          %2274 = vmatprep.subr.bf16.mxu0 0
          %2275 = vmatpush1.bf16.msra.mxu0 %v2069
          %2276 = vmatprep.subr.bf16.mxu0 0
          %2277 = vmatpush1.bf16.msra.mxu0 %v2072
          %2278 = vmatprep.subr.bf16.mxu0 0
          %2279 = vmatpush1.bf16.msra.mxu0 %v2075
          %2280 = vmatprep.subr.bf16.mxu0 0
          %2281 = vmatpush1.bf16.msra.mxu0 %v2078
          %2282 = vmatprep.subr.bf16.mxu0 0
          %2283 = vmatpush1.bf16.msra.mxu0 %v2081
          %2284 = vmatprep.subr.bf16.mxu0 0
          %2285 = vmatpush1.bf16.msra.mxu0 0
          %2286 = vmatprep.subr.bf16.mxu0 0
          %2287 = vmatpush1.bf16.msra.mxu0 0
          %2288 = vmatprep.subr.bf16.mxu0 0
          %2289 = vmatpush1.bf16.msra.mxu0 0
          %2290 = vmatprep.subr.bf16.mxu0 0
          %2291 = vmatpush1.bf16.msra.mxu0 0
          %2292 = vmatprep.subr.bf16.mxu0 0
          %2293 = vmatpush1.bf16.msra.mxu0 0
          %2294 = vmatprep.subr.bf16.mxu0 0
          %2295 = vmatpush1.bf16.msra.mxu0 0
          %2296 = vmatprep.subr.bf16.mxu0 0
          %2297 = vmatpush1.bf16.msra.mxu0 0
          %2298 = vmatprep.subr.bf16.mxu0 0
          %2299 = vmatpush1.bf16.msra.mxu0 0
          %2300 = vmatprep.mubr.bf16.mxu0 0
          %2301 = vmatmul.mubr.bf16.gmra.mrb[0].mxu0 %v2226
          %v2302 = vpop.f32.mrb[0].mxu0
          %v2303 = vadd.f32 0.0, %v2302
          %v2304 = vpop.f32.mrb[0].mxu0
          %v2305 = vpop.f32.mrb[0].mxu0
          %v2306 = vpop.f32.mrb[0].mxu0
          %2307 = vdwg.mxu0
          %v2308 = vadd.f32 %v2223, %v2262
          %v2309 = vxor.u32 %v2308, 2147483648
          %v2310 = vmul.f32 %v2309, 1.442695
          %v2311 = vpow.pop %v2310
          %v2312 = vadd.f32 %v2311, 1.0
          %v2313 = vrcp.pop %v2312
          %v2314 = vmul.f32 1.0, %v2313
          %v2315 = vadd.f32 %v2224, %v2264
          %v2316 = vxor.u32 %v2315, 2147483648
          %v2317 = vmul.f32 %v2316, 1.442695
          %v2318 = vpow.pop %v2317
          %v2319 = vadd.f32 %v2318, 1.0
          %v2320 = vrcp.pop %v2319
          %v2321 = vmul.f32 1.0, %v2320
          %v2322 = vadd.f32 %v2303, %v2205
          %v2323 = vmul.f32 %v2314, %v2322
          %v2324 = vadd.f32 %v2225, %v2323
          %v2325 = vtanh.pop %v2324
          %v2326 = vsub.f32 %v2221, %v2325
          %v2327 = vmul.f32 %v2321, %v2326
          %v2328 = vadd.f32 %v2325, %v2327
          %v2329 = vtanh.pop %v2328
          %v2330 = vmax.f32 %v2222, %v2329
          %s2331 = sadd.s32 %s2216, 1
          %p2332 = scmp.lt.s32.totalorder %s2331, 12
          %s2333 = scalar_select %p2332, 1, 0
          %v2334 = vstv %s2333
          %vm2335 = vcmp.eq.s32.totalorder %v2334, 1
          %v2336 = vsel %vm2335, %v2328, %v2221
          %v2337 = vsel %vm2335, %v2330, %v2222
          %v2338 = vld [vmem:[#allocation4 + $0x30] sm:$0xff]
          %v2339 = vld [vmem:[#allocation4 + $0x38] sm:$0xff]
          %v2340 = vld [vmem:[#allocation4 + $0x40] sm:$0xff]
          %v2341 = vpack.c.bf16 %v2336, %v2336
          %2342 = vmatprep.subr.bf16.mxu0 %v2059
          %2343 = vmatpush1.bf16.msra.mxu0 %v2058
          %2344 = vmatprep.subr.bf16.mxu0 %v2062
          %2345 = vmatpush1.bf16.msra.mxu0 %v2061
          %2346 = vmatprep.subr.bf16.mxu0 %v2065
          %2347 = vmatpush1.bf16.msra.mxu0 %v2064
          %2348 = vmatprep.subr.bf16.mxu0 %v2068
          %2349 = vmatpush1.bf16.msra.mxu0 %v2067
          %2350 = vmatprep.subr.bf16.mxu0 %v2071
          %2351 = vmatpush1.bf16.msra.mxu0 %v2070
          %2352 = vmatprep.subr.bf16.mxu0 %v2074
          %2353 = vmatpush1.bf16.msra.mxu0 %v2073
          %2354 = vmatprep.subr.bf16.mxu0 %v2077
          %2355 = vmatpush1.bf16.msra.mxu0 %v2076
          %2356 = vmatprep.subr.bf16.mxu0 %v2080
          %2357 = vmatpush1.bf16.msra.mxu0 %v2079
          %2358 = vmatprep.subr.bf16.mxu0 0
          %2359 = vmatpush1.bf16.msra.mxu0 0
          %2360 = vmatprep.subr.bf16.mxu0 0
          %2361 = vmatpush1.bf16.msra.mxu0 0
          %2362 = vmatprep.subr.bf16.mxu0 0
          %2363 = vmatpush1.bf16.msra.mxu0 0
          %2364 = vmatprep.subr.bf16.mxu0 0
          %2365 = vmatpush1.bf16.msra.mxu0 0
          %2366 = vmatprep.subr.bf16.mxu0 0
          %2367 = vmatpush1.bf16.msra.mxu0 0
          %2368 = vmatprep.subr.bf16.mxu0 0
          %2369 = vmatpush1.bf16.msra.mxu0 0
          %2370 = vmatprep.subr.bf16.mxu0 0
          %2371 = vmatpush1.bf16.msra.mxu0 0
          %2372 = vmatprep.subr.bf16.mxu0 0
          %2373 = vmatpush1.bf16.msra.mxu0 0
          %2374 = vmatprep.mubr.bf16.mxu0 0
          %2375 = vmatmul.mubr.bf16.gmra.mrb[0].mxu0 %v2341
          %v2376 = vpop.f32.mrb[0].mxu0
          %v2377 = vadd.f32 0.0, %v2376
          %v2378 = vpop.f32.mrb[0].mxu0
          %v2379 = vadd.f32 0.0, %v2378
          %v2380 = vpop.f32.mrb[0].mxu0
          %v2381 = vpop.f32.mrb[0].mxu0
          %2382 = vdwg.mxu0
          %2383 = vmatprep.subr.bf16.mxu0 0
          %2384 = vmatpush1.bf16.msra.mxu0 %v2060
          %2385 = vmatprep.subr.bf16.mxu0 0
          %2386 = vmatpush1.bf16.msra.mxu0 %v2063
          %2387 = vmatprep.subr.bf16.mxu0 0
          %2388 = vmatpush1.bf16.msra.mxu0 %v2066
          %2389 = vmatprep.subr.bf16.mxu0 0
          %2390 = vmatpush1.bf16.msra.mxu0 %v2069
          %2391 = vmatprep.subr.bf16.mxu0 0
          %2392 = vmatpush1.bf16.msra.mxu0 %v2072
          %2393 = vmatprep.subr.bf16.mxu0 0
          %2394 = vmatpush1.bf16.msra.mxu0 %v2075
          %2395 = vmatprep.subr.bf16.mxu0 0
          %2396 = vmatpush1.bf16.msra.mxu0 %v2078
          %2397 = vmatprep.subr.bf16.mxu0 0
          %2398 = vmatpush1.bf16.msra.mxu0 %v2081
          %2399 = vmatprep.subr.bf16.mxu0 0
          %2400 = vmatpush1.bf16.msra.mxu0 0
          %2401 = vmatprep.subr.bf16.mxu0 0
          %2402 = vmatpush1.bf16.msra.mxu0 0
          %2403 = vmatprep.subr.bf16.mxu0 0
          %2404 = vmatpush1.bf16.msra.mxu0 0
          %2405 = vmatprep.subr.bf16.mxu0 0
          %2406 = vmatpush1.bf16.msra.mxu0 0
          %2407 = vmatprep.subr.bf16.mxu0 0
          %2408 = vmatpush1.bf16.msra.mxu0 0
          %2409 = vmatprep.subr.bf16.mxu0 0
          %2410 = vmatpush1.bf16.msra.mxu0 0
          %2411 = vmatprep.subr.bf16.mxu0 0
          %2412 = vmatpush1.bf16.msra.mxu0 0
          %2413 = vmatprep.subr.bf16.mxu0 0
          %2414 = vmatpush1.bf16.msra.mxu0 0
          %2415 = vmatprep.mubr.bf16.mxu0 0
          %2416 = vmatmul.mubr.bf16.gmra.mrb[0].mxu0 %v2341
          %v2417 = vpop.f32.mrb[0].mxu0
          %v2418 = vadd.f32 0.0, %v2417
          %v2419 = vpop.f32.mrb[0].mxu0
          %v2420 = vpop.f32.mrb[0].mxu0
          %v2421 = vpop.f32.mrb[0].mxu0
          %2422 = vdwg.mxu0
          %v2423 = vadd.f32 %v2338, %v2377
          %v2424 = vxor.u32 %v2423, 2147483648
          %v2425 = vmul.f32 %v2424, 1.442695
          %v2426 = vpow.pop %v2425
          %v2427 = vadd.f32 %v2426, 1.0
          %v2428 = vrcp.pop %v2427
          %v2429 = vmul.f32 1.0, %v2428
          %v2430 = vadd.f32 %v2339, %v2379
          %v2431 = vxor.u32 %v2430, 2147483648
          %v2432 = vmul.f32 %v2431, 1.442695
          %v2433 = vpow.pop %v2432
          %v2434 = vadd.f32 %v2433, 1.0
          %v2435 = vrcp.pop %v2434
          %v2436 = vmul.f32 1.0, %v2435
          %v2437 = vadd.f32 %v2418, %v2205
          %v2438 = vmul.f32 %v2429, %v2437
          %v2439 = vadd.f32 %v2340, %v2438
          %v2440 = vtanh.pop %v2439
          %v2441 = vsub.f32 %v2336, %v2440
          %v2442 = vmul.f32 %v2436, %v2441
          %v2443 = vadd.f32 %v2440, %v2442
          %v2444 = vtanh.pop %v2443
          %v2445 = vmax.f32 %v2337, %v2444
          %s2446 = sadd.s32 %s2216, 2
          %p2447 = scmp.lt.s32.totalorder %s2446, 12
          %s2448 = scalar_select %p2447, 1, 0
          %v2449 = vstv %s2448
          %vm2450 = vcmp.eq.s32.totalorder %v2449, 1
          %v2451 = vsel %vm2450, %v2443, %v2336
          %v2452 = vsel %vm2450, %v2445, %v2337
          %v2453 = vld [vmem:[#allocation4 + $0x48] sm:$0xff]
          %v2454 = vld [vmem:[#allocation4 + $0x50] sm:$0xff]
          %v2455 = vld [vmem:[#allocation4 + $0x58] sm:$0xff]
          %v2456 = vpack.c.bf16 %v2451, %v2451
          %2457 = vmatprep.subr.bf16.mxu0 %v2059
          %2458 = vmatpush1.bf16.msra.mxu0 %v2058
          %2459 = vmatprep.subr.bf16.mxu0 %v2062
          %2460 = vmatpush1.bf16.msra.mxu0 %v2061
          %2461 = vmatprep.subr.bf16.mxu0 %v2065
          %2462 = vmatpush1.bf16.msra.mxu0 %v2064
          %2463 = vmatprep.subr.bf16.mxu0 %v2068
          %2464 = vmatpush1.bf16.msra.mxu0 %v2067
          %2465 = vmatprep.subr.bf16.mxu0 %v2071
          %2466 = vmatpush1.bf16.msra.mxu0 %v2070
          %2467 = vmatprep.subr.bf16.mxu0 %v2074
          %2468 = vmatpush1.bf16.msra.mxu0 %v2073
          %2469 = vmatprep.subr.bf16.mxu0 %v2077
          %2470 = vmatpush1.bf16.msra.mxu0 %v2076
          %2471 = vmatprep.subr.bf16.mxu0 %v2080
          %2472 = vmatpush1.bf16.msra.mxu0 %v2079
          %2473 = vmatprep.subr.bf16.mxu0 0
          %2474 = vmatpush1.bf16.msra.mxu0 0
          %2475 = vmatprep.subr.bf16.mxu0 0
          %2476 = vmatpush1.bf16.msra.mxu0 0
          %2477 = vmatprep.subr.bf16.mxu0 0
          %2478 = vmatpush1.bf16.msra.mxu0 0
          %2479 = vmatprep.subr.bf16.mxu0 0
          %2480 = vmatpush1.bf16.msra.mxu0 0
          %2481 = vmatprep.subr.bf16.mxu0 0
          %2482 = vmatpush1.bf16.msra.mxu0 0
          %2483 = vmatprep.subr.bf16.mxu0 0
          %2484 = vmatpush1.bf16.msra.mxu0 0
          %2485 = vmatprep.subr.bf16.mxu0 0
          %2486 = vmatpush1.bf16.msra.mxu0 0
          %2487 = vmatprep.subr.bf16.mxu0 0
          %2488 = vmatpush1.bf16.msra.mxu0 0
          %2489 = vmatprep.mubr.bf16.mxu0 0
          %2490 = vmatmul.mubr.bf16.gmra.mrb[0].mxu0 %v2456
          %v2491 = vpop.f32.mrb[0].mxu0
          %v2492 = vadd.f32 0.0, %v2491
          %v2493 = vpop.f32.mrb[0].mxu0
          %v2494 = vadd.f32 0.0, %v2493
          %v2495 = vpop.f32.mrb[0].mxu0
          %v2496 = vpop.f32.mrb[0].mxu0
          %2497 = vdwg.mxu0
          %2498 = vmatprep.subr.bf16.mxu0 0
          %2499 = vmatpush1.bf16.msra.mxu0 %v2060
          %2500 = vmatprep.subr.bf16.mxu0 0
          %2501 = vmatpush1.bf16.msra.mxu0 %v2063
          %2502 = vmatprep.subr.bf16.mxu0 0
          %2503 = vmatpush1.bf16.msra.mxu0 %v2066
          %2504 = vmatprep.subr.bf16.mxu0 0
          %2505 = vmatpush1.bf16.msra.mxu0 %v2069
          %2506 = vmatprep.subr.bf16.mxu0 0
          %2507 = vmatpush1.bf16.msra.mxu0 %v2072
          %2508 = vmatprep.subr.bf16.mxu0 0
          %2509 = vmatpush1.bf16.msra.mxu0 %v2075
          %2510 = vmatprep.subr.bf16.mxu0 0
          %2511 = vmatpush1.bf16.msra.mxu0 %v2078
          %2512 = vmatprep.subr.bf16.mxu0 0
          %2513 = vmatpush1.bf16.msra.mxu0 %v2081
          %2514 = vmatprep.subr.bf16.mxu0 0
          %2515 = vmatpush1.bf16.msra.mxu0 0
          %2516 = vmatprep.subr.bf16.mxu0 0
          %2517 = vmatpush1.bf16.msra.mxu0 0
          %2518 = vmatprep.subr.bf16.mxu0 0
          %2519 = vmatpush1.bf16.msra.mxu0 0
          %2520 = vmatprep.subr.bf16.mxu0 0
          %2521 = vmatpush1.bf16.msra.mxu0 0
          %2522 = vmatprep.subr.bf16.mxu0 0
          %2523 = vmatpush1.bf16.msra.mxu0 0
          %2524 = vmatprep.subr.bf16.mxu0 0
          %2525 = vmatpush1.bf16.msra.mxu0 0
          %2526 = vmatprep.subr.bf16.mxu0 0
          %2527 = vmatpush1.bf16.msra.mxu0 0
          %2528 = vmatprep.subr.bf16.mxu0 0
          %2529 = vmatpush1.bf16.msra.mxu0 0
          %2530 = vmatprep.mubr.bf16.mxu0 0
          %2531 = vmatmul.mubr.bf16.gmra.mrb[0].mxu0 %v2456
          %v2532 = vpop.f32.mrb[0].mxu0
          %v2533 = vadd.f32 0.0, %v2532
          %v2534 = vpop.f32.mrb[0].mxu0
          %v2535 = vpop.f32.mrb[0].mxu0
          %v2536 = vpop.f32.mrb[0].mxu0
          %2537 = vdwg.mxu0
          %v2538 = vadd.f32 %v2453, %v2492
          %v2539 = vxor.u32 %v2538, 2147483648
          %v2540 = vmul.f32 %v2539, 1.442695
          %v2541 = vpow.pop %v2540
          %v2542 = vadd.f32 %v2541, 1.0
          %v2543 = vrcp.pop %v2542
          %v2544 = vmul.f32 1.0, %v2543
          %v2545 = vadd.f32 %v2454, %v2494
          %v2546 = vxor.u32 %v2545, 2147483648
          %v2547 = vmul.f32 %v2546, 1.442695
          %v2548 = vpow.pop %v2547
          %v2549 = vadd.f32 %v2548, 1.0
          %v2550 = vrcp.pop %v2549
          %v2551 = vmul.f32 1.0, %v2550
          %v2552 = vadd.f32 %v2533, %v2205
          %v2553 = vmul.f32 %v2544, %v2552
          %v2554 = vadd.f32 %v2455, %v2553
          %v2555 = vtanh.pop %v2554
          %v2556 = vsub.f32 %v2451, %v2555
          %v2557 = vmul.f32 %v2551, %v2556
          %v2558 = vadd.f32 %v2555, %v2557
          %v2559 = vtanh.pop %v2558
          %v2560 = vmax.f32 %v2452, %v2559
          %s2561 = sadd.s32 %s2216, 3
          %p2562 = scmp.lt.s32.totalorder %s2561, 12
          %s2563 = scalar_select %p2562, 1, 0
          %v2564 = vstv %s2563
          %vm2565 = vcmp.eq.s32.totalorder %v2564, 1
          %v2566 = vsel %vm2565, %v2558, %v2451
          %v2567 = vsel %vm2565, %v2560, %v2452
          %v2568 = vld [vmem:[#allocation4 + $0x60] sm:$0xff]
          %v2569 = vld [vmem:[#allocation4 + $0x68] sm:$0xff]
          %v2570 = vld [vmem:[#allocation4 + $0x70] sm:$0xff]
          %v2571 = vpack.c.bf16 %v2566, %v2566
          %2572 = vmatprep.subr.bf16.mxu0 %v2059
          %2573 = vmatpush1.bf16.msra.mxu0 %v2058
          %2574 = vmatprep.subr.bf16.mxu0 %v2062
          %2575 = vmatpush1.bf16.msra.mxu0 %v2061
          %2576 = vmatprep.subr.bf16.mxu0 %v2065
          %2577 = vmatpush1.bf16.msra.mxu0 %v2064
          %2578 = vmatprep.subr.bf16.mxu0 %v2068
          %2579 = vmatpush1.bf16.msra.mxu0 %v2067
          %2580 = vmatprep.subr.bf16.mxu0 %v2071
          %2581 = vmatpush1.bf16.msra.mxu0 %v2070
          %2582 = vmatprep.subr.bf16.mxu0 %v2074
          %2583 = vmatpush1.bf16.msra.mxu0 %v2073
          %2584 = vmatprep.subr.bf16.mxu0 %v2077
          %2585 = vmatpush1.bf16.msra.mxu0 %v2076
          %2586 = vmatprep.subr.bf16.mxu0 %v2080
          %2587 = vmatpush1.bf16.msra.mxu0 %v2079
          %2588 = vmatprep.subr.bf16.mxu0 0
          %2589 = vmatpush1.bf16.msra.mxu0 0
          %2590 = vmatprep.subr.bf16.mxu0 0
          %2591 = vmatpush1.bf16.msra.mxu0 0
          %2592 = vmatprep.subr.bf16.mxu0 0
          %2593 = vmatpush1.bf16.msra.mxu0 0
          %2594 = vmatprep.subr.bf16.mxu0 0
          %2595 = vmatpush1.bf16.msra.mxu0 0
          %2596 = vmatprep.subr.bf16.mxu0 0
          %2597 = vmatpush1.bf16.msra.mxu0 0
          %2598 = vmatprep.subr.bf16.mxu0 0
          %2599 = vmatpush1.bf16.msra.mxu0 0
          %2600 = vmatprep.subr.bf16.mxu0 0
          %2601 = vmatpush1.bf16.msra.mxu0 0
          %2602 = vmatprep.subr.bf16.mxu0 0
          %2603 = vmatpush1.bf16.msra.mxu0 0
          %2604 = vmatprep.mubr.bf16.mxu0 0
          %2605 = vmatmul.mubr.bf16.gmra.mrb[0].mxu0 %v2571
          %v2606 = vpop.f32.mrb[0].mxu0
          %v2607 = vadd.f32 0.0, %v2606
          %v2608 = vpop.f32.mrb[0].mxu0
          %v2609 = vadd.f32 0.0, %v2608
          %v2610 = vpop.f32.mrb[0].mxu0
          %v2611 = vpop.f32.mrb[0].mxu0
          %2612 = vdwg.mxu0
          %2613 = vmatprep.subr.bf16.mxu0 0
          %2614 = vmatpush1.bf16.msra.mxu0 %v2060
          %2615 = vmatprep.subr.bf16.mxu0 0
          %2616 = vmatpush1.bf16.msra.mxu0 %v2063
          %2617 = vmatprep.subr.bf16.mxu0 0
          %2618 = vmatpush1.bf16.msra.mxu0 %v2066
          %2619 = vmatprep.subr.bf16.mxu0 0
          %2620 = vmatpush1.bf16.msra.mxu0 %v2069
          %2621 = vmatprep.subr.bf16.mxu0 0
          %2622 = vmatpush1.bf16.msra.mxu0 %v2072
          %2623 = vmatprep.subr.bf16.mxu0 0
          %2624 = vmatpush1.bf16.msra.mxu0 %v2075
          %2625 = vmatprep.subr.bf16.mxu0 0
          %2626 = vmatpush1.bf16.msra.mxu0 %v2078
          %2627 = vmatprep.subr.bf16.mxu0 0
          %2628 = vmatpush1.bf16.msra.mxu0 %v2081
          %2629 = vmatprep.subr.bf16.mxu0 0
          %2630 = vmatpush1.bf16.msra.mxu0 0
          %2631 = vmatprep.subr.bf16.mxu0 0
          %2632 = vmatpush1.bf16.msra.mxu0 0
          %2633 = vmatprep.subr.bf16.mxu0 0
          %2634 = vmatpush1.bf16.msra.mxu0 0
          %2635 = vmatprep.subr.bf16.mxu0 0
          %2636 = vmatpush1.bf16.msra.mxu0 0
          %2637 = vmatprep.subr.bf16.mxu0 0
          %2638 = vmatpush1.bf16.msra.mxu0 0
          %2639 = vmatprep.subr.bf16.mxu0 0
          %2640 = vmatpush1.bf16.msra.mxu0 0
          %2641 = vmatprep.subr.bf16.mxu0 0
          %2642 = vmatpush1.bf16.msra.mxu0 0
          %2643 = vmatprep.subr.bf16.mxu0 0
          %2644 = vmatpush1.bf16.msra.mxu0 0
          %2645 = vmatprep.mubr.bf16.mxu0 0
          %2646 = vmatmul.mubr.bf16.gmra.mrb[0].mxu0 %v2571
          %v2647 = vpop.f32.mrb[0].mxu0
          %v2648 = vadd.f32 0.0, %v2647
          %v2649 = vpop.f32.mrb[0].mxu0
          %v2650 = vpop.f32.mrb[0].mxu0
          %v2651 = vpop.f32.mrb[0].mxu0
          %2652 = vdwg.mxu0
          %v2653 = vadd.f32 %v2568, %v2607
          %v2654 = vxor.u32 %v2653, 2147483648
          %v2655 = vmul.f32 %v2654, 1.442695
          %v2656 = vpow.pop %v2655
          %v2657 = vadd.f32 %v2656, 1.0
          %v2658 = vrcp.pop %v2657
          %v2659 = vmul.f32 1.0, %v2658
          %v2660 = vadd.f32 %v2569, %v2609
          %v2661 = vxor.u32 %v2660, 2147483648
          %v2662 = vmul.f32 %v2661, 1.442695
          %v2663 = vpow.pop %v2662
          %v2664 = vadd.f32 %v2663, 1.0
          %v2665 = vrcp.pop %v2664
          %v2666 = vmul.f32 1.0, %v2665
          %v2667 = vadd.f32 %v2648, %v2205
          %v2668 = vmul.f32 %v2659, %v2667
          %v2669 = vadd.f32 %v2570, %v2668
          %v2670 = vtanh.pop %v2669
          %v2671 = vsub.f32 %v2566, %v2670
          %v2672 = vmul.f32 %v2666, %v2671
          %v2673 = vadd.f32 %v2670, %v2672
          %v2674 = vtanh.pop %v2673
          %v2675 = vmax.f32 %v2567, %v2674
          %s2676 = sadd.s32 %s2216, 4
          %p2677 = scmp.lt.s32.totalorder %s2676, 12
          %s2678 = scalar_select %p2677, 1, 0
          %v2679 = vstv %s2678
          %vm2680 = vcmp.eq.s32.totalorder %v2679, 1
          %v2681 = vsel %vm2680, %v2673, %v2566
          %v2682 = vsel %vm2680, %v2675, %v2567
          %v2683 = vld [vmem:[#allocation4 + $0x78] sm:$0xff]
          %v2684 = vld [vmem:[#allocation4 + $0x80] sm:$0xff]
          %v2685 = vld [vmem:[#allocation4 + $0x88] sm:$0xff]
          %v2686 = vpack.c.bf16 %v2681, %v2681
          %2687 = vmatprep.subr.bf16.mxu0 %v2059
          %2688 = vmatpush1.bf16.msra.mxu0 %v2058
          %2689 = vmatprep.subr.bf16.mxu0 %v2062
          %2690 = vmatpush1.bf16.msra.mxu0 %v2061
          %2691 = vmatprep.subr.bf16.mxu0 %v2065
          %2692 = vmatpush1.bf16.msra.mxu0 %v2064
          %2693 = vmatprep.subr.bf16.mxu0 %v2068
          %2694 = vmatpush1.bf16.msra.mxu0 %v2067
          %2695 = vmatprep.subr.bf16.mxu0 %v2071
          %2696 = vmatpush1.bf16.msra.mxu0 %v2070
          %2697 = vmatprep.subr.bf16.mxu0 %v2074
          %2698 = vmatpush1.bf16.msra.mxu0 %v2073
          %2699 = vmatprep.subr.bf16.mxu0 %v2077
          %2700 = vmatpush1.bf16.msra.mxu0 %v2076
          %2701 = vmatprep.subr.bf16.mxu0 %v2080
          %2702 = vmatpush1.bf16.msra.mxu0 %v2079
          %2703 = vmatprep.subr.bf16.mxu0 0
          %2704 = vmatpush1.bf16.msra.mxu0 0
          %2705 = vmatprep.subr.bf16.mxu0 0
          %2706 = vmatpush1.bf16.msra.mxu0 0
          %2707 = vmatprep.subr.bf16.mxu0 0
          %2708 = vmatpush1.bf16.msra.mxu0 0
          %2709 = vmatprep.subr.bf16.mxu0 0
          %2710 = vmatpush1.bf16.msra.mxu0 0
          %2711 = vmatprep.subr.bf16.mxu0 0
          %2712 = vmatpush1.bf16.msra.mxu0 0
          %2713 = vmatprep.subr.bf16.mxu0 0
          %2714 = vmatpush1.bf16.msra.mxu0 0
          %2715 = vmatprep.subr.bf16.mxu0 0
          %2716 = vmatpush1.bf16.msra.mxu0 0
          %2717 = vmatprep.subr.bf16.mxu0 0
          %2718 = vmatpush1.bf16.msra.mxu0 0
          %2719 = vmatprep.mubr.bf16.mxu0 0
          %2720 = vmatmul.mubr.bf16.gmra.mrb[0].mxu0 %v2686
          %v2721 = vpop.f32.mrb[0].mxu0
          %v2722 = vadd.f32 0.0, %v2721
          %v2723 = vpop.f32.mrb[0].mxu0
          %v2724 = vadd.f32 0.0, %v2723
          %v2725 = vpop.f32.mrb[0].mxu0
          %v2726 = vpop.f32.mrb[0].mxu0
          %2727 = vdwg.mxu0
          %2728 = vmatprep.subr.bf16.mxu0 0
          %2729 = vmatpush1.bf16.msra.mxu0 %v2060
          %2730 = vmatprep.subr.bf16.mxu0 0
          %2731 = vmatpush1.bf16.msra.mxu0 %v2063
          %2732 = vmatprep.subr.bf16.mxu0 0
          %2733 = vmatpush1.bf16.msra.mxu0 %v2066
          %2734 = vmatprep.subr.bf16.mxu0 0
          %2735 = vmatpush1.bf16.msra.mxu0 %v2069
          %2736 = vmatprep.subr.bf16.mxu0 0
          %2737 = vmatpush1.bf16.msra.mxu0 %v2072
          %2738 = vmatprep.subr.bf16.mxu0 0
          %2739 = vmatpush1.bf16.msra.mxu0 %v2075
          %2740 = vmatprep.subr.bf16.mxu0 0
          %2741 = vmatpush1.bf16.msra.mxu0 %v2078
          %2742 = vmatprep.subr.bf16.mxu0 0
          %2743 = vmatpush1.bf16.msra.mxu0 %v2081
          %2744 = vmatprep.subr.bf16.mxu0 0
          %2745 = vmatpush1.bf16.msra.mxu0 0
          %2746 = vmatprep.subr.bf16.mxu0 0
          %2747 = vmatpush1.bf16.msra.mxu0 0
          %2748 = vmatprep.subr.bf16.mxu0 0
          %2749 = vmatpush1.bf16.msra.mxu0 0
          %2750 = vmatprep.subr.bf16.mxu0 0
          %2751 = vmatpush1.bf16.msra.mxu0 0
          %2752 = vmatprep.subr.bf16.mxu0 0
          %2753 = vmatpush1.bf16.msra.mxu0 0
          %2754 = vmatprep.subr.bf16.mxu0 0
          %2755 = vmatpush1.bf16.msra.mxu0 0
          %2756 = vmatprep.subr.bf16.mxu0 0
          %2757 = vmatpush1.bf16.msra.mxu0 0
          %2758 = vmatprep.subr.bf16.mxu0 0
          %2759 = vmatpush1.bf16.msra.mxu0 0
          %2760 = vmatprep.mubr.bf16.mxu0 0
          %2761 = vmatmul.mubr.bf16.gmra.mrb[0].mxu0 %v2686
          %v2762 = vpop.f32.mrb[0].mxu0
          %v2763 = vadd.f32 0.0, %v2762
          %v2764 = vpop.f32.mrb[0].mxu0
          %v2765 = vpop.f32.mrb[0].mxu0
          %v2766 = vpop.f32.mrb[0].mxu0
          %2767 = vdwg.mxu0
          %v2768 = vadd.f32 %v2683, %v2722
          %v2769 = vxor.u32 %v2768, 2147483648
          %v2770 = vmul.f32 %v2769, 1.442695
          %v2771 = vpow.pop %v2770
          %v2772 = vadd.f32 %v2771, 1.0
          %v2773 = vrcp.pop %v2772
          %v2774 = vmul.f32 1.0, %v2773
          %v2775 = vadd.f32 %v2684, %v2724
          %v2776 = vxor.u32 %v2775, 2147483648
          %v2777 = vmul.f32 %v2776, 1.442695
          %v2778 = vpow.pop %v2777
          %v2779 = vadd.f32 %v2778, 1.0
          %v2780 = vrcp.pop %v2779
          %v2781 = vmul.f32 1.0, %v2780
          %v2782 = vadd.f32 %v2763, %v2205
          %v2783 = vmul.f32 %v2774, %v2782
          %v2784 = vadd.f32 %v2685, %v2783
          %v2785 = vtanh.pop %v2784
          %v2786 = vsub.f32 %v2681, %v2785
          %v2787 = vmul.f32 %v2781, %v2786
          %v2788 = vadd.f32 %v2785, %v2787
          %v2789 = vtanh.pop %v2788
          %v2790 = vmax.f32 %v2682, %v2789
          %s2791 = sadd.s32 %s2216, 5
          %p2792 = scmp.lt.s32.totalorder %s2791, 12
          %s2793 = scalar_select %p2792, 1, 0
          %v2794 = vstv %s2793
          %vm2795 = vcmp.eq.s32.totalorder %v2794, 1
          %v2796 = vsel %vm2795, %v2788, %v2681
          %v2797 = vsel %vm2795, %v2790, %v2682
          %v2798 = vld [vmem:[#allocation4 + $0x90] sm:$0xff]
          %v2799 = vld [vmem:[#allocation4 + $0x98] sm:$0xff]
          %v2800 = vld [vmem:[#allocation4 + $0xa0] sm:$0xff]
          %v2801 = vpack.c.bf16 %v2796, %v2796
          %2802 = vmatprep.subr.bf16.mxu0 %v2059
          %2803 = vmatpush1.bf16.msra.mxu0 %v2058
          %2804 = vmatprep.subr.bf16.mxu0 %v2062
          %2805 = vmatpush1.bf16.msra.mxu0 %v2061
          %2806 = vmatprep.subr.bf16.mxu0 %v2065
          %2807 = vmatpush1.bf16.msra.mxu0 %v2064
          %2808 = vmatprep.subr.bf16.mxu0 %v2068
          %2809 = vmatpush1.bf16.msra.mxu0 %v2067
          %2810 = vmatprep.subr.bf16.mxu0 %v2071
          %2811 = vmatpush1.bf16.msra.mxu0 %v2070
          %2812 = vmatprep.subr.bf16.mxu0 %v2074
          %2813 = vmatpush1.bf16.msra.mxu0 %v2073
          %2814 = vmatprep.subr.bf16.mxu0 %v2077
          %2815 = vmatpush1.bf16.msra.mxu0 %v2076
          %2816 = vmatprep.subr.bf16.mxu0 %v2080
          %2817 = vmatpush1.bf16.msra.mxu0 %v2079
          %2818 = vmatprep.subr.bf16.mxu0 0
          %2819 = vmatpush1.bf16.msra.mxu0 0
          %2820 = vmatprep.subr.bf16.mxu0 0
          %2821 = vmatpush1.bf16.msra.mxu0 0
          %2822 = vmatprep.subr.bf16.mxu0 0
          %2823 = vmatpush1.bf16.msra.mxu0 0
          %2824 = vmatprep.subr.bf16.mxu0 0
          %2825 = vmatpush1.bf16.msra.mxu0 0
          %2826 = vmatprep.subr.bf16.mxu0 0
          %2827 = vmatpush1.bf16.msra.mxu0 0
          %2828 = vmatprep.subr.bf16.mxu0 0
          %2829 = vmatpush1.bf16.msra.mxu0 0
          %2830 = vmatprep.subr.bf16.mxu0 0
          %2831 = vmatpush1.bf16.msra.mxu0 0
          %2832 = vmatprep.subr.bf16.mxu0 0
          %2833 = vmatpush1.bf16.msra.mxu0 0
          %2834 = vmatprep.mubr.bf16.mxu0 0
          %2835 = vmatmul.mubr.bf16.gmra.mrb[0].mxu0 %v2801
          %v2836 = vpop.f32.mrb[0].mxu0
          %v2837 = vadd.f32 0.0, %v2836
          %v2838 = vpop.f32.mrb[0].mxu0
          %v2839 = vadd.f32 0.0, %v2838
          %v2840 = vpop.f32.mrb[0].mxu0
          %v2841 = vpop.f32.mrb[0].mxu0
          %2842 = vdwg.mxu0
          %2843 = vmatprep.subr.bf16.mxu0 0
          %2844 = vmatpush1.bf16.msra.mxu0 %v2060
          %2845 = vmatprep.subr.bf16.mxu0 0
          %2846 = vmatpush1.bf16.msra.mxu0 %v2063
          %2847 = vmatprep.subr.bf16.mxu0 0
          %2848 = vmatpush1.bf16.msra.mxu0 %v2066
          %2849 = vmatprep.subr.bf16.mxu0 0
          %2850 = vmatpush1.bf16.msra.mxu0 %v2069
          %2851 = vmatprep.subr.bf16.mxu0 0
          %2852 = vmatpush1.bf16.msra.mxu0 %v2072
          %2853 = vmatprep.subr.bf16.mxu0 0
          %2854 = vmatpush1.bf16.msra.mxu0 %v2075
          %2855 = vmatprep.subr.bf16.mxu0 0
          %2856 = vmatpush1.bf16.msra.mxu0 %v2078
          %2857 = vmatprep.subr.bf16.mxu0 0
          %2858 = vmatpush1.bf16.msra.mxu0 %v2081
          %2859 = vmatprep.subr.bf16.mxu0 0
          %2860 = vmatpush1.bf16.msra.mxu0 0
          %2861 = vmatprep.subr.bf16.mxu0 0
          %2862 = vmatpush1.bf16.msra.mxu0 0
          %2863 = vmatprep.subr.bf16.mxu0 0
          %2864 = vmatpush1.bf16.msra.mxu0 0
          %2865 = vmatprep.subr.bf16.mxu0 0
          %2866 = vmatpush1.bf16.msra.mxu0 0
          %2867 = vmatprep.subr.bf16.mxu0 0
          %2868 = vmatpush1.bf16.msra.mxu0 0
          %2869 = vmatprep.subr.bf16.mxu0 0
          %2870 = vmatpush1.bf16.msra.mxu0 0
          %2871 = vmatprep.subr.bf16.mxu0 0
          %2872 = vmatpush1.bf16.msra.mxu0 0
          %2873 = vmatprep.subr.bf16.mxu0 0
          %2874 = vmatpush1.bf16.msra.mxu0 0
          %2875 = vmatprep.mubr.bf16.mxu0 0
          %2876 = vmatmul.mubr.bf16.gmra.mrb[0].mxu0 %v2801
          %v2877 = vpop.f32.mrb[0].mxu0
          %v2878 = vadd.f32 0.0, %v2877
          %v2879 = vpop.f32.mrb[0].mxu0
          %v2880 = vpop.f32.mrb[0].mxu0
          %v2881 = vpop.f32.mrb[0].mxu0
          %2882 = vdwg.mxu0
          %v2883 = vadd.f32 %v2798, %v2837
          %v2884 = vxor.u32 %v2883, 2147483648
          %v2885 = vmul.f32 %v2884, 1.442695
          %v2886 = vpow.pop %v2885
          %v2887 = vadd.f32 %v2886, 1.0
          %v2888 = vrcp.pop %v2887
          %v2889 = vmul.f32 1.0, %v2888
          %v2890 = vadd.f32 %v2799, %v2839
          %v2891 = vxor.u32 %v2890, 2147483648
          %v2892 = vmul.f32 %v2891, 1.442695
          %v2893 = vpow.pop %v2892
          %v2894 = vadd.f32 %v2893, 1.0
          %v2895 = vrcp.pop %v2894
          %v2896 = vmul.f32 1.0, %v2895
          %v2897 = vadd.f32 %v2878, %v2205
          %v2898 = vmul.f32 %v2889, %v2897
          %v2899 = vadd.f32 %v2800, %v2898
          %v2900 = vtanh.pop %v2899
          %v2901 = vsub.f32 %v2796, %v2900
          %v2902 = vmul.f32 %v2896, %v2901
          %v2903 = vadd.f32 %v2900, %v2902
          %v2904 = vtanh.pop %v2903
          %v2905 = vmax.f32 %v2797, %v2904
          %s2906 = sadd.s32 %s2216, 6
          %p2907 = scmp.lt.s32.totalorder %s2906, 12
          %s2908 = scalar_select %p2907, 1, 0
          %v2909 = vstv %s2908
          %vm2910 = vcmp.eq.s32.totalorder %v2909, 1
          %v2911 = vsel %vm2910, %v2903, %v2796
          %v2912 = vsel %vm2910, %v2905, %v2797
          %v2913 = vld [vmem:[#allocation4 + $0xa8] sm:$0xff]
          %v2914 = vld [vmem:[#allocation4 + $0xb0] sm:$0xff]
          %v2915 = vld [vmem:[#allocation4 + $0xb8] sm:$0xff]
          %v2916 = vpack.c.bf16 %v2911, %v2911
          %2917 = vmatprep.subr.bf16.mxu0 %v2059
          %2918 = vmatpush1.bf16.msra.mxu0 %v2058
          %2919 = vmatprep.subr.bf16.mxu0 %v2062
          %2920 = vmatpush1.bf16.msra.mxu0 %v2061
          %2921 = vmatprep.subr.bf16.mxu0 %v2065
          %2922 = vmatpush1.bf16.msra.mxu0 %v2064
          %2923 = vmatprep.subr.bf16.mxu0 %v2068
          %2924 = vmatpush1.bf16.msra.mxu0 %v2067
          %2925 = vmatprep.subr.bf16.mxu0 %v2071
          %2926 = vmatpush1.bf16.msra.mxu0 %v2070
          %2927 = vmatprep.subr.bf16.mxu0 %v2074
          %2928 = vmatpush1.bf16.msra.mxu0 %v2073
          %2929 = vmatprep.subr.bf16.mxu0 %v2077
          %2930 = vmatpush1.bf16.msra.mxu0 %v2076
          %2931 = vmatprep.subr.bf16.mxu0 %v2080
          %2932 = vmatpush1.bf16.msra.mxu0 %v2079
          %2933 = vmatprep.subr.bf16.mxu0 0
          %2934 = vmatpush1.bf16.msra.mxu0 0
          %2935 = vmatprep.subr.bf16.mxu0 0
          %2936 = vmatpush1.bf16.msra.mxu0 0
          %2937 = vmatprep.subr.bf16.mxu0 0
          %2938 = vmatpush1.bf16.msra.mxu0 0
          %2939 = vmatprep.subr.bf16.mxu0 0
          %2940 = vmatpush1.bf16.msra.mxu0 0
          %2941 = vmatprep.subr.bf16.mxu0 0
          %2942 = vmatpush1.bf16.msra.mxu0 0
          %2943 = vmatprep.subr.bf16.mxu0 0
          %2944 = vmatpush1.bf16.msra.mxu0 0
          %2945 = vmatprep.subr.bf16.mxu0 0
          %2946 = vmatpush1.bf16.msra.mxu0 0
          %2947 = vmatprep.subr.bf16.mxu0 0
          %2948 = vmatpush1.bf16.msra.mxu0 0
          %2949 = vmatprep.mubr.bf16.mxu0 0
          %2950 = vmatmul.mubr.bf16.gmra.mrb[0].mxu0 %v2916
          %v2951 = vpop.f32.mrb[0].mxu0
          %v2952 = vadd.f32 0.0, %v2951
          %v2953 = vpop.f32.mrb[0].mxu0
          %v2954 = vadd.f32 0.0, %v2953
          %v2955 = vpop.f32.mrb[0].mxu0
          %v2956 = vpop.f32.mrb[0].mxu0
          %2957 = vdwg.mxu0
          %2958 = vmatprep.subr.bf16.mxu0 0
          %2959 = vmatpush1.bf16.msra.mxu0 %v2060
          %2960 = vmatprep.subr.bf16.mxu0 0
          %2961 = vmatpush1.bf16.msra.mxu0 %v2063
          %2962 = vmatprep.subr.bf16.mxu0 0
          %2963 = vmatpush1.bf16.msra.mxu0 %v2066
          %2964 = vmatprep.subr.bf16.mxu0 0
          %2965 = vmatpush1.bf16.msra.mxu0 %v2069
          %2966 = vmatprep.subr.bf16.mxu0 0
          %2967 = vmatpush1.bf16.msra.mxu0 %v2072
          %2968 = vmatprep.subr.bf16.mxu0 0
          %2969 = vmatpush1.bf16.msra.mxu0 %v2075
          %2970 = vmatprep.subr.bf16.mxu0 0
          %2971 = vmatpush1.bf16.msra.mxu0 %v2078
          %2972 = vmatprep.subr.bf16.mxu0 0
          %2973 = vmatpush1.bf16.msra.mxu0 %v2081
          %2974 = vmatprep.subr.bf16.mxu0 0
          %2975 = vmatpush1.bf16.msra.mxu0 0
          %2976 = vmatprep.subr.bf16.mxu0 0
          %2977 = vmatpush1.bf16.msra.mxu0 0
          %2978 = vmatprep.subr.bf16.mxu0 0
          %2979 = vmatpush1.bf16.msra.mxu0 0
          %2980 = vmatprep.subr.bf16.mxu0 0
          %2981 = vmatpush1.bf16.msra.mxu0 0
          %2982 = vmatprep.subr.bf16.mxu0 0
          %2983 = vmatpush1.bf16.msra.mxu0 0
          %2984 = vmatprep.subr.bf16.mxu0 0
          %2985 = vmatpush1.bf16.msra.mxu0 0
          %2986 = vmatprep.subr.bf16.mxu0 0
          %2987 = vmatpush1.bf16.msra.mxu0 0
          %2988 = vmatprep.subr.bf16.mxu0 0
          %2989 = vmatpush1.bf16.msra.mxu0 0
          %2990 = vmatprep.mubr.bf16.mxu0 0
          %2991 = vmatmul.mubr.bf16.gmra.mrb[0].mxu0 %v2916
          %v2992 = vpop.f32.mrb[0].mxu0
          %v2993 = vadd.f32 0.0, %v2992
          %v2994 = vpop.f32.mrb[0].mxu0
          %v2995 = vpop.f32.mrb[0].mxu0
          %v2996 = vpop.f32.mrb[0].mxu0
          %2997 = vdwg.mxu0
          %v2998 = vadd.f32 %v2913, %v2952
          %v2999 = vxor.u32 %v2998, 2147483648
          %v3000 = vmul.f32 %v2999, 1.442695
          %v3001 = vpow.pop %v3000
          %v3002 = vadd.f32 %v3001, 1.0
          %v3003 = vrcp.pop %v3002
          %v3004 = vmul.f32 1.0, %v3003
          %v3005 = vadd.f32 %v2914, %v2954
          %v3006 = vxor.u32 %v3005, 2147483648
          %v3007 = vmul.f32 %v3006, 1.442695
          %v3008 = vpow.pop %v3007
          %v3009 = vadd.f32 %v3008, 1.0
          %v3010 = vrcp.pop %v3009
          %v3011 = vmul.f32 1.0, %v3010
          %v3012 = vadd.f32 %v2993, %v2205
          %v3013 = vmul.f32 %v3004, %v3012
          %v3014 = vadd.f32 %v2915, %v3013
          %v3015 = vtanh.pop %v3014
          %v3016 = vsub.f32 %v2911, %v3015
          %v3017 = vmul.f32 %v3011, %v3016
          %v3018 = vadd.f32 %v3015, %v3017
          %v3019 = vtanh.pop %v3018
          %v3020 = vmax.f32 %v2912, %v3019
          %s3021 = sadd.s32 %s2216, 7
          %p3022 = scmp.lt.s32.totalorder %s3021, 12
          %s3023 = scalar_select %p3022, 1, 0
          %v3024 = vstv %s3023
          %vm3025 = vcmp.eq.s32.totalorder %v3024, 1
          %v3026 = vsel %vm3025, %v3018, %v2911
          %v3027 = vsel %vm3025, %v3020, %v2912
          %3028 = vst [vmem:[#allocation2] sm:$0xff] %v3026
          %3029 = vst [vmem:[#allocation3] sm:$0xff] %v3027
          %v3030 = vld [vmem:[#allocation3] sm:$0xff]
          %v3031 = vld [vmem:[#allocation14] sm:$0xff]
          %v3032 = vld [vmem:[#allocation14 + $0x8] sm:$0xff]
          %v3033 = vld [vmem:[#allocation14 + $0x10] sm:$0xff]
          %v3034 = vld [vmem:[#allocation14 + $0x18] sm:$0xff]
          %v3035 = vld [vmem:[#allocation14 + $0x20] sm:$0xff]
          %v3036 = vld [vmem:[#allocation14 + $0x28] sm:$0xff]
          %v3037 = vld [vmem:[#allocation14 + $0x30] sm:$0xff]
          %v3038 = vld [vmem:[#allocation14 + $0x38] sm:$0xff]
          %v3039 = vld [vmem:[#allocation14 + $0x40] sm:$0xff]
          %v3040 = vld [vmem:[#allocation14 + $0x48] sm:$0xff]
          %v3041 = vld [vmem:[#allocation14 + $0x50] sm:$0xff]
          %v3042 = vld [vmem:[#allocation14 + $0x58] sm:$0xff]
          %v3043 = vld [vmem:[#allocation14 + $0x60] sm:$0xff]
          %v3044 = vld [vmem:[#allocation14 + $0x68] sm:$0xff]
          %v3045 = vld [vmem:[#allocation14 + $0x70] sm:$0xff]
          %v3046 = vld [vmem:[#allocation14 + $0x78] sm:$0xff]
          %v3047 = vld [vmem:[#allocation16] sm:$0x1]
          %v3049 = vlaneseq
          %v3050 = vshrl.u32 %v3049, 7
          %v3051 = vsub.s32 0, %v3050
          %v3052 = vrot.slane %v3047, %v3051
          %3054 = vmatprep.subr.mxu0 0.0
          %3055 = vmatpush1.msra.mxu0 %v3031
          %3056 = vmatprep.subr.mxu0 0.0
          %3057 = vmatpush1.msra.mxu0 %v3032
          %3058 = vmatprep.subr.mxu0 0.0
          %3059 = vmatpush1.msra.mxu0 %v3033
          %3060 = vmatprep.subr.mxu0 0.0
          %3061 = vmatpush1.msra.mxu0 %v3034
          %3062 = vmatprep.subr.mxu0 0.0
          %3063 = vmatpush1.msra.mxu0 %v3035
          %3064 = vmatprep.subr.mxu0 0.0
          %3065 = vmatpush1.msra.mxu0 %v3036
          %3066 = vmatprep.subr.mxu0 0.0
          %3067 = vmatpush1.msra.mxu0 %v3037
          %3068 = vmatprep.subr.mxu0 0.0
          %3069 = vmatpush1.msra.mxu0 %v3038
          %3070 = vmatprep.subr.mxu0 0.0
          %3071 = vmatpush1.msra.mxu0 %v3039
          %3072 = vmatprep.subr.mxu0 0.0
          %3073 = vmatpush1.msra.mxu0 %v3040
          %3074 = vmatprep.subr.mxu0 0.0
          %3075 = vmatpush1.msra.mxu0 %v3041
          %3076 = vmatprep.subr.mxu0 0.0
          %3077 = vmatpush1.msra.mxu0 %v3042
          %3078 = vmatprep.subr.mxu0 0.0
          %3079 = vmatpush1.msra.mxu0 %v3043
          %3080 = vmatprep.subr.mxu0 0.0
          %3081 = vmatpush1.msra.mxu0 %v3044
          %3082 = vmatprep.subr.mxu0 0.0
          %3083 = vmatpush1.msra.mxu0 %v3045
          %3084 = vmatprep.subr.mxu0 0.0
          %3085 = vmatpush1.msra.mxu0 %v3046
          %3086 = vmatprep.subr.mxu0 0.0
          %3087 = vmatpush1.msra.mxu0 0.0
          %3088 = vmatprep.subr.mxu0 0.0
          %3089 = vmatpush1.msra.mxu0 0.0
          %3090 = vmatprep.subr.mxu0 0.0
          %3091 = vmatpush1.msra.mxu0 0.0
          %3092 = vmatprep.subr.mxu0 0.0
          %3093 = vmatpush1.msra.mxu0 0.0
          %3094 = vmatprep.subr.mxu0 0.0
          %3095 = vmatpush1.msra.mxu0 0.0
          %3096 = vmatprep.subr.mxu0 0.0
          %3097 = vmatpush1.msra.mxu0 0.0
          %3098 = vmatprep.subr.mxu0 0.0
          %3099 = vmatpush1.msra.mxu0 0.0
          %3100 = vmatprep.subr.mxu0 0.0
          %3101 = vmatpush1.msra.mxu0 0.0
          %3102 = vmatprep.subr.mxu0 0.0
          %3103 = vmatpush1.msra.mxu0 0.0
          %3104 = vmatprep.subr.mxu0 0.0
          %3105 = vmatpush1.msra.mxu0 0.0
          %3106 = vmatprep.subr.mxu0 0.0
          %3107 = vmatpush1.msra.mxu0 0.0
          %3108 = vmatprep.subr.mxu0 0.0
          %3109 = vmatpush1.msra.mxu0 0.0
          %3110 = vmatprep.subr.mxu0 0.0
          %3111 = vmatpush1.msra.mxu0 0.0
          %3112 = vmatprep.subr.mxu0 0.0
          %3113 = vmatpush1.msra.mxu0 0.0
          %3114 = vmatprep.subr.mxu0 0.0
          %3115 = vmatpush1.msra.mxu0 0.0
          %3116 = vmatprep.subr.mxu0 0.0
          %3117 = vmatpush1.msra.mxu0 0.0
          %3118 = vmatprep.mubr.f32.mxu0 0.0
          %3119 = vmatmul.mubr.f32.gmra.mrb[0].mxu0 %v3030
          %v3120 = vpop.f32.mrb[0].mxu0
          %v3121 = vadd.f32 %v3052, %v3120
          %v3122 = vpop.f32.mrb[0].mxu0
          %3123 = vdwg.mxu0
          %v3124 = vld [vmem:[%s593] sm:$0xff]
          %v3125 = vld [vmem:[#allocation19] sm:$0xff]
          %v3126 = vld [vmem:[#allocation19 + $0x8] sm:$0xff]
          %v3127 = vld [vmem:[#allocation19 + $0x10] sm:$0xff]
          %v3128 = vld [vmem:[#allocation19 + $0x18] sm:$0xff]
          %v3129 = vld [vmem:[#allocation19 + $0x20] sm:$0xff]
          %v3130 = vld [vmem:[#allocation19 + $0x28] sm:$0xff]
          %v3131 = vld [vmem:[#allocation19 + $0x30] sm:$0xff]
          %v3132 = vld [vmem:[#allocation19 + $0x38] sm:$0xff]
          %v3133 = vld [vmem:[#allocation19 + $0x40] sm:$0xff]
          %v3134 = vld [vmem:[#allocation19 + $0x48] sm:$0xff]
          %v3135 = vld [vmem:[#allocation19 + $0x50] sm:$0xff]
          %v3136 = vld [vmem:[#allocation19 + $0x58] sm:$0xff]
          %v3137 = vld [vmem:[#allocation19 + $0x60] sm:$0xff]
          %v3138 = vld [vmem:[#allocation19 + $0x68] sm:$0xff]
          %v3139 = vld [vmem:[#allocation19 + $0x70] sm:$0xff]
          %v3140 = vld [vmem:[#allocation19 + $0x78] sm:$0xff]
          %v3142 = vcombine.high %v3124, %v3124
          %v3144 = vunpack.c.l.s4 1966171168
          %v3145 = vunpack.c.0.s8 %v3144
          %v3146 = vlaneseq
          %v3147 = vshrl.u32 %v3146, 7
          %v3148 = vsub.s32 %v3145, %v3147
          %v3149 = vrot.slane %v3124, %v3148
          %v3151 = vunpack.c.l.s4 1966171168
          %v3152 = vunpack.c.0.s8 %v3151
          %v3153 = vlaneseq
          %v3154 = vshrl.u32 %v3153, 7
          %v3155 = vsub.s32 %v3152, %v3154
          %v3156 = vrot.slane %v3142, %v3155
          %v3157 = vcombine.high %v3149, %v3149
          %v3158 = vcombine.high %v3156, %v3156
          %v3160 = vunpack.c.l.s4 1966171168
          %v3161 = vunpack.c.0.s8 %v3160
          %v3162 = vlaneseq
          %v3163 = vshrl.u32 %v3162, 7
          %v3164 = vsub.s32 %v3161, %v3163
          %v3165 = vrot.slane %v3149, %v3164
          %v3167 = vunpack.c.l.s4 1966171168
          %v3168 = vunpack.c.0.s8 %v3167
          %v3169 = vlaneseq
          %v3170 = vshrl.u32 %v3169, 7
          %v3171 = vsub.s32 %v3168, %v3170
          %v3172 = vrot.slane %v3156, %v3171
          %v3174 = vunpack.c.l.s4 1966171168
          %v3175 = vunpack.c.0.s8 %v3174
          %v3176 = vlaneseq
          %v3177 = vshrl.u32 %v3176, 7
          %v3178 = vsub.s32 %v3175, %v3177
          %v3179 = vrot.slane %v3157, %v3178
          %v3181 = vunpack.c.l.s4 1966171168
          %v3182 = vunpack.c.0.s8 %v3181
          %v3183 = vlaneseq
          %v3184 = vshrl.u32 %v3183, 7
          %v3185 = vsub.s32 %v3182, %v3184
          %v3186 = vrot.slane %v3158, %v3185
          %v3187 = vcombine.high %v3165, %v3165
          %v3188 = vcombine.high %v3172, %v3172
          %v3189 = vcombine.high %v3179, %v3179
          %v3190 = vcombine.high %v3186, %v3186
          %v3191 = vlaneseq
          %v3192 = vshrl.u32 %v3191, 7
          %v3193 = vsub.s32 0, %v3192
          %v3194 = vrot.slane %v3165, %v3193
          %v3195 = vlaneseq
          %v3196 = vshrl.u32 %v3195, 7
          %v3197 = vsub.s32 0, %v3196
          %v3198 = vrot.slane %v3179, %v3197
          %v3199 = vlaneseq
          %v3200 = vshrl.u32 %v3199, 7
          %v3201 = vsub.s32 0, %v3200
          %v3202 = vrot.slane %v3187, %v3201
          %v3203 = vlaneseq
          %v3204 = vshrl.u32 %v3203, 7
          %v3205 = vsub.s32 0, %v3204
          %v3206 = vrot.slane %v3189, %v3205
          %v3207 = vlaneseq
          %v3208 = vshrl.u32 %v3207, 7
          %v3209 = vsub.s32 0, %v3208
          %v3210 = vrot.slane %v3172, %v3209
          %v3211 = vlaneseq
          %v3212 = vshrl.u32 %v3211, 7
          %v3213 = vsub.s32 0, %v3212
          %v3214 = vrot.slane %v3186, %v3213
          %v3215 = vlaneseq
          %v3216 = vshrl.u32 %v3215, 7
          %v3217 = vsub.s32 0, %v3216
          %v3218 = vrot.slane %v3188, %v3217
          %v3219 = vlaneseq
          %v3220 = vshrl.u32 %v3219, 7
          %v3221 = vsub.s32 0, %v3220
          %v3222 = vrot.slane %v3190, %v3221
          %v3231 = vmul.f32 %v3194, %v3125
          %v3232 = vmul.f32 %v3194, %v3126
          %v3233 = vmul.f32 %v3194, %v3127
          %v3234 = vmul.f32 %v3194, %v3128
          %v3235 = vmul.f32 %v3194, %v3129
          %v3236 = vmul.f32 %v3194, %v3130
          %v3237 = vmul.f32 %v3194, %v3131
          %v3238 = vmul.f32 %v3194, %v3132
          %v3239 = vmul.f32 %v3194, %v3133
          %v3240 = vmul.f32 %v3194, %v3134
          %v3241 = vmul.f32 %v3194, %v3135
          %v3242 = vmul.f32 %v3194, %v3136
          %v3243 = vmul.f32 %v3194, %v3137
          %v3244 = vmul.f32 %v3194, %v3138
          %v3245 = vmul.f32 %v3194, %v3139
          %v3246 = vmul.f32 %v3194, %v3140
          %v3247 = vmul.f32 %v3198, %v3125
          %v3248 = vmul.f32 %v3198, %v3126
          %v3249 = vmul.f32 %v3198, %v3127
          %v3250 = vmul.f32 %v3198, %v3128
          %v3251 = vmul.f32 %v3198, %v3129
          %v3252 = vmul.f32 %v3198, %v3130
          %v3253 = vmul.f32 %v3198, %v3131
          %v3254 = vmul.f32 %v3198, %v3132
          %v3255 = vmul.f32 %v3198, %v3133
          %v3256 = vmul.f32 %v3198, %v3134
          %v3257 = vmul.f32 %v3198, %v3135
          %v3258 = vmul.f32 %v3198, %v3136
          %v3259 = vmul.f32 %v3198, %v3137
          %v3260 = vmul.f32 %v3198, %v3138
          %v3261 = vmul.f32 %v3198, %v3139
          %v3262 = vmul.f32 %v3198, %v3140
          %v3263 = vmul.f32 %v3202, %v3125
          %v3264 = vmul.f32 %v3202, %v3126
          %v3265 = vmul.f32 %v3202, %v3127
          %v3266 = vmul.f32 %v3202, %v3128
          %v3267 = vmul.f32 %v3202, %v3129
          %v3268 = vmul.f32 %v3202, %v3130
          %v3269 = vmul.f32 %v3202, %v3131
          %v3270 = vmul.f32 %v3202, %v3132
          %v3271 = vmul.f32 %v3202, %v3133
          %v3272 = vmul.f32 %v3202, %v3134
          %v3273 = vmul.f32 %v3202, %v3135
          %v3274 = vmul.f32 %v3202, %v3136
          %v3275 = vmul.f32 %v3202, %v3137
          %v3276 = vmul.f32 %v3202, %v3138
          %v3277 = vmul.f32 %v3202, %v3139
          %v3278 = vmul.f32 %v3202, %v3140
          %v3279 = vmul.f32 %v3206, %v3125
          %v3280 = vmul.f32 %v3206, %v3126
          %v3281 = vmul.f32 %v3206, %v3127
          %v3282 = vmul.f32 %v3206, %v3128
          %v3283 = vmul.f32 %v3206, %v3129
          %v3284 = vmul.f32 %v3206, %v3130
          %v3285 = vmul.f32 %v3206, %v3131
          %v3286 = vmul.f32 %v3206, %v3132
          %v3287 = vmul.f32 %v3206, %v3133
          %v3288 = vmul.f32 %v3206, %v3134
          %v3289 = vmul.f32 %v3206, %v3135
          %v3290 = vmul.f32 %v3206, %v3136
          %v3291 = vmul.f32 %v3206, %v3137
          %v3292 = vmul.f32 %v3206, %v3138
          %v3293 = vmul.f32 %v3206, %v3139
          %v3294 = vmul.f32 %v3206, %v3140
          %v3295 = vmul.f32 %v3210, %v3125
          %v3296 = vmul.f32 %v3210, %v3126
          %v3297 = vmul.f32 %v3210, %v3127
          %v3298 = vmul.f32 %v3210, %v3128
          %v3299 = vmul.f32 %v3210, %v3129
          %v3300 = vmul.f32 %v3210, %v3130
          %v3301 = vmul.f32 %v3210, %v3131
          %v3302 = vmul.f32 %v3210, %v3132
          %v3303 = vmul.f32 %v3210, %v3133
          %v3304 = vmul.f32 %v3210, %v3134
          %v3305 = vmul.f32 %v3210, %v3135
          %v3306 = vmul.f32 %v3210, %v3136
          %v3307 = vmul.f32 %v3210, %v3137
          %v3308 = vmul.f32 %v3210, %v3138
          %v3309 = vmul.f32 %v3210, %v3139
          %v3310 = vmul.f32 %v3210, %v3140
          %v3311 = vmul.f32 %v3214, %v3125
          %v3312 = vmul.f32 %v3214, %v3126
          %v3313 = vmul.f32 %v3214, %v3127
          %v3314 = vmul.f32 %v3214, %v3128
          %v3315 = vmul.f32 %v3214, %v3129
          %v3316 = vmul.f32 %v3214, %v3130
          %v3317 = vmul.f32 %v3214, %v3131
          %v3318 = vmul.f32 %v3214, %v3132
          %v3319 = vmul.f32 %v3214, %v3133
          %v3320 = vmul.f32 %v3214, %v3134
          %v3321 = vmul.f32 %v3214, %v3135
          %v3322 = vmul.f32 %v3214, %v3136
          %v3323 = vmul.f32 %v3214, %v3137
          %v3324 = vmul.f32 %v3214, %v3138
          %v3325 = vmul.f32 %v3214, %v3139
          %v3326 = vmul.f32 %v3214, %v3140
          %v3327 = vmul.f32 %v3218, %v3125
          %v3328 = vmul.f32 %v3218, %v3126
          %v3329 = vmul.f32 %v3218, %v3127
          %v3330 = vmul.f32 %v3218, %v3128
          %v3331 = vmul.f32 %v3218, %v3129
          %v3332 = vmul.f32 %v3218, %v3130
          %v3333 = vmul.f32 %v3218, %v3131
          %v3334 = vmul.f32 %v3218, %v3132
          %v3335 = vmul.f32 %v3218, %v3133
          %v3336 = vmul.f32 %v3218, %v3134
          %v3337 = vmul.f32 %v3218, %v3135
          %v3338 = vmul.f32 %v3218, %v3136
          %v3339 = vmul.f32 %v3218, %v3137
          %v3340 = vmul.f32 %v3218, %v3138
          %v3341 = vmul.f32 %v3218, %v3139
          %v3342 = vmul.f32 %v3218, %v3140
          %v3343 = vmul.f32 %v3222, %v3125
          %v3344 = vmul.f32 %v3222, %v3126
          %v3345 = vmul.f32 %v3222, %v3127
          %v3346 = vmul.f32 %v3222, %v3128
          %v3347 = vmul.f32 %v3222, %v3129
          %v3348 = vmul.f32 %v3222, %v3130
          %v3349 = vmul.f32 %v3222, %v3131
          %v3350 = vmul.f32 %v3222, %v3132
          %v3351 = vmul.f32 %v3222, %v3133
          %v3352 = vmul.f32 %v3222, %v3134
          %v3353 = vmul.f32 %v3222, %v3135
          %v3354 = vmul.f32 %v3222, %v3136
          %v3355 = vmul.f32 %v3222, %v3137
          %v3356 = vmul.f32 %v3222, %v3138
          %v3357 = vmul.f32 %v3222, %v3139
          %v3358 = vmul.f32 %v3222, %v3140
          %v3359 = vld [vmem:[#allocation20] sm:$0xff]
          %v3360 = vld [vmem:[#allocation20 + $0x8] sm:$0xff]
          %v3361 = vld [vmem:[#allocation20 + $0x10] sm:$0xff]
          %v3362 = vld [vmem:[#allocation22] sm:$0x1]
          %v3364 = vlaneseq
          %v3365 = vshrl.u32 %v3364, 7
          %v3366 = vsub.s32 0, %v3365
          %v3367 = vrot.slane %v3362, %v3366
          %vm3369 = vcmask 195584
          %v3371 = vsel %vm3369, %v3231, 0
          %v3374 = vsel %vm3369, %v3232, 0
          %v3377 = vsel %vm3369, %v3233, 0
          %v3380 = vsel %vm3369, %v3234, 0
          %v3383 = vsel %vm3369, %v3235, 0
          %v3386 = vsel %vm3369, %v3236, 0
          %v3389 = vsel %vm3369, %v3237, 0
          %v3392 = vsel %vm3369, %v3238, 0
          %v3395 = vsel %vm3369, %v3239, 0
          %v3398 = vsel %vm3369, %v3240, 0
          %v3401 = vsel %vm3369, %v3241, 0
          %v3404 = vsel %vm3369, %v3242, 0
          %v3407 = vsel %vm3369, %v3243, 0
          %v3410 = vsel %vm3369, %v3244, 0
          %v3413 = vsel %vm3369, %v3245, 0
          %v3416 = vsel %vm3369, %v3246, 0
          %v3419 = vsel %vm3369, %v3247, 0
          %v3422 = vsel %vm3369, %v3248, 0
          %v3425 = vsel %vm3369, %v3249, 0
          %v3428 = vsel %vm3369, %v3250, 0
          %v3431 = vsel %vm3369, %v3251, 0
          %v3434 = vsel %vm3369, %v3252, 0
          %v3437 = vsel %vm3369, %v3253, 0
          %v3440 = vsel %vm3369, %v3254, 0
          %v3443 = vsel %vm3369, %v3255, 0
          %v3446 = vsel %vm3369, %v3256, 0
          %v3449 = vsel %vm3369, %v3257, 0
          %v3452 = vsel %vm3369, %v3258, 0
          %v3455 = vsel %vm3369, %v3259, 0
          %v3458 = vsel %vm3369, %v3260, 0
          %v3461 = vsel %vm3369, %v3261, 0
          %v3464 = vsel %vm3369, %v3262, 0
          %v3467 = vsel %vm3369, %v3263, 0
          %v3470 = vsel %vm3369, %v3264, 0
          %v3473 = vsel %vm3369, %v3265, 0
          %v3476 = vsel %vm3369, %v3266, 0
          %v3479 = vsel %vm3369, %v3267, 0
          %v3482 = vsel %vm3369, %v3268, 0
          %v3485 = vsel %vm3369, %v3269, 0
          %v3488 = vsel %vm3369, %v3270, 0
          %v3491 = vsel %vm3369, %v3271, 0
          %v3494 = vsel %vm3369, %v3272, 0
          %v3497 = vsel %vm3369, %v3273, 0
          %v3500 = vsel %vm3369, %v3274, 0
          %v3503 = vsel %vm3369, %v3275, 0
          %v3506 = vsel %vm3369, %v3276, 0
          %v3509 = vsel %vm3369, %v3277, 0
          %v3512 = vsel %vm3369, %v3278, 0
          %v3515 = vsel %vm3369, %v3279, 0
          %v3518 = vsel %vm3369, %v3280, 0
          %v3521 = vsel %vm3369, %v3281, 0
          %v3524 = vsel %vm3369, %v3282, 0
          %v3527 = vsel %vm3369, %v3283, 0
          %v3530 = vsel %vm3369, %v3284, 0
          %v3533 = vsel %vm3369, %v3285, 0
          %v3536 = vsel %vm3369, %v3286, 0
          %v3539 = vsel %vm3369, %v3287, 0
          %v3542 = vsel %vm3369, %v3288, 0
          %v3545 = vsel %vm3369, %v3289, 0
          %v3548 = vsel %vm3369, %v3290, 0
          %v3551 = vsel %vm3369, %v3291, 0
          %v3554 = vsel %vm3369, %v3292, 0
          %v3557 = vsel %vm3369, %v3293, 0
          %v3560 = vsel %vm3369, %v3294, 0
          %v3563 = vsel %vm3369, %v3295, 0
          %v3566 = vsel %vm3369, %v3296, 0
          %v3569 = vsel %vm3369, %v3297, 0
          %v3572 = vsel %vm3369, %v3298, 0
          %v3575 = vsel %vm3369, %v3299, 0
          %v3578 = vsel %vm3369, %v3300, 0
          %v3581 = vsel %vm3369, %v3301, 0
          %v3584 = vsel %vm3369, %v3302, 0
          %v3587 = vsel %vm3369, %v3303, 0
          %v3590 = vsel %vm3369, %v3304, 0
          %v3593 = vsel %vm3369, %v3305, 0
          %v3596 = vsel %vm3369, %v3306, 0
          %v3599 = vsel %vm3369, %v3307, 0
          %v3602 = vsel %vm3369, %v3308, 0
          %v3605 = vsel %vm3369, %v3309, 0
          %v3608 = vsel %vm3369, %v3310, 0
          %v3611 = vsel %vm3369, %v3311, 0
          %v3614 = vsel %vm3369, %v3312, 0
          %v3617 = vsel %vm3369, %v3313, 0
          %v3620 = vsel %vm3369, %v3314, 0
          %v3623 = vsel %vm3369, %v3315, 0
          %v3626 = vsel %vm3369, %v3316, 0
          %v3629 = vsel %vm3369, %v3317, 0
          %v3632 = vsel %vm3369, %v3318, 0
          %v3635 = vsel %vm3369, %v3319, 0
          %v3638 = vsel %vm3369, %v3320, 0
          %v3641 = vsel %vm3369, %v3321, 0
          %v3644 = vsel %vm3369, %v3322, 0
          %v3647 = vsel %vm3369, %v3323, 0
          %v3650 = vsel %vm3369, %v3324, 0
          %v3653 = vsel %vm3369, %v3325, 0
          %v3656 = vsel %vm3369, %v3326, 0
          %v3659 = vsel %vm3369, %v3327, 0
          %v3662 = vsel %vm3369, %v3328, 0
          %v3665 = vsel %vm3369, %v3329, 0
          %v3668 = vsel %vm3369, %v3330, 0
          %v3671 = vsel %vm3369, %v3331, 0
          %v3674 = vsel %vm3369, %v3332, 0
          %v3677 = vsel %vm3369, %v3333, 0
          %v3680 = vsel %vm3369, %v3334, 0
          %v3683 = vsel %vm3369, %v3335, 0
          %v3686 = vsel %vm3369, %v3336, 0
          %v3689 = vsel %vm3369, %v3337, 0
          %v3692 = vsel %vm3369, %v3338, 0
          %v3695 = vsel %vm3369, %v3339, 0
          %v3698 = vsel %vm3369, %v3340, 0
          %v3701 = vsel %vm3369, %v3341, 0
          %v3704 = vsel %vm3369, %v3342, 0
          %v3707 = vsel %vm3369, %v3343, 0
          %v3710 = vsel %vm3369, %v3344, 0
          %v3713 = vsel %vm3369, %v3345, 0
          %v3716 = vsel %vm3369, %v3346, 0
          %v3719 = vsel %vm3369, %v3347, 0
          %v3722 = vsel %vm3369, %v3348, 0
          %v3725 = vsel %vm3369, %v3349, 0
          %v3728 = vsel %vm3369, %v3350, 0
          %v3731 = vsel %vm3369, %v3351, 0
          %v3734 = vsel %vm3369, %v3352, 0
          %v3737 = vsel %vm3369, %v3353, 0
          %v3740 = vsel %vm3369, %v3354, 0
          %v3743 = vsel %vm3369, %v3355, 0
          %v3746 = vsel %vm3369, %v3356, 0
          %v3749 = vsel %vm3369, %v3357, 0
          %v3752 = vsel %vm3369, %v3358, 0
          %3754 = vmatprep.subr.mxu0 0.0
          %3755 = vmatpush1.msra.mxu0 %v3359
          %3756 = vmatprep.subr.mxu0 0.0
          %3757 = vmatpush1.msra.mxu0 %v3360
          %3758 = vmatprep.subr.mxu0 0.0
          %3759 = vmatpush1.msra.mxu0 %v3361
          %3760 = vmatprep.subr.mxu0 0.0
          %3761 = vmatpush1.msra.mxu0 0.0
          %3762 = vmatprep.subr.mxu0 0.0
          %3763 = vmatpush1.msra.mxu0 0.0
          %3764 = vmatprep.subr.mxu0 0.0
          %3765 = vmatpush1.msra.mxu0 0.0
          %3766 = vmatprep.subr.mxu0 0.0
          %3767 = vmatpush1.msra.mxu0 0.0
          %3768 = vmatprep.subr.mxu0 0.0
          %3769 = vmatpush1.msra.mxu0 0.0
          %3770 = vmatprep.subr.mxu0 0.0
          %3771 = vmatpush1.msra.mxu0 0.0
          %3772 = vmatprep.subr.mxu0 0.0
          %3773 = vmatpush1.msra.mxu0 0.0
          %3774 = vmatprep.subr.mxu0 0.0
          %3775 = vmatpush1.msra.mxu0 0.0
          %3776 = vmatprep.subr.mxu0 0.0
          %3777 = vmatpush1.msra.mxu0 0.0
          %3778 = vmatprep.subr.mxu0 0.0
          %3779 = vmatpush1.msra.mxu0 0.0
          %3780 = vmatprep.subr.mxu0 0.0
          %3781 = vmatpush1.msra.mxu0 0.0
          %3782 = vmatprep.subr.mxu0 0.0
          %3783 = vmatpush1.msra.mxu0 0.0
          %3784 = vmatprep.subr.mxu0 0.0
          %3785 = vmatpush1.msra.mxu0 0.0
          %3786 = vmatprep.subr.mxu0 0.0
          %3787 = vmatpush1.msra.mxu0 0.0
          %3788 = vmatprep.subr.mxu0 0.0
          %3789 = vmatpush1.msra.mxu0 0.0
          %3790 = vmatprep.subr.mxu0 0.0
          %3791 = vmatpush1.msra.mxu0 0.0
          %3792 = vmatprep.subr.mxu0 0.0
          %3793 = vmatpush1.msra.mxu0 0.0
          %3794 = vmatprep.subr.mxu0 0.0
          %3795 = vmatpush1.msra.mxu0 0.0
          %3796 = vmatprep.subr.mxu0 0.0
          %3797 = vmatpush1.msra.mxu0 0.0
          %3798 = vmatprep.subr.mxu0 0.0
          %3799 = vmatpush1.msra.mxu0 0.0
          %3800 = vmatprep.subr.mxu0 0.0
          %3801 = vmatpush1.msra.mxu0 0.0
          %3802 = vmatprep.subr.mxu0 0.0
          %3803 = vmatpush1.msra.mxu0 0.0
          %3804 = vmatprep.subr.mxu0 0.0
          %3805 = vmatpush1.msra.mxu0 0.0
          %3806 = vmatprep.subr.mxu0 0.0
          %3807 = vmatpush1.msra.mxu0 0.0
          %3808 = vmatprep.subr.mxu0 0.0
          %3809 = vmatpush1.msra.mxu0 0.0
          %3810 = vmatprep.subr.mxu0 0.0
          %3811 = vmatpush1.msra.mxu0 0.0
          %3812 = vmatprep.subr.mxu0 0.0
          %3813 = vmatpush1.msra.mxu0 0.0
          %3814 = vmatprep.subr.mxu0 0.0
          %3815 = vmatpush1.msra.mxu0 0.0
          %3816 = vmatprep.subr.mxu0 0.0
          %3817 = vmatpush1.msra.mxu0 0.0
          %3818 = vmatprep.mubr.f32.mxu0 0.0
          %3819 = vmatmul.mubr.f32.gmra.mrb[0].mxu0 %v3371
          %v3820 = vpop.f32.mrb[0].mxu0
          %v3821 = vadd.f32 %v3367, %v3820
          %v3822 = vpop.f32.mrb[0].mxu0
          %3823 = vmatprep.mubr.f32.mxu0 0.0
          %3824 = vmatmul.mubr.f32.gmra.mrb[0].mxu0 %v3374
          %v3825 = vpop.f32.mrb[0].mxu0
          %v3826 = vadd.f32 %v3367, %v3825
          %v3827 = vpop.f32.mrb[0].mxu0
          %3828 = vmatprep.mubr.f32.mxu0 0.0
          %3829 = vmatmul.mubr.f32.gmra.mrb[0].mxu0 %v3377
          %v3830 = vpop.f32.mrb[0].mxu0
          %v3831 = vadd.f32 %v3367, %v3830
          %v3832 = vpop.f32.mrb[0].mxu0
          %3833 = vmatprep.mubr.f32.mxu0 0.0
          %3834 = vmatmul.mubr.f32.gmra.mrb[0].mxu0 %v3380
          %v3835 = vpop.f32.mrb[0].mxu0
          %v3836 = vadd.f32 %v3367, %v3835
          %v3837 = vpop.f32.mrb[0].mxu0
          %3838 = vmatprep.mubr.f32.mxu0 0.0
          %3839 = vmatmul.mubr.f32.gmra.mrb[0].mxu0 %v3383
          %v3840 = vpop.f32.mrb[0].mxu0
          %v3841 = vadd.f32 %v3367, %v3840
          %v3842 = vpop.f32.mrb[0].mxu0
          %3843 = vmatprep.mubr.f32.mxu0 0.0
          %3844 = vmatmul.mubr.f32.gmra.mrb[0].mxu0 %v3386
          %v3845 = vpop.f32.mrb[0].mxu0
          %v3846 = vadd.f32 %v3367, %v3845
          %v3847 = vpop.f32.mrb[0].mxu0
          %3848 = vmatprep.mubr.f32.mxu0 0.0
          %3849 = vmatmul.mubr.f32.gmra.mrb[0].mxu0 %v3389
          %v3850 = vpop.f32.mrb[0].mxu0
          %v3851 = vadd.f32 %v3367, %v3850
          %v3852 = vpop.f32.mrb[0].mxu0
          %3853 = vmatprep.mubr.f32.mxu0 0.0
          %3854 = vmatmul.mubr.f32.gmra.mrb[0].mxu0 %v3392
          %v3855 = vpop.f32.mrb[0].mxu0
          %v3856 = vadd.f32 %v3367, %v3855
          %v3857 = vpop.f32.mrb[0].mxu0
          %3858 = vmatprep.mubr.f32.mxu0 0.0
          %3859 = vmatmul.mubr.f32.gmra.mrb[0].mxu0 %v3395
          %v3860 = vpop.f32.mrb[0].mxu0
          %v3861 = vadd.f32 %v3367, %v3860
          %v3862 = vpop.f32.mrb[0].mxu0
          %3863 = vmatprep.mubr.f32.mxu0 0.0
          %3864 = vmatmul.mubr.f32.gmra.mrb[0].mxu0 %v3398
          %v3865 = vpop.f32.mrb[0].mxu0
          %v3866 = vadd.f32 %v3367, %v3865
          %v3867 = vpop.f32.mrb[0].mxu0
          %3868 = vmatprep.mubr.f32.mxu0 0.0
          %3869 = vmatmul.mubr.f32.gmra.mrb[0].mxu0 %v3401
          %v3870 = vpop.f32.mrb[0].mxu0
          %v3871 = vadd.f32 %v3367, %v3870
          %v3872 = vpop.f32.mrb[0].mxu0
          %3873 = vmatprep.mubr.f32.mxu0 0.0
          %3874 = vmatmul.mubr.f32.gmra.mrb[0].mxu0 %v3404
          %v3875 = vpop.f32.mrb[0].mxu0
          %v3876 = vadd.f32 %v3367, %v3875
          %v3877 = vpop.f32.mrb[0].mxu0
          %3878 = vmatprep.mubr.f32.mxu0 0.0
          %3879 = vmatmul.mubr.f32.gmra.mrb[0].mxu0 %v3407
          %v3880 = vpop.f32.mrb[0].mxu0
          %v3881 = vadd.f32 %v3367, %v3880
          %v3882 = vpop.f32.mrb[0].mxu0
          %3883 = vmatprep.mubr.f32.mxu0 0.0
          %3884 = vmatmul.mubr.f32.gmra.mrb[0].mxu0 %v3410
          %v3885 = vpop.f32.mrb[0].mxu0
          %v3886 = vadd.f32 %v3367, %v3885
          %v3887 = vpop.f32.mrb[0].mxu0
          %3888 = vmatprep.mubr.f32.mxu0 0.0
          %3889 = vmatmul.mubr.f32.gmra.mrb[0].mxu0 %v3413
          %v3890 = vpop.f32.mrb[0].mxu0
          %v3891 = vadd.f32 %v3367, %v3890
          %v3892 = vpop.f32.mrb[0].mxu0
          %3893 = vmatprep.mubr.f32.mxu0 0.0
          %3894 = vmatmul.mubr.f32.gmra.mrb[0].mxu0 %v3416
          %v3895 = vpop.f32.mrb[0].mxu0
          %v3896 = vadd.f32 %v3367, %v3895
          %v3897 = vpop.f32.mrb[0].mxu0
          %3898 = vmatprep.mubr.f32.mxu0 0.0
          %3899 = vmatmul.mubr.f32.gmra.mrb[0].mxu0 %v3419
          %v3900 = vpop.f32.mrb[0].mxu0
          %v3901 = vadd.f32 %v3367, %v3900
          %v3902 = vpop.f32.mrb[0].mxu0
          %3903 = vmatprep.mubr.f32.mxu0 0.0
          %3904 = vmatmul.mubr.f32.gmra.mrb[0].mxu0 %v3422
          %v3905 = vpop.f32.mrb[0].mxu0
          %v3906 = vadd.f32 %v3367, %v3905
          %v3907 = vpop.f32.mrb[0].mxu0
          %3908 = vmatprep.mubr.f32.mxu0 0.0
          %3909 = vmatmul.mubr.f32.gmra.mrb[0].mxu0 %v3425
          %v3910 = vpop.f32.mrb[0].mxu0
          %v3911 = vadd.f32 %v3367, %v3910
          %v3912 = vpop.f32.mrb[0].mxu0
          %3913 = vmatprep.mubr.f32.mxu0 0.0
          %3914 = vmatmul.mubr.f32.gmra.mrb[0].mxu0 %v3428
          %v3915 = vpop.f32.mrb[0].mxu0
          %v3916 = vadd.f32 %v3367, %v3915
          %v3917 = vpop.f32.mrb[0].mxu0
          %3918 = vmatprep.mubr.f32.mxu0 0.0
          %3919 = vmatmul.mubr.f32.gmra.mrb[0].mxu0 %v3431
          %v3920 = vpop.f32.mrb[0].mxu0
          %v3921 = vadd.f32 %v3367, %v3920
          %v3922 = vpop.f32.mrb[0].mxu0
          %3923 = vmatprep.mubr.f32.mxu0 0.0
          %3924 = vmatmul.mubr.f32.gmra.mrb[0].mxu0 %v3434
          %v3925 = vpop.f32.mrb[0].mxu0
          %v3926 = vadd.f32 %v3367, %v3925
          %v3927 = vpop.f32.mrb[0].mxu0
          %3928 = vmatprep.mubr.f32.mxu0 0.0
          %3929 = vmatmul.mubr.f32.gmra.mrb[0].mxu0 %v3437
          %v3930 = vpop.f32.mrb[0].mxu0
          %v3931 = vadd.f32 %v3367, %v3930
          %v3932 = vpop.f32.mrb[0].mxu0
          %3933 = vmatprep.mubr.f32.mxu0 0.0
          %3934 = vmatmul.mubr.f32.gmra.mrb[0].mxu0 %v3440
          %v3935 = vpop.f32.mrb[0].mxu0
          %v3936 = vadd.f32 %v3367, %v3935
          %v3937 = vpop.f32.mrb[0].mxu0
          %3938 = vmatprep.mubr.f32.mxu0 0.0
          %3939 = vmatmul.mubr.f32.gmra.mrb[0].mxu0 %v3443
          %v3940 = vpop.f32.mrb[0].mxu0
          %v3941 = vadd.f32 %v3367, %v3940
          %v3942 = vpop.f32.mrb[0].mxu0
          %3943 = vmatprep.mubr.f32.mxu0 0.0
          %3944 = vmatmul.mubr.f32.gmra.mrb[0].mxu0 %v3446
          %v3945 = vpop.f32.mrb[0].mxu0
          %v3946 = vadd.f32 %v3367, %v3945
          %v3947 = vpop.f32.mrb[0].mxu0
          %3948 = vmatprep.mubr.f32.mxu0 0.0
          %3949 = vmatmul.mubr.f32.gmra.mrb[0].mxu0 %v3449
          %v3950 = vpop.f32.mrb[0].mxu0
          %v3951 = vadd.f32 %v3367, %v3950
          %v3952 = vpop.f32.mrb[0].mxu0
          %3953 = vmatprep.mubr.f32.mxu0 0.0
          %3954 = vmatmul.mubr.f32.gmra.mrb[0].mxu0 %v3452
          %v3955 = vpop.f32.mrb[0].mxu0
          %v3956 = vadd.f32 %v3367, %v3955
          %v3957 = vpop.f32.mrb[0].mxu0
          %3958 = vmatprep.mubr.f32.mxu0 0.0
          %3959 = vmatmul.mubr.f32.gmra.mrb[0].mxu0 %v3455
          %v3960 = vpop.f32.mrb[0].mxu0
          %v3961 = vadd.f32 %v3367, %v3960
          %v3962 = vpop.f32.mrb[0].mxu0
          %3963 = vmatprep.mubr.f32.mxu0 0.0
          %3964 = vmatmul.mubr.f32.gmra.mrb[0].mxu0 %v3458
          %v3965 = vpop.f32.mrb[0].mxu0
          %v3966 = vadd.f32 %v3367, %v3965
          %v3967 = vpop.f32.mrb[0].mxu0
          %3968 = vmatprep.mubr.f32.mxu0 0.0
          %3969 = vmatmul.mubr.f32.gmra.mrb[0].mxu0 %v3461
          %v3970 = vpop.f32.mrb[0].mxu0
          %v3971 = vadd.f32 %v3367, %v3970
          %v3972 = vpop.f32.mrb[0].mxu0
          %3973 = vmatprep.mubr.f32.mxu0 0.0
          %3974 = vmatmul.mubr.f32.gmra.mrb[0].mxu0 %v3464
          %v3975 = vpop.f32.mrb[0].mxu0
          %v3976 = vadd.f32 %v3367, %v3975
          %v3977 = vpop.f32.mrb[0].mxu0
          %3978 = vmatprep.mubr.f32.mxu0 0.0
          %3979 = vmatmul.mubr.f32.gmra.mrb[0].mxu0 %v3467
          %v3980 = vpop.f32.mrb[0].mxu0
          %v3981 = vadd.f32 %v3367, %v3980
          %v3982 = vpop.f32.mrb[0].mxu0
          %3983 = vmatprep.mubr.f32.mxu0 0.0
          %3984 = vmatmul.mubr.f32.gmra.mrb[0].mxu0 %v3470
          %v3985 = vpop.f32.mrb[0].mxu0
          %v3986 = vadd.f32 %v3367, %v3985
          %v3987 = vpop.f32.mrb[0].mxu0
          %3988 = vmatprep.mubr.f32.mxu0 0.0
          %3989 = vmatmul.mubr.f32.gmra.mrb[0].mxu0 %v3473
          %v3990 = vpop.f32.mrb[0].mxu0
          %v3991 = vadd.f32 %v3367, %v3990
          %v3992 = vpop.f32.mrb[0].mxu0
          %3993 = vmatprep.mubr.f32.mxu0 0.0
          %3994 = vmatmul.mubr.f32.gmra.mrb[0].mxu0 %v3476
          %v3995 = vpop.f32.mrb[0].mxu0
          %v3996 = vadd.f32 %v3367, %v3995
          %v3997 = vpop.f32.mrb[0].mxu0
          %3998 = vmatprep.mubr.f32.mxu0 0.0
          %3999 = vmatmul.mubr.f32.gmra.mrb[0].mxu0 %v3479
          %v4000 = vpop.f32.mrb[0].mxu0
          %v4001 = vadd.f32 %v3367, %v4000
          %v4002 = vpop.f32.mrb[0].mxu0
          %4003 = vmatprep.mubr.f32.mxu0 0.0
          %4004 = vmatmul.mubr.f32.gmra.mrb[0].mxu0 %v3482
          %v4005 = vpop.f32.mrb[0].mxu0
          %v4006 = vadd.f32 %v3367, %v4005
          %v4007 = vpop.f32.mrb[0].mxu0
          %4008 = vmatprep.mubr.f32.mxu0 0.0
          %4009 = vmatmul.mubr.f32.gmra.mrb[0].mxu0 %v3485
          %v4010 = vpop.f32.mrb[0].mxu0
          %v4011 = vadd.f32 %v3367, %v4010
          %v4012 = vpop.f32.mrb[0].mxu0
          %4013 = vmatprep.mubr.f32.mxu0 0.0
          %4014 = vmatmul.mubr.f32.gmra.mrb[0].mxu0 %v3488
          %v4015 = vpop.f32.mrb[0].mxu0
          %v4016 = vadd.f32 %v3367, %v4015
          %v4017 = vpop.f32.mrb[0].mxu0
          %4018 = vmatprep.mubr.f32.mxu0 0.0
          %4019 = vmatmul.mubr.f32.gmra.mrb[0].mxu0 %v3491
          %v4020 = vpop.f32.mrb[0].mxu0
          %v4021 = vadd.f32 %v3367, %v4020
          %v4022 = vpop.f32.mrb[0].mxu0
          %4023 = vmatprep.mubr.f32.mxu0 0.0
          %4024 = vmatmul.mubr.f32.gmra.mrb[0].mxu0 %v3494
          %v4025 = vpop.f32.mrb[0].mxu0
          %v4026 = vadd.f32 %v3367, %v4025
          %v4027 = vpop.f32.mrb[0].mxu0
          %4028 = vmatprep.mubr.f32.mxu0 0.0
          %4029 = vmatmul.mubr.f32.gmra.mrb[0].mxu0 %v3497
          %v4030 = vpop.f32.mrb[0].mxu0
          %v4031 = vadd.f32 %v3367, %v4030
          %v4032 = vpop.f32.mrb[0].mxu0
          %4033 = vmatprep.mubr.f32.mxu0 0.0
          %4034 = vmatmul.mubr.f32.gmra.mrb[0].mxu0 %v3500
          %v4035 = vpop.f32.mrb[0].mxu0
          %v4036 = vadd.f32 %v3367, %v4035
          %v4037 = vpop.f32.mrb[0].mxu0
          %4038 = vmatprep.mubr.f32.mxu0 0.0
          %4039 = vmatmul.mubr.f32.gmra.mrb[0].mxu0 %v3503
          %v4040 = vpop.f32.mrb[0].mxu0
          %v4041 = vadd.f32 %v3367, %v4040
          %v4042 = vpop.f32.mrb[0].mxu0
          %4043 = vmatprep.mubr.f32.mxu0 0.0
          %4044 = vmatmul.mubr.f32.gmra.mrb[0].mxu0 %v3506
          %v4045 = vpop.f32.mrb[0].mxu0
          %v4046 = vadd.f32 %v3367, %v4045
          %v4047 = vpop.f32.mrb[0].mxu0
          %4048 = vmatprep.mubr.f32.mxu0 0.0
          %4049 = vmatmul.mubr.f32.gmra.mrb[0].mxu0 %v3509
          %v4050 = vpop.f32.mrb[0].mxu0
          %v4051 = vadd.f32 %v3367, %v4050
          %v4052 = vpop.f32.mrb[0].mxu0
          %4053 = vmatprep.mubr.f32.mxu0 0.0
          %4054 = vmatmul.mubr.f32.gmra.mrb[0].mxu0 %v3512
          %v4055 = vpop.f32.mrb[0].mxu0
          %v4056 = vadd.f32 %v3367, %v4055
          %v4057 = vpop.f32.mrb[0].mxu0
          %4058 = vmatprep.mubr.f32.mxu0 0.0
          %4059 = vmatmul.mubr.f32.gmra.mrb[0].mxu0 %v3515
          %v4060 = vpop.f32.mrb[0].mxu0
          %v4061 = vadd.f32 %v3367, %v4060
          %v4062 = vpop.f32.mrb[0].mxu0
          %4063 = vmatprep.mubr.f32.mxu0 0.0
          %4064 = vmatmul.mubr.f32.gmra.mrb[0].mxu0 %v3518
          %v4065 = vpop.f32.mrb[0].mxu0
          %v4066 = vadd.f32 %v3367, %v4065
          %v4067 = vpop.f32.mrb[0].mxu0
          %4068 = vmatprep.mubr.f32.mxu0 0.0
          %4069 = vmatmul.mubr.f32.gmra.mrb[0].mxu0 %v3521
          %v4070 = vpop.f32.mrb[0].mxu0
          %v4071 = vadd.f32 %v3367, %v4070
          %v4072 = vpop.f32.mrb[0].mxu0
          %4073 = vmatprep.mubr.f32.mxu0 0.0
          %4074 = vmatmul.mubr.f32.gmra.mrb[0].mxu0 %v3524
          %v4075 = vpop.f32.mrb[0].mxu0
          %v4076 = vadd.f32 %v3367, %v4075
          %v4077 = vpop.f32.mrb[0].mxu0
          %4078 = vmatprep.mubr.f32.mxu0 0.0
          %4079 = vmatmul.mubr.f32.gmra.mrb[0].mxu0 %v3527
          %v4080 = vpop.f32.mrb[0].mxu0
          %v4081 = vadd.f32 %v3367, %v4080
          %v4082 = vpop.f32.mrb[0].mxu0
          %4083 = vmatprep.mubr.f32.mxu0 0.0
          %4084 = vmatmul.mubr.f32.gmra.mrb[0].mxu0 %v3530
          %v4085 = vpop.f32.mrb[0].mxu0
          %v4086 = vadd.f32 %v3367, %v4085
          %v4087 = vpop.f32.mrb[0].mxu0
          %4088 = vmatprep.mubr.f32.mxu0 0.0
          %4089 = vmatmul.mubr.f32.gmra.mrb[0].mxu0 %v3533
          %v4090 = vpop.f32.mrb[0].mxu0
          %v4091 = vadd.f32 %v3367, %v4090
          %v4092 = vpop.f32.mrb[0].mxu0
          %4093 = vmatprep.mubr.f32.mxu0 0.0
          %4094 = vmatmul.mubr.f32.gmra.mrb[0].mxu0 %v3536
          %v4095 = vpop.f32.mrb[0].mxu0
          %v4096 = vadd.f32 %v3367, %v4095
          %v4097 = vpop.f32.mrb[0].mxu0
          %4098 = vmatprep.mubr.f32.mxu0 0.0
          %4099 = vmatmul.mubr.f32.gmra.mrb[0].mxu0 %v3539
          %v4100 = vpop.f32.mrb[0].mxu0
          %v4101 = vadd.f32 %v3367, %v4100
          %v4102 = vpop.f32.mrb[0].mxu0
          %4103 = vmatprep.mubr.f32.mxu0 0.0
          %4104 = vmatmul.mubr.f32.gmra.mrb[0].mxu0 %v3542
          %v4105 = vpop.f32.mrb[0].mxu0
          %v4106 = vadd.f32 %v3367, %v4105
          %v4107 = vpop.f32.mrb[0].mxu0
          %4108 = vmatprep.mubr.f32.mxu0 0.0
          %4109 = vmatmul.mubr.f32.gmra.mrb[0].mxu0 %v3545
          %v4110 = vpop.f32.mrb[0].mxu0
          %v4111 = vadd.f32 %v3367, %v4110
          %v4112 = vpop.f32.mrb[0].mxu0
          %4113 = vmatprep.mubr.f32.mxu0 0.0
          %4114 = vmatmul.mubr.f32.gmra.mrb[0].mxu0 %v3548
          %v4115 = vpop.f32.mrb[0].mxu0
          %v4116 = vadd.f32 %v3367, %v4115
          %v4117 = vpop.f32.mrb[0].mxu0
          %4118 = vmatprep.mubr.f32.mxu0 0.0
          %4119 = vmatmul.mubr.f32.gmra.mrb[0].mxu0 %v3551
          %v4120 = vpop.f32.mrb[0].mxu0
          %v4121 = vadd.f32 %v3367, %v4120
          %v4122 = vpop.f32.mrb[0].mxu0
          %4123 = vmatprep.mubr.f32.mxu0 0.0
          %4124 = vmatmul.mubr.f32.gmra.mrb[0].mxu0 %v3554
          %v4125 = vpop.f32.mrb[0].mxu0
          %v4126 = vadd.f32 %v3367, %v4125
          %v4127 = vpop.f32.mrb[0].mxu0
          %4128 = vmatprep.mubr.f32.mxu0 0.0
          %4129 = vmatmul.mubr.f32.gmra.mrb[0].mxu0 %v3557
          %v4130 = vpop.f32.mrb[0].mxu0
          %v4131 = vadd.f32 %v3367, %v4130
          %v4132 = vpop.f32.mrb[0].mxu0
          %4133 = vmatprep.mubr.f32.mxu0 0.0
          %4134 = vmatmul.mubr.f32.gmra.mrb[0].mxu0 %v3560
          %v4135 = vpop.f32.mrb[0].mxu0
          %v4136 = vadd.f32 %v3367, %v4135
          %v4137 = vpop.f32.mrb[0].mxu0
          %4138 = vmatprep.mubr.f32.mxu0 0.0
          %4139 = vmatmul.mubr.f32.gmra.mrb[0].mxu0 %v3563
          %v4140 = vpop.f32.mrb[0].mxu0
          %v4141 = vadd.f32 %v3367, %v4140
          %v4142 = vpop.f32.mrb[0].mxu0
          %4143 = vmatprep.mubr.f32.mxu0 0.0
          %4144 = vmatmul.mubr.f32.gmra.mrb[0].mxu0 %v3566
          %v4145 = vpop.f32.mrb[0].mxu0
          %v4146 = vadd.f32 %v3367, %v4145
          %v4147 = vpop.f32.mrb[0].mxu0
          %4148 = vmatprep.mubr.f32.mxu0 0.0
          %4149 = vmatmul.mubr.f32.gmra.mrb[0].mxu0 %v3569
          %v4150 = vpop.f32.mrb[0].mxu0
          %v4151 = vadd.f32 %v3367, %v4150
          %v4152 = vpop.f32.mrb[0].mxu0
          %4153 = vmatprep.mubr.f32.mxu0 0.0
          %4154 = vmatmul.mubr.f32.gmra.mrb[0].mxu0 %v3572
          %v4155 = vpop.f32.mrb[0].mxu0
          %v4156 = vadd.f32 %v3367, %v4155
          %v4157 = vpop.f32.mrb[0].mxu0
          %4158 = vmatprep.mubr.f32.mxu0 0.0
          %4159 = vmatmul.mubr.f32.gmra.mrb[0].mxu0 %v3575
          %v4160 = vpop.f32.mrb[0].mxu0
          %v4161 = vadd.f32 %v3367, %v4160
          %v4162 = vpop.f32.mrb[0].mxu0
          %4163 = vmatprep.mubr.f32.mxu0 0.0
          %4164 = vmatmul.mubr.f32.gmra.mrb[0].mxu0 %v3578
          %v4165 = vpop.f32.mrb[0].mxu0
          %v4166 = vadd.f32 %v3367, %v4165
          %v4167 = vpop.f32.mrb[0].mxu0
          %4168 = vmatprep.mubr.f32.mxu0 0.0
          %4169 = vmatmul.mubr.f32.gmra.mrb[0].mxu0 %v3581
          %v4170 = vpop.f32.mrb[0].mxu0
          %v4171 = vadd.f32 %v3367, %v4170
          %v4172 = vpop.f32.mrb[0].mxu0
          %4173 = vmatprep.mubr.f32.mxu0 0.0
          %4174 = vmatmul.mubr.f32.gmra.mrb[0].mxu0 %v3584
          %v4175 = vpop.f32.mrb[0].mxu0
          %v4176 = vadd.f32 %v3367, %v4175
          %v4177 = vpop.f32.mrb[0].mxu0
          %4178 = vmatprep.mubr.f32.mxu0 0.0
          %4179 = vmatmul.mubr.f32.gmra.mrb[0].mxu0 %v3587
          %v4180 = vpop.f32.mrb[0].mxu0
          %v4181 = vadd.f32 %v3367, %v4180
          %v4182 = vpop.f32.mrb[0].mxu0
          %4183 = vmatprep.mubr.f32.mxu0 0.0
          %4184 = vmatmul.mubr.f32.gmra.mrb[0].mxu0 %v3590
          %v4185 = vpop.f32.mrb[0].mxu0
          %v4186 = vadd.f32 %v3367, %v4185
          %v4187 = vpop.f32.mrb[0].mxu0
          %4188 = vmatprep.mubr.f32.mxu0 0.0
          %4189 = vmatmul.mubr.f32.gmra.mrb[0].mxu0 %v3593
          %v4190 = vpop.f32.mrb[0].mxu0
          %v4191 = vadd.f32 %v3367, %v4190
          %v4192 = vpop.f32.mrb[0].mxu0
          %4193 = vmatprep.mubr.f32.mxu0 0.0
          %4194 = vmatmul.mubr.f32.gmra.mrb[0].mxu0 %v3596
          %v4195 = vpop.f32.mrb[0].mxu0
          %v4196 = vadd.f32 %v3367, %v4195
          %v4197 = vpop.f32.mrb[0].mxu0
          %4198 = vmatprep.mubr.f32.mxu0 0.0
          %4199 = vmatmul.mubr.f32.gmra.mrb[0].mxu0 %v3599
          %v4200 = vpop.f32.mrb[0].mxu0
          %v4201 = vadd.f32 %v3367, %v4200
          %v4202 = vpop.f32.mrb[0].mxu0
          %4203 = vmatprep.mubr.f32.mxu0 0.0
          %4204 = vmatmul.mubr.f32.gmra.mrb[0].mxu0 %v3602
          %v4205 = vpop.f32.mrb[0].mxu0
          %v4206 = vadd.f32 %v3367, %v4205
          %v4207 = vpop.f32.mrb[0].mxu0
          %4208 = vmatprep.mubr.f32.mxu0 0.0
          %4209 = vmatmul.mubr.f32.gmra.mrb[0].mxu0 %v3605
          %v4210 = vpop.f32.mrb[0].mxu0
          %v4211 = vadd.f32 %v3367, %v4210
          %v4212 = vpop.f32.mrb[0].mxu0
          %4213 = vmatprep.mubr.f32.mxu0 0.0
          %4214 = vmatmul.mubr.f32.gmra.mrb[0].mxu0 %v3608
          %v4215 = vpop.f32.mrb[0].mxu0
          %v4216 = vadd.f32 %v3367, %v4215
          %v4217 = vpop.f32.mrb[0].mxu0
          %4218 = vmatprep.mubr.f32.mxu0 0.0
          %4219 = vmatmul.mubr.f32.gmra.mrb[0].mxu0 %v3611
          %v4220 = vpop.f32.mrb[0].mxu0
          %v4221 = vadd.f32 %v3367, %v4220
          %v4222 = vpop.f32.mrb[0].mxu0
          %4223 = vmatprep.mubr.f32.mxu0 0.0
          %4224 = vmatmul.mubr.f32.gmra.mrb[0].mxu0 %v3614
          %v4225 = vpop.f32.mrb[0].mxu0
          %v4226 = vadd.f32 %v3367, %v4225
          %v4227 = vpop.f32.mrb[0].mxu0
          %4228 = vmatprep.mubr.f32.mxu0 0.0
          %4229 = vmatmul.mubr.f32.gmra.mrb[0].mxu0 %v3617
          %v4230 = vpop.f32.mrb[0].mxu0
          %v4231 = vadd.f32 %v3367, %v4230
          %v4232 = vpop.f32.mrb[0].mxu0
          %4233 = vmatprep.mubr.f32.mxu0 0.0
          %4234 = vmatmul.mubr.f32.gmra.mrb[0].mxu0 %v3620
          %v4235 = vpop.f32.mrb[0].mxu0
          %v4236 = vadd.f32 %v3367, %v4235
          %v4237 = vpop.f32.mrb[0].mxu0
          %4238 = vmatprep.mubr.f32.mxu0 0.0
          %4239 = vmatmul.mubr.f32.gmra.mrb[0].mxu0 %v3623
          %v4240 = vpop.f32.mrb[0].mxu0
          %v4241 = vadd.f32 %v3367, %v4240
          %v4242 = vpop.f32.mrb[0].mxu0
          %4243 = vmatprep.mubr.f32.mxu0 0.0
          %4244 = vmatmul.mubr.f32.gmra.mrb[0].mxu0 %v3626
          %v4245 = vpop.f32.mrb[0].mxu0
          %v4246 = vadd.f32 %v3367, %v4245
          %v4247 = vpop.f32.mrb[0].mxu0
          %4248 = vmatprep.mubr.f32.mxu0 0.0
          %4249 = vmatmul.mubr.f32.gmra.mrb[0].mxu0 %v3629
          %v4250 = vpop.f32.mrb[0].mxu0
          %v4251 = vadd.f32 %v3367, %v4250
          %v4252 = vpop.f32.mrb[0].mxu0
          %4253 = vmatprep.mubr.f32.mxu0 0.0
          %4254 = vmatmul.mubr.f32.gmra.mrb[0].mxu0 %v3632
          %v4255 = vpop.f32.mrb[0].mxu0
          %v4256 = vadd.f32 %v3367, %v4255
          %v4257 = vpop.f32.mrb[0].mxu0
          %4258 = vmatprep.mubr.f32.mxu0 0.0
          %4259 = vmatmul.mubr.f32.gmra.mrb[0].mxu0 %v3635
          %v4260 = vpop.f32.mrb[0].mxu0
          %v4261 = vadd.f32 %v3367, %v4260
          %v4262 = vpop.f32.mrb[0].mxu0
          %4263 = vmatprep.mubr.f32.mxu0 0.0
          %4264 = vmatmul.mubr.f32.gmra.mrb[0].mxu0 %v3638
          %v4265 = vpop.f32.mrb[0].mxu0
          %v4266 = vadd.f32 %v3367, %v4265
          %v4267 = vpop.f32.mrb[0].mxu0
          %4268 = vmatprep.mubr.f32.mxu0 0.0
          %4269 = vmatmul.mubr.f32.gmra.mrb[0].mxu0 %v3641
          %v4270 = vpop.f32.mrb[0].mxu0
          %v4271 = vadd.f32 %v3367, %v4270
          %v4272 = vpop.f32.mrb[0].mxu0
          %4273 = vmatprep.mubr.f32.mxu0 0.0
          %4274 = vmatmul.mubr.f32.gmra.mrb[0].mxu0 %v3644
          %v4275 = vpop.f32.mrb[0].mxu0
          %v4276 = vadd.f32 %v3367, %v4275
          %v4277 = vpop.f32.mrb[0].mxu0
          %4278 = vmatprep.mubr.f32.mxu0 0.0
          %4279 = vmatmul.mubr.f32.gmra.mrb[0].mxu0 %v3647
          %v4280 = vpop.f32.mrb[0].mxu0
          %v4281 = vadd.f32 %v3367, %v4280
          %v4282 = vpop.f32.mrb[0].mxu0
          %4283 = vmatprep.mubr.f32.mxu0 0.0
          %4284 = vmatmul.mubr.f32.gmra.mrb[0].mxu0 %v3650
          %v4285 = vpop.f32.mrb[0].mxu0
          %v4286 = vadd.f32 %v3367, %v4285
          %v4287 = vpop.f32.mrb[0].mxu0
          %4288 = vmatprep.mubr.f32.mxu0 0.0
          %4289 = vmatmul.mubr.f32.gmra.mrb[0].mxu0 %v3653
          %v4290 = vpop.f32.mrb[0].mxu0
          %v4291 = vadd.f32 %v3367, %v4290
          %v4292 = vpop.f32.mrb[0].mxu0
          %4293 = vmatprep.mubr.f32.mxu0 0.0
          %4294 = vmatmul.mubr.f32.gmra.mrb[0].mxu0 %v3656
          %v4295 = vpop.f32.mrb[0].mxu0
          %v4296 = vadd.f32 %v3367, %v4295
          %v4297 = vpop.f32.mrb[0].mxu0
          %4298 = vmatprep.mubr.f32.mxu0 0.0
          %4299 = vmatmul.mubr.f32.gmra.mrb[0].mxu0 %v3659
          %v4300 = vpop.f32.mrb[0].mxu0
          %v4301 = vadd.f32 %v3367, %v4300
          %v4302 = vpop.f32.mrb[0].mxu0
          %4303 = vmatprep.mubr.f32.mxu0 0.0
          %4304 = vmatmul.mubr.f32.gmra.mrb[0].mxu0 %v3662
          %v4305 = vpop.f32.mrb[0].mxu0
          %v4306 = vadd.f32 %v3367, %v4305
          %v4307 = vpop.f32.mrb[0].mxu0
          %4308 = vmatprep.mubr.f32.mxu0 0.0
          %4309 = vmatmul.mubr.f32.gmra.mrb[0].mxu0 %v3665
          %v4310 = vpop.f32.mrb[0].mxu0
          %v4311 = vadd.f32 %v3367, %v4310
          %v4312 = vpop.f32.mrb[0].mxu0
          %4313 = vmatprep.mubr.f32.mxu0 0.0
          %4314 = vmatmul.mubr.f32.gmra.mrb[0].mxu0 %v3668
          %v4315 = vpop.f32.mrb[0].mxu0
          %v4316 = vadd.f32 %v3367, %v4315
          %v4317 = vpop.f32.mrb[0].mxu0
          %4318 = vmatprep.mubr.f32.mxu0 0.0
          %4319 = vmatmul.mubr.f32.gmra.mrb[0].mxu0 %v3671
          %v4320 = vpop.f32.mrb[0].mxu0
          %v4321 = vadd.f32 %v3367, %v4320
          %v4322 = vpop.f32.mrb[0].mxu0
          %4323 = vmatprep.mubr.f32.mxu0 0.0
          %4324 = vmatmul.mubr.f32.gmra.mrb[0].mxu0 %v3674
          %v4325 = vpop.f32.mrb[0].mxu0
          %v4326 = vadd.f32 %v3367, %v4325
          %v4327 = vpop.f32.mrb[0].mxu0
          %4328 = vmatprep.mubr.f32.mxu0 0.0
          %4329 = vmatmul.mubr.f32.gmra.mrb[0].mxu0 %v3677
          %v4330 = vpop.f32.mrb[0].mxu0
          %v4331 = vadd.f32 %v3367, %v4330
          %v4332 = vpop.f32.mrb[0].mxu0
          %4333 = vmatprep.mubr.f32.mxu0 0.0
          %4334 = vmatmul.mubr.f32.gmra.mrb[0].mxu0 %v3680
          %v4335 = vpop.f32.mrb[0].mxu0
          %v4336 = vadd.f32 %v3367, %v4335
          %v4337 = vpop.f32.mrb[0].mxu0
          %4338 = vmatprep.mubr.f32.mxu0 0.0
          %4339 = vmatmul.mubr.f32.gmra.mrb[0].mxu0 %v3683
          %v4340 = vpop.f32.mrb[0].mxu0
          %v4341 = vadd.f32 %v3367, %v4340
          %v4342 = vpop.f32.mrb[0].mxu0
          %4343 = vmatprep.mubr.f32.mxu0 0.0
          %4344 = vmatmul.mubr.f32.gmra.mrb[0].mxu0 %v3686
          %v4345 = vpop.f32.mrb[0].mxu0
          %v4346 = vadd.f32 %v3367, %v4345
          %v4347 = vpop.f32.mrb[0].mxu0
          %4348 = vmatprep.mubr.f32.mxu0 0.0
          %4349 = vmatmul.mubr.f32.gmra.mrb[0].mxu0 %v3689
          %v4350 = vpop.f32.mrb[0].mxu0
          %v4351 = vadd.f32 %v3367, %v4350
          %v4352 = vpop.f32.mrb[0].mxu0
          %4353 = vmatprep.mubr.f32.mxu0 0.0
          %4354 = vmatmul.mubr.f32.gmra.mrb[0].mxu0 %v3692
          %v4355 = vpop.f32.mrb[0].mxu0
          %v4356 = vadd.f32 %v3367, %v4355
          %v4357 = vpop.f32.mrb[0].mxu0
          %4358 = vmatprep.mubr.f32.mxu0 0.0
          %4359 = vmatmul.mubr.f32.gmra.mrb[0].mxu0 %v3695
          %v4360 = vpop.f32.mrb[0].mxu0
          %v4361 = vadd.f32 %v3367, %v4360
          %v4362 = vpop.f32.mrb[0].mxu0
          %4363 = vmatprep.mubr.f32.mxu0 0.0
          %4364 = vmatmul.mubr.f32.gmra.mrb[0].mxu0 %v3698
          %v4365 = vpop.f32.mrb[0].mxu0
          %v4366 = vadd.f32 %v3367, %v4365
          %v4367 = vpop.f32.mrb[0].mxu0
          %4368 = vmatprep.mubr.f32.mxu0 0.0
          %4369 = vmatmul.mubr.f32.gmra.mrb[0].mxu0 %v3701
          %v4370 = vpop.f32.mrb[0].mxu0
          %v4371 = vadd.f32 %v3367, %v4370
          %v4372 = vpop.f32.mrb[0].mxu0
          %4373 = vmatprep.mubr.f32.mxu0 0.0
          %4374 = vmatmul.mubr.f32.gmra.mrb[0].mxu0 %v3704
          %v4375 = vpop.f32.mrb[0].mxu0
          %v4376 = vadd.f32 %v3367, %v4375
          %v4377 = vpop.f32.mrb[0].mxu0
          %4378 = vmatprep.mubr.f32.mxu0 0.0
          %4379 = vmatmul.mubr.f32.gmra.mrb[0].mxu0 %v3707
          %v4380 = vpop.f32.mrb[0].mxu0
          %v4381 = vadd.f32 %v3367, %v4380
          %v4382 = vpop.f32.mrb[0].mxu0
          %4383 = vmatprep.mubr.f32.mxu0 0.0
          %4384 = vmatmul.mubr.f32.gmra.mrb[0].mxu0 %v3710
          %v4385 = vpop.f32.mrb[0].mxu0
          %v4386 = vadd.f32 %v3367, %v4385
          %v4387 = vpop.f32.mrb[0].mxu0
          %4388 = vmatprep.mubr.f32.mxu0 0.0
          %4389 = vmatmul.mubr.f32.gmra.mrb[0].mxu0 %v3713
          %v4390 = vpop.f32.mrb[0].mxu0
          %v4391 = vadd.f32 %v3367, %v4390
          %v4392 = vpop.f32.mrb[0].mxu0
          %4393 = vmatprep.mubr.f32.mxu0 0.0
          %4394 = vmatmul.mubr.f32.gmra.mrb[0].mxu0 %v3716
          %v4395 = vpop.f32.mrb[0].mxu0
          %v4396 = vadd.f32 %v3367, %v4395
          %v4397 = vpop.f32.mrb[0].mxu0
          %4398 = vmatprep.mubr.f32.mxu0 0.0
          %4399 = vmatmul.mubr.f32.gmra.mrb[0].mxu0 %v3719
          %v4400 = vpop.f32.mrb[0].mxu0
          %v4401 = vadd.f32 %v3367, %v4400
          %v4402 = vpop.f32.mrb[0].mxu0
          %4403 = vmatprep.mubr.f32.mxu0 0.0
          %4404 = vmatmul.mubr.f32.gmra.mrb[0].mxu0 %v3722
          %v4405 = vpop.f32.mrb[0].mxu0
          %v4406 = vadd.f32 %v3367, %v4405
          %v4407 = vpop.f32.mrb[0].mxu0
          %4408 = vmatprep.mubr.f32.mxu0 0.0
          %4409 = vmatmul.mubr.f32.gmra.mrb[0].mxu0 %v3725
          %v4410 = vpop.f32.mrb[0].mxu0
          %v4411 = vadd.f32 %v3367, %v4410
          %v4412 = vpop.f32.mrb[0].mxu0
          %4413 = vmatprep.mubr.f32.mxu0 0.0
          %4414 = vmatmul.mubr.f32.gmra.mrb[0].mxu0 %v3728
          %v4415 = vpop.f32.mrb[0].mxu0
          %v4416 = vadd.f32 %v3367, %v4415
          %v4417 = vpop.f32.mrb[0].mxu0
          %4418 = vmatprep.mubr.f32.mxu0 0.0
          %4419 = vmatmul.mubr.f32.gmra.mrb[0].mxu0 %v3731
          %v4420 = vpop.f32.mrb[0].mxu0
          %v4421 = vadd.f32 %v3367, %v4420
          %v4422 = vpop.f32.mrb[0].mxu0
          %4423 = vmatprep.mubr.f32.mxu0 0.0
          %4424 = vmatmul.mubr.f32.gmra.mrb[0].mxu0 %v3734
          %v4425 = vpop.f32.mrb[0].mxu0
          %v4426 = vadd.f32 %v3367, %v4425
          %v4427 = vpop.f32.mrb[0].mxu0
          %4428 = vmatprep.mubr.f32.mxu0 0.0
          %4429 = vmatmul.mubr.f32.gmra.mrb[0].mxu0 %v3737
          %v4430 = vpop.f32.mrb[0].mxu0
          %v4431 = vadd.f32 %v3367, %v4430
          %v4432 = vpop.f32.mrb[0].mxu0
          %4433 = vmatprep.mubr.f32.mxu0 0.0
          %4434 = vmatmul.mubr.f32.gmra.mrb[0].mxu0 %v3740
          %v4435 = vpop.f32.mrb[0].mxu0
          %v4436 = vadd.f32 %v3367, %v4435
          %v4437 = vpop.f32.mrb[0].mxu0
          %4438 = vmatprep.mubr.f32.mxu0 0.0
          %4439 = vmatmul.mubr.f32.gmra.mrb[0].mxu0 %v3743
          %v4440 = vpop.f32.mrb[0].mxu0
          %v4441 = vadd.f32 %v3367, %v4440
          %v4442 = vpop.f32.mrb[0].mxu0
          %4443 = vmatprep.mubr.f32.mxu0 0.0
          %4444 = vmatmul.mubr.f32.gmra.mrb[0].mxu0 %v3746
          %v4445 = vpop.f32.mrb[0].mxu0
          %v4446 = vadd.f32 %v3367, %v4445
          %v4447 = vpop.f32.mrb[0].mxu0
          %4448 = vmatprep.mubr.f32.mxu0 0.0
          %4449 = vmatmul.mubr.f32.gmra.mrb[0].mxu0 %v3749
          %v4450 = vpop.f32.mrb[0].mxu0
          %v4451 = vadd.f32 %v3367, %v4450
          %v4452 = vpop.f32.mrb[0].mxu0
          %4453 = vmatprep.mubr.f32.mxu0 0.0
          %4454 = vmatmul.mubr.f32.gmra.mrb[0].mxu0 %v3752
          %v4455 = vpop.f32.mrb[0].mxu0
          %v4456 = vadd.f32 %v3367, %v4455
          %v4457 = vpop.f32.mrb[0].mxu0
          %4458 = vdwg.mxu0
          %v4459 = vld [vmem:[#allocation23] sm:$0xff]
          %v4460 = vld [vmem:[#allocation23 + $0x8] sm:$0xff]
          %v4461 = vld [vmem:[#allocation23 + $0x10] sm:$0xff]
          %v4462 = vld [vmem:[#allocation23 + $0x18] sm:$0xff]
          %v4464 = vsel %vm754, %v3821, 0
          %v4467 = vsel %vm754, %v3826, 0
          %v4470 = vsel %vm754, %v3831, 0
          %v4473 = vsel %vm754, %v3836, 0
          %v4476 = vsel %vm754, %v3841, 0
          %v4479 = vsel %vm754, %v3846, 0
          %v4482 = vsel %vm754, %v3851, 0
          %v4485 = vsel %vm754, %v3856, 0
          %v4488 = vsel %vm754, %v3861, 0
          %v4491 = vsel %vm754, %v3866, 0
          %v4494 = vsel %vm754, %v3871, 0
          %v4497 = vsel %vm754, %v3876, 0
          %v4500 = vsel %vm754, %v3881, 0
          %v4503 = vsel %vm754, %v3886, 0
          %v4506 = vsel %vm754, %v3891, 0
          %v4509 = vsel %vm754, %v3896, 0
          %v4512 = vsel %vm754, %v3901, 0
          %v4515 = vsel %vm754, %v3906, 0
          %v4518 = vsel %vm754, %v3911, 0
          %v4521 = vsel %vm754, %v3916, 0
          %v4524 = vsel %vm754, %v3921, 0
          %v4527 = vsel %vm754, %v3926, 0
          %v4530 = vsel %vm754, %v3931, 0
          %v4533 = vsel %vm754, %v3936, 0
          %v4536 = vsel %vm754, %v3941, 0
          %v4539 = vsel %vm754, %v3946, 0
          %v4542 = vsel %vm754, %v3951, 0
          %v4545 = vsel %vm754, %v3956, 0
          %v4548 = vsel %vm754, %v3961, 0
          %v4551 = vsel %vm754, %v3966, 0
          %v4554 = vsel %vm754, %v3971, 0
          %v4557 = vsel %vm754, %v3976, 0
          %v4560 = vsel %vm754, %v3981, 0
          %v4563 = vsel %vm754, %v3986, 0
          %v4566 = vsel %vm754, %v3991, 0
          %v4569 = vsel %vm754, %v3996, 0
          %v4572 = vsel %vm754, %v4001, 0
          %v4575 = vsel %vm754, %v4006, 0
          %v4578 = vsel %vm754, %v4011, 0
          %v4581 = vsel %vm754, %v4016, 0
          %v4584 = vsel %vm754, %v4021, 0
          %v4587 = vsel %vm754, %v4026, 0
          %v4590 = vsel %vm754, %v4031, 0
          %v4593 = vsel %vm754, %v4036, 0
          %v4596 = vsel %vm754, %v4041, 0
          %v4599 = vsel %vm754, %v4046, 0
          %v4602 = vsel %vm754, %v4051, 0
          %v4605 = vsel %vm754, %v4056, 0
          %v4608 = vsel %vm754, %v4061, 0
          %v4611 = vsel %vm754, %v4066, 0
          %v4614 = vsel %vm754, %v4071, 0
          %v4617 = vsel %vm754, %v4076, 0
          %v4620 = vsel %vm754, %v4081, 0
          %v4623 = vsel %vm754, %v4086, 0
          %v4626 = vsel %vm754, %v4091, 0
          %v4629 = vsel %vm754, %v4096, 0
          %v4632 = vsel %vm754, %v4101, 0
          %v4635 = vsel %vm754, %v4106, 0
          %v4638 = vsel %vm754, %v4111, 0
          %v4641 = vsel %vm754, %v4116, 0
          %v4644 = vsel %vm754, %v4121, 0
          %v4647 = vsel %vm754, %v4126, 0
          %v4650 = vsel %vm754, %v4131, 0
          %v4653 = vsel %vm754, %v4136, 0
          %v4656 = vsel %vm754, %v4141, 0
          %v4659 = vsel %vm754, %v4146, 0
          %v4662 = vsel %vm754, %v4151, 0
          %v4665 = vsel %vm754, %v4156, 0
          %v4668 = vsel %vm754, %v4161, 0
          %v4671 = vsel %vm754, %v4166, 0
          %v4674 = vsel %vm754, %v4171, 0
          %v4677 = vsel %vm754, %v4176, 0
          %v4680 = vsel %vm754, %v4181, 0
          %v4683 = vsel %vm754, %v4186, 0
          %v4686 = vsel %vm754, %v4191, 0
          %v4689 = vsel %vm754, %v4196, 0
          %v4692 = vsel %vm754, %v4201, 0
          %v4695 = vsel %vm754, %v4206, 0
          %v4698 = vsel %vm754, %v4211, 0
          %v4701 = vsel %vm754, %v4216, 0
          %v4704 = vsel %vm754, %v4221, 0
          %v4707 = vsel %vm754, %v4226, 0
          %v4710 = vsel %vm754, %v4231, 0
          %v4713 = vsel %vm754, %v4236, 0
          %v4716 = vsel %vm754, %v4241, 0
          %v4719 = vsel %vm754, %v4246, 0
          %v4722 = vsel %vm754, %v4251, 0
          %v4725 = vsel %vm754, %v4256, 0
          %v4728 = vsel %vm754, %v4261, 0
          %v4731 = vsel %vm754, %v4266, 0
          %v4734 = vsel %vm754, %v4271, 0
          %v4737 = vsel %vm754, %v4276, 0
          %v4740 = vsel %vm754, %v4281, 0
          %v4743 = vsel %vm754, %v4286, 0
          %v4746 = vsel %vm754, %v4291, 0
          %v4749 = vsel %vm754, %v4296, 0
          %v4752 = vsel %vm754, %v4301, 0
          %v4755 = vsel %vm754, %v4306, 0
          %v4758 = vsel %vm754, %v4311, 0
          %v4761 = vsel %vm754, %v4316, 0
          %v4764 = vsel %vm754, %v4321, 0
          %v4767 = vsel %vm754, %v4326, 0
          %v4770 = vsel %vm754, %v4331, 0
          %v4773 = vsel %vm754, %v4336, 0
          %v4776 = vsel %vm754, %v4341, 0
          %v4779 = vsel %vm754, %v4346, 0
          %v4782 = vsel %vm754, %v4351, 0
          %v4785 = vsel %vm754, %v4356, 0
          %v4788 = vsel %vm754, %v4361, 0
          %v4791 = vsel %vm754, %v4366, 0
          %v4794 = vsel %vm754, %v4371, 0
          %v4797 = vsel %vm754, %v4376, 0
          %v4800 = vsel %vm754, %v4381, 0
          %v4803 = vsel %vm754, %v4386, 0
          %v4806 = vsel %vm754, %v4391, 0
          %v4809 = vsel %vm754, %v4396, 0
          %v4812 = vsel %vm754, %v4401, 0
          %v4815 = vsel %vm754, %v4406, 0
          %v4818 = vsel %vm754, %v4411, 0
          %v4821 = vsel %vm754, %v4416, 0
          %v4824 = vsel %vm754, %v4421, 0
          %v4827 = vsel %vm754, %v4426, 0
          %v4830 = vsel %vm754, %v4431, 0
          %v4833 = vsel %vm754, %v4436, 0
          %v4836 = vsel %vm754, %v4441, 0
          %v4839 = vsel %vm754, %v4446, 0
          %v4842 = vsel %vm754, %v4451, 0
          %v4845 = vsel %vm754, %v4456, 0
          %4847 = vmatprep.subr.mxu0 0.0
          %4848 = vmatpush1.msra.mxu0 %v4459
          %4849 = vmatprep.subr.mxu0 0.0
          %4850 = vmatpush1.msra.mxu0 %v4460
          %4851 = vmatprep.subr.mxu0 0.0
          %4852 = vmatpush1.msra.mxu0 %v4461
          %4853 = vmatprep.subr.mxu0 0.0
          %4854 = vmatpush1.msra.mxu0 %v4462
          %4855 = vmatprep.subr.mxu0 0.0
          %4856 = vmatpush1.msra.mxu0 0.0
          %4857 = vmatprep.subr.mxu0 0.0
          %4858 = vmatpush1.msra.mxu0 0.0
          %4859 = vmatprep.subr.mxu0 0.0
          %4860 = vmatpush1.msra.mxu0 0.0
          %4861 = vmatprep.subr.mxu0 0.0
          %4862 = vmatpush1.msra.mxu0 0.0
          %4863 = vmatprep.subr.mxu0 0.0
          %4864 = vmatpush1.msra.mxu0 0.0
          %4865 = vmatprep.subr.mxu0 0.0
          %4866 = vmatpush1.msra.mxu0 0.0
          %4867 = vmatprep.subr.mxu0 0.0
          %4868 = vmatpush1.msra.mxu0 0.0
          %4869 = vmatprep.subr.mxu0 0.0
          %4870 = vmatpush1.msra.mxu0 0.0
          %4871 = vmatprep.subr.mxu0 0.0
          %4872 = vmatpush1.msra.mxu0 0.0
          %4873 = vmatprep.subr.mxu0 0.0
          %4874 = vmatpush1.msra.mxu0 0.0
          %4875 = vmatprep.subr.mxu0 0.0
          %4876 = vmatpush1.msra.mxu0 0.0
          %4877 = vmatprep.subr.mxu0 0.0
          %4878 = vmatpush1.msra.mxu0 0.0
          %4879 = vmatprep.subr.mxu0 0.0
          %4880 = vmatpush1.msra.mxu0 0.0
          %4881 = vmatprep.subr.mxu0 0.0
          %4882 = vmatpush1.msra.mxu0 0.0
          %4883 = vmatprep.subr.mxu0 0.0
          %4884 = vmatpush1.msra.mxu0 0.0
          %4885 = vmatprep.subr.mxu0 0.0
          %4886 = vmatpush1.msra.mxu0 0.0
          %4887 = vmatprep.subr.mxu0 0.0
          %4888 = vmatpush1.msra.mxu0 0.0
          %4889 = vmatprep.subr.mxu0 0.0
          %4890 = vmatpush1.msra.mxu0 0.0
          %4891 = vmatprep.subr.mxu0 0.0
          %4892 = vmatpush1.msra.mxu0 0.0
          %4893 = vmatprep.subr.mxu0 0.0
          %4894 = vmatpush1.msra.mxu0 0.0
          %4895 = vmatprep.subr.mxu0 0.0
          %4896 = vmatpush1.msra.mxu0 0.0
          %4897 = vmatprep.subr.mxu0 0.0
          %4898 = vmatpush1.msra.mxu0 0.0
          %4899 = vmatprep.subr.mxu0 0.0
          %4900 = vmatpush1.msra.mxu0 0.0
          %4901 = vmatprep.subr.mxu0 0.0
          %4902 = vmatpush1.msra.mxu0 0.0
          %4903 = vmatprep.subr.mxu0 0.0
          %4904 = vmatpush1.msra.mxu0 0.0
          %4905 = vmatprep.subr.mxu0 0.0
          %4906 = vmatpush1.msra.mxu0 0.0
          %4907 = vmatprep.subr.mxu0 0.0
          %4908 = vmatpush1.msra.mxu0 0.0
          %4909 = vmatprep.subr.mxu0 0.0
          %4910 = vmatpush1.msra.mxu0 0.0
          %4911 = vmatprep.mubr.f32.mxu0 0.0
          %4912 = vmatmul.mubr.f32.gmra.mrb[0].mxu0 %v4464
          %v4913 = vpop.f32.mrb[0].mxu0
          %v4914 = vadd.f32 0.0, %v4913
          %v4915 = vpop.f32.mrb[0].mxu0
          %4916 = vmatprep.mubr.f32.mxu0 0.0
          %4917 = vmatmul.mubr.f32.gmra.mrb[0].mxu0 %v4467
          %v4918 = vpop.f32.mrb[0].mxu0
          %v4919 = vadd.f32 0.0, %v4918
          %v4920 = vpop.f32.mrb[0].mxu0
          %4921 = vmatprep.mubr.f32.mxu0 0.0
          %4922 = vmatmul.mubr.f32.gmra.mrb[0].mxu0 %v4470
          %v4923 = vpop.f32.mrb[0].mxu0
          %v4924 = vadd.f32 0.0, %v4923
          %v4925 = vpop.f32.mrb[0].mxu0
          %4926 = vmatprep.mubr.f32.mxu0 0.0
          %4927 = vmatmul.mubr.f32.gmra.mrb[0].mxu0 %v4473
          %v4928 = vpop.f32.mrb[0].mxu0
          %v4929 = vadd.f32 0.0, %v4928
          %v4930 = vpop.f32.mrb[0].mxu0
          %4931 = vmatprep.mubr.f32.mxu0 0.0
          %4932 = vmatmul.mubr.f32.gmra.mrb[0].mxu0 %v4476
          %v4933 = vpop.f32.mrb[0].mxu0
          %v4934 = vadd.f32 0.0, %v4933
          %v4935 = vpop.f32.mrb[0].mxu0
          %4936 = vmatprep.mubr.f32.mxu0 0.0
          %4937 = vmatmul.mubr.f32.gmra.mrb[0].mxu0 %v4479
          %v4938 = vpop.f32.mrb[0].mxu0
          %v4939 = vadd.f32 0.0, %v4938
          %v4940 = vpop.f32.mrb[0].mxu0
          %4941 = vmatprep.mubr.f32.mxu0 0.0
          %4942 = vmatmul.mubr.f32.gmra.mrb[0].mxu0 %v4482
          %v4943 = vpop.f32.mrb[0].mxu0
          %v4944 = vadd.f32 0.0, %v4943
          %v4945 = vpop.f32.mrb[0].mxu0
          %4946 = vmatprep.mubr.f32.mxu0 0.0
          %4947 = vmatmul.mubr.f32.gmra.mrb[0].mxu0 %v4485
          %v4948 = vpop.f32.mrb[0].mxu0
          %v4949 = vadd.f32 0.0, %v4948
          %v4950 = vpop.f32.mrb[0].mxu0
          %4951 = vmatprep.mubr.f32.mxu0 0.0
          %4952 = vmatmul.mubr.f32.gmra.mrb[0].mxu0 %v4488
          %v4953 = vpop.f32.mrb[0].mxu0
          %v4954 = vadd.f32 0.0, %v4953
          %v4955 = vpop.f32.mrb[0].mxu0
          %4956 = vmatprep.mubr.f32.mxu0 0.0
          %4957 = vmatmul.mubr.f32.gmra.mrb[0].mxu0 %v4491
          %v4958 = vpop.f32.mrb[0].mxu0
          %v4959 = vadd.f32 0.0, %v4958
          %v4960 = vpop.f32.mrb[0].mxu0
          %4961 = vmatprep.mubr.f32.mxu0 0.0
          %4962 = vmatmul.mubr.f32.gmra.mrb[0].mxu0 %v4494
          %v4963 = vpop.f32.mrb[0].mxu0
          %v4964 = vadd.f32 0.0, %v4963
          %v4965 = vpop.f32.mrb[0].mxu0
          %4966 = vmatprep.mubr.f32.mxu0 0.0
          %4967 = vmatmul.mubr.f32.gmra.mrb[0].mxu0 %v4497
          %v4968 = vpop.f32.mrb[0].mxu0
          %v4969 = vadd.f32 0.0, %v4968
          %v4970 = vpop.f32.mrb[0].mxu0
          %4971 = vmatprep.mubr.f32.mxu0 0.0
          %4972 = vmatmul.mubr.f32.gmra.mrb[0].mxu0 %v4500
          %v4973 = vpop.f32.mrb[0].mxu0
          %v4974 = vadd.f32 0.0, %v4973
          %v4975 = vpop.f32.mrb[0].mxu0
          %4976 = vmatprep.mubr.f32.mxu0 0.0
          %4977 = vmatmul.mubr.f32.gmra.mrb[0].mxu0 %v4503
          %v4978 = vpop.f32.mrb[0].mxu0
          %v4979 = vadd.f32 0.0, %v4978
          %v4980 = vpop.f32.mrb[0].mxu0
          %4981 = vmatprep.mubr.f32.mxu0 0.0
          %4982 = vmatmul.mubr.f32.gmra.mrb[0].mxu0 %v4506
          %v4983 = vpop.f32.mrb[0].mxu0
          %v4984 = vadd.f32 0.0, %v4983
          %v4985 = vpop.f32.mrb[0].mxu0
          %4986 = vmatprep.mubr.f32.mxu0 0.0
          %4987 = vmatmul.mubr.f32.gmra.mrb[0].mxu0 %v4509
          %v4988 = vpop.f32.mrb[0].mxu0
          %v4989 = vadd.f32 0.0, %v4988
          %v4990 = vpop.f32.mrb[0].mxu0
          %4991 = vmatprep.mubr.f32.mxu0 0.0
          %4992 = vmatmul.mubr.f32.gmra.mrb[0].mxu0 %v4512
          %v4993 = vpop.f32.mrb[0].mxu0
          %v4994 = vadd.f32 0.0, %v4993
          %v4995 = vpop.f32.mrb[0].mxu0
          %4996 = vmatprep.mubr.f32.mxu0 0.0
          %4997 = vmatmul.mubr.f32.gmra.mrb[0].mxu0 %v4515
          %v4998 = vpop.f32.mrb[0].mxu0
          %v4999 = vadd.f32 0.0, %v4998
          %v5000 = vpop.f32.mrb[0].mxu0
          %5001 = vmatprep.mubr.f32.mxu0 0.0
          %5002 = vmatmul.mubr.f32.gmra.mrb[0].mxu0 %v4518
          %v5003 = vpop.f32.mrb[0].mxu0
          %v5004 = vadd.f32 0.0, %v5003
          %v5005 = vpop.f32.mrb[0].mxu0
          %5006 = vmatprep.mubr.f32.mxu0 0.0
          %5007 = vmatmul.mubr.f32.gmra.mrb[0].mxu0 %v4521
          %v5008 = vpop.f32.mrb[0].mxu0
          %v5009 = vadd.f32 0.0, %v5008
          %v5010 = vpop.f32.mrb[0].mxu0
          %5011 = vmatprep.mubr.f32.mxu0 0.0
          %5012 = vmatmul.mubr.f32.gmra.mrb[0].mxu0 %v4524
          %v5013 = vpop.f32.mrb[0].mxu0
          %v5014 = vadd.f32 0.0, %v5013
          %v5015 = vpop.f32.mrb[0].mxu0
          %5016 = vmatprep.mubr.f32.mxu0 0.0
          %5017 = vmatmul.mubr.f32.gmra.mrb[0].mxu0 %v4527
          %v5018 = vpop.f32.mrb[0].mxu0
          %v5019 = vadd.f32 0.0, %v5018
          %v5020 = vpop.f32.mrb[0].mxu0
          %5021 = vmatprep.mubr.f32.mxu0 0.0
          %5022 = vmatmul.mubr.f32.gmra.mrb[0].mxu0 %v4530
          %v5023 = vpop.f32.mrb[0].mxu0
          %v5024 = vadd.f32 0.0, %v5023
          %v5025 = vpop.f32.mrb[0].mxu0
          %5026 = vmatprep.mubr.f32.mxu0 0.0
          %5027 = vmatmul.mubr.f32.gmra.mrb[0].mxu0 %v4533
          %v5028 = vpop.f32.mrb[0].mxu0
          %v5029 = vadd.f32 0.0, %v5028
          %v5030 = vpop.f32.mrb[0].mxu0
          %5031 = vmatprep.mubr.f32.mxu0 0.0
          %5032 = vmatmul.mubr.f32.gmra.mrb[0].mxu0 %v4536
          %v5033 = vpop.f32.mrb[0].mxu0
          %v5034 = vadd.f32 0.0, %v5033
          %v5035 = vpop.f32.mrb[0].mxu0
          %5036 = vmatprep.mubr.f32.mxu0 0.0
          %5037 = vmatmul.mubr.f32.gmra.mrb[0].mxu0 %v4539
          %v5038 = vpop.f32.mrb[0].mxu0
          %v5039 = vadd.f32 0.0, %v5038
          %v5040 = vpop.f32.mrb[0].mxu0
          %5041 = vmatprep.mubr.f32.mxu0 0.0
          %5042 = vmatmul.mubr.f32.gmra.mrb[0].mxu0 %v4542
          %v5043 = vpop.f32.mrb[0].mxu0
          %v5044 = vadd.f32 0.0, %v5043
          %v5045 = vpop.f32.mrb[0].mxu0
          %5046 = vmatprep.mubr.f32.mxu0 0.0
          %5047 = vmatmul.mubr.f32.gmra.mrb[0].mxu0 %v4545
          %v5048 = vpop.f32.mrb[0].mxu0
          %v5049 = vadd.f32 0.0, %v5048
          %v5050 = vpop.f32.mrb[0].mxu0
          %5051 = vmatprep.mubr.f32.mxu0 0.0
          %5052 = vmatmul.mubr.f32.gmra.mrb[0].mxu0 %v4548
          %v5053 = vpop.f32.mrb[0].mxu0
          %v5054 = vadd.f32 0.0, %v5053
          %v5055 = vpop.f32.mrb[0].mxu0
          %5056 = vmatprep.mubr.f32.mxu0 0.0
          %5057 = vmatmul.mubr.f32.gmra.mrb[0].mxu0 %v4551
          %v5058 = vpop.f32.mrb[0].mxu0
          %v5059 = vadd.f32 0.0, %v5058
          %v5060 = vpop.f32.mrb[0].mxu0
          %5061 = vmatprep.mubr.f32.mxu0 0.0
          %5062 = vmatmul.mubr.f32.gmra.mrb[0].mxu0 %v4554
          %v5063 = vpop.f32.mrb[0].mxu0
          %v5064 = vadd.f32 0.0, %v5063
          %v5065 = vpop.f32.mrb[0].mxu0
          %5066 = vmatprep.mubr.f32.mxu0 0.0
          %5067 = vmatmul.mubr.f32.gmra.mrb[0].mxu0 %v4557
          %v5068 = vpop.f32.mrb[0].mxu0
          %v5069 = vadd.f32 0.0, %v5068
          %v5070 = vpop.f32.mrb[0].mxu0
          %5071 = vmatprep.mubr.f32.mxu0 0.0
          %5072 = vmatmul.mubr.f32.gmra.mrb[0].mxu0 %v4560
          %v5073 = vpop.f32.mrb[0].mxu0
          %v5074 = vadd.f32 0.0, %v5073
          %v5075 = vpop.f32.mrb[0].mxu0
          %5076 = vmatprep.mubr.f32.mxu0 0.0
          %5077 = vmatmul.mubr.f32.gmra.mrb[0].mxu0 %v4563
          %v5078 = vpop.f32.mrb[0].mxu0
          %v5079 = vadd.f32 0.0, %v5078
          %v5080 = vpop.f32.mrb[0].mxu0
          %5081 = vmatprep.mubr.f32.mxu0 0.0
          %5082 = vmatmul.mubr.f32.gmra.mrb[0].mxu0 %v4566
          %v5083 = vpop.f32.mrb[0].mxu0
          %v5084 = vadd.f32 0.0, %v5083
          %v5085 = vpop.f32.mrb[0].mxu0
          %5086 = vmatprep.mubr.f32.mxu0 0.0
          %5087 = vmatmul.mubr.f32.gmra.mrb[0].mxu0 %v4569
          %v5088 = vpop.f32.mrb[0].mxu0
          %v5089 = vadd.f32 0.0, %v5088
          %v5090 = vpop.f32.mrb[0].mxu0
          %5091 = vmatprep.mubr.f32.mxu0 0.0
          %5092 = vmatmul.mubr.f32.gmra.mrb[0].mxu0 %v4572
          %v5093 = vpop.f32.mrb[0].mxu0
          %v5094 = vadd.f32 0.0, %v5093
          %v5095 = vpop.f32.mrb[0].mxu0
          %5096 = vmatprep.mubr.f32.mxu0 0.0
          %5097 = vmatmul.mubr.f32.gmra.mrb[0].mxu0 %v4575
          %v5098 = vpop.f32.mrb[0].mxu0
          %v5099 = vadd.f32 0.0, %v5098
          %v5100 = vpop.f32.mrb[0].mxu0
          %5101 = vmatprep.mubr.f32.mxu0 0.0
          %5102 = vmatmul.mubr.f32.gmra.mrb[0].mxu0 %v4578
          %v5103 = vpop.f32.mrb[0].mxu0
          %v5104 = vadd.f32 0.0, %v5103
          %v5105 = vpop.f32.mrb[0].mxu0
          %5106 = vmatprep.mubr.f32.mxu0 0.0
          %5107 = vmatmul.mubr.f32.gmra.mrb[0].mxu0 %v4581
          %v5108 = vpop.f32.mrb[0].mxu0
          %v5109 = vadd.f32 0.0, %v5108
          %v5110 = vpop.f32.mrb[0].mxu0
          %5111 = vmatprep.mubr.f32.mxu0 0.0
          %5112 = vmatmul.mubr.f32.gmra.mrb[0].mxu0 %v4584
          %v5113 = vpop.f32.mrb[0].mxu0
          %v5114 = vadd.f32 0.0, %v5113
          %v5115 = vpop.f32.mrb[0].mxu0
          %5116 = vmatprep.mubr.f32.mxu0 0.0
          %5117 = vmatmul.mubr.f32.gmra.mrb[0].mxu0 %v4587
          %v5118 = vpop.f32.mrb[0].mxu0
          %v5119 = vadd.f32 0.0, %v5118
          %v5120 = vpop.f32.mrb[0].mxu0
          %5121 = vmatprep.mubr.f32.mxu0 0.0
          %5122 = vmatmul.mubr.f32.gmra.mrb[0].mxu0 %v4590
          %v5123 = vpop.f32.mrb[0].mxu0
          %v5124 = vadd.f32 0.0, %v5123
          %v5125 = vpop.f32.mrb[0].mxu0
          %5126 = vmatprep.mubr.f32.mxu0 0.0
          %5127 = vmatmul.mubr.f32.gmra.mrb[0].mxu0 %v4593
          %v5128 = vpop.f32.mrb[0].mxu0
          %v5129 = vadd.f32 0.0, %v5128
          %v5130 = vpop.f32.mrb[0].mxu0
          %5131 = vmatprep.mubr.f32.mxu0 0.0
          %5132 = vmatmul.mubr.f32.gmra.mrb[0].mxu0 %v4596
          %v5133 = vpop.f32.mrb[0].mxu0
          %v5134 = vadd.f32 0.0, %v5133
          %v5135 = vpop.f32.mrb[0].mxu0
          %5136 = vmatprep.mubr.f32.mxu0 0.0
          %5137 = vmatmul.mubr.f32.gmra.mrb[0].mxu0 %v4599
          %v5138 = vpop.f32.mrb[0].mxu0
          %v5139 = vadd.f32 0.0, %v5138
          %v5140 = vpop.f32.mrb[0].mxu0
          %5141 = vmatprep.mubr.f32.mxu0 0.0
          %5142 = vmatmul.mubr.f32.gmra.mrb[0].mxu0 %v4602
          %v5143 = vpop.f32.mrb[0].mxu0
          %v5144 = vadd.f32 0.0, %v5143
          %v5145 = vpop.f32.mrb[0].mxu0
          %5146 = vmatprep.mubr.f32.mxu0 0.0
          %5147 = vmatmul.mubr.f32.gmra.mrb[0].mxu0 %v4605
          %v5148 = vpop.f32.mrb[0].mxu0
          %v5149 = vadd.f32 0.0, %v5148
          %v5150 = vpop.f32.mrb[0].mxu0
          %5151 = vmatprep.mubr.f32.mxu0 0.0
          %5152 = vmatmul.mubr.f32.gmra.mrb[0].mxu0 %v4608
          %v5153 = vpop.f32.mrb[0].mxu0
          %v5154 = vadd.f32 0.0, %v5153
          %v5155 = vpop.f32.mrb[0].mxu0
          %5156 = vmatprep.mubr.f32.mxu0 0.0
          %5157 = vmatmul.mubr.f32.gmra.mrb[0].mxu0 %v4611
          %v5158 = vpop.f32.mrb[0].mxu0
          %v5159 = vadd.f32 0.0, %v5158
          %v5160 = vpop.f32.mrb[0].mxu0
          %5161 = vmatprep.mubr.f32.mxu0 0.0
          %5162 = vmatmul.mubr.f32.gmra.mrb[0].mxu0 %v4614
          %v5163 = vpop.f32.mrb[0].mxu0
          %v5164 = vadd.f32 0.0, %v5163
          %v5165 = vpop.f32.mrb[0].mxu0
          %5166 = vmatprep.mubr.f32.mxu0 0.0
          %5167 = vmatmul.mubr.f32.gmra.mrb[0].mxu0 %v4617
          %v5168 = vpop.f32.mrb[0].mxu0
          %v5169 = vadd.f32 0.0, %v5168
          %v5170 = vpop.f32.mrb[0].mxu0
          %5171 = vmatprep.mubr.f32.mxu0 0.0
          %5172 = vmatmul.mubr.f32.gmra.mrb[0].mxu0 %v4620
          %v5173 = vpop.f32.mrb[0].mxu0
          %v5174 = vadd.f32 0.0, %v5173
          %v5175 = vpop.f32.mrb[0].mxu0
          %5176 = vmatprep.mubr.f32.mxu0 0.0
          %5177 = vmatmul.mubr.f32.gmra.mrb[0].mxu0 %v4623
          %v5178 = vpop.f32.mrb[0].mxu0
          %v5179 = vadd.f32 0.0, %v5178
          %v5180 = vpop.f32.mrb[0].mxu0
          %5181 = vmatprep.mubr.f32.mxu0 0.0
          %5182 = vmatmul.mubr.f32.gmra.mrb[0].mxu0 %v4626
          %v5183 = vpop.f32.mrb[0].mxu0
          %v5184 = vadd.f32 0.0, %v5183
          %v5185 = vpop.f32.mrb[0].mxu0
          %5186 = vmatprep.mubr.f32.mxu0 0.0
          %5187 = vmatmul.mubr.f32.gmra.mrb[0].mxu0 %v4629
          %v5188 = vpop.f32.mrb[0].mxu0
          %v5189 = vadd.f32 0.0, %v5188
          %v5190 = vpop.f32.mrb[0].mxu0
          %5191 = vmatprep.mubr.f32.mxu0 0.0
          %5192 = vmatmul.mubr.f32.gmra.mrb[0].mxu0 %v4632
          %v5193 = vpop.f32.mrb[0].mxu0
          %v5194 = vadd.f32 0.0, %v5193
          %v5195 = vpop.f32.mrb[0].mxu0
          %5196 = vmatprep.mubr.f32.mxu0 0.0
          %5197 = vmatmul.mubr.f32.gmra.mrb[0].mxu0 %v4635
          %v5198 = vpop.f32.mrb[0].mxu0
          %v5199 = vadd.f32 0.0, %v5198
          %v5200 = vpop.f32.mrb[0].mxu0
          %5201 = vmatprep.mubr.f32.mxu0 0.0
          %5202 = vmatmul.mubr.f32.gmra.mrb[0].mxu0 %v4638
          %v5203 = vpop.f32.mrb[0].mxu0
          %v5204 = vadd.f32 0.0, %v5203
          %v5205 = vpop.f32.mrb[0].mxu0
          %5206 = vmatprep.mubr.f32.mxu0 0.0
          %5207 = vmatmul.mubr.f32.gmra.mrb[0].mxu0 %v4641
          %v5208 = vpop.f32.mrb[0].mxu0
          %v5209 = vadd.f32 0.0, %v5208
          %v5210 = vpop.f32.mrb[0].mxu0
          %5211 = vmatprep.mubr.f32.mxu0 0.0
          %5212 = vmatmul.mubr.f32.gmra.mrb[0].mxu0 %v4644
          %v5213 = vpop.f32.mrb[0].mxu0
          %v5214 = vadd.f32 0.0, %v5213
          %v5215 = vpop.f32.mrb[0].mxu0
          %5216 = vmatprep.mubr.f32.mxu0 0.0
          %5217 = vmatmul.mubr.f32.gmra.mrb[0].mxu0 %v4647
          %v5218 = vpop.f32.mrb[0].mxu0
          %v5219 = vadd.f32 0.0, %v5218
          %v5220 = vpop.f32.mrb[0].mxu0
          %5221 = vmatprep.mubr.f32.mxu0 0.0
          %5222 = vmatmul.mubr.f32.gmra.mrb[0].mxu0 %v4650
          %v5223 = vpop.f32.mrb[0].mxu0
          %v5224 = vadd.f32 0.0, %v5223
          %v5225 = vpop.f32.mrb[0].mxu0
          %5226 = vmatprep.mubr.f32.mxu0 0.0
          %5227 = vmatmul.mubr.f32.gmra.mrb[0].mxu0 %v4653
          %v5228 = vpop.f32.mrb[0].mxu0
          %v5229 = vadd.f32 0.0, %v5228
          %v5230 = vpop.f32.mrb[0].mxu0
          %5231 = vmatprep.mubr.f32.mxu0 0.0
          %5232 = vmatmul.mubr.f32.gmra.mrb[0].mxu0 %v4656
          %v5233 = vpop.f32.mrb[0].mxu0
          %v5234 = vadd.f32 0.0, %v5233
          %v5235 = vpop.f32.mrb[0].mxu0
          %5236 = vmatprep.mubr.f32.mxu0 0.0
          %5237 = vmatmul.mubr.f32.gmra.mrb[0].mxu0 %v4659
          %v5238 = vpop.f32.mrb[0].mxu0
          %v5239 = vadd.f32 0.0, %v5238
          %v5240 = vpop.f32.mrb[0].mxu0
          %5241 = vmatprep.mubr.f32.mxu0 0.0
          %5242 = vmatmul.mubr.f32.gmra.mrb[0].mxu0 %v4662
          %v5243 = vpop.f32.mrb[0].mxu0
          %v5244 = vadd.f32 0.0, %v5243
          %v5245 = vpop.f32.mrb[0].mxu0
          %5246 = vmatprep.mubr.f32.mxu0 0.0
          %5247 = vmatmul.mubr.f32.gmra.mrb[0].mxu0 %v4665
          %v5248 = vpop.f32.mrb[0].mxu0
          %v5249 = vadd.f32 0.0, %v5248
          %v5250 = vpop.f32.mrb[0].mxu0
          %5251 = vmatprep.mubr.f32.mxu0 0.0
          %5252 = vmatmul.mubr.f32.gmra.mrb[0].mxu0 %v4668
          %v5253 = vpop.f32.mrb[0].mxu0
          %v5254 = vadd.f32 0.0, %v5253
          %v5255 = vpop.f32.mrb[0].mxu0
          %5256 = vmatprep.mubr.f32.mxu0 0.0
          %5257 = vmatmul.mubr.f32.gmra.mrb[0].mxu0 %v4671
          %v5258 = vpop.f32.mrb[0].mxu0
          %v5259 = vadd.f32 0.0, %v5258
          %v5260 = vpop.f32.mrb[0].mxu0
          %5261 = vmatprep.mubr.f32.mxu0 0.0
          %5262 = vmatmul.mubr.f32.gmra.mrb[0].mxu0 %v4674
          %v5263 = vpop.f32.mrb[0].mxu0
          %v5264 = vadd.f32 0.0, %v5263
          %v5265 = vpop.f32.mrb[0].mxu0
          %5266 = vmatprep.mubr.f32.mxu0 0.0
          %5267 = vmatmul.mubr.f32.gmra.mrb[0].mxu0 %v4677
          %v5268 = vpop.f32.mrb[0].mxu0
          %v5269 = vadd.f32 0.0, %v5268
          %v5270 = vpop.f32.mrb[0].mxu0
          %5271 = vmatprep.mubr.f32.mxu0 0.0
          %5272 = vmatmul.mubr.f32.gmra.mrb[0].mxu0 %v4680
          %v5273 = vpop.f32.mrb[0].mxu0
          %v5274 = vadd.f32 0.0, %v5273
          %v5275 = vpop.f32.mrb[0].mxu0
          %5276 = vmatprep.mubr.f32.mxu0 0.0
          %5277 = vmatmul.mubr.f32.gmra.mrb[0].mxu0 %v4683
          %v5278 = vpop.f32.mrb[0].mxu0
          %v5279 = vadd.f32 0.0, %v5278
          %v5280 = vpop.f32.mrb[0].mxu0
          %5281 = vmatprep.mubr.f32.mxu0 0.0
          %5282 = vmatmul.mubr.f32.gmra.mrb[0].mxu0 %v4686
          %v5283 = vpop.f32.mrb[0].mxu0
          %v5284 = vadd.f32 0.0, %v5283
          %v5285 = vpop.f32.mrb[0].mxu0
          %5286 = vmatprep.mubr.f32.mxu0 0.0
          %5287 = vmatmul.mubr.f32.gmra.mrb[0].mxu0 %v4689
          %v5288 = vpop.f32.mrb[0].mxu0
          %v5289 = vadd.f32 0.0, %v5288
          %v5290 = vpop.f32.mrb[0].mxu0
          %5291 = vmatprep.mubr.f32.mxu0 0.0
          %5292 = vmatmul.mubr.f32.gmra.mrb[0].mxu0 %v4692
          %v5293 = vpop.f32.mrb[0].mxu0
          %v5294 = vadd.f32 0.0, %v5293
          %v5295 = vpop.f32.mrb[0].mxu0
          %5296 = vmatprep.mubr.f32.mxu0 0.0
          %5297 = vmatmul.mubr.f32.gmra.mrb[0].mxu0 %v4695
          %v5298 = vpop.f32.mrb[0].mxu0
          %v5299 = vadd.f32 0.0, %v5298
          %v5300 = vpop.f32.mrb[0].mxu0
          %5301 = vmatprep.mubr.f32.mxu0 0.0
          %5302 = vmatmul.mubr.f32.gmra.mrb[0].mxu0 %v4698
          %v5303 = vpop.f32.mrb[0].mxu0
          %v5304 = vadd.f32 0.0, %v5303
          %v5305 = vpop.f32.mrb[0].mxu0
          %5306 = vmatprep.mubr.f32.mxu0 0.0
          %5307 = vmatmul.mubr.f32.gmra.mrb[0].mxu0 %v4701
          %v5308 = vpop.f32.mrb[0].mxu0
          %v5309 = vadd.f32 0.0, %v5308
          %v5310 = vpop.f32.mrb[0].mxu0
          %5311 = vmatprep.mubr.f32.mxu0 0.0
          %5312 = vmatmul.mubr.f32.gmra.mrb[0].mxu0 %v4704
          %v5313 = vpop.f32.mrb[0].mxu0
          %v5314 = vadd.f32 0.0, %v5313
          %v5315 = vpop.f32.mrb[0].mxu0
          %5316 = vmatprep.mubr.f32.mxu0 0.0
          %5317 = vmatmul.mubr.f32.gmra.mrb[0].mxu0 %v4707
          %v5318 = vpop.f32.mrb[0].mxu0
          %v5319 = vadd.f32 0.0, %v5318
          %v5320 = vpop.f32.mrb[0].mxu0
          %5321 = vmatprep.mubr.f32.mxu0 0.0
          %5322 = vmatmul.mubr.f32.gmra.mrb[0].mxu0 %v4710
          %v5323 = vpop.f32.mrb[0].mxu0
          %v5324 = vadd.f32 0.0, %v5323
          %v5325 = vpop.f32.mrb[0].mxu0
          %5326 = vmatprep.mubr.f32.mxu0 0.0
          %5327 = vmatmul.mubr.f32.gmra.mrb[0].mxu0 %v4713
          %v5328 = vpop.f32.mrb[0].mxu0
          %v5329 = vadd.f32 0.0, %v5328
          %v5330 = vpop.f32.mrb[0].mxu0
          %5331 = vmatprep.mubr.f32.mxu0 0.0
          %5332 = vmatmul.mubr.f32.gmra.mrb[0].mxu0 %v4716
          %v5333 = vpop.f32.mrb[0].mxu0
          %v5334 = vadd.f32 0.0, %v5333
          %v5335 = vpop.f32.mrb[0].mxu0
          %5336 = vmatprep.mubr.f32.mxu0 0.0
          %5337 = vmatmul.mubr.f32.gmra.mrb[0].mxu0 %v4719
          %v5338 = vpop.f32.mrb[0].mxu0
          %v5339 = vadd.f32 0.0, %v5338
          %v5340 = vpop.f32.mrb[0].mxu0
          %5341 = vmatprep.mubr.f32.mxu0 0.0
          %5342 = vmatmul.mubr.f32.gmra.mrb[0].mxu0 %v4722
          %v5343 = vpop.f32.mrb[0].mxu0
          %v5344 = vadd.f32 0.0, %v5343
          %v5345 = vpop.f32.mrb[0].mxu0
          %5346 = vmatprep.mubr.f32.mxu0 0.0
          %5347 = vmatmul.mubr.f32.gmra.mrb[0].mxu0 %v4725
          %v5348 = vpop.f32.mrb[0].mxu0
          %v5349 = vadd.f32 0.0, %v5348
          %v5350 = vpop.f32.mrb[0].mxu0
          %5351 = vmatprep.mubr.f32.mxu0 0.0
          %5352 = vmatmul.mubr.f32.gmra.mrb[0].mxu0 %v4728
          %v5353 = vpop.f32.mrb[0].mxu0
          %v5354 = vadd.f32 0.0, %v5353
          %v5355 = vpop.f32.mrb[0].mxu0
          %5356 = vmatprep.mubr.f32.mxu0 0.0
          %5357 = vmatmul.mubr.f32.gmra.mrb[0].mxu0 %v4731
          %v5358 = vpop.f32.mrb[0].mxu0
          %v5359 = vadd.f32 0.0, %v5358
          %v5360 = vpop.f32.mrb[0].mxu0
          %5361 = vmatprep.mubr.f32.mxu0 0.0
          %5362 = vmatmul.mubr.f32.gmra.mrb[0].mxu0 %v4734
          %v5363 = vpop.f32.mrb[0].mxu0
          %v5364 = vadd.f32 0.0, %v5363
          %v5365 = vpop.f32.mrb[0].mxu0
          %5366 = vmatprep.mubr.f32.mxu0 0.0
          %5367 = vmatmul.mubr.f32.gmra.mrb[0].mxu0 %v4737
          %v5368 = vpop.f32.mrb[0].mxu0
          %v5369 = vadd.f32 0.0, %v5368
          %v5370 = vpop.f32.mrb[0].mxu0
          %5371 = vmatprep.mubr.f32.mxu0 0.0
          %5372 = vmatmul.mubr.f32.gmra.mrb[0].mxu0 %v4740
          %v5373 = vpop.f32.mrb[0].mxu0
          %v5374 = vadd.f32 0.0, %v5373
          %v5375 = vpop.f32.mrb[0].mxu0
          %5376 = vmatprep.mubr.f32.mxu0 0.0
          %5377 = vmatmul.mubr.f32.gmra.mrb[0].mxu0 %v4743
          %v5378 = vpop.f32.mrb[0].mxu0
          %v5379 = vadd.f32 0.0, %v5378
          %v5380 = vpop.f32.mrb[0].mxu0
          %5381 = vmatprep.mubr.f32.mxu0 0.0
          %5382 = vmatmul.mubr.f32.gmra.mrb[0].mxu0 %v4746
          %v5383 = vpop.f32.mrb[0].mxu0
          %v5384 = vadd.f32 0.0, %v5383
          %v5385 = vpop.f32.mrb[0].mxu0
          %5386 = vmatprep.mubr.f32.mxu0 0.0
          %5387 = vmatmul.mubr.f32.gmra.mrb[0].mxu0 %v4749
          %v5388 = vpop.f32.mrb[0].mxu0
          %v5389 = vadd.f32 0.0, %v5388
          %v5390 = vpop.f32.mrb[0].mxu0
          %5391 = vmatprep.mubr.f32.mxu0 0.0
          %5392 = vmatmul.mubr.f32.gmra.mrb[0].mxu0 %v4752
          %v5393 = vpop.f32.mrb[0].mxu0
          %v5394 = vadd.f32 0.0, %v5393
          %v5395 = vpop.f32.mrb[0].mxu0
          %5396 = vmatprep.mubr.f32.mxu0 0.0
          %5397 = vmatmul.mubr.f32.gmra.mrb[0].mxu0 %v4755
          %v5398 = vpop.f32.mrb[0].mxu0
          %v5399 = vadd.f32 0.0, %v5398
          %v5400 = vpop.f32.mrb[0].mxu0
          %5401 = vmatprep.mubr.f32.mxu0 0.0
          %5402 = vmatmul.mubr.f32.gmra.mrb[0].mxu0 %v4758
          %v5403 = vpop.f32.mrb[0].mxu0
          %v5404 = vadd.f32 0.0, %v5403
          %v5405 = vpop.f32.mrb[0].mxu0
          %5406 = vmatprep.mubr.f32.mxu0 0.0
          %5407 = vmatmul.mubr.f32.gmra.mrb[0].mxu0 %v4761
          %v5408 = vpop.f32.mrb[0].mxu0
          %v5409 = vadd.f32 0.0, %v5408
          %v5410 = vpop.f32.mrb[0].mxu0
          %5411 = vmatprep.mubr.f32.mxu0 0.0
          %5412 = vmatmul.mubr.f32.gmra.mrb[0].mxu0 %v4764
          %v5413 = vpop.f32.mrb[0].mxu0
          %v5414 = vadd.f32 0.0, %v5413
          %v5415 = vpop.f32.mrb[0].mxu0
          %5416 = vmatprep.mubr.f32.mxu0 0.0
          %5417 = vmatmul.mubr.f32.gmra.mrb[0].mxu0 %v4767
          %v5418 = vpop.f32.mrb[0].mxu0
          %v5419 = vadd.f32 0.0, %v5418
          %v5420 = vpop.f32.mrb[0].mxu0
          %5421 = vmatprep.mubr.f32.mxu0 0.0
          %5422 = vmatmul.mubr.f32.gmra.mrb[0].mxu0 %v4770
          %v5423 = vpop.f32.mrb[0].mxu0
          %v5424 = vadd.f32 0.0, %v5423
          %v5425 = vpop.f32.mrb[0].mxu0
          %5426 = vmatprep.mubr.f32.mxu0 0.0
          %5427 = vmatmul.mubr.f32.gmra.mrb[0].mxu0 %v4773
          %v5428 = vpop.f32.mrb[0].mxu0
          %v5429 = vadd.f32 0.0, %v5428
          %v5430 = vpop.f32.mrb[0].mxu0
          %5431 = vmatprep.mubr.f32.mxu0 0.0
          %5432 = vmatmul.mubr.f32.gmra.mrb[0].mxu0 %v4776
          %v5433 = vpop.f32.mrb[0].mxu0
          %v5434 = vadd.f32 0.0, %v5433
          %v5435 = vpop.f32.mrb[0].mxu0
          %5436 = vmatprep.mubr.f32.mxu0 0.0
          %5437 = vmatmul.mubr.f32.gmra.mrb[0].mxu0 %v4779
          %v5438 = vpop.f32.mrb[0].mxu0
          %v5439 = vadd.f32 0.0, %v5438
          %v5440 = vpop.f32.mrb[0].mxu0
          %5441 = vmatprep.mubr.f32.mxu0 0.0
          %5442 = vmatmul.mubr.f32.gmra.mrb[0].mxu0 %v4782
          %v5443 = vpop.f32.mrb[0].mxu0
          %v5444 = vadd.f32 0.0, %v5443
          %v5445 = vpop.f32.mrb[0].mxu0
          %5446 = vmatprep.mubr.f32.mxu0 0.0
          %5447 = vmatmul.mubr.f32.gmra.mrb[0].mxu0 %v4785
          %v5448 = vpop.f32.mrb[0].mxu0
          %v5449 = vadd.f32 0.0, %v5448
          %v5450 = vpop.f32.mrb[0].mxu0
          %5451 = vmatprep.mubr.f32.mxu0 0.0
          %5452 = vmatmul.mubr.f32.gmra.mrb[0].mxu0 %v4788
          %v5453 = vpop.f32.mrb[0].mxu0
          %v5454 = vadd.f32 0.0, %v5453
          %v5455 = vpop.f32.mrb[0].mxu0
          %5456 = vmatprep.mubr.f32.mxu0 0.0
          %5457 = vmatmul.mubr.f32.gmra.mrb[0].mxu0 %v4791
          %v5458 = vpop.f32.mrb[0].mxu0
          %v5459 = vadd.f32 0.0, %v5458
          %v5460 = vpop.f32.mrb[0].mxu0
          %5461 = vmatprep.mubr.f32.mxu0 0.0
          %5462 = vmatmul.mubr.f32.gmra.mrb[0].mxu0 %v4794
          %v5463 = vpop.f32.mrb[0].mxu0
          %v5464 = vadd.f32 0.0, %v5463
          %v5465 = vpop.f32.mrb[0].mxu0
          %5466 = vmatprep.mubr.f32.mxu0 0.0
          %5467 = vmatmul.mubr.f32.gmra.mrb[0].mxu0 %v4797
          %v5468 = vpop.f32.mrb[0].mxu0
          %v5469 = vadd.f32 0.0, %v5468
          %v5470 = vpop.f32.mrb[0].mxu0
          %5471 = vmatprep.mubr.f32.mxu0 0.0
          %5472 = vmatmul.mubr.f32.gmra.mrb[0].mxu0 %v4800
          %v5473 = vpop.f32.mrb[0].mxu0
          %v5474 = vadd.f32 0.0, %v5473
          %v5475 = vpop.f32.mrb[0].mxu0
          %5476 = vmatprep.mubr.f32.mxu0 0.0
          %5477 = vmatmul.mubr.f32.gmra.mrb[0].mxu0 %v4803
          %v5478 = vpop.f32.mrb[0].mxu0
          %v5479 = vadd.f32 0.0, %v5478
          %v5480 = vpop.f32.mrb[0].mxu0
          %5481 = vmatprep.mubr.f32.mxu0 0.0
          %5482 = vmatmul.mubr.f32.gmra.mrb[0].mxu0 %v4806
          %v5483 = vpop.f32.mrb[0].mxu0
          %v5484 = vadd.f32 0.0, %v5483
          %v5485 = vpop.f32.mrb[0].mxu0
          %5486 = vmatprep.mubr.f32.mxu0 0.0
          %5487 = vmatmul.mubr.f32.gmra.mrb[0].mxu0 %v4809
          %v5488 = vpop.f32.mrb[0].mxu0
          %v5489 = vadd.f32 0.0, %v5488
          %v5490 = vpop.f32.mrb[0].mxu0
          %5491 = vmatprep.mubr.f32.mxu0 0.0
          %5492 = vmatmul.mubr.f32.gmra.mrb[0].mxu0 %v4812
          %v5493 = vpop.f32.mrb[0].mxu0
          %v5494 = vadd.f32 0.0, %v5493
          %v5495 = vpop.f32.mrb[0].mxu0
          %5496 = vmatprep.mubr.f32.mxu0 0.0
          %5497 = vmatmul.mubr.f32.gmra.mrb[0].mxu0 %v4815
          %v5498 = vpop.f32.mrb[0].mxu0
          %v5499 = vadd.f32 0.0, %v5498
          %v5500 = vpop.f32.mrb[0].mxu0
          %5501 = vmatprep.mubr.f32.mxu0 0.0
          %5502 = vmatmul.mubr.f32.gmra.mrb[0].mxu0 %v4818
          %v5503 = vpop.f32.mrb[0].mxu0
          %v5504 = vadd.f32 0.0, %v5503
          %v5505 = vpop.f32.mrb[0].mxu0
          %5506 = vmatprep.mubr.f32.mxu0 0.0
          %5507 = vmatmul.mubr.f32.gmra.mrb[0].mxu0 %v4821
          %v5508 = vpop.f32.mrb[0].mxu0
          %v5509 = vadd.f32 0.0, %v5508
          %v5510 = vpop.f32.mrb[0].mxu0
          %5511 = vmatprep.mubr.f32.mxu0 0.0
          %5512 = vmatmul.mubr.f32.gmra.mrb[0].mxu0 %v4824
          %v5513 = vpop.f32.mrb[0].mxu0
          %v5514 = vadd.f32 0.0, %v5513
          %v5515 = vpop.f32.mrb[0].mxu0
          %5516 = vmatprep.mubr.f32.mxu0 0.0
          %5517 = vmatmul.mubr.f32.gmra.mrb[0].mxu0 %v4827
          %v5518 = vpop.f32.mrb[0].mxu0
          %v5519 = vadd.f32 0.0, %v5518
          %v5520 = vpop.f32.mrb[0].mxu0
          %5521 = vmatprep.mubr.f32.mxu0 0.0
          %5522 = vmatmul.mubr.f32.gmra.mrb[0].mxu0 %v4830
          %v5523 = vpop.f32.mrb[0].mxu0
          %v5524 = vadd.f32 0.0, %v5523
          %v5525 = vpop.f32.mrb[0].mxu0
          %5526 = vmatprep.mubr.f32.mxu0 0.0
          %5527 = vmatmul.mubr.f32.gmra.mrb[0].mxu0 %v4833
          %v5528 = vpop.f32.mrb[0].mxu0
          %v5529 = vadd.f32 0.0, %v5528
          %v5530 = vpop.f32.mrb[0].mxu0
          %5531 = vmatprep.mubr.f32.mxu0 0.0
          %5532 = vmatmul.mubr.f32.gmra.mrb[0].mxu0 %v4836
          %v5533 = vpop.f32.mrb[0].mxu0
          %v5534 = vadd.f32 0.0, %v5533
          %v5535 = vpop.f32.mrb[0].mxu0
          %5536 = vmatprep.mubr.f32.mxu0 0.0
          %5537 = vmatmul.mubr.f32.gmra.mrb[0].mxu0 %v4839
          %v5538 = vpop.f32.mrb[0].mxu0
          %v5539 = vadd.f32 0.0, %v5538
          %v5540 = vpop.f32.mrb[0].mxu0
          %5541 = vmatprep.mubr.f32.mxu0 0.0
          %5542 = vmatmul.mubr.f32.gmra.mrb[0].mxu0 %v4842
          %v5543 = vpop.f32.mrb[0].mxu0
          %v5544 = vadd.f32 0.0, %v5543
          %v5545 = vpop.f32.mrb[0].mxu0
          %5546 = vmatprep.mubr.f32.mxu0 0.0
          %5547 = vmatmul.mubr.f32.gmra.mrb[0].mxu0 %v4845
          %v5548 = vpop.f32.mrb[0].mxu0
          %v5549 = vadd.f32 0.0, %v5548
          %v5550 = vpop.f32.mrb[0].mxu0
          %5551 = vdwg.mxu0
          %v5552 = vxor.u32 %v4914, 2147483648
          %v5553 = vxor.u32 %v4919, 2147483648
          %v5554 = vxor.u32 %v4924, 2147483648
          %v5555 = vxor.u32 %v4929, 2147483648
          %v5556 = vxor.u32 %v4934, 2147483648
          %v5557 = vxor.u32 %v4939, 2147483648
          %v5558 = vxor.u32 %v4944, 2147483648
          %v5559 = vxor.u32 %v4949, 2147483648
          %v5560 = vxor.u32 %v4954, 2147483648
          %v5561 = vxor.u32 %v4959, 2147483648
          %v5562 = vxor.u32 %v4964, 2147483648
          %v5563 = vxor.u32 %v4969, 2147483648
          %v5564 = vxor.u32 %v4974, 2147483648
          %v5565 = vxor.u32 %v4979, 2147483648
          %v5566 = vxor.u32 %v4984, 2147483648
          %v5567 = vxor.u32 %v4989, 2147483648
          %v5568 = vxor.u32 %v4994, 2147483648
          %v5569 = vxor.u32 %v4999, 2147483648
          %v5570 = vxor.u32 %v5004, 2147483648
          %v5571 = vxor.u32 %v5009, 2147483648
          %v5572 = vxor.u32 %v5014, 2147483648
          %v5573 = vxor.u32 %v5019, 2147483648
          %v5574 = vxor.u32 %v5024, 2147483648
          %v5575 = vxor.u32 %v5029, 2147483648
          %v5576 = vxor.u32 %v5034, 2147483648
          %v5577 = vxor.u32 %v5039, 2147483648
          %v5578 = vxor.u32 %v5044, 2147483648
          %v5579 = vxor.u32 %v5049, 2147483648
          %v5580 = vxor.u32 %v5054, 2147483648
          %v5581 = vxor.u32 %v5059, 2147483648
          %v5582 = vxor.u32 %v5064, 2147483648
          %v5583 = vxor.u32 %v5069, 2147483648
          %v5584 = vxor.u32 %v5074, 2147483648
          %v5585 = vxor.u32 %v5079, 2147483648
          %v5586 = vxor.u32 %v5084, 2147483648
          %v5587 = vxor.u32 %v5089, 2147483648
          %v5588 = vxor.u32 %v5094, 2147483648
          %v5589 = vxor.u32 %v5099, 2147483648
          %v5590 = vxor.u32 %v5104, 2147483648
          %v5591 = vxor.u32 %v5109, 2147483648
          %v5592 = vxor.u32 %v5114, 2147483648
          %v5593 = vxor.u32 %v5119, 2147483648
          %v5594 = vxor.u32 %v5124, 2147483648
          %v5595 = vxor.u32 %v5129, 2147483648
          %v5596 = vxor.u32 %v5134, 2147483648
          %v5597 = vxor.u32 %v5139, 2147483648
          %v5598 = vxor.u32 %v5144, 2147483648
          %v5599 = vxor.u32 %v5149, 2147483648
          %v5600 = vxor.u32 %v5154, 2147483648
          %v5601 = vxor.u32 %v5159, 2147483648
          %v5602 = vxor.u32 %v5164, 2147483648
          %v5603 = vxor.u32 %v5169, 2147483648
          %v5604 = vxor.u32 %v5174, 2147483648
          %v5605 = vxor.u32 %v5179, 2147483648
          %v5606 = vxor.u32 %v5184, 2147483648
          %v5607 = vxor.u32 %v5189, 2147483648
          %v5608 = vxor.u32 %v5194, 2147483648
          %v5609 = vxor.u32 %v5199, 2147483648
          %v5610 = vxor.u32 %v5204, 2147483648
          %v5611 = vxor.u32 %v5209, 2147483648
          %v5612 = vxor.u32 %v5214, 2147483648
          %v5613 = vxor.u32 %v5219, 2147483648
          %v5614 = vxor.u32 %v5224, 2147483648
          %v5615 = vxor.u32 %v5229, 2147483648
          %v5616 = vxor.u32 %v5234, 2147483648
          %v5617 = vxor.u32 %v5239, 2147483648
          %v5618 = vxor.u32 %v5244, 2147483648
          %v5619 = vxor.u32 %v5249, 2147483648
          %v5620 = vxor.u32 %v5254, 2147483648
          %v5621 = vxor.u32 %v5259, 2147483648
          %v5622 = vxor.u32 %v5264, 2147483648
          %v5623 = vxor.u32 %v5269, 2147483648
          %v5624 = vxor.u32 %v5274, 2147483648
          %v5625 = vxor.u32 %v5279, 2147483648
          %v5626 = vxor.u32 %v5284, 2147483648
          %v5627 = vxor.u32 %v5289, 2147483648
          %v5628 = vxor.u32 %v5294, 2147483648
          %v5629 = vxor.u32 %v5299, 2147483648
          %v5630 = vxor.u32 %v5304, 2147483648
          %v5631 = vxor.u32 %v5309, 2147483648
          %v5632 = vxor.u32 %v5314, 2147483648
          %v5633 = vxor.u32 %v5319, 2147483648
          %v5634 = vxor.u32 %v5324, 2147483648
          %v5635 = vxor.u32 %v5329, 2147483648
          %v5636 = vxor.u32 %v5334, 2147483648
          %v5637 = vxor.u32 %v5339, 2147483648
          %v5638 = vxor.u32 %v5344, 2147483648
          %v5639 = vxor.u32 %v5349, 2147483648
          %v5640 = vxor.u32 %v5354, 2147483648
          %v5641 = vxor.u32 %v5359, 2147483648
          %v5642 = vxor.u32 %v5364, 2147483648
          %v5643 = vxor.u32 %v5369, 2147483648
          %v5644 = vxor.u32 %v5374, 2147483648
          %v5645 = vxor.u32 %v5379, 2147483648
          %v5646 = vxor.u32 %v5384, 2147483648
          %v5647 = vxor.u32 %v5389, 2147483648
          %v5648 = vxor.u32 %v5394, 2147483648
          %v5649 = vxor.u32 %v5399, 2147483648
          %v5650 = vxor.u32 %v5404, 2147483648
          %v5651 = vxor.u32 %v5409, 2147483648
          %v5652 = vxor.u32 %v5414, 2147483648
          %v5653 = vxor.u32 %v5419, 2147483648
          %v5654 = vxor.u32 %v5424, 2147483648
          %v5655 = vxor.u32 %v5429, 2147483648
          %v5656 = vxor.u32 %v5434, 2147483648
          %v5657 = vxor.u32 %v5439, 2147483648
          %v5658 = vxor.u32 %v5444, 2147483648
          %v5659 = vxor.u32 %v5449, 2147483648
          %v5660 = vxor.u32 %v5454, 2147483648
          %v5661 = vxor.u32 %v5459, 2147483648
          %v5662 = vxor.u32 %v5464, 2147483648
          %v5663 = vxor.u32 %v5469, 2147483648
          %v5664 = vxor.u32 %v5474, 2147483648
          %v5665 = vxor.u32 %v5479, 2147483648
          %v5666 = vxor.u32 %v5484, 2147483648
          %v5667 = vxor.u32 %v5489, 2147483648
          %v5668 = vxor.u32 %v5494, 2147483648
          %v5669 = vxor.u32 %v5499, 2147483648
          %v5670 = vxor.u32 %v5504, 2147483648
          %v5671 = vxor.u32 %v5509, 2147483648
          %v5672 = vxor.u32 %v5514, 2147483648
          %v5673 = vxor.u32 %v5519, 2147483648
          %v5674 = vxor.u32 %v5524, 2147483648
          %v5675 = vxor.u32 %v5529, 2147483648
          %v5676 = vxor.u32 %v5534, 2147483648
          %v5677 = vxor.u32 %v5539, 2147483648
          %v5678 = vxor.u32 %v5544, 2147483648
          %v5679 = vxor.u32 %v5549, 2147483648
          %v5680 = vmul.f32 %v5552, 1.442695
          %v5681 = vpow.pop %v5680
          %v5682 = vmul.f32 %v5553, 1.442695
          %v5683 = vpow.pop %v5682
          %v5684 = vmul.f32 %v5554, 1.442695
          %v5685 = vpow.pop %v5684
          %v5686 = vmul.f32 %v5555, 1.442695
          %v5687 = vpow.pop %v5686
          %v5688 = vmul.f32 %v5556, 1.442695
          %v5689 = vpow.pop %v5688
          %v5690 = vmul.f32 %v5557, 1.442695
          %v5691 = vpow.pop %v5690
          %v5692 = vmul.f32 %v5558, 1.442695
          %v5693 = vpow.pop %v5692
          %v5694 = vmul.f32 %v5559, 1.442695
          %v5695 = vpow.pop %v5694
          %v5696 = vmul.f32 %v5560, 1.442695
          %v5697 = vpow.pop %v5696
          %v5698 = vmul.f32 %v5561, 1.442695
          %v5699 = vpow.pop %v5698
          %v5700 = vmul.f32 %v5562, 1.442695
          %v5701 = vpow.pop %v5700
          %v5702 = vmul.f32 %v5563, 1.442695
          %v5703 = vpow.pop %v5702
          %v5704 = vmul.f32 %v5564, 1.442695
          %v5705 = vpow.pop %v5704
          %v5706 = vmul.f32 %v5565, 1.442695
          %v5707 = vpow.pop %v5706
          %v5708 = vmul.f32 %v5566, 1.442695
          %v5709 = vpow.pop %v5708
          %v5710 = vmul.f32 %v5567, 1.442695
          %v5711 = vpow.pop %v5710
          %v5712 = vmul.f32 %v5568, 1.442695
          %v5713 = vpow.pop %v5712
          %v5714 = vmul.f32 %v5569, 1.442695
          %v5715 = vpow.pop %v5714
          %v5716 = vmul.f32 %v5570, 1.442695
          %v5717 = vpow.pop %v5716
          %v5718 = vmul.f32 %v5571, 1.442695
          %v5719 = vpow.pop %v5718
          %v5720 = vmul.f32 %v5572, 1.442695
          %v5721 = vpow.pop %v5720
          %v5722 = vmul.f32 %v5573, 1.442695
          %v5723 = vpow.pop %v5722
          %v5724 = vmul.f32 %v5574, 1.442695
          %v5725 = vpow.pop %v5724
          %v5726 = vmul.f32 %v5575, 1.442695
          %v5727 = vpow.pop %v5726
          %v5728 = vmul.f32 %v5576, 1.442695
          %v5729 = vpow.pop %v5728
          %v5730 = vmul.f32 %v5577, 1.442695
          %v5731 = vpow.pop %v5730
          %v5732 = vmul.f32 %v5578, 1.442695
          %v5733 = vpow.pop %v5732
          %v5734 = vmul.f32 %v5579, 1.442695
          %v5735 = vpow.pop %v5734
          %v5736 = vmul.f32 %v5580, 1.442695
          %v5737 = vpow.pop %v5736
          %v5738 = vmul.f32 %v5581, 1.442695
          %v5739 = vpow.pop %v5738
          %v5740 = vmul.f32 %v5582, 1.442695
          %v5741 = vpow.pop %v5740
          %v5742 = vmul.f32 %v5583, 1.442695
          %v5743 = vpow.pop %v5742
          %v5744 = vmul.f32 %v5584, 1.442695
          %v5745 = vpow.pop %v5744
          %v5746 = vmul.f32 %v5585, 1.442695
          %v5747 = vpow.pop %v5746
          %v5748 = vmul.f32 %v5586, 1.442695
          %v5749 = vpow.pop %v5748
          %v5750 = vmul.f32 %v5587, 1.442695
          %v5751 = vpow.pop %v5750
          %v5752 = vmul.f32 %v5588, 1.442695
          %v5753 = vpow.pop %v5752
          %v5754 = vmul.f32 %v5589, 1.442695
          %v5755 = vpow.pop %v5754
          %v5756 = vmul.f32 %v5590, 1.442695
          %v5757 = vpow.pop %v5756
          %v5758 = vmul.f32 %v5591, 1.442695
          %v5759 = vpow.pop %v5758
          %v5760 = vmul.f32 %v5592, 1.442695
          %v5761 = vpow.pop %v5760
          %v5762 = vmul.f32 %v5593, 1.442695
          %v5763 = vpow.pop %v5762
          %v5764 = vmul.f32 %v5594, 1.442695
          %v5765 = vpow.pop %v5764
          %v5766 = vmul.f32 %v5595, 1.442695
          %v5767 = vpow.pop %v5766
          %v5768 = vmul.f32 %v5596, 1.442695
          %v5769 = vpow.pop %v5768
          %v5770 = vmul.f32 %v5597, 1.442695
          %v5771 = vpow.pop %v5770
          %v5772 = vmul.f32 %v5598, 1.442695
          %v5773 = vpow.pop %v5772
          %v5774 = vmul.f32 %v5599, 1.442695
          %v5775 = vpow.pop %v5774
          %v5776 = vmul.f32 %v5600, 1.442695
          %v5777 = vpow.pop %v5776
          %v5778 = vmul.f32 %v5601, 1.442695
          %v5779 = vpow.pop %v5778
          %v5780 = vmul.f32 %v5602, 1.442695
          %v5781 = vpow.pop %v5780
          %v5782 = vmul.f32 %v5603, 1.442695
          %v5783 = vpow.pop %v5782
          %v5784 = vmul.f32 %v5604, 1.442695
          %v5785 = vpow.pop %v5784
          %v5786 = vmul.f32 %v5605, 1.442695
          %v5787 = vpow.pop %v5786
          %v5788 = vmul.f32 %v5606, 1.442695
          %v5789 = vpow.pop %v5788
          %v5790 = vmul.f32 %v5607, 1.442695
          %v5791 = vpow.pop %v5790
          %v5792 = vmul.f32 %v5608, 1.442695
          %v5793 = vpow.pop %v5792
          %v5794 = vmul.f32 %v5609, 1.442695
          %v5795 = vpow.pop %v5794
          %v5796 = vmul.f32 %v5610, 1.442695
          %v5797 = vpow.pop %v5796
          %v5798 = vmul.f32 %v5611, 1.442695
          %v5799 = vpow.pop %v5798
          %v5800 = vmul.f32 %v5612, 1.442695
          %v5801 = vpow.pop %v5800
          %v5802 = vmul.f32 %v5613, 1.442695
          %v5803 = vpow.pop %v5802
          %v5804 = vmul.f32 %v5614, 1.442695
          %v5805 = vpow.pop %v5804
          %v5806 = vmul.f32 %v5615, 1.442695
          %v5807 = vpow.pop %v5806
          %v5808 = vmul.f32 %v5616, 1.442695
          %v5809 = vpow.pop %v5808
          %v5810 = vmul.f32 %v5617, 1.442695
          %v5811 = vpow.pop %v5810
          %v5812 = vmul.f32 %v5618, 1.442695
          %v5813 = vpow.pop %v5812
          %v5814 = vmul.f32 %v5619, 1.442695
          %v5815 = vpow.pop %v5814
          %v5816 = vmul.f32 %v5620, 1.442695
          %v5817 = vpow.pop %v5816
          %v5818 = vmul.f32 %v5621, 1.442695
          %v5819 = vpow.pop %v5818
          %v5820 = vmul.f32 %v5622, 1.442695
          %v5821 = vpow.pop %v5820
          %v5822 = vmul.f32 %v5623, 1.442695
          %v5823 = vpow.pop %v5822
          %v5824 = vmul.f32 %v5624, 1.442695
          %v5825 = vpow.pop %v5824
          %v5826 = vmul.f32 %v5625, 1.442695
          %v5827 = vpow.pop %v5826
          %v5828 = vmul.f32 %v5626, 1.442695
          %v5829 = vpow.pop %v5828
          %v5830 = vmul.f32 %v5627, 1.442695
          %v5831 = vpow.pop %v5830
          %v5832 = vmul.f32 %v5628, 1.442695
          %v5833 = vpow.pop %v5832
          %v5834 = vmul.f32 %v5629, 1.442695
          %v5835 = vpow.pop %v5834
          %v5836 = vmul.f32 %v5630, 1.442695
          %v5837 = vpow.pop %v5836
          %v5838 = vmul.f32 %v5631, 1.442695
          %v5839 = vpow.pop %v5838
          %v5840 = vmul.f32 %v5632, 1.442695
          %v5841 = vpow.pop %v5840
          %v5842 = vmul.f32 %v5633, 1.442695
          %v5843 = vpow.pop %v5842
          %v5844 = vmul.f32 %v5634, 1.442695
          %v5845 = vpow.pop %v5844
          %v5846 = vmul.f32 %v5635, 1.442695
          %v5847 = vpow.pop %v5846
          %v5848 = vmul.f32 %v5636, 1.442695
          %v5849 = vpow.pop %v5848
          %v5850 = vmul.f32 %v5637, 1.442695
          %v5851 = vpow.pop %v5850
          %v5852 = vmul.f32 %v5638, 1.442695
          %v5853 = vpow.pop %v5852
          %v5854 = vmul.f32 %v5639, 1.442695
          %v5855 = vpow.pop %v5854
          %v5856 = vmul.f32 %v5640, 1.442695
          %v5857 = vpow.pop %v5856
          %v5858 = vmul.f32 %v5641, 1.442695
          %v5859 = vpow.pop %v5858
          %v5860 = vmul.f32 %v5642, 1.442695
          %v5861 = vpow.pop %v5860
          %v5862 = vmul.f32 %v5643, 1.442695
          %v5863 = vpow.pop %v5862
          %v5864 = vmul.f32 %v5644, 1.442695
          %v5865 = vpow.pop %v5864
          %v5866 = vmul.f32 %v5645, 1.442695
          %v5867 = vpow.pop %v5866
          %v5868 = vmul.f32 %v5646, 1.442695
          %v5869 = vpow.pop %v5868
          %v5870 = vmul.f32 %v5647, 1.442695
          %v5871 = vpow.pop %v5870
          %v5872 = vmul.f32 %v5648, 1.442695
          %v5873 = vpow.pop %v5872
          %v5874 = vmul.f32 %v5649, 1.442695
          %v5875 = vpow.pop %v5874
          %v5876 = vmul.f32 %v5650, 1.442695
          %v5877 = vpow.pop %v5876
          %v5878 = vmul.f32 %v5651, 1.442695
          %v5879 = vpow.pop %v5878
          %v5880 = vmul.f32 %v5652, 1.442695
          %v5881 = vpow.pop %v5880
          %v5882 = vmul.f32 %v5653, 1.442695
          %v5883 = vpow.pop %v5882
          %v5884 = vmul.f32 %v5654, 1.442695
          %v5885 = vpow.pop %v5884
          %v5886 = vmul.f32 %v5655, 1.442695
          %v5887 = vpow.pop %v5886
          %v5888 = vmul.f32 %v5656, 1.442695
          %v5889 = vpow.pop %v5888
          %v5890 = vmul.f32 %v5657, 1.442695
          %v5891 = vpow.pop %v5890
          %v5892 = vmul.f32 %v5658, 1.442695
          %v5893 = vpow.pop %v5892
          %v5894 = vmul.f32 %v5659, 1.442695
          %v5895 = vpow.pop %v5894
          %v5896 = vmul.f32 %v5660, 1.442695
          %v5897 = vpow.pop %v5896
          %v5898 = vmul.f32 %v5661, 1.442695
          %v5899 = vpow.pop %v5898
          %v5900 = vmul.f32 %v5662, 1.442695
          %v5901 = vpow.pop %v5900
          %v5902 = vmul.f32 %v5663, 1.442695
          %v5903 = vpow.pop %v5902
          %v5904 = vmul.f32 %v5664, 1.442695
          %v5905 = vpow.pop %v5904
          %v5906 = vmul.f32 %v5665, 1.442695
          %v5907 = vpow.pop %v5906
          %v5908 = vmul.f32 %v5666, 1.442695
          %v5909 = vpow.pop %v5908
          %v5910 = vmul.f32 %v5667, 1.442695
          %v5911 = vpow.pop %v5910
          %v5912 = vmul.f32 %v5668, 1.442695
          %v5913 = vpow.pop %v5912
          %v5914 = vmul.f32 %v5669, 1.442695
          %v5915 = vpow.pop %v5914
          %v5916 = vmul.f32 %v5670, 1.442695
          %v5917 = vpow.pop %v5916
          %v5918 = vmul.f32 %v5671, 1.442695
          %v5919 = vpow.pop %v5918
          %v5920 = vmul.f32 %v5672, 1.442695
          %v5921 = vpow.pop %v5920
          %v5922 = vmul.f32 %v5673, 1.442695
          %v5923 = vpow.pop %v5922
          %v5924 = vmul.f32 %v5674, 1.442695
          %v5925 = vpow.pop %v5924
          %v5926 = vmul.f32 %v5675, 1.442695
          %v5927 = vpow.pop %v5926
          %v5928 = vmul.f32 %v5676, 1.442695
          %v5929 = vpow.pop %v5928
          %v5930 = vmul.f32 %v5677, 1.442695
          %v5931 = vpow.pop %v5930
          %v5932 = vmul.f32 %v5678, 1.442695
          %v5933 = vpow.pop %v5932
          %v5934 = vmul.f32 %v5679, 1.442695
          %v5935 = vpow.pop %v5934
          %v5936 = vadd.f32 %v5681, 1.0
          %v5937 = vadd.f32 %v5683, 1.0
          %v5938 = vadd.f32 %v5685, 1.0
          %v5939 = vadd.f32 %v5687, 1.0
          %v5940 = vadd.f32 %v5689, 1.0
          %v5941 = vadd.f32 %v5691, 1.0
          %v5942 = vadd.f32 %v5693, 1.0
          %v5943 = vadd.f32 %v5695, 1.0
          %v5944 = vadd.f32 %v5697, 1.0
          %v5945 = vadd.f32 %v5699, 1.0
          %v5946 = vadd.f32 %v5701, 1.0
          %v5947 = vadd.f32 %v5703, 1.0
          %v5948 = vadd.f32 %v5705, 1.0
          %v5949 = vadd.f32 %v5707, 1.0
          %v5950 = vadd.f32 %v5709, 1.0
          %v5951 = vadd.f32 %v5711, 1.0
          %v5952 = vadd.f32 %v5713, 1.0
          %v5953 = vadd.f32 %v5715, 1.0
          %v5954 = vadd.f32 %v5717, 1.0
          %v5955 = vadd.f32 %v5719, 1.0
          %v5956 = vadd.f32 %v5721, 1.0
          %v5957 = vadd.f32 %v5723, 1.0
          %v5958 = vadd.f32 %v5725, 1.0
          %v5959 = vadd.f32 %v5727, 1.0
          %v5960 = vadd.f32 %v5729, 1.0
          %v5961 = vadd.f32 %v5731, 1.0
          %v5962 = vadd.f32 %v5733, 1.0
          %v5963 = vadd.f32 %v5735, 1.0
          %v5964 = vadd.f32 %v5737, 1.0
          %v5965 = vadd.f32 %v5739, 1.0
          %v5966 = vadd.f32 %v5741, 1.0
          %v5967 = vadd.f32 %v5743, 1.0
          %v5968 = vadd.f32 %v5745, 1.0
          %v5969 = vadd.f32 %v5747, 1.0
          %v5970 = vadd.f32 %v5749, 1.0
          %v5971 = vadd.f32 %v5751, 1.0
          %v5972 = vadd.f32 %v5753, 1.0
          %v5973 = vadd.f32 %v5755, 1.0
          %v5974 = vadd.f32 %v5757, 1.0
          %v5975 = vadd.f32 %v5759, 1.0
          %v5976 = vadd.f32 %v5761, 1.0
          %v5977 = vadd.f32 %v5763, 1.0
          %v5978 = vadd.f32 %v5765, 1.0
          %v5979 = vadd.f32 %v5767, 1.0
          %v5980 = vadd.f32 %v5769, 1.0
          %v5981 = vadd.f32 %v5771, 1.0
          %v5982 = vadd.f32 %v5773, 1.0
          %v5983 = vadd.f32 %v5775, 1.0
          %v5984 = vadd.f32 %v5777, 1.0
          %v5985 = vadd.f32 %v5779, 1.0
          %v5986 = vadd.f32 %v5781, 1.0
          %v5987 = vadd.f32 %v5783, 1.0
          %v5988 = vadd.f32 %v5785, 1.0
          %v5989 = vadd.f32 %v5787, 1.0
          %v5990 = vadd.f32 %v5789, 1.0
          %v5991 = vadd.f32 %v5791, 1.0
          %v5992 = vadd.f32 %v5793, 1.0
          %v5993 = vadd.f32 %v5795, 1.0
          %v5994 = vadd.f32 %v5797, 1.0
          %v5995 = vadd.f32 %v5799, 1.0
          %v5996 = vadd.f32 %v5801, 1.0
          %v5997 = vadd.f32 %v5803, 1.0
          %v5998 = vadd.f32 %v5805, 1.0
          %v5999 = vadd.f32 %v5807, 1.0
          %v6000 = vadd.f32 %v5809, 1.0
          %v6001 = vadd.f32 %v5811, 1.0
          %v6002 = vadd.f32 %v5813, 1.0
          %v6003 = vadd.f32 %v5815, 1.0
          %v6004 = vadd.f32 %v5817, 1.0
          %v6005 = vadd.f32 %v5819, 1.0
          %v6006 = vadd.f32 %v5821, 1.0
          %v6007 = vadd.f32 %v5823, 1.0
          %v6008 = vadd.f32 %v5825, 1.0
          %v6009 = vadd.f32 %v5827, 1.0
          %v6010 = vadd.f32 %v5829, 1.0
          %v6011 = vadd.f32 %v5831, 1.0
          %v6012 = vadd.f32 %v5833, 1.0
          %v6013 = vadd.f32 %v5835, 1.0
          %v6014 = vadd.f32 %v5837, 1.0
          %v6015 = vadd.f32 %v5839, 1.0
          %v6016 = vadd.f32 %v5841, 1.0
          %v6017 = vadd.f32 %v5843, 1.0
          %v6018 = vadd.f32 %v5845, 1.0
          %v6019 = vadd.f32 %v5847, 1.0
          %v6020 = vadd.f32 %v5849, 1.0
          %v6021 = vadd.f32 %v5851, 1.0
          %v6022 = vadd.f32 %v5853, 1.0
          %v6023 = vadd.f32 %v5855, 1.0
          %v6024 = vadd.f32 %v5857, 1.0
          %v6025 = vadd.f32 %v5859, 1.0
          %v6026 = vadd.f32 %v5861, 1.0
          %v6027 = vadd.f32 %v5863, 1.0
          %v6028 = vadd.f32 %v5865, 1.0
          %v6029 = vadd.f32 %v5867, 1.0
          %v6030 = vadd.f32 %v5869, 1.0
          %v6031 = vadd.f32 %v5871, 1.0
          %v6032 = vadd.f32 %v5873, 1.0
          %v6033 = vadd.f32 %v5875, 1.0
          %v6034 = vadd.f32 %v5877, 1.0
          %v6035 = vadd.f32 %v5879, 1.0
          %v6036 = vadd.f32 %v5881, 1.0
          %v6037 = vadd.f32 %v5883, 1.0
          %v6038 = vadd.f32 %v5885, 1.0
          %v6039 = vadd.f32 %v5887, 1.0
          %v6040 = vadd.f32 %v5889, 1.0
          %v6041 = vadd.f32 %v5891, 1.0
          %v6042 = vadd.f32 %v5893, 1.0
          %v6043 = vadd.f32 %v5895, 1.0
          %v6044 = vadd.f32 %v5897, 1.0
          %v6045 = vadd.f32 %v5899, 1.0
          %v6046 = vadd.f32 %v5901, 1.0
          %v6047 = vadd.f32 %v5903, 1.0
          %v6048 = vadd.f32 %v5905, 1.0
          %v6049 = vadd.f32 %v5907, 1.0
          %v6050 = vadd.f32 %v5909, 1.0
          %v6051 = vadd.f32 %v5911, 1.0
          %v6052 = vadd.f32 %v5913, 1.0
          %v6053 = vadd.f32 %v5915, 1.0
          %v6054 = vadd.f32 %v5917, 1.0
          %v6055 = vadd.f32 %v5919, 1.0
          %v6056 = vadd.f32 %v5921, 1.0
          %v6057 = vadd.f32 %v5923, 1.0
          %v6058 = vadd.f32 %v5925, 1.0
          %v6059 = vadd.f32 %v5927, 1.0
          %v6060 = vadd.f32 %v5929, 1.0
          %v6061 = vadd.f32 %v5931, 1.0
          %v6062 = vadd.f32 %v5933, 1.0
          %v6063 = vadd.f32 %v5935, 1.0
          %v6064 = vrcp.pop %v5936
          %v6065 = vmul.f32 1.0, %v6064
          %v6066 = vrcp.pop %v5937
          %v6067 = vmul.f32 1.0, %v6066
          %v6068 = vrcp.pop %v5938
          %v6069 = vmul.f32 1.0, %v6068
          %v6070 = vrcp.pop %v5939
          %v6071 = vmul.f32 1.0, %v6070
          %v6072 = vrcp.pop %v5940
          %v6073 = vmul.f32 1.0, %v6072
          %v6074 = vrcp.pop %v5941
          %v6075 = vmul.f32 1.0, %v6074
          %v6076 = vrcp.pop %v5942
          %v6077 = vmul.f32 1.0, %v6076
          %v6078 = vrcp.pop %v5943
          %v6079 = vmul.f32 1.0, %v6078
          %v6080 = vrcp.pop %v5944
          %v6081 = vmul.f32 1.0, %v6080
          %v6082 = vrcp.pop %v5945
          %v6083 = vmul.f32 1.0, %v6082
          %v6084 = vrcp.pop %v5946
          %v6085 = vmul.f32 1.0, %v6084
          %v6086 = vrcp.pop %v5947
          %v6087 = vmul.f32 1.0, %v6086
          %v6088 = vrcp.pop %v5948
          %v6089 = vmul.f32 1.0, %v6088
          %v6090 = vrcp.pop %v5949
          %v6091 = vmul.f32 1.0, %v6090
          %v6092 = vrcp.pop %v5950
          %v6093 = vmul.f32 1.0, %v6092
          %v6094 = vrcp.pop %v5951
          %v6095 = vmul.f32 1.0, %v6094
          %v6096 = vrcp.pop %v5952
          %v6097 = vmul.f32 1.0, %v6096
          %v6098 = vrcp.pop %v5953
          %v6099 = vmul.f32 1.0, %v6098
          %v6100 = vrcp.pop %v5954
          %v6101 = vmul.f32 1.0, %v6100
          %v6102 = vrcp.pop %v5955
          %v6103 = vmul.f32 1.0, %v6102
          %v6104 = vrcp.pop %v5956
          %v6105 = vmul.f32 1.0, %v6104
          %v6106 = vrcp.pop %v5957
          %v6107 = vmul.f32 1.0, %v6106
          %v6108 = vrcp.pop %v5958
          %v6109 = vmul.f32 1.0, %v6108
          %v6110 = vrcp.pop %v5959
          %v6111 = vmul.f32 1.0, %v6110
          %v6112 = vrcp.pop %v5960
          %v6113 = vmul.f32 1.0, %v6112
          %v6114 = vrcp.pop %v5961
          %v6115 = vmul.f32 1.0, %v6114
          %v6116 = vrcp.pop %v5962
          %v6117 = vmul.f32 1.0, %v6116
          %v6118 = vrcp.pop %v5963
          %v6119 = vmul.f32 1.0, %v6118
          %v6120 = vrcp.pop %v5964
          %v6121 = vmul.f32 1.0, %v6120
          %v6122 = vrcp.pop %v5965
          %v6123 = vmul.f32 1.0, %v6122
          %v6124 = vrcp.pop %v5966
          %v6125 = vmul.f32 1.0, %v6124
          %v6126 = vrcp.pop %v5967
          %v6127 = vmul.f32 1.0, %v6126
          %v6128 = vrcp.pop %v5968
          %v6129 = vmul.f32 1.0, %v6128
          %v6130 = vrcp.pop %v5969
          %v6131 = vmul.f32 1.0, %v6130
          %v6132 = vrcp.pop %v5970
          %v6133 = vmul.f32 1.0, %v6132
          %v6134 = vrcp.pop %v5971
          %v6135 = vmul.f32 1.0, %v6134
          %v6136 = vrcp.pop %v5972
          %v6137 = vmul.f32 1.0, %v6136
          %v6138 = vrcp.pop %v5973
          %v6139 = vmul.f32 1.0, %v6138
          %v6140 = vrcp.pop %v5974
          %v6141 = vmul.f32 1.0, %v6140
          %v6142 = vrcp.pop %v5975
          %v6143 = vmul.f32 1.0, %v6142
          %v6144 = vrcp.pop %v5976
          %v6145 = vmul.f32 1.0, %v6144
          %v6146 = vrcp.pop %v5977
          %v6147 = vmul.f32 1.0, %v6146
          %v6148 = vrcp.pop %v5978
          %v6149 = vmul.f32 1.0, %v6148
          %v6150 = vrcp.pop %v5979
          %v6151 = vmul.f32 1.0, %v6150
          %v6152 = vrcp.pop %v5980
          %v6153 = vmul.f32 1.0, %v6152
          %v6154 = vrcp.pop %v5981
          %v6155 = vmul.f32 1.0, %v6154
          %v6156 = vrcp.pop %v5982
          %v6157 = vmul.f32 1.0, %v6156
          %v6158 = vrcp.pop %v5983
          %v6159 = vmul.f32 1.0, %v6158
          %v6160 = vrcp.pop %v5984
          %v6161 = vmul.f32 1.0, %v6160
          %v6162 = vrcp.pop %v5985
          %v6163 = vmul.f32 1.0, %v6162
          %v6164 = vrcp.pop %v5986
          %v6165 = vmul.f32 1.0, %v6164
          %v6166 = vrcp.pop %v5987
          %v6167 = vmul.f32 1.0, %v6166
          %v6168 = vrcp.pop %v5988
          %v6169 = vmul.f32 1.0, %v6168
          %v6170 = vrcp.pop %v5989
          %v6171 = vmul.f32 1.0, %v6170
          %v6172 = vrcp.pop %v5990
          %v6173 = vmul.f32 1.0, %v6172
          %v6174 = vrcp.pop %v5991
          %v6175 = vmul.f32 1.0, %v6174
          %v6176 = vrcp.pop %v5992
          %v6177 = vmul.f32 1.0, %v6176
          %v6178 = vrcp.pop %v5993
          %v6179 = vmul.f32 1.0, %v6178
          %v6180 = vrcp.pop %v5994
          %v6181 = vmul.f32 1.0, %v6180
          %v6182 = vrcp.pop %v5995
          %v6183 = vmul.f32 1.0, %v6182
          %v6184 = vrcp.pop %v5996
          %v6185 = vmul.f32 1.0, %v6184
          %v6186 = vrcp.pop %v5997
          %v6187 = vmul.f32 1.0, %v6186
          %v6188 = vrcp.pop %v5998
          %v6189 = vmul.f32 1.0, %v6188
          %v6190 = vrcp.pop %v5999
          %v6191 = vmul.f32 1.0, %v6190
          %v6192 = vrcp.pop %v6000
          %v6193 = vmul.f32 1.0, %v6192
          %v6194 = vrcp.pop %v6001
          %v6195 = vmul.f32 1.0, %v6194
          %v6196 = vrcp.pop %v6002
          %v6197 = vmul.f32 1.0, %v6196
          %v6198 = vrcp.pop %v6003
          %v6199 = vmul.f32 1.0, %v6198
          %v6200 = vrcp.pop %v6004
          %v6201 = vmul.f32 1.0, %v6200
          %v6202 = vrcp.pop %v6005
          %v6203 = vmul.f32 1.0, %v6202
          %v6204 = vrcp.pop %v6006
          %v6205 = vmul.f32 1.0, %v6204
          %v6206 = vrcp.pop %v6007
          %v6207 = vmul.f32 1.0, %v6206
          %v6208 = vrcp.pop %v6008
          %v6209 = vmul.f32 1.0, %v6208
          %v6210 = vrcp.pop %v6009
          %v6211 = vmul.f32 1.0, %v6210
          %v6212 = vrcp.pop %v6010
          %v6213 = vmul.f32 1.0, %v6212
          %v6214 = vrcp.pop %v6011
          %v6215 = vmul.f32 1.0, %v6214
          %v6216 = vrcp.pop %v6012
          %v6217 = vmul.f32 1.0, %v6216
          %v6218 = vrcp.pop %v6013
          %v6219 = vmul.f32 1.0, %v6218
          %v6220 = vrcp.pop %v6014
          %v6221 = vmul.f32 1.0, %v6220
          %v6222 = vrcp.pop %v6015
          %v6223 = vmul.f32 1.0, %v6222
          %v6224 = vrcp.pop %v6016
          %v6225 = vmul.f32 1.0, %v6224
          %v6226 = vrcp.pop %v6017
          %v6227 = vmul.f32 1.0, %v6226
          %v6228 = vrcp.pop %v6018
          %v6229 = vmul.f32 1.0, %v6228
          %v6230 = vrcp.pop %v6019
          %v6231 = vmul.f32 1.0, %v6230
          %v6232 = vrcp.pop %v6020
          %v6233 = vmul.f32 1.0, %v6232
          %v6234 = vrcp.pop %v6021
          %v6235 = vmul.f32 1.0, %v6234
          %v6236 = vrcp.pop %v6022
          %v6237 = vmul.f32 1.0, %v6236
          %v6238 = vrcp.pop %v6023
          %v6239 = vmul.f32 1.0, %v6238
          %v6240 = vrcp.pop %v6024
          %v6241 = vmul.f32 1.0, %v6240
          %v6242 = vrcp.pop %v6025
          %v6243 = vmul.f32 1.0, %v6242
          %v6244 = vrcp.pop %v6026
          %v6245 = vmul.f32 1.0, %v6244
          %v6246 = vrcp.pop %v6027
          %v6247 = vmul.f32 1.0, %v6246
          %v6248 = vrcp.pop %v6028
          %v6249 = vmul.f32 1.0, %v6248
          %v6250 = vrcp.pop %v6029
          %v6251 = vmul.f32 1.0, %v6250
          %v6252 = vrcp.pop %v6030
          %v6253 = vmul.f32 1.0, %v6252
          %v6254 = vrcp.pop %v6031
          %v6255 = vmul.f32 1.0, %v6254
          %v6256 = vrcp.pop %v6032
          %v6257 = vmul.f32 1.0, %v6256
          %v6258 = vrcp.pop %v6033
          %v6259 = vmul.f32 1.0, %v6258
          %v6260 = vrcp.pop %v6034
          %v6261 = vmul.f32 1.0, %v6260
          %v6262 = vrcp.pop %v6035
          %v6263 = vmul.f32 1.0, %v6262
          %v6264 = vrcp.pop %v6036
          %v6265 = vmul.f32 1.0, %v6264
          %v6266 = vrcp.pop %v6037
          %v6267 = vmul.f32 1.0, %v6266
          %v6268 = vrcp.pop %v6038
          %v6269 = vmul.f32 1.0, %v6268
          %v6270 = vrcp.pop %v6039
          %v6271 = vmul.f32 1.0, %v6270
          %v6272 = vrcp.pop %v6040
          %v6273 = vmul.f32 1.0, %v6272
          %v6274 = vrcp.pop %v6041
          %v6275 = vmul.f32 1.0, %v6274
          %v6276 = vrcp.pop %v6042
          %v6277 = vmul.f32 1.0, %v6276
          %v6278 = vrcp.pop %v6043
          %v6279 = vmul.f32 1.0, %v6278
          %v6280 = vrcp.pop %v6044
          %v6281 = vmul.f32 1.0, %v6280
          %v6282 = vrcp.pop %v6045
          %v6283 = vmul.f32 1.0, %v6282
          %v6284 = vrcp.pop %v6046
          %v6285 = vmul.f32 1.0, %v6284
          %v6286 = vrcp.pop %v6047
          %v6287 = vmul.f32 1.0, %v6286
          %v6288 = vrcp.pop %v6048
          %v6289 = vmul.f32 1.0, %v6288
          %v6290 = vrcp.pop %v6049
          %v6291 = vmul.f32 1.0, %v6290
          %v6292 = vrcp.pop %v6050
          %v6293 = vmul.f32 1.0, %v6292
          %v6294 = vrcp.pop %v6051
          %v6295 = vmul.f32 1.0, %v6294
          %v6296 = vrcp.pop %v6052
          %v6297 = vmul.f32 1.0, %v6296
          %v6298 = vrcp.pop %v6053
          %v6299 = vmul.f32 1.0, %v6298
          %v6300 = vrcp.pop %v6054
          %v6301 = vmul.f32 1.0, %v6300
          %v6302 = vrcp.pop %v6055
          %v6303 = vmul.f32 1.0, %v6302
          %v6304 = vrcp.pop %v6056
          %v6305 = vmul.f32 1.0, %v6304
          %v6306 = vrcp.pop %v6057
          %v6307 = vmul.f32 1.0, %v6306
          %v6308 = vrcp.pop %v6058
          %v6309 = vmul.f32 1.0, %v6308
          %v6310 = vrcp.pop %v6059
          %v6311 = vmul.f32 1.0, %v6310
          %v6312 = vrcp.pop %v6060
          %v6313 = vmul.f32 1.0, %v6312
          %v6314 = vrcp.pop %v6061
          %v6315 = vmul.f32 1.0, %v6314
          %v6316 = vrcp.pop %v6062
          %v6317 = vmul.f32 1.0, %v6316
          %v6318 = vrcp.pop %v6063
          %v6319 = vmul.f32 1.0, %v6318
          %v6320 = vmul.f32 %v3821, %v6065
          %v6321 = vmul.f32 %v3826, %v6067
          %v6322 = vmul.f32 %v3831, %v6069
          %v6323 = vmul.f32 %v3836, %v6071
          %v6324 = vmul.f32 %v3841, %v6073
          %v6325 = vmul.f32 %v3846, %v6075
          %v6326 = vmul.f32 %v3851, %v6077
          %v6327 = vmul.f32 %v3856, %v6079
          %v6328 = vmul.f32 %v3861, %v6081
          %v6329 = vmul.f32 %v3866, %v6083
          %v6330 = vmul.f32 %v3871, %v6085
          %v6331 = vmul.f32 %v3876, %v6087
          %v6332 = vmul.f32 %v3881, %v6089
          %v6333 = vmul.f32 %v3886, %v6091
          %v6334 = vmul.f32 %v3891, %v6093
          %v6335 = vmul.f32 %v3896, %v6095
          %v6336 = vmul.f32 %v3901, %v6097
          %v6337 = vmul.f32 %v3906, %v6099
          %v6338 = vmul.f32 %v3911, %v6101
          %v6339 = vmul.f32 %v3916, %v6103
          %v6340 = vmul.f32 %v3921, %v6105
          %v6341 = vmul.f32 %v3926, %v6107
          %v6342 = vmul.f32 %v3931, %v6109
          %v6343 = vmul.f32 %v3936, %v6111
          %v6344 = vmul.f32 %v3941, %v6113
          %v6345 = vmul.f32 %v3946, %v6115
          %v6346 = vmul.f32 %v3951, %v6117
          %v6347 = vmul.f32 %v3956, %v6119
          %v6348 = vmul.f32 %v3961, %v6121
          %v6349 = vmul.f32 %v3966, %v6123
          %v6350 = vmul.f32 %v3971, %v6125
          %v6351 = vmul.f32 %v3976, %v6127
          %v6352 = vmul.f32 %v3981, %v6129
          %v6353 = vmul.f32 %v3986, %v6131
          %v6354 = vmul.f32 %v3991, %v6133
          %v6355 = vmul.f32 %v3996, %v6135
          %v6356 = vmul.f32 %v4001, %v6137
          %v6357 = vmul.f32 %v4006, %v6139
          %v6358 = vmul.f32 %v4011, %v6141
          %v6359 = vmul.f32 %v4016, %v6143
          %v6360 = vmul.f32 %v4021, %v6145
          %v6361 = vmul.f32 %v4026, %v6147
          %v6362 = vmul.f32 %v4031, %v6149
          %v6363 = vmul.f32 %v4036, %v6151
          %v6364 = vmul.f32 %v4041, %v6153
          %v6365 = vmul.f32 %v4046, %v6155
          %v6366 = vmul.f32 %v4051, %v6157
          %v6367 = vmul.f32 %v4056, %v6159
          %v6368 = vmul.f32 %v4061, %v6161
          %v6369 = vmul.f32 %v4066, %v6163
          %v6370 = vmul.f32 %v4071, %v6165
          %v6371 = vmul.f32 %v4076, %v6167
          %v6372 = vmul.f32 %v4081, %v6169
          %v6373 = vmul.f32 %v4086, %v6171
          %v6374 = vmul.f32 %v4091, %v6173
          %v6375 = vmul.f32 %v4096, %v6175
          %v6376 = vmul.f32 %v4101, %v6177
          %v6377 = vmul.f32 %v4106, %v6179
          %v6378 = vmul.f32 %v4111, %v6181
          %v6379 = vmul.f32 %v4116, %v6183
          %v6380 = vmul.f32 %v4121, %v6185
          %v6381 = vmul.f32 %v4126, %v6187
          %v6382 = vmul.f32 %v4131, %v6189
          %v6383 = vmul.f32 %v4136, %v6191
          %v6384 = vmul.f32 %v4141, %v6193
          %v6385 = vmul.f32 %v4146, %v6195
          %v6386 = vmul.f32 %v4151, %v6197
          %v6387 = vmul.f32 %v4156, %v6199
          %v6388 = vmul.f32 %v4161, %v6201
          %v6389 = vmul.f32 %v4166, %v6203
          %v6390 = vmul.f32 %v4171, %v6205
          %v6391 = vmul.f32 %v4176, %v6207
          %v6392 = vmul.f32 %v4181, %v6209
          %v6393 = vmul.f32 %v4186, %v6211
          %v6394 = vmul.f32 %v4191, %v6213
          %v6395 = vmul.f32 %v4196, %v6215
          %v6396 = vmul.f32 %v4201, %v6217
          %v6397 = vmul.f32 %v4206, %v6219
          %v6398 = vmul.f32 %v4211, %v6221
          %v6399 = vmul.f32 %v4216, %v6223
          %v6400 = vmul.f32 %v4221, %v6225
          %v6401 = vmul.f32 %v4226, %v6227
          %v6402 = vmul.f32 %v4231, %v6229
          %v6403 = vmul.f32 %v4236, %v6231
          %v6404 = vmul.f32 %v4241, %v6233
          %v6405 = vmul.f32 %v4246, %v6235
          %v6406 = vmul.f32 %v4251, %v6237
          %v6407 = vmul.f32 %v4256, %v6239
          %v6408 = vmul.f32 %v4261, %v6241
          %v6409 = vmul.f32 %v4266, %v6243
          %v6410 = vmul.f32 %v4271, %v6245
          %v6411 = vmul.f32 %v4276, %v6247
          %v6412 = vmul.f32 %v4281, %v6249
          %v6413 = vmul.f32 %v4286, %v6251
          %v6414 = vmul.f32 %v4291, %v6253
          %v6415 = vmul.f32 %v4296, %v6255
          %v6416 = vmul.f32 %v4301, %v6257
          %v6417 = vmul.f32 %v4306, %v6259
          %v6418 = vmul.f32 %v4311, %v6261
          %v6419 = vmul.f32 %v4316, %v6263
          %v6420 = vmul.f32 %v4321, %v6265
          %v6421 = vmul.f32 %v4326, %v6267
          %v6422 = vmul.f32 %v4331, %v6269
          %v6423 = vmul.f32 %v4336, %v6271
          %v6424 = vmul.f32 %v4341, %v6273
          %v6425 = vmul.f32 %v4346, %v6275
          %v6426 = vmul.f32 %v4351, %v6277
          %v6427 = vmul.f32 %v4356, %v6279
          %v6428 = vmul.f32 %v4361, %v6281
          %v6429 = vmul.f32 %v4366, %v6283
          %v6430 = vmul.f32 %v4371, %v6285
          %v6431 = vmul.f32 %v4376, %v6287
          %v6432 = vmul.f32 %v4381, %v6289
          %v6433 = vmul.f32 %v4386, %v6291
          %v6434 = vmul.f32 %v4391, %v6293
          %v6435 = vmul.f32 %v4396, %v6295
          %v6436 = vmul.f32 %v4401, %v6297
          %v6437 = vmul.f32 %v4406, %v6299
          %v6438 = vmul.f32 %v4411, %v6301
          %v6439 = vmul.f32 %v4416, %v6303
          %v6440 = vmul.f32 %v4421, %v6305
          %v6441 = vmul.f32 %v4426, %v6307
          %v6442 = vmul.f32 %v4431, %v6309
          %v6443 = vmul.f32 %v4436, %v6311
          %v6444 = vmul.f32 %v4441, %v6313
          %v6445 = vmul.f32 %v4446, %v6315
          %v6446 = vmul.f32 %v4451, %v6317
          %v6447 = vmul.f32 %v4456, %v6319
          %v6448 = vld [vmem:[#allocation25] sm:$0x1]
          %v6450 = vlaneseq
          %v6451 = vshrl.u32 %v6450, 7
          %v6452 = vsub.s32 0, %v6451
          %v6453 = vrot.slane %v6448, %v6452
          %v6455 = vmul.f32 %v6320, %v6453
          %v6456 = vmul.f32 %v6321, %v6453
          %v6457 = vmul.f32 %v6322, %v6453
          %v6458 = vmul.f32 %v6323, %v6453
          %v6459 = vmul.f32 %v6324, %v6453
          %v6460 = vmul.f32 %v6325, %v6453
          %v6461 = vmul.f32 %v6326, %v6453
          %v6462 = vmul.f32 %v6327, %v6453
          %v6463 = vmul.f32 %v6328, %v6453
          %v6464 = vmul.f32 %v6329, %v6453
          %v6465 = vmul.f32 %v6330, %v6453
          %v6466 = vmul.f32 %v6331, %v6453
          %v6467 = vmul.f32 %v6332, %v6453
          %v6468 = vmul.f32 %v6333, %v6453
          %v6469 = vmul.f32 %v6334, %v6453
          %v6470 = vmul.f32 %v6335, %v6453
          %v6471 = vmul.f32 %v6336, %v6453
          %v6472 = vmul.f32 %v6337, %v6453
          %v6473 = vmul.f32 %v6338, %v6453
          %v6474 = vmul.f32 %v6339, %v6453
          %v6475 = vmul.f32 %v6340, %v6453
          %v6476 = vmul.f32 %v6341, %v6453
          %v6477 = vmul.f32 %v6342, %v6453
          %v6478 = vmul.f32 %v6343, %v6453
          %v6479 = vmul.f32 %v6344, %v6453
          %v6480 = vmul.f32 %v6345, %v6453
          %v6481 = vmul.f32 %v6346, %v6453
          %v6482 = vmul.f32 %v6347, %v6453
          %v6483 = vmul.f32 %v6348, %v6453
          %v6484 = vmul.f32 %v6349, %v6453
          %v6485 = vmul.f32 %v6350, %v6453
          %v6486 = vmul.f32 %v6351, %v6453
          %v6487 = vmul.f32 %v6352, %v6453
          %v6488 = vmul.f32 %v6353, %v6453
          %v6489 = vmul.f32 %v6354, %v6453
          %v6490 = vmul.f32 %v6355, %v6453
          %v6491 = vmul.f32 %v6356, %v6453
          %v6492 = vmul.f32 %v6357, %v6453
          %v6493 = vmul.f32 %v6358, %v6453
          %v6494 = vmul.f32 %v6359, %v6453
          %v6495 = vmul.f32 %v6360, %v6453
          %v6496 = vmul.f32 %v6361, %v6453
          %v6497 = vmul.f32 %v6362, %v6453
          %v6498 = vmul.f32 %v6363, %v6453
          %v6499 = vmul.f32 %v6364, %v6453
          %v6500 = vmul.f32 %v6365, %v6453
          %v6501 = vmul.f32 %v6366, %v6453
          %v6502 = vmul.f32 %v6367, %v6453
          %v6503 = vmul.f32 %v6368, %v6453
          %v6504 = vmul.f32 %v6369, %v6453
          %v6505 = vmul.f32 %v6370, %v6453
          %v6506 = vmul.f32 %v6371, %v6453
          %v6507 = vmul.f32 %v6372, %v6453
          %v6508 = vmul.f32 %v6373, %v6453
          %v6509 = vmul.f32 %v6374, %v6453
          %v6510 = vmul.f32 %v6375, %v6453
          %v6511 = vmul.f32 %v6376, %v6453
          %v6512 = vmul.f32 %v6377, %v6453
          %v6513 = vmul.f32 %v6378, %v6453
          %v6514 = vmul.f32 %v6379, %v6453
          %v6515 = vmul.f32 %v6380, %v6453
          %v6516 = vmul.f32 %v6381, %v6453
          %v6517 = vmul.f32 %v6382, %v6453
          %v6518 = vmul.f32 %v6383, %v6453
          %v6519 = vmul.f32 %v6384, %v6453
          %v6520 = vmul.f32 %v6385, %v6453
          %v6521 = vmul.f32 %v6386, %v6453
          %v6522 = vmul.f32 %v6387, %v6453
          %v6523 = vmul.f32 %v6388, %v6453
          %v6524 = vmul.f32 %v6389, %v6453
          %v6525 = vmul.f32 %v6390, %v6453
          %v6526 = vmul.f32 %v6391, %v6453
          %v6527 = vmul.f32 %v6392, %v6453
          %v6528 = vmul.f32 %v6393, %v6453
          %v6529 = vmul.f32 %v6394, %v6453
          %v6530 = vmul.f32 %v6395, %v6453
          %v6531 = vmul.f32 %v6396, %v6453
          %v6532 = vmul.f32 %v6397, %v6453
          %v6533 = vmul.f32 %v6398, %v6453
          %v6534 = vmul.f32 %v6399, %v6453
          %v6535 = vmul.f32 %v6400, %v6453
          %v6536 = vmul.f32 %v6401, %v6453
          %v6537 = vmul.f32 %v6402, %v6453
          %v6538 = vmul.f32 %v6403, %v6453
          %v6539 = vmul.f32 %v6404, %v6453
          %v6540 = vmul.f32 %v6405, %v6453
          %v6541 = vmul.f32 %v6406, %v6453
          %v6542 = vmul.f32 %v6407, %v6453
          %v6543 = vmul.f32 %v6408, %v6453
          %v6544 = vmul.f32 %v6409, %v6453
          %v6545 = vmul.f32 %v6410, %v6453
          %v6546 = vmul.f32 %v6411, %v6453
          %v6547 = vmul.f32 %v6412, %v6453
          %v6548 = vmul.f32 %v6413, %v6453
          %v6549 = vmul.f32 %v6414, %v6453
          %v6550 = vmul.f32 %v6415, %v6453
          %v6551 = vmul.f32 %v6416, %v6453
          %v6552 = vmul.f32 %v6417, %v6453
          %v6553 = vmul.f32 %v6418, %v6453
          %v6554 = vmul.f32 %v6419, %v6453
          %v6555 = vmul.f32 %v6420, %v6453
          %v6556 = vmul.f32 %v6421, %v6453
          %v6557 = vmul.f32 %v6422, %v6453
          %v6558 = vmul.f32 %v6423, %v6453
          %v6559 = vmul.f32 %v6424, %v6453
          %v6560 = vmul.f32 %v6425, %v6453
          %v6561 = vmul.f32 %v6426, %v6453
          %v6562 = vmul.f32 %v6427, %v6453
          %v6563 = vmul.f32 %v6428, %v6453
          %v6564 = vmul.f32 %v6429, %v6453
          %v6565 = vmul.f32 %v6430, %v6453
          %v6566 = vmul.f32 %v6431, %v6453
          %v6567 = vmul.f32 %v6432, %v6453
          %v6568 = vmul.f32 %v6433, %v6453
          %v6569 = vmul.f32 %v6434, %v6453
          %v6570 = vmul.f32 %v6435, %v6453
          %v6571 = vmul.f32 %v6436, %v6453
          %v6572 = vmul.f32 %v6437, %v6453
          %v6573 = vmul.f32 %v6438, %v6453
          %v6574 = vmul.f32 %v6439, %v6453
          %v6575 = vmul.f32 %v6440, %v6453
          %v6576 = vmul.f32 %v6441, %v6453
          %v6577 = vmul.f32 %v6442, %v6453
          %v6578 = vmul.f32 %v6443, %v6453
          %v6579 = vmul.f32 %v6444, %v6453
          %v6580 = vmul.f32 %v6445, %v6453
          %v6581 = vmul.f32 %v6446, %v6453
          %v6582 = vmul.f32 %v6447, %v6453
          %v6583 = vsel %vm754, %v6455, 0.0
          %6584 = vadd.xlane.f32.xlu0 %v6583
          %v6585 = vpop.xlane.xlu0 %6584
          %v6586 = vsel %vm754, %v6456, 0.0
          %6587 = vadd.xlane.f32.xlu0 %v6586
          %v6588 = vpop.xlane.xlu0 %6587
          %v6589 = vsel %vm754, %v6457, 0.0
          %6590 = vadd.xlane.f32.xlu0 %v6589
          %v6591 = vpop.xlane.xlu0 %6590
          %v6592 = vsel %vm754, %v6458, 0.0
          %6593 = vadd.xlane.f32.xlu0 %v6592
          %v6594 = vpop.xlane.xlu0 %6593
          %v6595 = vsel %vm754, %v6459, 0.0
          %6596 = vadd.xlane.f32.xlu0 %v6595
          %v6597 = vpop.xlane.xlu0 %6596
          %v6598 = vsel %vm754, %v6460, 0.0
          %6599 = vadd.xlane.f32.xlu0 %v6598
          %v6600 = vpop.xlane.xlu0 %6599
          %v6601 = vsel %vm754, %v6461, 0.0
          %6602 = vadd.xlane.f32.xlu0 %v6601
          %v6603 = vpop.xlane.xlu0 %6602
          %v6604 = vsel %vm754, %v6462, 0.0
          %6605 = vadd.xlane.f32.xlu0 %v6604
          %v6606 = vpop.xlane.xlu0 %6605
          %v6607 = vsel %vm754, %v6463, 0.0
          %6608 = vadd.xlane.f32.xlu0 %v6607
          %v6609 = vpop.xlane.xlu0 %6608
          %v6610 = vsel %vm754, %v6464, 0.0
          %6611 = vadd.xlane.f32.xlu0 %v6610
          %v6612 = vpop.xlane.xlu0 %6611
          %v6613 = vsel %vm754, %v6465, 0.0
          %6614 = vadd.xlane.f32.xlu0 %v6613
          %v6615 = vpop.xlane.xlu0 %6614
          %v6616 = vsel %vm754, %v6466, 0.0
          %6617 = vadd.xlane.f32.xlu0 %v6616
          %v6618 = vpop.xlane.xlu0 %6617
          %v6619 = vsel %vm754, %v6467, 0.0
          %6620 = vadd.xlane.f32.xlu0 %v6619
          %v6621 = vpop.xlane.xlu0 %6620
          %v6622 = vsel %vm754, %v6468, 0.0
          %6623 = vadd.xlane.f32.xlu0 %v6622
          %v6624 = vpop.xlane.xlu0 %6623
          %v6625 = vsel %vm754, %v6469, 0.0
          %6626 = vadd.xlane.f32.xlu0 %v6625
          %v6627 = vpop.xlane.xlu0 %6626
          %v6628 = vsel %vm754, %v6470, 0.0
          %6629 = vadd.xlane.f32.xlu0 %v6628
          %v6630 = vpop.xlane.xlu0 %6629
          %v6631 = vsel %vm754, %v6471, 0.0
          %6632 = vadd.xlane.f32.xlu0 %v6631
          %v6633 = vpop.xlane.xlu0 %6632
          %v6634 = vsel %vm754, %v6472, 0.0
          %6635 = vadd.xlane.f32.xlu0 %v6634
          %v6636 = vpop.xlane.xlu0 %6635
          %v6637 = vsel %vm754, %v6473, 0.0
          %6638 = vadd.xlane.f32.xlu0 %v6637
          %v6639 = vpop.xlane.xlu0 %6638
          %v6640 = vsel %vm754, %v6474, 0.0
          %6641 = vadd.xlane.f32.xlu0 %v6640
          %v6642 = vpop.xlane.xlu0 %6641
          %v6643 = vsel %vm754, %v6475, 0.0
          %6644 = vadd.xlane.f32.xlu0 %v6643
          %v6645 = vpop.xlane.xlu0 %6644
          %v6646 = vsel %vm754, %v6476, 0.0
          %6647 = vadd.xlane.f32.xlu0 %v6646
          %v6648 = vpop.xlane.xlu0 %6647
          %v6649 = vsel %vm754, %v6477, 0.0
          %6650 = vadd.xlane.f32.xlu0 %v6649
          %v6651 = vpop.xlane.xlu0 %6650
          %v6652 = vsel %vm754, %v6478, 0.0
          %6653 = vadd.xlane.f32.xlu0 %v6652
          %v6654 = vpop.xlane.xlu0 %6653
          %v6655 = vsel %vm754, %v6479, 0.0
          %6656 = vadd.xlane.f32.xlu0 %v6655
          %v6657 = vpop.xlane.xlu0 %6656
          %v6658 = vsel %vm754, %v6480, 0.0
          %6659 = vadd.xlane.f32.xlu0 %v6658
          %v6660 = vpop.xlane.xlu0 %6659
          %v6661 = vsel %vm754, %v6481, 0.0
          %6662 = vadd.xlane.f32.xlu0 %v6661
          %v6663 = vpop.xlane.xlu0 %6662
          %v6664 = vsel %vm754, %v6482, 0.0
          %6665 = vadd.xlane.f32.xlu0 %v6664
          %v6666 = vpop.xlane.xlu0 %6665
          %v6667 = vsel %vm754, %v6483, 0.0
          %6668 = vadd.xlane.f32.xlu0 %v6667
          %v6669 = vpop.xlane.xlu0 %6668
          %v6670 = vsel %vm754, %v6484, 0.0
          %6671 = vadd.xlane.f32.xlu0 %v6670
          %v6672 = vpop.xlane.xlu0 %6671
          %v6673 = vsel %vm754, %v6485, 0.0
          %6674 = vadd.xlane.f32.xlu0 %v6673
          %v6675 = vpop.xlane.xlu0 %6674
          %v6676 = vsel %vm754, %v6486, 0.0
          %6677 = vadd.xlane.f32.xlu0 %v6676
          %v6678 = vpop.xlane.xlu0 %6677
          %v6679 = vsel %vm754, %v6487, 0.0
          %6680 = vadd.xlane.f32.xlu0 %v6679
          %v6681 = vpop.xlane.xlu0 %6680
          %v6682 = vsel %vm754, %v6488, 0.0
          %6683 = vadd.xlane.f32.xlu0 %v6682
          %v6684 = vpop.xlane.xlu0 %6683
          %v6685 = vsel %vm754, %v6489, 0.0
          %6686 = vadd.xlane.f32.xlu0 %v6685
          %v6687 = vpop.xlane.xlu0 %6686
          %v6688 = vsel %vm754, %v6490, 0.0
          %6689 = vadd.xlane.f32.xlu0 %v6688
          %v6690 = vpop.xlane.xlu0 %6689
          %v6691 = vsel %vm754, %v6491, 0.0
          %6692 = vadd.xlane.f32.xlu0 %v6691
          %v6693 = vpop.xlane.xlu0 %6692
          %v6694 = vsel %vm754, %v6492, 0.0
          %6695 = vadd.xlane.f32.xlu0 %v6694
          %v6696 = vpop.xlane.xlu0 %6695
          %v6697 = vsel %vm754, %v6493, 0.0
          %6698 = vadd.xlane.f32.xlu0 %v6697
          %v6699 = vpop.xlane.xlu0 %6698
          %v6700 = vsel %vm754, %v6494, 0.0
          %6701 = vadd.xlane.f32.xlu0 %v6700
          %v6702 = vpop.xlane.xlu0 %6701
          %v6703 = vsel %vm754, %v6495, 0.0
          %6704 = vadd.xlane.f32.xlu0 %v6703
          %v6705 = vpop.xlane.xlu0 %6704
          %v6706 = vsel %vm754, %v6496, 0.0
          %6707 = vadd.xlane.f32.xlu0 %v6706
          %v6708 = vpop.xlane.xlu0 %6707
          %v6709 = vsel %vm754, %v6497, 0.0
          %6710 = vadd.xlane.f32.xlu0 %v6709
          %v6711 = vpop.xlane.xlu0 %6710
          %v6712 = vsel %vm754, %v6498, 0.0
          %6713 = vadd.xlane.f32.xlu0 %v6712
          %v6714 = vpop.xlane.xlu0 %6713
          %v6715 = vsel %vm754, %v6499, 0.0
          %6716 = vadd.xlane.f32.xlu0 %v6715
          %v6717 = vpop.xlane.xlu0 %6716
          %v6718 = vsel %vm754, %v6500, 0.0
          %6719 = vadd.xlane.f32.xlu0 %v6718
          %v6720 = vpop.xlane.xlu0 %6719
          %v6721 = vsel %vm754, %v6501, 0.0
          %6722 = vadd.xlane.f32.xlu0 %v6721
          %v6723 = vpop.xlane.xlu0 %6722
          %v6724 = vsel %vm754, %v6502, 0.0
          %6725 = vadd.xlane.f32.xlu0 %v6724
          %v6726 = vpop.xlane.xlu0 %6725
          %v6727 = vsel %vm754, %v6503, 0.0
          %6728 = vadd.xlane.f32.xlu0 %v6727
          %v6729 = vpop.xlane.xlu0 %6728
          %v6730 = vsel %vm754, %v6504, 0.0
          %6731 = vadd.xlane.f32.xlu0 %v6730
          %v6732 = vpop.xlane.xlu0 %6731
          %v6733 = vsel %vm754, %v6505, 0.0
          %6734 = vadd.xlane.f32.xlu0 %v6733
          %v6735 = vpop.xlane.xlu0 %6734
          %v6736 = vsel %vm754, %v6506, 0.0
          %6737 = vadd.xlane.f32.xlu0 %v6736
          %v6738 = vpop.xlane.xlu0 %6737
          %v6739 = vsel %vm754, %v6507, 0.0
          %6740 = vadd.xlane.f32.xlu0 %v6739
          %v6741 = vpop.xlane.xlu0 %6740
          %v6742 = vsel %vm754, %v6508, 0.0
          %6743 = vadd.xlane.f32.xlu0 %v6742
          %v6744 = vpop.xlane.xlu0 %6743
          %v6745 = vsel %vm754, %v6509, 0.0
          %6746 = vadd.xlane.f32.xlu0 %v6745
          %v6747 = vpop.xlane.xlu0 %6746
          %v6748 = vsel %vm754, %v6510, 0.0
          %6749 = vadd.xlane.f32.xlu0 %v6748
          %v6750 = vpop.xlane.xlu0 %6749
          %v6751 = vsel %vm754, %v6511, 0.0
          %6752 = vadd.xlane.f32.xlu0 %v6751
          %v6753 = vpop.xlane.xlu0 %6752
          %v6754 = vsel %vm754, %v6512, 0.0
          %6755 = vadd.xlane.f32.xlu0 %v6754
          %v6756 = vpop.xlane.xlu0 %6755
          %v6757 = vsel %vm754, %v6513, 0.0
          %6758 = vadd.xlane.f32.xlu0 %v6757
          %v6759 = vpop.xlane.xlu0 %6758
          %v6760 = vsel %vm754, %v6514, 0.0
          %6761 = vadd.xlane.f32.xlu0 %v6760
          %v6762 = vpop.xlane.xlu0 %6761
          %v6763 = vsel %vm754, %v6515, 0.0
          %6764 = vadd.xlane.f32.xlu0 %v6763
          %v6765 = vpop.xlane.xlu0 %6764
          %v6766 = vsel %vm754, %v6516, 0.0
          %6767 = vadd.xlane.f32.xlu0 %v6766
          %v6768 = vpop.xlane.xlu0 %6767
          %v6769 = vsel %vm754, %v6517, 0.0
          %6770 = vadd.xlane.f32.xlu0 %v6769
          %v6771 = vpop.xlane.xlu0 %6770
          %v6772 = vsel %vm754, %v6518, 0.0
          %6773 = vadd.xlane.f32.xlu0 %v6772
          %v6774 = vpop.xlane.xlu0 %6773
          %v6775 = vsel %vm754, %v6519, 0.0
          %6776 = vadd.xlane.f32.xlu0 %v6775
          %v6777 = vpop.xlane.xlu0 %6776
          %v6778 = vsel %vm754, %v6520, 0.0
          %6779 = vadd.xlane.f32.xlu0 %v6778
          %v6780 = vpop.xlane.xlu0 %6779
          %v6781 = vsel %vm754, %v6521, 0.0
          %6782 = vadd.xlane.f32.xlu0 %v6781
          %v6783 = vpop.xlane.xlu0 %6782
          %v6784 = vsel %vm754, %v6522, 0.0
          %6785 = vadd.xlane.f32.xlu0 %v6784
          %v6786 = vpop.xlane.xlu0 %6785
          %v6787 = vsel %vm754, %v6523, 0.0
          %6788 = vadd.xlane.f32.xlu0 %v6787
          %v6789 = vpop.xlane.xlu0 %6788
          %v6790 = vsel %vm754, %v6524, 0.0
          %6791 = vadd.xlane.f32.xlu0 %v6790
          %v6792 = vpop.xlane.xlu0 %6791
          %v6793 = vsel %vm754, %v6525, 0.0
          %6794 = vadd.xlane.f32.xlu0 %v6793
          %v6795 = vpop.xlane.xlu0 %6794
          %v6796 = vsel %vm754, %v6526, 0.0
          %6797 = vadd.xlane.f32.xlu0 %v6796
          %v6798 = vpop.xlane.xlu0 %6797
          %v6799 = vsel %vm754, %v6527, 0.0
          %6800 = vadd.xlane.f32.xlu0 %v6799
          %v6801 = vpop.xlane.xlu0 %6800
          %v6802 = vsel %vm754, %v6528, 0.0
          %6803 = vadd.xlane.f32.xlu0 %v6802
          %v6804 = vpop.xlane.xlu0 %6803
          %v6805 = vsel %vm754, %v6529, 0.0
          %6806 = vadd.xlane.f32.xlu0 %v6805
          %v6807 = vpop.xlane.xlu0 %6806
          %v6808 = vsel %vm754, %v6530, 0.0
          %6809 = vadd.xlane.f32.xlu0 %v6808
          %v6810 = vpop.xlane.xlu0 %6809
          %v6811 = vsel %vm754, %v6531, 0.0
          %6812 = vadd.xlane.f32.xlu0 %v6811
          %v6813 = vpop.xlane.xlu0 %6812
          %v6814 = vsel %vm754, %v6532, 0.0
          %6815 = vadd.xlane.f32.xlu0 %v6814
          %v6816 = vpop.xlane.xlu0 %6815
          %v6817 = vsel %vm754, %v6533, 0.0
          %6818 = vadd.xlane.f32.xlu0 %v6817
          %v6819 = vpop.xlane.xlu0 %6818
          %v6820 = vsel %vm754, %v6534, 0.0
          %6821 = vadd.xlane.f32.xlu0 %v6820
          %v6822 = vpop.xlane.xlu0 %6821
          %v6823 = vsel %vm754, %v6535, 0.0
          %6824 = vadd.xlane.f32.xlu0 %v6823
          %v6825 = vpop.xlane.xlu0 %6824
          %v6826 = vsel %vm754, %v6536, 0.0
          %6827 = vadd.xlane.f32.xlu0 %v6826
          %v6828 = vpop.xlane.xlu0 %6827
          %v6829 = vsel %vm754, %v6537, 0.0
          %6830 = vadd.xlane.f32.xlu0 %v6829
          %v6831 = vpop.xlane.xlu0 %6830
          %v6832 = vsel %vm754, %v6538, 0.0
          %6833 = vadd.xlane.f32.xlu0 %v6832
          %v6834 = vpop.xlane.xlu0 %6833
          %v6835 = vsel %vm754, %v6539, 0.0
          %6836 = vadd.xlane.f32.xlu0 %v6835
          %v6837 = vpop.xlane.xlu0 %6836
          %v6838 = vsel %vm754, %v6540, 0.0
          %6839 = vadd.xlane.f32.xlu0 %v6838
          %v6840 = vpop.xlane.xlu0 %6839
          %v6841 = vsel %vm754, %v6541, 0.0
          %6842 = vadd.xlane.f32.xlu0 %v6841
          %v6843 = vpop.xlane.xlu0 %6842
          %v6844 = vsel %vm754, %v6542, 0.0
          %6845 = vadd.xlane.f32.xlu0 %v6844
          %v6846 = vpop.xlane.xlu0 %6845
          %v6847 = vsel %vm754, %v6543, 0.0
          %6848 = vadd.xlane.f32.xlu0 %v6847
          %v6849 = vpop.xlane.xlu0 %6848
          %v6850 = vsel %vm754, %v6544, 0.0
          %6851 = vadd.xlane.f32.xlu0 %v6850
          %v6852 = vpop.xlane.xlu0 %6851
          %v6853 = vsel %vm754, %v6545, 0.0
          %6854 = vadd.xlane.f32.xlu0 %v6853
          %v6855 = vpop.xlane.xlu0 %6854
          %v6856 = vsel %vm754, %v6546, 0.0
          %6857 = vadd.xlane.f32.xlu0 %v6856
          %v6858 = vpop.xlane.xlu0 %6857
          %v6859 = vsel %vm754, %v6547, 0.0
          %6860 = vadd.xlane.f32.xlu0 %v6859
          %v6861 = vpop.xlane.xlu0 %6860
          %v6862 = vsel %vm754, %v6548, 0.0
          %6863 = vadd.xlane.f32.xlu0 %v6862
          %v6864 = vpop.xlane.xlu0 %6863
          %v6865 = vsel %vm754, %v6549, 0.0
          %6866 = vadd.xlane.f32.xlu0 %v6865
          %v6867 = vpop.xlane.xlu0 %6866
          %v6868 = vsel %vm754, %v6550, 0.0
          %6869 = vadd.xlane.f32.xlu0 %v6868
          %v6870 = vpop.xlane.xlu0 %6869
          %v6871 = vsel %vm754, %v6551, 0.0
          %6872 = vadd.xlane.f32.xlu0 %v6871
          %v6873 = vpop.xlane.xlu0 %6872
          %v6874 = vsel %vm754, %v6552, 0.0
          %6875 = vadd.xlane.f32.xlu0 %v6874
          %v6876 = vpop.xlane.xlu0 %6875
          %v6877 = vsel %vm754, %v6553, 0.0
          %6878 = vadd.xlane.f32.xlu0 %v6877
          %v6879 = vpop.xlane.xlu0 %6878
          %v6880 = vsel %vm754, %v6554, 0.0
          %6881 = vadd.xlane.f32.xlu0 %v6880
          %v6882 = vpop.xlane.xlu0 %6881
          %v6883 = vsel %vm754, %v6555, 0.0
          %6884 = vadd.xlane.f32.xlu0 %v6883
          %v6885 = vpop.xlane.xlu0 %6884
          %v6886 = vsel %vm754, %v6556, 0.0
          %6887 = vadd.xlane.f32.xlu0 %v6886
          %v6888 = vpop.xlane.xlu0 %6887
          %v6889 = vsel %vm754, %v6557, 0.0
          %6890 = vadd.xlane.f32.xlu0 %v6889
          %v6891 = vpop.xlane.xlu0 %6890
          %v6892 = vsel %vm754, %v6558, 0.0
          %6893 = vadd.xlane.f32.xlu0 %v6892
          %v6894 = vpop.xlane.xlu0 %6893
          %v6895 = vsel %vm754, %v6559, 0.0
          %6896 = vadd.xlane.f32.xlu0 %v6895
          %v6897 = vpop.xlane.xlu0 %6896
          %v6898 = vsel %vm754, %v6560, 0.0
          %6899 = vadd.xlane.f32.xlu0 %v6898
          %v6900 = vpop.xlane.xlu0 %6899
          %v6901 = vsel %vm754, %v6561, 0.0
          %6902 = vadd.xlane.f32.xlu0 %v6901
          %v6903 = vpop.xlane.xlu0 %6902
          %v6904 = vsel %vm754, %v6562, 0.0
          %6905 = vadd.xlane.f32.xlu0 %v6904
          %v6906 = vpop.xlane.xlu0 %6905
          %v6907 = vsel %vm754, %v6563, 0.0
          %6908 = vadd.xlane.f32.xlu0 %v6907
          %v6909 = vpop.xlane.xlu0 %6908
          %v6910 = vsel %vm754, %v6564, 0.0
          %6911 = vadd.xlane.f32.xlu0 %v6910
          %v6912 = vpop.xlane.xlu0 %6911
          %v6913 = vsel %vm754, %v6565, 0.0
          %6914 = vadd.xlane.f32.xlu0 %v6913
          %v6915 = vpop.xlane.xlu0 %6914
          %v6916 = vsel %vm754, %v6566, 0.0
          %6917 = vadd.xlane.f32.xlu0 %v6916
          %v6918 = vpop.xlane.xlu0 %6917
          %v6919 = vsel %vm754, %v6567, 0.0
          %6920 = vadd.xlane.f32.xlu0 %v6919
          %v6921 = vpop.xlane.xlu0 %6920
          %v6922 = vsel %vm754, %v6568, 0.0
          %6923 = vadd.xlane.f32.xlu0 %v6922
          %v6924 = vpop.xlane.xlu0 %6923
          %v6925 = vsel %vm754, %v6569, 0.0
          %6926 = vadd.xlane.f32.xlu0 %v6925
          %v6927 = vpop.xlane.xlu0 %6926
          %v6928 = vsel %vm754, %v6570, 0.0
          %6929 = vadd.xlane.f32.xlu0 %v6928
          %v6930 = vpop.xlane.xlu0 %6929
          %v6931 = vsel %vm754, %v6571, 0.0
          %6932 = vadd.xlane.f32.xlu0 %v6931
          %v6933 = vpop.xlane.xlu0 %6932
          %v6934 = vsel %vm754, %v6572, 0.0
          %6935 = vadd.xlane.f32.xlu0 %v6934
          %v6936 = vpop.xlane.xlu0 %6935
          %v6937 = vsel %vm754, %v6573, 0.0
          %6938 = vadd.xlane.f32.xlu0 %v6937
          %v6939 = vpop.xlane.xlu0 %6938
          %v6940 = vsel %vm754, %v6574, 0.0
          %6941 = vadd.xlane.f32.xlu0 %v6940
          %v6942 = vpop.xlane.xlu0 %6941
          %v6943 = vsel %vm754, %v6575, 0.0
          %6944 = vadd.xlane.f32.xlu0 %v6943
          %v6945 = vpop.xlane.xlu0 %6944
          %v6946 = vsel %vm754, %v6576, 0.0
          %6947 = vadd.xlane.f32.xlu0 %v6946
          %v6948 = vpop.xlane.xlu0 %6947
          %v6949 = vsel %vm754, %v6577, 0.0
          %6950 = vadd.xlane.f32.xlu0 %v6949
          %v6951 = vpop.xlane.xlu0 %6950
          %v6952 = vsel %vm754, %v6578, 0.0
          %6953 = vadd.xlane.f32.xlu0 %v6952
          %v6954 = vpop.xlane.xlu0 %6953
          %v6955 = vsel %vm754, %v6579, 0.0
          %6956 = vadd.xlane.f32.xlu0 %v6955
          %v6957 = vpop.xlane.xlu0 %6956
          %v6958 = vsel %vm754, %v6580, 0.0
          %6959 = vadd.xlane.f32.xlu0 %v6958
          %v6960 = vpop.xlane.xlu0 %6959
          %v6961 = vsel %vm754, %v6581, 0.0
          %6962 = vadd.xlane.f32.xlu0 %v6961
          %v6963 = vpop.xlane.xlu0 %6962
          %v6964 = vsel %vm754, %v6582, 0.0
          %6965 = vadd.xlane.f32.xlu0 %v6964
          %v6966 = vpop.xlane.xlu0 %6965
          %v7095 = vlaneseq
          %v7096 = vand.u32 %v7095, 127
          %v7097 = vlaneseq
          %v7098 = vshrl.u32 %v7097, 7
          %v7099 = vsub.s32 %v7096, %v7098
          %v7100 = vrot.slane %v6585, %v7099
          %v7101 = vadd.s32 %v7096, 4294967288
          %v7102 = vlaneseq
          %v7103 = vshrl.u32 %v7102, 7
          %v7104 = vsub.s32 %v7101, %v7103
          %v7105 = vrot.slane %v6588, %v7104
          %vm7106 = vcmask 130112
          %v7107 = vsel %vm7106, %v7105, %v7100
          %v7108 = vadd.s32 %v7096, 4294967280
          %v7109 = vlaneseq
          %v7110 = vshrl.u32 %v7109, 7
          %v7111 = vsub.s32 %v7108, %v7110
          %v7112 = vrot.slane %v6591, %v7111
          %vm7113 = vcmask 195712
          %v7114 = vsel %vm7113, %v7112, %v7107
          %v7115 = vadd.s32 %v7096, 4294967272
          %v7116 = vlaneseq
          %v7117 = vshrl.u32 %v7116, 7
          %v7118 = vsub.s32 %v7115, %v7117
          %v7119 = vrot.slane %v6594, %v7118
          %vm7120 = vcmask 261312
          %v7121 = vsel %vm7120, %v7119, %v7114
          %v7122 = vadd.s32 %v7096, 4294967264
          %v7123 = vlaneseq
          %v7124 = vshrl.u32 %v7123, 7
          %v7125 = vsub.s32 %v7122, %v7124
          %v7126 = vrot.slane %v6597, %v7125
          %vm7127 = vcmask 326912
          %v7128 = vsel %vm7127, %v7126, %v7121
          %v7129 = vadd.s32 %v7096, 4294967256
          %v7130 = vlaneseq
          %v7131 = vshrl.u32 %v7130, 7
          %v7132 = vsub.s32 %v7129, %v7131
          %v7133 = vrot.slane %v6600, %v7132
          %vm7134 = vcmask 392512
          %v7135 = vsel %vm7134, %v7133, %v7128
          %v7136 = vadd.s32 %v7096, 4294967248
          %v7137 = vlaneseq
          %v7138 = vshrl.u32 %v7137, 7
          %v7139 = vsub.s32 %v7136, %v7138
          %v7140 = vrot.slane %v6603, %v7139
          %vm7141 = vcmask 458112
          %v7142 = vsel %vm7141, %v7140, %v7135
          %v7143 = vadd.s32 %v7096, 4294967240
          %v7144 = vlaneseq
          %v7145 = vshrl.u32 %v7144, 7
          %v7146 = vsub.s32 %v7143, %v7145
          %v7147 = vrot.slane %v6606, %v7146
          %vm7148 = vcmask 523712
          %v7149 = vsel %vm7148, %v7147, %v7142
          %v7150 = vadd.s32 %v7096, 4294967232
          %v7151 = vlaneseq
          %v7152 = vshrl.u32 %v7151, 7
          %v7153 = vsub.s32 %v7150, %v7152
          %v7154 = vrot.slane %v6609, %v7153
          %vm7155 = vcmask 589312
          %v7156 = vsel %vm7155, %v7154, %v7149
          %v7157 = vadd.s32 %v7096, 4294967224
          %v7158 = vlaneseq
          %v7159 = vshrl.u32 %v7158, 7
          %v7160 = vsub.s32 %v7157, %v7159
          %v7161 = vrot.slane %v6612, %v7160
          %vm7162 = vcmask 654912
          %v7163 = vsel %vm7162, %v7161, %v7156
          %v7164 = vadd.s32 %v7096, 4294967216
          %v7165 = vlaneseq
          %v7166 = vshrl.u32 %v7165, 7
          %v7167 = vsub.s32 %v7164, %v7166
          %v7168 = vrot.slane %v6615, %v7167
          %vm7169 = vcmask 720512
          %v7170 = vsel %vm7169, %v7168, %v7163
          %v7171 = vadd.s32 %v7096, 4294967208
          %v7172 = vlaneseq
          %v7173 = vshrl.u32 %v7172, 7
          %v7174 = vsub.s32 %v7171, %v7173
          %v7175 = vrot.slane %v6618, %v7174
          %vm7176 = vcmask 786112
          %v7177 = vsel %vm7176, %v7175, %v7170
          %v7178 = vadd.s32 %v7096, 4294967200
          %v7179 = vlaneseq
          %v7180 = vshrl.u32 %v7179, 7
          %v7181 = vsub.s32 %v7178, %v7180
          %v7182 = vrot.slane %v6621, %v7181
          %vm7183 = vcmask 851712
          %v7184 = vsel %vm7183, %v7182, %v7177
          %v7185 = vadd.s32 %v7096, 4294967192
          %v7186 = vlaneseq
          %v7187 = vshrl.u32 %v7186, 7
          %v7188 = vsub.s32 %v7185, %v7187
          %v7189 = vrot.slane %v6624, %v7188
          %vm7190 = vcmask 917312
          %v7191 = vsel %vm7190, %v7189, %v7184
          %v7192 = vadd.s32 %v7096, 4294967184
          %v7193 = vlaneseq
          %v7194 = vshrl.u32 %v7193, 7
          %v7195 = vsub.s32 %v7192, %v7194
          %v7196 = vrot.slane %v6627, %v7195
          %vm7197 = vcmask 982912
          %v7198 = vsel %vm7197, %v7196, %v7191
          %v7199 = vadd.s32 %v7096, 4294967176
          %v7200 = vlaneseq
          %v7201 = vshrl.u32 %v7200, 7
          %v7202 = vsub.s32 %v7199, %v7201
          %v7203 = vrot.slane %v6630, %v7202
          %vm7204 = vcmask 1048512
          %v7205 = vsel %vm7204, %v7203, %v7198
          %v7206 = vlaneseq
          %v7207 = vshrl.u32 %v7206, 7
          %v7208 = vsub.s32 %v7096, %v7207
          %v7209 = vrot.slane %v6633, %v7208
          %v7210 = vlaneseq
          %v7211 = vshrl.u32 %v7210, 7
          %v7212 = vsub.s32 %v7101, %v7211
          %v7213 = vrot.slane %v6636, %v7212
          %v7214 = vsel %vm7106, %v7213, %v7209
          %v7215 = vlaneseq
          %v7216 = vshrl.u32 %v7215, 7
          %v7217 = vsub.s32 %v7108, %v7216
          %v7218 = vrot.slane %v6639, %v7217
          %v7219 = vsel %vm7113, %v7218, %v7214
          %v7220 = vlaneseq
          %v7221 = vshrl.u32 %v7220, 7
          %v7222 = vsub.s32 %v7115, %v7221
          %v7223 = vrot.slane %v6642, %v7222
          %v7224 = vsel %vm7120, %v7223, %v7219
          %v7225 = vlaneseq
          %v7226 = vshrl.u32 %v7225, 7
          %v7227 = vsub.s32 %v7122, %v7226
          %v7228 = vrot.slane %v6645, %v7227
          %v7229 = vsel %vm7127, %v7228, %v7224
          %v7230 = vlaneseq
          %v7231 = vshrl.u32 %v7230, 7
          %v7232 = vsub.s32 %v7129, %v7231
          %v7233 = vrot.slane %v6648, %v7232
          %v7234 = vsel %vm7134, %v7233, %v7229
          %v7235 = vlaneseq
          %v7236 = vshrl.u32 %v7235, 7
          %v7237 = vsub.s32 %v7136, %v7236
          %v7238 = vrot.slane %v6651, %v7237
          %v7239 = vsel %vm7141, %v7238, %v7234
          %v7240 = vlaneseq
          %v7241 = vshrl.u32 %v7240, 7
          %v7242 = vsub.s32 %v7143, %v7241
          %v7243 = vrot.slane %v6654, %v7242
          %v7244 = vsel %vm7148, %v7243, %v7239
          %v7245 = vlaneseq
          %v7246 = vshrl.u32 %v7245, 7
          %v7247 = vsub.s32 %v7150, %v7246
          %v7248 = vrot.slane %v6657, %v7247
          %v7249 = vsel %vm7155, %v7248, %v7244
          %v7250 = vlaneseq
          %v7251 = vshrl.u32 %v7250, 7
          %v7252 = vsub.s32 %v7157, %v7251
          %v7253 = vrot.slane %v6660, %v7252
          %v7254 = vsel %vm7162, %v7253, %v7249
          %v7255 = vlaneseq
          %v7256 = vshrl.u32 %v7255, 7
          %v7257 = vsub.s32 %v7164, %v7256
          %v7258 = vrot.slane %v6663, %v7257
          %v7259 = vsel %vm7169, %v7258, %v7254
          %v7260 = vlaneseq
          %v7261 = vshrl.u32 %v7260, 7
          %v7262 = vsub.s32 %v7171, %v7261
          %v7263 = vrot.slane %v6666, %v7262
          %v7264 = vsel %vm7176, %v7263, %v7259
          %v7265 = vlaneseq
          %v7266 = vshrl.u32 %v7265, 7
          %v7267 = vsub.s32 %v7178, %v7266
          %v7268 = vrot.slane %v6669, %v7267
          %v7269 = vsel %vm7183, %v7268, %v7264
          %v7270 = vlaneseq
          %v7271 = vshrl.u32 %v7270, 7
          %v7272 = vsub.s32 %v7185, %v7271
          %v7273 = vrot.slane %v6672, %v7272
          %v7274 = vsel %vm7190, %v7273, %v7269
          %v7275 = vlaneseq
          %v7276 = vshrl.u32 %v7275, 7
          %v7277 = vsub.s32 %v7192, %v7276
          %v7278 = vrot.slane %v6675, %v7277
          %v7279 = vsel %vm7197, %v7278, %v7274
          %v7280 = vlaneseq
          %v7281 = vshrl.u32 %v7280, 7
          %v7282 = vsub.s32 %v7199, %v7281
          %v7283 = vrot.slane %v6678, %v7282
          %v7284 = vsel %vm7204, %v7283, %v7279
          %v7285 = vlaneseq
          %v7286 = vshrl.u32 %v7285, 7
          %v7287 = vsub.s32 %v7096, %v7286
          %v7288 = vrot.slane %v6681, %v7287
          %v7289 = vlaneseq
          %v7290 = vshrl.u32 %v7289, 7
          %v7291 = vsub.s32 %v7101, %v7290
          %v7292 = vrot.slane %v6684, %v7291
          %v7293 = vsel %vm7106, %v7292, %v7288
          %v7294 = vlaneseq
          %v7295 = vshrl.u32 %v7294, 7
          %v7296 = vsub.s32 %v7108, %v7295
          %v7297 = vrot.slane %v6687, %v7296
          %v7298 = vsel %vm7113, %v7297, %v7293
          %v7299 = vlaneseq
          %v7300 = vshrl.u32 %v7299, 7
          %v7301 = vsub.s32 %v7115, %v7300
          %v7302 = vrot.slane %v6690, %v7301
          %v7303 = vsel %vm7120, %v7302, %v7298
          %v7304 = vlaneseq
          %v7305 = vshrl.u32 %v7304, 7
          %v7306 = vsub.s32 %v7122, %v7305
          %v7307 = vrot.slane %v6693, %v7306
          %v7308 = vsel %vm7127, %v7307, %v7303
          %v7309 = vlaneseq
          %v7310 = vshrl.u32 %v7309, 7
          %v7311 = vsub.s32 %v7129, %v7310
          %v7312 = vrot.slane %v6696, %v7311
          %v7313 = vsel %vm7134, %v7312, %v7308
          %v7314 = vlaneseq
          %v7315 = vshrl.u32 %v7314, 7
          %v7316 = vsub.s32 %v7136, %v7315
          %v7317 = vrot.slane %v6699, %v7316
          %v7318 = vsel %vm7141, %v7317, %v7313
          %v7319 = vlaneseq
          %v7320 = vshrl.u32 %v7319, 7
          %v7321 = vsub.s32 %v7143, %v7320
          %v7322 = vrot.slane %v6702, %v7321
          %v7323 = vsel %vm7148, %v7322, %v7318
          %v7324 = vlaneseq
          %v7325 = vshrl.u32 %v7324, 7
          %v7326 = vsub.s32 %v7150, %v7325
          %v7327 = vrot.slane %v6705, %v7326
          %v7328 = vsel %vm7155, %v7327, %v7323
          %v7329 = vlaneseq
          %v7330 = vshrl.u32 %v7329, 7
          %v7331 = vsub.s32 %v7157, %v7330
          %v7332 = vrot.slane %v6708, %v7331
          %v7333 = vsel %vm7162, %v7332, %v7328
          %v7334 = vlaneseq
          %v7335 = vshrl.u32 %v7334, 7
          %v7336 = vsub.s32 %v7164, %v7335
          %v7337 = vrot.slane %v6711, %v7336
          %v7338 = vsel %vm7169, %v7337, %v7333
          %v7339 = vlaneseq
          %v7340 = vshrl.u32 %v7339, 7
          %v7341 = vsub.s32 %v7171, %v7340
          %v7342 = vrot.slane %v6714, %v7341
          %v7343 = vsel %vm7176, %v7342, %v7338
          %v7344 = vlaneseq
          %v7345 = vshrl.u32 %v7344, 7
          %v7346 = vsub.s32 %v7178, %v7345
          %v7347 = vrot.slane %v6717, %v7346
          %v7348 = vsel %vm7183, %v7347, %v7343
          %v7349 = vlaneseq
          %v7350 = vshrl.u32 %v7349, 7
          %v7351 = vsub.s32 %v7185, %v7350
          %v7352 = vrot.slane %v6720, %v7351
          %v7353 = vsel %vm7190, %v7352, %v7348
          %v7354 = vlaneseq
          %v7355 = vshrl.u32 %v7354, 7
          %v7356 = vsub.s32 %v7192, %v7355
          %v7357 = vrot.slane %v6723, %v7356
          %v7358 = vsel %vm7197, %v7357, %v7353
          %v7359 = vlaneseq
          %v7360 = vshrl.u32 %v7359, 7
          %v7361 = vsub.s32 %v7199, %v7360
          %v7362 = vrot.slane %v6726, %v7361
          %v7363 = vsel %vm7204, %v7362, %v7358
          %v7364 = vlaneseq
          %v7365 = vshrl.u32 %v7364, 7
          %v7366 = vsub.s32 %v7096, %v7365
          %v7367 = vrot.slane %v6729, %v7366
          %v7368 = vlaneseq
          %v7369 = vshrl.u32 %v7368, 7
          %v7370 = vsub.s32 %v7101, %v7369
          %v7371 = vrot.slane %v6732, %v7370
          %v7372 = vsel %vm7106, %v7371, %v7367
          %v7373 = vlaneseq
          %v7374 = vshrl.u32 %v7373, 7
          %v7375 = vsub.s32 %v7108, %v7374
          %v7376 = vrot.slane %v6735, %v7375
          %v7377 = vsel %vm7113, %v7376, %v7372
          %v7378 = vlaneseq
          %v7379 = vshrl.u32 %v7378, 7
          %v7380 = vsub.s32 %v7115, %v7379
          %v7381 = vrot.slane %v6738, %v7380
          %v7382 = vsel %vm7120, %v7381, %v7377
          %v7383 = vlaneseq
          %v7384 = vshrl.u32 %v7383, 7
          %v7385 = vsub.s32 %v7122, %v7384
          %v7386 = vrot.slane %v6741, %v7385
          %v7387 = vsel %vm7127, %v7386, %v7382
          %v7388 = vlaneseq
          %v7389 = vshrl.u32 %v7388, 7
          %v7390 = vsub.s32 %v7129, %v7389
          %v7391 = vrot.slane %v6744, %v7390
          %v7392 = vsel %vm7134, %v7391, %v7387
          %v7393 = vlaneseq
          %v7394 = vshrl.u32 %v7393, 7
          %v7395 = vsub.s32 %v7136, %v7394
          %v7396 = vrot.slane %v6747, %v7395
          %v7397 = vsel %vm7141, %v7396, %v7392
          %v7398 = vlaneseq
          %v7399 = vshrl.u32 %v7398, 7
          %v7400 = vsub.s32 %v7143, %v7399
          %v7401 = vrot.slane %v6750, %v7400
          %v7402 = vsel %vm7148, %v7401, %v7397
          %v7403 = vlaneseq
          %v7404 = vshrl.u32 %v7403, 7
          %v7405 = vsub.s32 %v7150, %v7404
          %v7406 = vrot.slane %v6753, %v7405
          %v7407 = vsel %vm7155, %v7406, %v7402
          %v7408 = vlaneseq
          %v7409 = vshrl.u32 %v7408, 7
          %v7410 = vsub.s32 %v7157, %v7409
          %v7411 = vrot.slane %v6756, %v7410
          %v7412 = vsel %vm7162, %v7411, %v7407
          %v7413 = vlaneseq
          %v7414 = vshrl.u32 %v7413, 7
          %v7415 = vsub.s32 %v7164, %v7414
          %v7416 = vrot.slane %v6759, %v7415
          %v7417 = vsel %vm7169, %v7416, %v7412
          %v7418 = vlaneseq
          %v7419 = vshrl.u32 %v7418, 7
          %v7420 = vsub.s32 %v7171, %v7419
          %v7421 = vrot.slane %v6762, %v7420
          %v7422 = vsel %vm7176, %v7421, %v7417
          %v7423 = vlaneseq
          %v7424 = vshrl.u32 %v7423, 7
          %v7425 = vsub.s32 %v7178, %v7424
          %v7426 = vrot.slane %v6765, %v7425
          %v7427 = vsel %vm7183, %v7426, %v7422
          %v7428 = vlaneseq
          %v7429 = vshrl.u32 %v7428, 7
          %v7430 = vsub.s32 %v7185, %v7429
          %v7431 = vrot.slane %v6768, %v7430
          %v7432 = vsel %vm7190, %v7431, %v7427
          %v7433 = vlaneseq
          %v7434 = vshrl.u32 %v7433, 7
          %v7435 = vsub.s32 %v7192, %v7434
          %v7436 = vrot.slane %v6771, %v7435
          %v7437 = vsel %vm7197, %v7436, %v7432
          %v7438 = vlaneseq
          %v7439 = vshrl.u32 %v7438, 7
          %v7440 = vsub.s32 %v7199, %v7439
          %v7441 = vrot.slane %v6774, %v7440
          %v7442 = vsel %vm7204, %v7441, %v7437
          %v7443 = vlaneseq
          %v7444 = vshrl.u32 %v7443, 7
          %v7445 = vsub.s32 %v7096, %v7444
          %v7446 = vrot.slane %v6777, %v7445
          %v7447 = vlaneseq
          %v7448 = vshrl.u32 %v7447, 7
          %v7449 = vsub.s32 %v7101, %v7448
          %v7450 = vrot.slane %v6780, %v7449
          %v7451 = vsel %vm7106, %v7450, %v7446
          %v7452 = vlaneseq
          %v7453 = vshrl.u32 %v7452, 7
          %v7454 = vsub.s32 %v7108, %v7453
          %v7455 = vrot.slane %v6783, %v7454
          %v7456 = vsel %vm7113, %v7455, %v7451
          %v7457 = vlaneseq
          %v7458 = vshrl.u32 %v7457, 7
          %v7459 = vsub.s32 %v7115, %v7458
          %v7460 = vrot.slane %v6786, %v7459
          %v7461 = vsel %vm7120, %v7460, %v7456
          %v7462 = vlaneseq
          %v7463 = vshrl.u32 %v7462, 7
          %v7464 = vsub.s32 %v7122, %v7463
          %v7465 = vrot.slane %v6789, %v7464
          %v7466 = vsel %vm7127, %v7465, %v7461
          %v7467 = vlaneseq
          %v7468 = vshrl.u32 %v7467, 7
          %v7469 = vsub.s32 %v7129, %v7468
          %v7470 = vrot.slane %v6792, %v7469
          %v7471 = vsel %vm7134, %v7470, %v7466
          %v7472 = vlaneseq
          %v7473 = vshrl.u32 %v7472, 7
          %v7474 = vsub.s32 %v7136, %v7473
          %v7475 = vrot.slane %v6795, %v7474
          %v7476 = vsel %vm7141, %v7475, %v7471
          %v7477 = vlaneseq
          %v7478 = vshrl.u32 %v7477, 7
          %v7479 = vsub.s32 %v7143, %v7478
          %v7480 = vrot.slane %v6798, %v7479
          %v7481 = vsel %vm7148, %v7480, %v7476
          %v7482 = vlaneseq
          %v7483 = vshrl.u32 %v7482, 7
          %v7484 = vsub.s32 %v7150, %v7483
          %v7485 = vrot.slane %v6801, %v7484
          %v7486 = vsel %vm7155, %v7485, %v7481
          %v7487 = vlaneseq
          %v7488 = vshrl.u32 %v7487, 7
          %v7489 = vsub.s32 %v7157, %v7488
          %v7490 = vrot.slane %v6804, %v7489
          %v7491 = vsel %vm7162, %v7490, %v7486
          %v7492 = vlaneseq
          %v7493 = vshrl.u32 %v7492, 7
          %v7494 = vsub.s32 %v7164, %v7493
          %v7495 = vrot.slane %v6807, %v7494
          %v7496 = vsel %vm7169, %v7495, %v7491
          %v7497 = vlaneseq
          %v7498 = vshrl.u32 %v7497, 7
          %v7499 = vsub.s32 %v7171, %v7498
          %v7500 = vrot.slane %v6810, %v7499
          %v7501 = vsel %vm7176, %v7500, %v7496
          %v7502 = vlaneseq
          %v7503 = vshrl.u32 %v7502, 7
          %v7504 = vsub.s32 %v7178, %v7503
          %v7505 = vrot.slane %v6813, %v7504
          %v7506 = vsel %vm7183, %v7505, %v7501
          %v7507 = vlaneseq
          %v7508 = vshrl.u32 %v7507, 7
          %v7509 = vsub.s32 %v7185, %v7508
          %v7510 = vrot.slane %v6816, %v7509
          %v7511 = vsel %vm7190, %v7510, %v7506
          %v7512 = vlaneseq
          %v7513 = vshrl.u32 %v7512, 7
          %v7514 = vsub.s32 %v7192, %v7513
          %v7515 = vrot.slane %v6819, %v7514
          %v7516 = vsel %vm7197, %v7515, %v7511
          %v7517 = vlaneseq
          %v7518 = vshrl.u32 %v7517, 7
          %v7519 = vsub.s32 %v7199, %v7518
          %v7520 = vrot.slane %v6822, %v7519
          %v7521 = vsel %vm7204, %v7520, %v7516
          %v7522 = vlaneseq
          %v7523 = vshrl.u32 %v7522, 7
          %v7524 = vsub.s32 %v7096, %v7523
          %v7525 = vrot.slane %v6825, %v7524
          %v7526 = vlaneseq
          %v7527 = vshrl.u32 %v7526, 7
          %v7528 = vsub.s32 %v7101, %v7527
          %v7529 = vrot.slane %v6828, %v7528
          %v7530 = vsel %vm7106, %v7529, %v7525
          %v7531 = vlaneseq
          %v7532 = vshrl.u32 %v7531, 7
          %v7533 = vsub.s32 %v7108, %v7532
          %v7534 = vrot.slane %v6831, %v7533
          %v7535 = vsel %vm7113, %v7534, %v7530
          %v7536 = vlaneseq
          %v7537 = vshrl.u32 %v7536, 7
          %v7538 = vsub.s32 %v7115, %v7537
          %v7539 = vrot.slane %v6834, %v7538
          %v7540 = vsel %vm7120, %v7539, %v7535
          %v7541 = vlaneseq
          %v7542 = vshrl.u32 %v7541, 7
          %v7543 = vsub.s32 %v7122, %v7542
          %v7544 = vrot.slane %v6837, %v7543
          %v7545 = vsel %vm7127, %v7544, %v7540
          %v7546 = vlaneseq
          %v7547 = vshrl.u32 %v7546, 7
          %v7548 = vsub.s32 %v7129, %v7547
          %v7549 = vrot.slane %v6840, %v7548
          %v7550 = vsel %vm7134, %v7549, %v7545
          %v7551 = vlaneseq
          %v7552 = vshrl.u32 %v7551, 7
          %v7553 = vsub.s32 %v7136, %v7552
          %v7554 = vrot.slane %v6843, %v7553
          %v7555 = vsel %vm7141, %v7554, %v7550
          %v7556 = vlaneseq
          %v7557 = vshrl.u32 %v7556, 7
          %v7558 = vsub.s32 %v7143, %v7557
          %v7559 = vrot.slane %v6846, %v7558
          %v7560 = vsel %vm7148, %v7559, %v7555
          %v7561 = vlaneseq
          %v7562 = vshrl.u32 %v7561, 7
          %v7563 = vsub.s32 %v7150, %v7562
          %v7564 = vrot.slane %v6849, %v7563
          %v7565 = vsel %vm7155, %v7564, %v7560
          %v7566 = vlaneseq
          %v7567 = vshrl.u32 %v7566, 7
          %v7568 = vsub.s32 %v7157, %v7567
          %v7569 = vrot.slane %v6852, %v7568
          %v7570 = vsel %vm7162, %v7569, %v7565
          %v7571 = vlaneseq
          %v7572 = vshrl.u32 %v7571, 7
          %v7573 = vsub.s32 %v7164, %v7572
          %v7574 = vrot.slane %v6855, %v7573
          %v7575 = vsel %vm7169, %v7574, %v7570
          %v7576 = vlaneseq
          %v7577 = vshrl.u32 %v7576, 7
          %v7578 = vsub.s32 %v7171, %v7577
          %v7579 = vrot.slane %v6858, %v7578
          %v7580 = vsel %vm7176, %v7579, %v7575
          %v7581 = vlaneseq
          %v7582 = vshrl.u32 %v7581, 7
          %v7583 = vsub.s32 %v7178, %v7582
          %v7584 = vrot.slane %v6861, %v7583
          %v7585 = vsel %vm7183, %v7584, %v7580
          %v7586 = vlaneseq
          %v7587 = vshrl.u32 %v7586, 7
          %v7588 = vsub.s32 %v7185, %v7587
          %v7589 = vrot.slane %v6864, %v7588
          %v7590 = vsel %vm7190, %v7589, %v7585
          %v7591 = vlaneseq
          %v7592 = vshrl.u32 %v7591, 7
          %v7593 = vsub.s32 %v7192, %v7592
          %v7594 = vrot.slane %v6867, %v7593
          %v7595 = vsel %vm7197, %v7594, %v7590
          %v7596 = vlaneseq
          %v7597 = vshrl.u32 %v7596, 7
          %v7598 = vsub.s32 %v7199, %v7597
          %v7599 = vrot.slane %v6870, %v7598
          %v7600 = vsel %vm7204, %v7599, %v7595
          %v7601 = vlaneseq
          %v7602 = vshrl.u32 %v7601, 7
          %v7603 = vsub.s32 %v7096, %v7602
          %v7604 = vrot.slane %v6873, %v7603
          %v7605 = vlaneseq
          %v7606 = vshrl.u32 %v7605, 7
          %v7607 = vsub.s32 %v7101, %v7606
          %v7608 = vrot.slane %v6876, %v7607
          %v7609 = vsel %vm7106, %v7608, %v7604
          %v7610 = vlaneseq
          %v7611 = vshrl.u32 %v7610, 7
          %v7612 = vsub.s32 %v7108, %v7611
          %v7613 = vrot.slane %v6879, %v7612
          %v7614 = vsel %vm7113, %v7613, %v7609
          %v7615 = vlaneseq
          %v7616 = vshrl.u32 %v7615, 7
          %v7617 = vsub.s32 %v7115, %v7616
          %v7618 = vrot.slane %v6882, %v7617
          %v7619 = vsel %vm7120, %v7618, %v7614
          %v7620 = vlaneseq
          %v7621 = vshrl.u32 %v7620, 7
          %v7622 = vsub.s32 %v7122, %v7621
          %v7623 = vrot.slane %v6885, %v7622
          %v7624 = vsel %vm7127, %v7623, %v7619
          %v7625 = vlaneseq
          %v7626 = vshrl.u32 %v7625, 7
          %v7627 = vsub.s32 %v7129, %v7626
          %v7628 = vrot.slane %v6888, %v7627
          %v7629 = vsel %vm7134, %v7628, %v7624
          %v7630 = vlaneseq
          %v7631 = vshrl.u32 %v7630, 7
          %v7632 = vsub.s32 %v7136, %v7631
          %v7633 = vrot.slane %v6891, %v7632
          %v7634 = vsel %vm7141, %v7633, %v7629
          %v7635 = vlaneseq
          %v7636 = vshrl.u32 %v7635, 7
          %v7637 = vsub.s32 %v7143, %v7636
          %v7638 = vrot.slane %v6894, %v7637
          %v7639 = vsel %vm7148, %v7638, %v7634
          %v7640 = vlaneseq
          %v7641 = vshrl.u32 %v7640, 7
          %v7642 = vsub.s32 %v7150, %v7641
          %v7643 = vrot.slane %v6897, %v7642
          %v7644 = vsel %vm7155, %v7643, %v7639
          %v7645 = vlaneseq
          %v7646 = vshrl.u32 %v7645, 7
          %v7647 = vsub.s32 %v7157, %v7646
          %v7648 = vrot.slane %v6900, %v7647
          %v7649 = vsel %vm7162, %v7648, %v7644
          %v7650 = vlaneseq
          %v7651 = vshrl.u32 %v7650, 7
          %v7652 = vsub.s32 %v7164, %v7651
          %v7653 = vrot.slane %v6903, %v7652
          %v7654 = vsel %vm7169, %v7653, %v7649
          %v7655 = vlaneseq
          %v7656 = vshrl.u32 %v7655, 7
          %v7657 = vsub.s32 %v7171, %v7656
          %v7658 = vrot.slane %v6906, %v7657
          %v7659 = vsel %vm7176, %v7658, %v7654
          %v7660 = vlaneseq
          %v7661 = vshrl.u32 %v7660, 7
          %v7662 = vsub.s32 %v7178, %v7661
          %v7663 = vrot.slane %v6909, %v7662
          %v7664 = vsel %vm7183, %v7663, %v7659
          %v7665 = vlaneseq
          %v7666 = vshrl.u32 %v7665, 7
          %v7667 = vsub.s32 %v7185, %v7666
          %v7668 = vrot.slane %v6912, %v7667
          %v7669 = vsel %vm7190, %v7668, %v7664
          %v7670 = vlaneseq
          %v7671 = vshrl.u32 %v7670, 7
          %v7672 = vsub.s32 %v7192, %v7671
          %v7673 = vrot.slane %v6915, %v7672
          %v7674 = vsel %vm7197, %v7673, %v7669
          %v7675 = vlaneseq
          %v7676 = vshrl.u32 %v7675, 7
          %v7677 = vsub.s32 %v7199, %v7676
          %v7678 = vrot.slane %v6918, %v7677
          %v7679 = vsel %vm7204, %v7678, %v7674
          %v7680 = vlaneseq
          %v7681 = vshrl.u32 %v7680, 7
          %v7682 = vsub.s32 %v7096, %v7681
          %v7683 = vrot.slane %v6921, %v7682
          %v7684 = vlaneseq
          %v7685 = vshrl.u32 %v7684, 7
          %v7686 = vsub.s32 %v7101, %v7685
          %v7687 = vrot.slane %v6924, %v7686
          %v7688 = vsel %vm7106, %v7687, %v7683
          %v7689 = vlaneseq
          %v7690 = vshrl.u32 %v7689, 7
          %v7691 = vsub.s32 %v7108, %v7690
          %v7692 = vrot.slane %v6927, %v7691
          %v7693 = vsel %vm7113, %v7692, %v7688
          %v7694 = vlaneseq
          %v7695 = vshrl.u32 %v7694, 7
          %v7696 = vsub.s32 %v7115, %v7695
          %v7697 = vrot.slane %v6930, %v7696
          %v7698 = vsel %vm7120, %v7697, %v7693
          %v7699 = vlaneseq
          %v7700 = vshrl.u32 %v7699, 7
          %v7701 = vsub.s32 %v7122, %v7700
          %v7702 = vrot.slane %v6933, %v7701
          %v7703 = vsel %vm7127, %v7702, %v7698
          %v7704 = vlaneseq
          %v7705 = vshrl.u32 %v7704, 7
          %v7706 = vsub.s32 %v7129, %v7705
          %v7707 = vrot.slane %v6936, %v7706
          %v7708 = vsel %vm7134, %v7707, %v7703
          %v7709 = vlaneseq
          %v7710 = vshrl.u32 %v7709, 7
          %v7711 = vsub.s32 %v7136, %v7710
          %v7712 = vrot.slane %v6939, %v7711
          %v7713 = vsel %vm7141, %v7712, %v7708
          %v7714 = vlaneseq
          %v7715 = vshrl.u32 %v7714, 7
          %v7716 = vsub.s32 %v7143, %v7715
          %v7717 = vrot.slane %v6942, %v7716
          %v7718 = vsel %vm7148, %v7717, %v7713
          %v7719 = vlaneseq
          %v7720 = vshrl.u32 %v7719, 7
          %v7721 = vsub.s32 %v7150, %v7720
          %v7722 = vrot.slane %v6945, %v7721
          %v7723 = vsel %vm7155, %v7722, %v7718
          %v7724 = vlaneseq
          %v7725 = vshrl.u32 %v7724, 7
          %v7726 = vsub.s32 %v7157, %v7725
          %v7727 = vrot.slane %v6948, %v7726
          %v7728 = vsel %vm7162, %v7727, %v7723
          %v7729 = vlaneseq
          %v7730 = vshrl.u32 %v7729, 7
          %v7731 = vsub.s32 %v7164, %v7730
          %v7732 = vrot.slane %v6951, %v7731
          %v7733 = vsel %vm7169, %v7732, %v7728
          %v7734 = vlaneseq
          %v7735 = vshrl.u32 %v7734, 7
          %v7736 = vsub.s32 %v7171, %v7735
          %v7737 = vrot.slane %v6954, %v7736
          %v7738 = vsel %vm7176, %v7737, %v7733
          %v7739 = vlaneseq
          %v7740 = vshrl.u32 %v7739, 7
          %v7741 = vsub.s32 %v7178, %v7740
          %v7742 = vrot.slane %v6957, %v7741
          %v7743 = vsel %vm7183, %v7742, %v7738
          %v7744 = vlaneseq
          %v7745 = vshrl.u32 %v7744, 7
          %v7746 = vsub.s32 %v7185, %v7745
          %v7747 = vrot.slane %v6960, %v7746
          %v7748 = vsel %vm7190, %v7747, %v7743
          %v7749 = vlaneseq
          %v7750 = vshrl.u32 %v7749, 7
          %v7751 = vsub.s32 %v7192, %v7750
          %v7752 = vrot.slane %v6963, %v7751
          %v7753 = vsel %vm7197, %v7752, %v7748
          %v7754 = vlaneseq
          %v7755 = vshrl.u32 %v7754, 7
          %v7756 = vsub.s32 %v7199, %v7755
          %v7757 = vrot.slane %v6966, %v7756
          %v7758 = vsel %vm7204, %v7757, %v7753
          %vm7759 = vcmask 1041409
          %v7760 = vsel %vm7759, %v7284, %v7205
          %vm7761 = vcmask 1042434
          %v7762 = vsel %vm7761, %v7363, %v7760
          %vm7763 = vcmask 1043459
          %v7764 = vsel %vm7763, %v7442, %v7762
          %vm7765 = vcmask 1044484
          %v7766 = vsel %vm7765, %v7521, %v7764
          %vm7767 = vcmask 1045509
          %v7768 = vsel %vm7767, %v7600, %v7766
          %vm7769 = vcmask 1046534
          %v7770 = vsel %vm7769, %v7679, %v7768
          %vm7771 = vcmask 1047559
          %v7772 = vsel %vm7771, %v7758, %v7770
          %v7774 = vadd.f32 %v3121, %v7772
          %v7775 = vxor.u32 %v7774, 2147483648
          %v7776 = vmul.f32 %v7775, 1.442695
          %v7777 = vpow.pop %v7776
          %v7778 = vadd.f32 %v7777, 1.0
          %v7779 = vrcp.pop %v7778
          %v7780 = vmul.f32 1.0, %v7779
          %7781 = vst [vmem:[%s660] sm:$0xff] %v7780
        $region136: #{tpu_custom_call.1} parent=71 // pred_fallthru
          _
        %s7782 = sand.u32 %s343, 1
        %s7783 = scalar_lea.sflag [#allocation7], %s7782
        %s7784 = sand.u32 %s343, 1
        %s7785 = smul.addr %s7784, 8
        %s7786 = scalar_lea.vmem [#allocation26], %s7785
        // Predicated region
        $region137: #{tpu_custom_call.1} parent=71 // pred_check
          %p7787 = pneg %p353
        $region138: #{tpu_custom_call.1} parent=71 // pred_check_branch
          %7789 = sbr.rel (%p7787) target = $region140
        $region139: #{tpu_custom_call.1} parent=71 // pred_region
          %s7791 = ssub.s32 128, 128
          %7792 = vsyncadd %s7783, %s7791
          %s7793 = smul.addr %s42, 128
          %s7794 = scalar_lea.hbm %s13, %s7793
          %s7796 = sshll.u32 %s7786, 4
          %s7797 = int_to_ptr.vmem [resolvable:$true] %s7796
          %7799 = dma.vmem_to_hbm [thread:$0]  %s7797, 128, %s7794, %s7783
        $region140: #{tpu_custom_call.1} parent=71 // pred_fallthru
          _
      $region72: #{tpu_custom_call.1} parent=5 // pred_fallthru
        _
      %p7800 = scmp.le.s32.totalorder 2, %s33
      // Predicated region
      $region141: #{tpu_custom_call.1} parent=5 // pred_check
        %p7801 = pneg %p7800
      $region142: #{tpu_custom_call.1} parent=5 // pred_check_branch
        %7803 = sbr.rel (%p7801) target = $region144
      $region143: #{tpu_custom_call.1} parent=5 // pred_region
        %s7804 = ssub.s32 %s33, 2
        // Predicated region
        $region145: #{tpu_custom_call.1} parent=143 // pred_check
          %p7805 = pneg %p359
        $region146: #{tpu_custom_call.1} parent=143 // pred_check_branch
          %7807 = sbr.rel (%p7805) target = $region148
        $region147: #{tpu_custom_call.1} parent=143 // pred_region
          %s7808 = sand.u32 %s344, 1
          %s7809 = scalar_lea.sflag [#allocation7], %s7808
          %s7810 = sand.u32 %s344, 1
          %s7811 = smul.addr %s7810, 8
          %s7812 = scalar_lea.vmem [#allocation26], %s7811
          %7813 = dma.done %s7809, 128
        $region148: #{tpu_custom_call.1} parent=143 // pred_fallthru
          _
      $region144: #{tpu_custom_call.1} parent=5 // pred_fallthru
        _
    $region6: #{tpu_custom_call.1} parent=1 // loop_footer
      %s37 = sadd.s32 1, %s33
    $region7: #{tpu_custom_call.1} parent=1 // loop_footer_branch
      %32 = sbr.rel target = $region3
    $region8: #{tpu_custom_call.1} parent=1 // loop_exit
      _
    %7814 = vsyncpa [#allocation6], 1
    %s7815 = scalar_lea.sflag [#allocation6], 1
    %7816 = vsyncpa %s7815, 1
    %7817 = vsyncpa [#allocation9], 1
    %7818 = vsyncpa [#allocation12], 1
    %7819 = vsyncpa [#allocation15], 1
    %7820 = vsyncpa [#allocation18], 1
    %s7821 = scalar_lea.sflag [#allocation18], 1
    %7822 = vsyncpa %s7821, 1
    %7823 = vsyncpa [#allocation21], 1
    %7824 = vsyncpa [#allocation24], 1
    %7825 = vsyncpa [#allocation7], 1
    %s7826 = scalar_lea.sflag [#allocation7], 1
    %7827 = vsyncpa %s7826, 1

</llo_original>
